<compile_context>
chip_gen: v7x
topology: tpu7x:2x2x1
jax: 0.10.0
libtpu: 0.0.40
codegen_flags: <defaults>
</compile_context>

<pallas_src>
import functools
import numpy as np

import jax
import jax.numpy as jnp
from jax.experimental import pallas as pl
from jax.experimental.pallas import tpu as pltpu


# ------------------------------ Pallas kernel -------------------------------

def _fused_cnn_kernel(xl_ref, w1_ref, b1_ref, w2_ref, b2_ref, wc_ref, bc_ref,
                      sel_ref, o_ref):
    f32 = jnp.float32
    bf16 = jnp.bfloat16
    n1 = xl_ref.shape[1]          # BT*12 pooled conv1 rows in this block
    n2 = n1 - 4                   # conv2 rows (incl. 4 unused rows per image)
    n3 = n2 - 1                   # rows after the row half of maxpool2

    # conv1 LHS variants: (input-row parity p, row offset s), pre-sliced in the
    # wrapper so the kernel only indexes the leading dim of the ref.
    lhs = [xl_ref[k] for k in range(6)]                    # each [n1, 28] bf16

    # ---- conv1 (5x5, 1->16) fused with the whole 2x2 maxpool ---------------
    # Branch (qh, qw) = row/column parity of the conv output inside the pooling
    # window; each branch is a sum of 5 per-tap matmuls, the pool is an
    # elementwise max over the 4 branches (ReLU and the shared bias commute
    # with max).
    branch = []
    for qh in range(2):
        for qw in range(2):
            acc = None
            for di in range(5):
                p = (qh + di) % 2
                s = (qh + di) // 2
                d = jnp.dot(lhs[p * 3 + s], w1_ref[qw * 5 + di],
                            preferred_element_type=f32)
                acc = d if acc is None else acc + d
            branch.append(acc)
    pre1 = jnp.maximum(jnp.maximum(branch[0], branch[1]),
                       jnp.maximum(branch[2], branch[3]))
    p1 = jnp.maximum(pre1 + b1_ref[...], 0.0)              # [n1, 192] pooled
    p1b = p1.astype(bf16)

    # ---- conv2 (5x5, 16->32) fused with the column half of maxpool2 --------
    # Row taps are realised as shifted sublane slices of p1; rows b*12+(8..11)
    # are cross-image garbage that never reaches the output (masked by `sel`).
    acc2 = [None, None]
    for qw in range(2):
        for di in range(5):
            d = jnp.dot(p1b[di:di + n2, :], w2_ref[qw * 5 + di],
                        preferred_element_type=f32)
            acc2[qw] = d if acc2[qw] is None else acc2[qw] + d
    t2 = jnp.maximum(acc2[0], acc2[1]) + b2_ref[...]       # [n2, 128]
    # row half of maxpool2: max over adjacent rows (valid at even local rows)
    u2 = jnp.maximum(t2[0:n3, :], t2[1:n3 + 1, :])          # [n3, 128]
    p2 = jnp.maximum(u2, 0.0).astype(bf16)                  # [n3, 128]

    # ---- classifier ---------------------------------------------------------
    # sel[h2] is an exact 0/1 matrix that picks row b*12 + 2*h2 of p2 for every
    # image b; wc_ref[h2] holds the classifier weights for that pooled row.
    lg = None
    for h2 in range(4):
        rows = jnp.dot(sel_ref[h2], p2, preferred_element_type=f32)   # [BT,128]
        d = jnp.dot(rows.astype(bf16), wc_ref[h2], preferred_element_type=f32)
        lg = d if lg is None else lg + d
    o_ref[...] = lg + bc_ref[...]                           # [BT, 128] lane-dense


# ------------------------- one-time parameter prep --------------------------

def prepare_params(params):
    """Hoisted, one-time re-layout of all weights/biases (bf16 MXU operands)."""
    w1, b1, w2, b2, wc, bc = (np.asarray(p, np.float32) for p in params)

    # conv1 weights fused with the column-parity (qw) half of maxpool1:
    # w1q[qw*5+di][j, wp*16+c] = W1[c, 0, di, j - (2*wp+qw)]
    w1q = np.zeros((10, 28, 192), np.float32)
    for qw in range(2):
        for di in range(5):
            for dj in range(5):
                for wp in range(12):
                    j = 2 * wp + qw + dj
                    w1q[qw * 5 + di, j, wp * 16:(wp + 1) * 16] = w1[:, 0, di, dj]
    b1r = np.tile(b1, 12)[None, :]                           # [1, 192]

    # conv2 weights fused with the column-parity (qw) half of maxpool2:
    # w2q[qw*5+di][wp*16+c, w2p*32+o] = W2[o, c, di, wp - (2*w2p+qw)]
    w2q = np.zeros((10, 192, 128), np.float32)
    for qw in range(2):
        for di in range(5):
            for dj in range(5):
                for w2p in range(4):
                    wp = 2 * w2p + qw + dj
                    w2q[qw * 5 + di, wp * 16:(wp + 1) * 16,
                        w2p * 32:(w2p + 1) * 32] = w2[:, :, di, dj].T
    b2r = np.tile(b2, 4)[None, :]                            # [1, 128]

    # classifier, re-ordered for PyTorch's NCHW flatten (f = o*16 + h2*4 + w2),
    # class dimension padded to 128 lanes.
    wc4 = np.zeros((4, 128, 128), np.float32)
    wcr = wc.reshape(10, 32, 4, 4)                           # [j, o, h2, w2]
    for h2 in range(4):
        for w2p in range(4):
            wc4[h2, w2p * 32:(w2p + 1) * 32, 0:10] = wcr[:, :, h2, w2p].T
    bcp = np.zeros((1, 128), np.float32)
    bcp[0, :10] = bc

    return (jnp.asarray(w1q, jnp.bfloat16), jnp.asarray(b1r),
            jnp.asarray(w2q, jnp.bfloat16), jnp.asarray(b2r),
            jnp.asarray(wc4, jnp.bfloat16), jnp.asarray(bcp))


# --------------------------------- wrapper ----------------------------------

def forward(prepped, x_nchw, block_batch=8):
    # block_batch must be a multiple of 8 (sublane tiling of the output block).
    (w1q, b1r, w2q, b2r, wc4, bcp) = prepped
    bt = block_batch
    b = x_nchw.shape[0]
    nb = (b + bt - 1) // bt
    bp = nb * bt

    xs = x_nchw[:, 0, :, :].astype(jnp.float32)              # [B, 28, 28]
    if bp != b:
        xs = jnp.concatenate(
            [xs, jnp.zeros((bp - b, 28, 28), xs.dtype)], axis=0)

    # Pre-slice the 6 (row-parity, tap-offset) conv1 LHS variants (pure XLA,
    # hoisted) so the kernel never reshapes or strides.
    xe = xs[:, 0::2, :]                                      # rows 0,2,...,26
    xo = xs[:, 1::2, :]                                      # rows 1,3,...,27
    parts = []
    for src in (xe, xo):
        for s in range(3):
            parts.append(src[:, s:s + 12, :].reshape(bp * 12, 28))
    xl = jnp.stack(parts, axis=0).astype(jnp.bfloat16)       # [6, bp*12, 28]

    n1 = bt * 12
    n3 = n1 - 5
    sel = np.zeros((4, bt, n3), np.float32)
    for h2 in range(4):
        for bi in range(bt):
            sel[h2, bi, bi * 12 + 2 * h2] = 1.0
    sel = jnp.asarray(sel, jnp.bfloat16)

    macs = nb * (20 * n1 * 28 * 192 + 10 * (n1 - 4) * 192 * 128
                 + 4 * bt * n3 * 128 + 4 * bt * 128 * 128)
    nbytes = (xl.size * 2 + w1q.size * 2 + w2q.size * 2 + wc4.size * 2
              + sel.size * 2 + (b1r.size + b2r.size + bcp.size) * 4
              + bp * 128 * 4)

    out = pl.pallas_call(
        _fused_cnn_kernel,
        out_shape=jax.ShapeDtypeStruct((bp, 128), jnp.float32),
        grid=(nb,),
        in_specs=[
            pl.BlockSpec((6, n1, 28), lambda i: (0, i, 0)),      # conv1 LHS slices
            pl.BlockSpec((10, 28, 192), lambda i: (0, 0, 0)),    # conv1 weights
            pl.BlockSpec((1, 192), lambda i: (0, 0)),            # conv1 bias
            pl.BlockSpec((10, 192, 128), lambda i: (0, 0, 0)),   # conv2 weights
            pl.BlockSpec((1, 128), lambda i: (0, 0)),            # conv2 bias
            pl.BlockSpec((4, 128, 128), lambda i: (0, 0, 0)),    # clf weights
            pl.BlockSpec((1, 128), lambda i: (0, 0)),            # clf bias (padded)
            pl.BlockSpec((4, bt, n3), lambda i: (0, 0, 0)),      # row selectors
        ],
        out_specs=pl.BlockSpec((bt, 128), lambda i: (i, 0)),
        compiler_params=pltpu.CompilerParams(
            dimension_semantics=("parallel",)),
        cost_estimate=pl.CostEstimate(flops=int(2 * macs), transcendentals=0,
                                      bytes_accessed=int(nbytes)),
    )(xl, w1q, b1r, w2q, b2r, wc4, bcp, sel)
    return out[:b, :10]


# --------------------------- deterministic params ---------------------------

def init_params(key):
    k1, k2, k3 = jax.random.split(key, 3)
    w1 = 0.1 * jax.random.normal(k1, (16, 1, 5, 5), jnp.float32)
    b1 = jnp.linspace(-0.1, 0.1, 16, dtype=jnp.float32)
    w2 = 0.05 * jax.random.normal(k2, (32, 16, 5, 5), jnp.float32)
    b2 = jnp.linspace(-0.1, 0.1, 32, dtype=jnp.float32)
    wc = 0.02 * jax.random.normal(k3, (10, 32 * 4 * 4), jnp.float32)
    bc = jnp.linspace(-0.05, 0.05, 10, dtype=jnp.float32)
    return (w1, b1, w2, b2, wc, bc)


# ---------------------------- pure-JAX reference ----------------------------

def reference_forward(params, x):
    w1, b1, w2, b2, wc, bc = params
    dn = ("NCHW", "OIHW", "NCHW")
    y = jax.lax.conv_general_dilated(x, w1, (1, 1), "VALID", dimension_numbers=dn)
    y = jnp.maximum(y + b1[None, :, None, None], 0.0)
    y = jax.lax.reduce_window(y, -jnp.inf, jax.lax.max,
                              (1, 1, 2, 2), (1, 1, 2, 2), "VALID")
    y = jax.lax.conv_general_dilated(y, w2, (1, 1), "VALID", dimension_numbers=dn)
    y = jnp.maximum(y + b2[None, :, None, None], 0.0)
    y = jax.lax.reduce_window(y, -jnp.inf, jax.lax.max,
                              (1, 1, 2, 2), (1, 1, 2, 2), "VALID")
    y = y.reshape(x.shape[0], -1)
    return y @ wc.T + bc[None, :]


if __name__ == "__main__":
    # Spatial size 28 is implied by the module: 28 -conv5-> 24 -pool-> 12
    # -conv5-> 8 -pool-> 4, and the classifier expects 32*4*4 features.
    # B=16 with BT=8 gives a grid of 2 parallel blocks (keeps both v7x TCs busy).
    x = jax.random.normal(jax.random.PRNGKey(0), (16, 1, 28, 28), jnp.float32)
    params = init_params(jax.random.PRNGKey(42))

    prepped = prepare_params(params)          # one-time layout prep (hoisted)

    run = jax.jit(functools.partial(forward, block_batch=8))
    logits = jax.block_until_ready(run(prepped, x))
    assert logits.shape == (16, 10) and logits.dtype == jnp.float32

    ref = jax.block_until_ready(jax.jit(reference_forward)(params, x))
    np.testing.assert_allclose(np.asarray(logits), np.asarray(ref),
                               rtol=3e-2, atol=3e-2)
    print("KERNEL_OK")
</pallas_src>

<mosaic_0001>
module attributes {stable_mosaic.version = 11 : i64} {
  func.func @_fused_cnn_kernel(%arg0: i32, %arg1: memref<6x96x28xbf16, #tpu.memory_space<vmem>>, %arg2: memref<10x28x192xbf16, #tpu.memory_space<vmem>>, %arg3: memref<1x192xf32, #tpu.memory_space<vmem>>, %arg4: memref<10x192x128xbf16, #tpu.memory_space<vmem>>, %arg5: memref<1x128xf32, #tpu.memory_space<vmem>>, %arg6: memref<4x128x128xbf16, #tpu.memory_space<vmem>>, %arg7: memref<1x128xf32, #tpu.memory_space<vmem>>, %arg8: memref<4x8x91xbf16, #tpu.memory_space<vmem>>, %arg9: memref<8x128xf32, #tpu.memory_space<vmem>>) attributes {dimension_semantics = [#tpu.dimension_semantics<parallel>], iteration_bounds = array<i64: 2>, scalar_prefetch = 0 : i64, scratch_operands = 0 : i64, tpu.core_type = #tpu.core_type<tc>, window_params = [{transform_indices = @transform_0, window_bounds = array<i64: 6, 96, 28>}, {pipeline_mode = #tpu.pipeline_mode<synchronous>, transform_indices = @transform_1, window_bounds = array<i64: 10, 28, 192>}, {pipeline_mode = #tpu.pipeline_mode<synchronous>, transform_indices = @transform_2, window_bounds = array<i64: 1, 192>}, {pipeline_mode = #tpu.pipeline_mode<synchronous>, transform_indices = @transform_3, window_bounds = array<i64: 10, 192, 128>}, {pipeline_mode = #tpu.pipeline_mode<synchronous>, transform_indices = @transform_4, window_bounds = array<i64: 1, 128>}, {pipeline_mode = #tpu.pipeline_mode<synchronous>, transform_indices = @transform_5, window_bounds = array<i64: 4, 128, 128>}, {pipeline_mode = #tpu.pipeline_mode<synchronous>, transform_indices = @transform_6, window_bounds = array<i64: 1, 128>}, {pipeline_mode = #tpu.pipeline_mode<synchronous>, transform_indices = @transform_7, window_bounds = array<i64: 4, 8, 91>}, {transform_indices = @transform_8, window_bounds = array<i64: 8, 128>}]} {
    %c0 = arith.constant 0 : index
    %c0_0 = arith.constant 0 : index
    %c0_1 = arith.constant 0 : index
    %0 = vector.load %arg1[%c0, %c0_0, %c0_1] : memref<6x96x28xbf16, #tpu.memory_space<vmem>>, vector<1x96x28xbf16>
    %1 = vector.shape_cast %0 : vector<1x96x28xbf16> to vector<96x28xbf16>
    %c1 = arith.constant 1 : index
    %c0_2 = arith.constant 0 : index
    %c0_3 = arith.constant 0 : index
    %2 = vector.load %arg1[%c1, %c0_2, %c0_3] : memref<6x96x28xbf16, #tpu.memory_space<vmem>>, vector<1x96x28xbf16>
    %3 = vector.shape_cast %2 : vector<1x96x28xbf16> to vector<96x28xbf16>
    %c2 = arith.constant 2 : index
    %c0_4 = arith.constant 0 : index
    %c0_5 = arith.constant 0 : index
    %4 = vector.load %arg1[%c2, %c0_4, %c0_5] : memref<6x96x28xbf16, #tpu.memory_space<vmem>>, vector<1x96x28xbf16>
    %5 = vector.shape_cast %4 : vector<1x96x28xbf16> to vector<96x28xbf16>
    %c3 = arith.constant 3 : index
    %c0_6 = arith.constant 0 : index
    %c0_7 = arith.constant 0 : index
    %6 = vector.load %arg1[%c3, %c0_6, %c0_7] : memref<6x96x28xbf16, #tpu.memory_space<vmem>>, vector<1x96x28xbf16>
    %7 = vector.shape_cast %6 : vector<1x96x28xbf16> to vector<96x28xbf16>
    %c4 = arith.constant 4 : index
    %c0_8 = arith.constant 0 : index
    %c0_9 = arith.constant 0 : index
    %8 = vector.load %arg1[%c4, %c0_8, %c0_9] : memref<6x96x28xbf16, #tpu.memory_space<vmem>>, vector<1x96x28xbf16>
    %9 = vector.shape_cast %8 : vector<1x96x28xbf16> to vector<96x28xbf16>
    %c5 = arith.constant 5 : index
    %c0_10 = arith.constant 0 : index
    %c0_11 = arith.constant 0 : index
    %10 = vector.load %arg1[%c5, %c0_10, %c0_11] : memref<6x96x28xbf16, #tpu.memory_space<vmem>>, vector<1x96x28xbf16>
    %11 = vector.shape_cast %10 : vector<1x96x28xbf16> to vector<96x28xbf16>
    %c0_12 = arith.constant 0 : index
    %c0_13 = arith.constant 0 : index
    %c0_14 = arith.constant 0 : index
    %12 = vector.load %arg2[%c0_12, %c0_13, %c0_14] : memref<10x28x192xbf16, #tpu.memory_space<vmem>>, vector<1x28x192xbf16>
    %13 = vector.shape_cast %12 : vector<1x28x192xbf16> to vector<28x192xbf16>
    %cst = arith.constant dense<0.000000e+00> : vector<96x192xf32>
    %14 = tpu.matmul %1, %13, %cst {dimension_numbers = #tpu.dot_dimension_numbers<[1], [0], [0], [1], [0, 0, 1, 1], [], []>} : vector<96x28xbf16>, vector<28x192xbf16>, vector<96x192xf32> -> vector<96x192xf32>
    %c1_15 = arith.constant 1 : index
    %c0_16 = arith.constant 0 : index
    %c0_17 = arith.constant 0 : index
    %15 = vector.load %arg2[%c1_15, %c0_16, %c0_17] : memref<10x28x192xbf16, #tpu.memory_space<vmem>>, vector<1x28x192xbf16>
    %16 = vector.shape_cast %15 : vector<1x28x192xbf16> to vector<28x192xbf16>
    %cst_18 = arith.constant dense<0.000000e+00> : vector<96x192xf32>
    %17 = tpu.matmul %7, %16, %cst_18 {dimension_numbers = #tpu.dot_dimension_numbers<[1], [0], [0], [1], [0, 0, 1, 1], [], []>} : vector<96x28xbf16>, vector<28x192xbf16>, vector<96x192xf32> -> vector<96x192xf32>
    %18 = arith.addf %14, %17 : vector<96x192xf32>
    %c2_19 = arith.constant 2 : index
    %c0_20 = arith.constant 0 : index
    %c0_21 = arith.constant 0 : index
    %19 = vector.load %arg2[%c2_19, %c0_20, %c0_21] : memref<10x28x192xbf16, #tpu.memory_space<vmem>>, vector<1x28x192xbf16>
    %20 = vector.shape_cast %19 : vector<1x28x192xbf16> to vector<28x192xbf16>
    %cst_22 = arith.constant dense<0.000000e+00> : vector<96x192xf32>
    %21 = tpu.matmul %3, %20, %cst_22 {dimension_numbers = #tpu.dot_dimension_numbers<[1], [0], [0], [1], [0, 0, 1, 1], [], []>} : vector<96x28xbf16>, vector<28x192xbf16>, vector<96x192xf32> -> vector<96x192xf32>
    %22 = arith.addf %18, %21 : vector<96x192xf32>
    %c3_23 = arith.constant 3 : index
    %c0_24 = arith.constant 0 : index
    %c0_25 = arith.constant 0 : index
    %23 = vector.load %arg2[%c3_23, %c0_24, %c0_25] : memref<10x28x192xbf16, #tpu.memory_space<vmem>>, vector<1x28x192xbf16>
    %24 = vector.shape_cast %23 : vector<1x28x192xbf16> to vector<28x192xbf16>
    %cst_26 = arith.constant dense<0.000000e+00> : vector<96x192xf32>
    %25 = tpu.matmul %9, %24, %cst_26 {dimension_numbers = #tpu.dot_dimension_numbers<[1], [0], [0], [1], [0, 0, 1, 1], [], []>} : vector<96x28xbf16>, vector<28x192xbf16>, vector<96x192xf32> -> vector<96x192xf32>
    %26 = arith.addf %22, %25 : vector<96x192xf32>
    %c4_27 = arith.constant 4 : index
    %c0_28 = arith.constant 0 : index
    %c0_29 = arith.constant 0 : index
    %27 = vector.load %arg2[%c4_27, %c0_28, %c0_29] : memref<10x28x192xbf16, #tpu.memory_space<vmem>>, vector<1x28x192xbf16>
    %28 = vector.shape_cast %27 : vector<1x28x192xbf16> to vector<28x192xbf16>
    %cst_30 = arith.constant dense<0.000000e+00> : vector<96x192xf32>
    %29 = tpu.matmul %5, %28, %cst_30 {dimension_numbers = #tpu.dot_dimension_numbers<[1], [0], [0], [1], [0, 0, 1, 1], [], []>} : vector<96x28xbf16>, vector<28x192xbf16>, vector<96x192xf32> -> vector<96x192xf32>
    %30 = arith.addf %26, %29 : vector<96x192xf32>
    %c5_31 = arith.constant 5 : index
    %c0_32 = arith.constant 0 : index
    %c0_33 = arith.constant 0 : index
    %31 = vector.load %arg2[%c5_31, %c0_32, %c0_33] : memref<10x28x192xbf16, #tpu.memory_space<vmem>>, vector<1x28x192xbf16>
    %32 = vector.shape_cast %31 : vector<1x28x192xbf16> to vector<28x192xbf16>
    %cst_34 = arith.constant dense<0.000000e+00> : vector<96x192xf32>
    %33 = tpu.matmul %1, %32, %cst_34 {dimension_numbers = #tpu.dot_dimension_numbers<[1], [0], [0], [1], [0, 0, 1, 1], [], []>} : vector<96x28xbf16>, vector<28x192xbf16>, vector<96x192xf32> -> vector<96x192xf32>
    %c6 = arith.constant 6 : index
    %c0_35 = arith.constant 0 : index
    %c0_36 = arith.constant 0 : index
    %34 = vector.load %arg2[%c6, %c0_35, %c0_36] : memref<10x28x192xbf16, #tpu.memory_space<vmem>>, vector<1x28x192xbf16>
    %35 = vector.shape_cast %34 : vector<1x28x192xbf16> to vector<28x192xbf16>
    %cst_37 = arith.constant dense<0.000000e+00> : vector<96x192xf32>
    %36 = tpu.matmul %7, %35, %cst_37 {dimension_numbers = #tpu.dot_dimension_numbers<[1], [0], [0], [1], [0, 0, 1, 1], [], []>} : vector<96x28xbf16>, vector<28x192xbf16>, vector<96x192xf32> -> vector<96x192xf32>
    %37 = arith.addf %33, %36 : vector<96x192xf32>
    %c7 = arith.constant 7 : index
    %c0_38 = arith.constant 0 : index
    %c0_39 = arith.constant 0 : index
    %38 = vector.load %arg2[%c7, %c0_38, %c0_39] : memref<10x28x192xbf16, #tpu.memory_space<vmem>>, vector<1x28x192xbf16>
    %39 = vector.shape_cast %38 : vector<1x28x192xbf16> to vector<28x192xbf16>
    %cst_40 = arith.constant dense<0.000000e+00> : vector<96x192xf32>
    %40 = tpu.matmul %3, %39, %cst_40 {dimension_numbers = #tpu.dot_dimension_numbers<[1], [0], [0], [1], [0, 0, 1, 1], [], []>} : vector<96x28xbf16>, vector<28x192xbf16>, vector<96x192xf32> -> vector<96x192xf32>
    %41 = arith.addf %37, %40 : vector<96x192xf32>
    %c8 = arith.constant 8 : index
    %c0_41 = arith.constant 0 : index
    %c0_42 = arith.constant 0 : index
    %42 = vector.load %arg2[%c8, %c0_41, %c0_42] : memref<10x28x192xbf16, #tpu.memory_space<vmem>>, vector<1x28x192xbf16>
    %43 = vector.shape_cast %42 : vector<1x28x192xbf16> to vector<28x192xbf16>
    %cst_43 = arith.constant dense<0.000000e+00> : vector<96x192xf32>
    %44 = tpu.matmul %9, %43, %cst_43 {dimension_numbers = #tpu.dot_dimension_numbers<[1], [0], [0], [1], [0, 0, 1, 1], [], []>} : vector<96x28xbf16>, vector<28x192xbf16>, vector<96x192xf32> -> vector<96x192xf32>
    %45 = arith.addf %41, %44 : vector<96x192xf32>
    %c9 = arith.constant 9 : index
    %c0_44 = arith.constant 0 : index
    %c0_45 = arith.constant 0 : index
    %46 = vector.load %arg2[%c9, %c0_44, %c0_45] : memref<10x28x192xbf16, #tpu.memory_space<vmem>>, vector<1x28x192xbf16>
    %47 = vector.shape_cast %46 : vector<1x28x192xbf16> to vector<28x192xbf16>
    %cst_46 = arith.constant dense<0.000000e+00> : vector<96x192xf32>
    %48 = tpu.matmul %5, %47, %cst_46 {dimension_numbers = #tpu.dot_dimension_numbers<[1], [0], [0], [1], [0, 0, 1, 1], [], []>} : vector<96x28xbf16>, vector<28x192xbf16>, vector<96x192xf32> -> vector<96x192xf32>
    %49 = arith.addf %45, %48 : vector<96x192xf32>
    %c0_47 = arith.constant 0 : index
    %c0_48 = arith.constant 0 : index
    %c0_49 = arith.constant 0 : index
    %50 = vector.load %arg2[%c0_47, %c0_48, %c0_49] : memref<10x28x192xbf16, #tpu.memory_space<vmem>>, vector<1x28x192xbf16>
    %51 = vector.shape_cast %50 : vector<1x28x192xbf16> to vector<28x192xbf16>
    %cst_50 = arith.constant dense<0.000000e+00> : vector<96x192xf32>
    %52 = tpu.matmul %7, %51, %cst_50 {dimension_numbers = #tpu.dot_dimension_numbers<[1], [0], [0], [1], [0, 0, 1, 1], [], []>} : vector<96x28xbf16>, vector<28x192xbf16>, vector<96x192xf32> -> vector<96x192xf32>
    %c1_51 = arith.constant 1 : index
    %c0_52 = arith.constant 0 : index
    %c0_53 = arith.constant 0 : index
    %53 = vector.load %arg2[%c1_51, %c0_52, %c0_53] : memref<10x28x192xbf16, #tpu.memory_space<vmem>>, vector<1x28x192xbf16>
    %54 = vector.shape_cast %53 : vector<1x28x192xbf16> to vector<28x192xbf16>
    %cst_54 = arith.constant dense<0.000000e+00> : vector<96x192xf32>
    %55 = tpu.matmul %3, %54, %cst_54 {dimension_numbers = #tpu.dot_dimension_numbers<[1], [0], [0], [1], [0, 0, 1, 1], [], []>} : vector<96x28xbf16>, vector<28x192xbf16>, vector<96x192xf32> -> vector<96x192xf32>
    %56 = arith.addf %52, %55 : vector<96x192xf32>
    %c2_55 = arith.constant 2 : index
    %c0_56 = arith.constant 0 : index
    %c0_57 = arith.constant 0 : index
    %57 = vector.load %arg2[%c2_55, %c0_56, %c0_57] : memref<10x28x192xbf16, #tpu.memory_space<vmem>>, vector<1x28x192xbf16>
    %58 = vector.shape_cast %57 : vector<1x28x192xbf16> to vector<28x192xbf16>
    %cst_58 = arith.constant dense<0.000000e+00> : vector<96x192xf32>
    %59 = tpu.matmul %9, %58, %cst_58 {dimension_numbers = #tpu.dot_dimension_numbers<[1], [0], [0], [1], [0, 0, 1, 1], [], []>} : vector<96x28xbf16>, vector<28x192xbf16>, vector<96x192xf32> -> vector<96x192xf32>
    %60 = arith.addf %56, %59 : vector<96x192xf32>
    %c3_59 = arith.constant 3 : index
    %c0_60 = arith.constant 0 : index
    %c0_61 = arith.constant 0 : index
    %61 = vector.load %arg2[%c3_59, %c0_60, %c0_61] : memref<10x28x192xbf16, #tpu.memory_space<vmem>>, vector<1x28x192xbf16>
    %62 = vector.shape_cast %61 : vector<1x28x192xbf16> to vector<28x192xbf16>
    %cst_62 = arith.constant dense<0.000000e+00> : vector<96x192xf32>
    %63 = tpu.matmul %5, %62, %cst_62 {dimension_numbers = #tpu.dot_dimension_numbers<[1], [0], [0], [1], [0, 0, 1, 1], [], []>} : vector<96x28xbf16>, vector<28x192xbf16>, vector<96x192xf32> -> vector<96x192xf32>
    %64 = arith.addf %60, %63 : vector<96x192xf32>
    %c4_63 = arith.constant 4 : index
    %c0_64 = arith.constant 0 : index
    %c0_65 = arith.constant 0 : index
    %65 = vector.load %arg2[%c4_63, %c0_64, %c0_65] : memref<10x28x192xbf16, #tpu.memory_space<vmem>>, vector<1x28x192xbf16>
    %66 = vector.shape_cast %65 : vector<1x28x192xbf16> to vector<28x192xbf16>
    %cst_66 = arith.constant dense<0.000000e+00> : vector<96x192xf32>
    %67 = tpu.matmul %11, %66, %cst_66 {dimension_numbers = #tpu.dot_dimension_numbers<[1], [0], [0], [1], [0, 0, 1, 1], [], []>} : vector<96x28xbf16>, vector<28x192xbf16>, vector<96x192xf32> -> vector<96x192xf32>
    %68 = arith.addf %64, %67 : vector<96x192xf32>
    %c5_67 = arith.constant 5 : index
    %c0_68 = arith.constant 0 : index
    %c0_69 = arith.constant 0 : index
    %69 = vector.load %arg2[%c5_67, %c0_68, %c0_69] : memref<10x28x192xbf16, #tpu.memory_space<vmem>>, vector<1x28x192xbf16>
    %70 = vector.shape_cast %69 : vector<1x28x192xbf16> to vector<28x192xbf16>
    %cst_70 = arith.constant dense<0.000000e+00> : vector<96x192xf32>
    %71 = tpu.matmul %7, %70, %cst_70 {dimension_numbers = #tpu.dot_dimension_numbers<[1], [0], [0], [1], [0, 0, 1, 1], [], []>} : vector<96x28xbf16>, vector<28x192xbf16>, vector<96x192xf32> -> vector<96x192xf32>
    %c6_71 = arith.constant 6 : index
    %c0_72 = arith.constant 0 : index
    %c0_73 = arith.constant 0 : index
    %72 = vector.load %arg2[%c6_71, %c0_72, %c0_73] : memref<10x28x192xbf16, #tpu.memory_space<vmem>>, vector<1x28x192xbf16>
    %73 = vector.shape_cast %72 : vector<1x28x192xbf16> to vector<28x192xbf16>
    %cst_74 = arith.constant dense<0.000000e+00> : vector<96x192xf32>
    %74 = tpu.matmul %3, %73, %cst_74 {dimension_numbers = #tpu.dot_dimension_numbers<[1], [0], [0], [1], [0, 0, 1, 1], [], []>} : vector<96x28xbf16>, vector<28x192xbf16>, vector<96x192xf32> -> vector<96x192xf32>
    %75 = arith.addf %71, %74 : vector<96x192xf32>
    %c7_75 = arith.constant 7 : index
    %c0_76 = arith.constant 0 : index
    %c0_77 = arith.constant 0 : index
    %76 = vector.load %arg2[%c7_75, %c0_76, %c0_77] : memref<10x28x192xbf16, #tpu.memory_space<vmem>>, vector<1x28x192xbf16>
    %77 = vector.shape_cast %76 : vector<1x28x192xbf16> to vector<28x192xbf16>
    %cst_78 = arith.constant dense<0.000000e+00> : vector<96x192xf32>
    %78 = tpu.matmul %9, %77, %cst_78 {dimension_numbers = #tpu.dot_dimension_numbers<[1], [0], [0], [1], [0, 0, 1, 1], [], []>} : vector<96x28xbf16>, vector<28x192xbf16>, vector<96x192xf32> -> vector<96x192xf32>
    %79 = arith.addf %75, %78 : vector<96x192xf32>
    %c8_79 = arith.constant 8 : index
    %c0_80 = arith.constant 0 : index
    %c0_81 = arith.constant 0 : index
    %80 = vector.load %arg2[%c8_79, %c0_80, %c0_81] : memref<10x28x192xbf16, #tpu.memory_space<vmem>>, vector<1x28x192xbf16>
    %81 = vector.shape_cast %80 : vector<1x28x192xbf16> to vector<28x192xbf16>
    %cst_82 = arith.constant dense<0.000000e+00> : vector<96x192xf32>
    %82 = tpu.matmul %5, %81, %cst_82 {dimension_numbers = #tpu.dot_dimension_numbers<[1], [0], [0], [1], [0, 0, 1, 1], [], []>} : vector<96x28xbf16>, vector<28x192xbf16>, vector<96x192xf32> -> vector<96x192xf32>
    %83 = arith.addf %79, %82 : vector<96x192xf32>
    %c9_83 = arith.constant 9 : index
    %c0_84 = arith.constant 0 : index
    %c0_85 = arith.constant 0 : index
    %84 = vector.load %arg2[%c9_83, %c0_84, %c0_85] : memref<10x28x192xbf16, #tpu.memory_space<vmem>>, vector<1x28x192xbf16>
    %85 = vector.shape_cast %84 : vector<1x28x192xbf16> to vector<28x192xbf16>
    %cst_86 = arith.constant dense<0.000000e+00> : vector<96x192xf32>
    %86 = tpu.matmul %11, %85, %cst_86 {dimension_numbers = #tpu.dot_dimension_numbers<[1], [0], [0], [1], [0, 0, 1, 1], [], []>} : vector<96x28xbf16>, vector<28x192xbf16>, vector<96x192xf32> -> vector<96x192xf32>
    %87 = arith.addf %83, %86 : vector<96x192xf32>
    %88 = arith.maximumf %30, %49 : vector<96x192xf32>
    %89 = arith.maximumf %68, %87 : vector<96x192xf32>
    %90 = arith.maximumf %88, %89 : vector<96x192xf32>
    %c0_87 = arith.constant 0 : index
    %c0_88 = arith.constant 0 : index
    %91 = vector.load %arg3[%c0_87, %c0_88] : memref<1x192xf32, #tpu.memory_space<vmem>>, vector<1x192xf32>
    %92 = vector.broadcast %91 : vector<1x192xf32> to vector<96x192xf32>
    %93 = arith.addf %90, %92 : vector<96x192xf32>
    %cst_89 = arith.constant 0.000000e+00 : f32
    %94 = vector.broadcast %cst_89 : f32 to vector<96x192xf32>
    %95 = arith.maximumf %93, %94 : vector<96x192xf32>
    %96 = arith.truncf %95 : vector<96x192xf32> to vector<96x192xbf16>
    %97 = vector.extract_strided_slice %96 {offsets = [0, 0], sizes = [92, 192], strides = [1, 1]} : vector<96x192xbf16> to vector<92x192xbf16>
    %c0_90 = arith.constant 0 : index
    %c0_91 = arith.constant 0 : index
    %c0_92 = arith.constant 0 : index
    %98 = vector.load %arg4[%c0_90, %c0_91, %c0_92] : memref<10x192x128xbf16, #tpu.memory_space<vmem>>, vector<1x192x128xbf16>
    %99 = vector.shape_cast %98 : vector<1x192x128xbf16> to vector<192x128xbf16>
    %cst_93 = arith.constant dense<0.000000e+00> : vector<92x128xf32>
    %100 = tpu.matmul %97, %99, %cst_93 {dimension_numbers = #tpu.dot_dimension_numbers<[1], [0], [0], [1], [0, 0, 1, 1], [], []>} : vector<92x192xbf16>, vector<192x128xbf16>, vector<92x128xf32> -> vector<92x128xf32>
    %101 = vector.extract_strided_slice %96 {offsets = [1, 0], sizes = [92, 192], strides = [1, 1]} : vector<96x192xbf16> to vector<92x192xbf16>
    %c1_94 = arith.constant 1 : index
    %c0_95 = arith.constant 0 : index
    %c0_96 = arith.constant 0 : index
    %102 = vector.load %arg4[%c1_94, %c0_95, %c0_96] : memref<10x192x128xbf16, #tpu.memory_space<vmem>>, vector<1x192x128xbf16>
    %103 = vector.shape_cast %102 : vector<1x192x128xbf16> to vector<192x128xbf16>
    %cst_97 = arith.constant dense<0.000000e+00> : vector<92x128xf32>
    %104 = tpu.matmul %101, %103, %cst_97 {dimension_numbers = #tpu.dot_dimension_numbers<[1], [0], [0], [1], [0, 0, 1, 1], [], []>} : vector<92x192xbf16>, vector<192x128xbf16>, vector<92x128xf32> -> vector<92x128xf32>
    %105 = arith.addf %100, %104 : vector<92x128xf32>
    %106 = vector.extract_strided_slice %96 {offsets = [2, 0], sizes = [92, 192], strides = [1, 1]} : vector<96x192xbf16> to vector<92x192xbf16>
    %c2_98 = arith.constant 2 : index
    %c0_99 = arith.constant 0 : index
    %c0_100 = arith.constant 0 : index
    %107 = vector.load %arg4[%c2_98, %c0_99, %c0_100] : memref<10x192x128xbf16, #tpu.memory_space<vmem>>, vector<1x192x128xbf16>
    %108 = vector.shape_cast %107 : vector<1x192x128xbf16> to vector<192x128xbf16>
    %cst_101 = arith.constant dense<0.000000e+00> : vector<92x128xf32>
    %109 = tpu.matmul %106, %108, %cst_101 {dimension_numbers = #tpu.dot_dimension_numbers<[1], [0], [0], [1], [0, 0, 1, 1], [], []>} : vector<92x192xbf16>, vector<192x128xbf16>, vector<92x128xf32> -> vector<92x128xf32>
    %110 = arith.addf %105, %109 : vector<92x128xf32>
    %111 = vector.extract_strided_slice %96 {offsets = [3, 0], sizes = [92, 192], strides = [1, 1]} : vector<96x192xbf16> to vector<92x192xbf16>
    %c3_102 = arith.constant 3 : index
    %c0_103 = arith.constant 0 : index
    %c0_104 = arith.constant 0 : index
    %112 = vector.load %arg4[%c3_102, %c0_103, %c0_104] : memref<10x192x128xbf16, #tpu.memory_space<vmem>>, vector<1x192x128xbf16>
    %113 = vector.shape_cast %112 : vector<1x192x128xbf16> to vector<192x128xbf16>
    %cst_105 = arith.constant dense<0.000000e+00> : vector<92x128xf32>
    %114 = tpu.matmul %111, %113, %cst_105 {dimension_numbers = #tpu.dot_dimension_numbers<[1], [0], [0], [1], [0, 0, 1, 1], [], []>} : vector<92x192xbf16>, vector<192x128xbf16>, vector<92x128xf32> -> vector<92x128xf32>
    %115 = arith.addf %110, %114 : vector<92x128xf32>
    %116 = vector.extract_strided_slice %96 {offsets = [4, 0], sizes = [92, 192], strides = [1, 1]} : vector<96x192xbf16> to vector<92x192xbf16>
    %c4_106 = arith.constant 4 : index
    %c0_107 = arith.constant 0 : index
    %c0_108 = arith.constant 0 : index
    %117 = vector.load %arg4[%c4_106, %c0_107, %c0_108] : memref<10x192x128xbf16, #tpu.memory_space<vmem>>, vector<1x192x128xbf16>
    %118 = vector.shape_cast %117 : vector<1x192x128xbf16> to vector<192x128xbf16>
    %cst_109 = arith.constant dense<0.000000e+00> : vector<92x128xf32>
    %119 = tpu.matmul %116, %118, %cst_109 {dimension_numbers = #tpu.dot_dimension_numbers<[1], [0], [0], [1], [0, 0, 1, 1], [], []>} : vector<92x192xbf16>, vector<192x128xbf16>, vector<92x128xf32> -> vector<92x128xf32>
    %120 = arith.addf %115, %119 : vector<92x128xf32>
    %121 = vector.extract_strided_slice %96 {offsets = [0, 0], sizes = [92, 192], strides = [1, 1]} : vector<96x192xbf16> to vector<92x192xbf16>
    %c5_110 = arith.constant 5 : index
    %c0_111 = arith.constant 0 : index
    %c0_112 = arith.constant 0 : index
    %122 = vector.load %arg4[%c5_110, %c0_111, %c0_112] : memref<10x192x128xbf16, #tpu.memory_space<vmem>>, vector<1x192x128xbf16>
    %123 = vector.shape_cast %122 : vector<1x192x128xbf16> to vector<192x128xbf16>
    %cst_113 = arith.constant dense<0.000000e+00> : vector<92x128xf32>
    %124 = tpu.matmul %121, %123, %cst_113 {dimension_numbers = #tpu.dot_dimension_numbers<[1], [0], [0], [1], [0, 0, 1, 1], [], []>} : vector<92x192xbf16>, vector<192x128xbf16>, vector<92x128xf32> -> vector<92x128xf32>
    %125 = vector.extract_strided_slice %96 {offsets = [1, 0], sizes = [92, 192], strides = [1, 1]} : vector<96x192xbf16> to vector<92x192xbf16>
    %c6_114 = arith.constant 6 : index
    %c0_115 = arith.constant 0 : index
    %c0_116 = arith.constant 0 : index
    %126 = vector.load %arg4[%c6_114, %c0_115, %c0_116] : memref<10x192x128xbf16, #tpu.memory_space<vmem>>, vector<1x192x128xbf16>
    %127 = vector.shape_cast %126 : vector<1x192x128xbf16> to vector<192x128xbf16>
    %cst_117 = arith.constant dense<0.000000e+00> : vector<92x128xf32>
    %128 = tpu.matmul %125, %127, %cst_117 {dimension_numbers = #tpu.dot_dimension_numbers<[1], [0], [0], [1], [0, 0, 1, 1], [], []>} : vector<92x192xbf16>, vector<192x128xbf16>, vector<92x128xf32> -> vector<92x128xf32>
    %129 = arith.addf %124, %128 : vector<92x128xf32>
    %130 = vector.extract_strided_slice %96 {offsets = [2, 0], sizes = [92, 192], strides = [1, 1]} : vector<96x192xbf16> to vector<92x192xbf16>
    %c7_118 = arith.constant 7 : index
    %c0_119 = arith.constant 0 : index
    %c0_120 = arith.constant 0 : index
    %131 = vector.load %arg4[%c7_118, %c0_119, %c0_120] : memref<10x192x128xbf16, #tpu.memory_space<vmem>>, vector<1x192x128xbf16>
    %132 = vector.shape_cast %131 : vector<1x192x128xbf16> to vector<192x128xbf16>
    %cst_121 = arith.constant dense<0.000000e+00> : vector<92x128xf32>
    %133 = tpu.matmul %130, %132, %cst_121 {dimension_numbers = #tpu.dot_dimension_numbers<[1], [0], [0], [1], [0, 0, 1, 1], [], []>} : vector<92x192xbf16>, vector<192x128xbf16>, vector<92x128xf32> -> vector<92x128xf32>
    %134 = arith.addf %129, %133 : vector<92x128xf32>
    %135 = vector.extract_strided_slice %96 {offsets = [3, 0], sizes = [92, 192], strides = [1, 1]} : vector<96x192xbf16> to vector<92x192xbf16>
    %c8_122 = arith.constant 8 : index
    %c0_123 = arith.constant 0 : index
    %c0_124 = arith.constant 0 : index
    %136 = vector.load %arg4[%c8_122, %c0_123, %c0_124] : memref<10x192x128xbf16, #tpu.memory_space<vmem>>, vector<1x192x128xbf16>
    %137 = vector.shape_cast %136 : vector<1x192x128xbf16> to vector<192x128xbf16>
    %cst_125 = arith.constant dense<0.000000e+00> : vector<92x128xf32>
    %138 = tpu.matmul %135, %137, %cst_125 {dimension_numbers = #tpu.dot_dimension_numbers<[1], [0], [0], [1], [0, 0, 1, 1], [], []>} : vector<92x192xbf16>, vector<192x128xbf16>, vector<92x128xf32> -> vector<92x128xf32>
    %139 = arith.addf %134, %138 : vector<92x128xf32>
    %140 = vector.extract_strided_slice %96 {offsets = [4, 0], sizes = [92, 192], strides = [1, 1]} : vector<96x192xbf16> to vector<92x192xbf16>
    %c9_126 = arith.constant 9 : index
    %c0_127 = arith.constant 0 : index
    %c0_128 = arith.constant 0 : index
    %141 = vector.load %arg4[%c9_126, %c0_127, %c0_128] : memref<10x192x128xbf16, #tpu.memory_space<vmem>>, vector<1x192x128xbf16>
    %142 = vector.shape_cast %141 : vector<1x192x128xbf16> to vector<192x128xbf16>
    %cst_129 = arith.constant dense<0.000000e+00> : vector<92x128xf32>
    %143 = tpu.matmul %140, %142, %cst_129 {dimension_numbers = #tpu.dot_dimension_numbers<[1], [0], [0], [1], [0, 0, 1, 1], [], []>} : vector<92x192xbf16>, vector<192x128xbf16>, vector<92x128xf32> -> vector<92x128xf32>
    %144 = arith.addf %139, %143 : vector<92x128xf32>
    %145 = arith.maximumf %120, %144 : vector<92x128xf32>
    %c0_130 = arith.constant 0 : index
    %c0_131 = arith.constant 0 : index
    %146 = vector.load %arg5[%c0_130, %c0_131] : memref<1x128xf32, #tpu.memory_space<vmem>>, vector<1x128xf32>
    %147 = vector.broadcast %146 : vector<1x128xf32> to vector<92x128xf32>
    %148 = arith.addf %145, %147 : vector<92x128xf32>
    %149 = vector.extract_strided_slice %148 {offsets = [0, 0], sizes = [91, 128], strides = [1, 1]} : vector<92x128xf32> to vector<91x128xf32>
    %150 = vector.extract_strided_slice %148 {offsets = [1, 0], sizes = [91, 128], strides = [1, 1]} : vector<92x128xf32> to vector<91x128xf32>
    %151 = arith.maximumf %149, %150 : vector<91x128xf32>
    %cst_132 = arith.constant 0.000000e+00 : f32
    %152 = vector.broadcast %cst_132 : f32 to vector<91x128xf32>
    %153 = arith.maximumf %151, %152 : vector<91x128xf32>
    %154 = arith.truncf %153 : vector<91x128xf32> to vector<91x128xbf16>
    %c0_133 = arith.constant 0 : index
    %c0_134 = arith.constant 0 : index
    %c0_135 = arith.constant 0 : index
    %155 = vector.load %arg8[%c0_133, %c0_134, %c0_135] : memref<4x8x91xbf16, #tpu.memory_space<vmem>>, vector<1x8x91xbf16>
    %156 = vector.shape_cast %155 : vector<1x8x91xbf16> to vector<8x91xbf16>
    %cst_136 = arith.constant dense<0.000000e+00> : vector<8x128xf32>
    %157 = tpu.matmul %156, %154, %cst_136 {dimension_numbers = #tpu.dot_dimension_numbers<[1], [0], [0], [1], [0, 0, 1, 1], [], []>} : vector<8x91xbf16>, vector<91x128xbf16>, vector<8x128xf32> -> vector<8x128xf32>
    %158 = arith.truncf %157 : vector<8x128xf32> to vector<8x128xbf16>
    %c0_137 = arith.constant 0 : index
    %c0_138 = arith.constant 0 : index
    %c0_139 = arith.constant 0 : index
    %159 = vector.load %arg6[%c0_137, %c0_138, %c0_139] : memref<4x128x128xbf16, #tpu.memory_space<vmem>>, vector<1x128x128xbf16>
    %160 = vector.shape_cast %159 : vector<1x128x128xbf16> to vector<128x128xbf16>
    %cst_140 = arith.constant dense<0.000000e+00> : vector<8x128xf32>
    %161 = tpu.matmul %158, %160, %cst_140 {dimension_numbers = #tpu.dot_dimension_numbers<[1], [0], [0], [1], [0, 0, 1, 1], [], []>} : vector<8x128xbf16>, vector<128x128xbf16>, vector<8x128xf32> -> vector<8x128xf32>
    %c1_141 = arith.constant 1 : index
    %c0_142 = arith.constant 0 : index
    %c0_143 = arith.constant 0 : index
    %162 = vector.load %arg8[%c1_141, %c0_142, %c0_143] : memref<4x8x91xbf16, #tpu.memory_space<vmem>>, vector<1x8x91xbf16>
    %163 = vector.shape_cast %162 : vector<1x8x91xbf16> to vector<8x91xbf16>
    %cst_144 = arith.constant dense<0.000000e+00> : vector<8x128xf32>
    %164 = tpu.matmul %163, %154, %cst_144 {dimension_numbers = #tpu.dot_dimension_numbers<[1], [0], [0], [1], [0, 0, 1, 1], [], []>} : vector<8x91xbf16>, vector<91x128xbf16>, vector<8x128xf32> -> vector<8x128xf32>
    %165 = arith.truncf %164 : vector<8x128xf32> to vector<8x128xbf16>
    %c1_145 = arith.constant 1 : index
    %c0_146 = arith.constant 0 : index
    %c0_147 = arith.constant 0 : index
    %166 = vector.load %arg6[%c1_145, %c0_146, %c0_147] : memref<4x128x128xbf16, #tpu.memory_space<vmem>>, vector<1x128x128xbf16>
    %167 = vector.shape_cast %166 : vector<1x128x128xbf16> to vector<128x128xbf16>
    %cst_148 = arith.constant dense<0.000000e+00> : vector<8x128xf32>
    %168 = tpu.matmul %165, %167, %cst_148 {dimension_numbers = #tpu.dot_dimension_numbers<[1], [0], [0], [1], [0, 0, 1, 1], [], []>} : vector<8x128xbf16>, vector<128x128xbf16>, vector<8x128xf32> -> vector<8x128xf32>
    %169 = arith.addf %161, %168 : vector<8x128xf32>
    %c2_149 = arith.constant 2 : index
    %c0_150 = arith.constant 0 : index
    %c0_151 = arith.constant 0 : index
    %170 = vector.load %arg8[%c2_149, %c0_150, %c0_151] : memref<4x8x91xbf16, #tpu.memory_space<vmem>>, vector<1x8x91xbf16>
    %171 = vector.shape_cast %170 : vector<1x8x91xbf16> to vector<8x91xbf16>
    %cst_152 = arith.constant dense<0.000000e+00> : vector<8x128xf32>
    %172 = tpu.matmul %171, %154, %cst_152 {dimension_numbers = #tpu.dot_dimension_numbers<[1], [0], [0], [1], [0, 0, 1, 1], [], []>} : vector<8x91xbf16>, vector<91x128xbf16>, vector<8x128xf32> -> vector<8x128xf32>
    %173 = arith.truncf %172 : vector<8x128xf32> to vector<8x128xbf16>
    %c2_153 = arith.constant 2 : index
    %c0_154 = arith.constant 0 : index
    %c0_155 = arith.constant 0 : index
    %174 = vector.load %arg6[%c2_153, %c0_154, %c0_155] : memref<4x128x128xbf16, #tpu.memory_space<vmem>>, vector<1x128x128xbf16>
    %175 = vector.shape_cast %174 : vector<1x128x128xbf16> to vector<128x128xbf16>
    %cst_156 = arith.constant dense<0.000000e+00> : vector<8x128xf32>
    %176 = tpu.matmul %173, %175, %cst_156 {dimension_numbers = #tpu.dot_dimension_numbers<[1], [0], [0], [1], [0, 0, 1, 1], [], []>} : vector<8x128xbf16>, vector<128x128xbf16>, vector<8x128xf32> -> vector<8x128xf32>
    %177 = arith.addf %169, %176 : vector<8x128xf32>
    %c3_157 = arith.constant 3 : index
    %c0_158 = arith.constant 0 : index
    %c0_159 = arith.constant 0 : index
    %178 = vector.load %arg8[%c3_157, %c0_158, %c0_159] : memref<4x8x91xbf16, #tpu.memory_space<vmem>>, vector<1x8x91xbf16>
    %179 = vector.shape_cast %178 : vector<1x8x91xbf16> to vector<8x91xbf16>
    %cst_160 = arith.constant dense<0.000000e+00> : vector<8x128xf32>
    %180 = tpu.matmul %179, %154, %cst_160 {dimension_numbers = #tpu.dot_dimension_numbers<[1], [0], [0], [1], [0, 0, 1, 1], [], []>} : vector<8x91xbf16>, vector<91x128xbf16>, vector<8x128xf32> -> vector<8x128xf32>
    %181 = arith.truncf %180 : vector<8x128xf32> to vector<8x128xbf16>
    %c3_161 = arith.constant 3 : index
    %c0_162 = arith.constant 0 : index
    %c0_163 = arith.constant 0 : index
    %182 = vector.load %arg6[%c3_161, %c0_162, %c0_163] : memref<4x128x128xbf16, #tpu.memory_space<vmem>>, vector<1x128x128xbf16>
    %183 = vector.shape_cast %182 : vector<1x128x128xbf16> to vector<128x128xbf16>
    %cst_164 = arith.constant dense<0.000000e+00> : vector<8x128xf32>
    %184 = tpu.matmul %181, %183, %cst_164 {dimension_numbers = #tpu.dot_dimension_numbers<[1], [0], [0], [1], [0, 0, 1, 1], [], []>} : vector<8x128xbf16>, vector<128x128xbf16>, vector<8x128xf32> -> vector<8x128xf32>
    %185 = arith.addf %177, %184 : vector<8x128xf32>
    %c0_165 = arith.constant 0 : index
    %c0_166 = arith.constant 0 : index
    %186 = vector.load %arg7[%c0_165, %c0_166] : memref<1x128xf32, #tpu.memory_space<vmem>>, vector<1x128xf32>
    %187 = vector.broadcast %186 : vector<1x128xf32> to vector<8x128xf32>
    %188 = arith.addf %185, %187 : vector<8x128xf32>
    %c0_167 = arith.constant 0 : index
    %c0_168 = arith.constant 0 : index
    %189 = vector.load %arg9[%c0_167, %c0_168] : memref<8x128xf32, #tpu.memory_space<vmem>>, vector<8x128xf32>
    tpu.vector_store %arg9[%c0_167, %c0_168], %188 {strides = array<i32>} : memref<8x128xf32, #tpu.memory_space<vmem>>, vector<8x128xf32>,
    return
  }
  func.func @transform_0(%arg0: i32) -> (i32, i32, i32) {
    %c0_i32 = arith.constant 0 : i32
    %c0_i32_0 = arith.constant 0 : i32
    %c0_i32_1 = arith.constant 0 : i32
    return %c0_i32, %arg0, %c0_i32_0 : i32, i32, i32
  }
  func.func @transform_1(%arg0: i32) -> (i32, i32, i32) {
    %c0_i32 = arith.constant 0 : i32
    %c0_i32_0 = arith.constant 0 : i32
    %c0_i32_1 = arith.constant 0 : i32
    %c0_i32_2 = arith.constant 0 : i32
    return %c0_i32, %c0_i32_0, %c0_i32_1 : i32, i32, i32
  }
  func.func @transform_2(%arg0: i32) -> (i32, i32) {
    %c0_i32 = arith.constant 0 : i32
    %c0_i32_0 = arith.constant 0 : i32
    %c0_i32_1 = arith.constant 0 : i32
    return %c0_i32, %c0_i32_0 : i32, i32
  }
  func.func @transform_3(%arg0: i32) -> (i32, i32, i32) {
    %c0_i32 = arith.constant 0 : i32
    %c0_i32_0 = arith.constant 0 : i32
    %c0_i32_1 = arith.constant 0 : i32
    %c0_i32_2 = arith.constant 0 : i32
    return %c0_i32, %c0_i32_0, %c0_i32_1 : i32, i32, i32
  }
  func.func @transform_4(%arg0: i32) -> (i32, i32) {
    %c0_i32 = arith.constant 0 : i32
    %c0_i32_0 = arith.constant 0 : i32
    %c0_i32_1 = arith.constant 0 : i32
    return %c0_i32, %c0_i32_0 : i32, i32
  }
  func.func @transform_5(%arg0: i32) -> (i32, i32, i32) {
    %c0_i32 = arith.constant 0 : i32
    %c0_i32_0 = arith.constant 0 : i32
    %c0_i32_1 = arith.constant 0 : i32
    %c0_i32_2 = arith.constant 0 : i32
    return %c0_i32, %c0_i32_0, %c0_i32_1 : i32, i32, i32
  }
  func.func @transform_6(%arg0: i32) -> (i32, i32) {
    %c0_i32 = arith.constant 0 : i32
    %c0_i32_0 = arith.constant 0 : i32
    %c0_i32_1 = arith.constant 0 : i32
    return %c0_i32, %c0_i32_0 : i32, i32
  }
  func.func @transform_7(%arg0: i32) -> (i32, i32, i32) {
    %c0_i32 = arith.constant 0 : i32
    %c0_i32_0 = arith.constant 0 : i32
    %c0_i32_1 = arith.constant 0 : i32
    %c0_i32_2 = arith.constant 0 : i32
    return %c0_i32, %c0_i32_0, %c0_i32_1 : i32, i32, i32
  }
  func.func @transform_8(%arg0: i32) -> (i32, i32) {
    %c0_i32 = arith.constant 0 : i32
    %c0_i32_0 = arith.constant 0 : i32
    return %arg0, %c0_i32 : i32, i32
  }
}

</mosaic_0001>

<llo_original>
// kernel: forward.1
$region0: #{forward.1}
  #allocation0 [shape = 'u32[]', space=smem, size = 0x4, offset = 0x4, fixed_abs, tag = 'smem constant byte address 0x4 - core index']
  #allocation1 [shape = 'u32[144,128]{1,0:T(1,128)}', space=vmem, size = 0x12000, scoped, tag = 'internal scratch']
  %s0 = inlined_call_operand.vmem [shape: bf16[6,192,28], index: 0, kind: input, shape index: {}]
  %s1 = inlined_call_operand.vmem [shape: bf16[10,28,192], index: 1, kind: input, shape index: {}]
  %s2 = inlined_call_operand.vmem [shape: f32[1,192], index: 2, kind: input, shape index: {}]
  %s3 = inlined_call_operand.vmem [shape: bf16[10,192,128], index: 3, kind: input, shape index: {}]
  %s4 = inlined_call_operand.vmem [shape: f32[1,128], index: 4, kind: input, shape index: {}]
  %s5 = inlined_call_operand.vmem [shape: bf16[4,128,128], index: 5, kind: input, shape index: {}]
  %s6 = inlined_call_operand.vmem [shape: f32[1,128], index: 6, kind: input, shape index: {}]
  %s7 = inlined_call_operand.vmem [shape: bf16[4,8,91], index: 7, kind: input, shape index: {}]
  %s8 = inlined_call_operand.hbm [shape: f32[16,128], index: 8, kind: output, shape index: {}]
  %s9 = sld [smem:[#allocation0]]
  $region106: #{forward.1} parent=0
    _
  %s11 = ssub.s32 1, %s9
  %s12 = scalar_select 0, %s11, %s9
  $region1: #{forward.1} parent=0
    #allocation2 [shape = 'u8[294912]{0}', space=vmem, size = 0x48000, scoped, tag = 'input window, operand 0']
    #allocation3 [shape = 'u8[8192]{0}', space=vmem, size = 0x2000, scoped, tag = 'output window, operand 0']
    #allocation4 [shape = 's32[2]{0}', space=sflag, size = 0x8, scoped, tag = 'scoped memory for forward.1']
    %13 = vsyncpa [#allocation4], 0
    %s14 = scalar_lea.sflag [#allocation4], 1
    %15 = vsyncpa %s14, 0
    loop: start=0, step=1, limit=4
    $region2: #{forward.1} parent=1 // loop_pre_header
      _
    $region3: #{forward.1} parent=1 // loop_header
      %s17 = sphi 0, %s21
      %p18 = scmp.ge.s32.totalorder %s17, 4
      %s27 = sphi 0, %s29
      %s30 = sphi 0, %s27
      %s31 = sphi 0, %s30
      %s47 = sphi 0, %s31
      %s51 = sphi 0, %s51
      %s53 = sphi 0, %s51
      %s54 = sphi 0, %s53
      %s68 = sphi 0, %s54
      %s72 = sphi 0, %s72
      %s74 = sphi 0, %s72
      %s75 = sphi 0, %s74
      %s89 = sphi 0, %s75
      %s93 = sphi 0, %s93
      %s95 = sphi 0, %s93
      %s96 = sphi 0, %s95
      %s110 = sphi 0, %s96
      %s114 = sphi 0, %s114
      %s116 = sphi 0, %s114
      %s117 = sphi 0, %s116
      %s131 = sphi 0, %s117
      %s135 = sphi 0, %s135
      %s137 = sphi 0, %s135
      %s138 = sphi 0, %s137
      %s152 = sphi 0, %s138
      %s156 = sphi 0, %s156
      %s158 = sphi 0, %s156
      %s159 = sphi 0, %s158
      %s173 = sphi 0, %s159
      %s177 = sphi 0, %s177
      %s179 = sphi 0, %s177
      %s180 = sphi 0, %s179
      %s194 = sphi 0, %s180
      %s200 = sphi 0, %s202
      %s203 = sphi 0, %s200
      %s204 = sphi 0, %s203
      %s220 = sphi 0, %s204
    $region4: #{forward.1} parent=1 // loop_header_branch
      %20 = sbr.rel (%p18) target = $region8
    $region5: #{forward.1} parent=1 // loop_body
      %s22 = ssub.s32 %s17, 1
      %s23 = ssub.s32 %s17, 2
      %s24 = sadd.s32 %s17, 1
      %s25 = ssub.s32 %s17, %s24
      %p26 = scmp.eq.s32.totalorder %s25, 0
      %s28 = sadd.s32 %s27, 1
      %s29 = scalar_select %p26, %s27, %s28
      %p32 = pneg %p26
      %p33 = scmp.eq.s32.totalorder %s17, 1
      %p34 = por %p32, %p33
      %p35 = scmp.ne.s32.totalorder %s27, %s30
      %p36 = scmp.eq.s32.totalorder %s17, 0
      %p37 = por %p35, %p36
      %p38 = scmp.ne.s32.totalorder %s27, %s30
      %p39 = scmp.eq.s32.totalorder %s22, 1
      %p40 = por %p38, %p39
      %p41 = scmp.ne.s32.totalorder %s30, %s31
      %p42 = scmp.eq.s32.totalorder %s22, 0
      %p43 = por %p41, %p42
      %p44 = scmp.ne.s32.totalorder %s30, %s31
      %p45 = scmp.eq.s32.totalorder %s23, 1
      %p46 = por %p44, %p45
      %p48 = scmp.ne.s32.totalorder %s31, %s47
      %p49 = scmp.eq.s32.totalorder %s23, 0
      %p50 = por %p48, %p49
      %s52 = sadd.s32 %s51, 1
      %p55 = scmp.eq.s32.totalorder %s17, 1
      %p56 = scmp.ne.s32.totalorder %s51, %s53
      %p57 = scmp.eq.s32.totalorder %s17, 0
      %p58 = por %p56, %p57
      %p59 = scmp.ne.s32.totalorder %s51, %s53
      %p60 = scmp.eq.s32.totalorder %s22, 1
      %p61 = por %p59, %p60
      %p62 = scmp.ne.s32.totalorder %s53, %s54
      %p63 = scmp.eq.s32.totalorder %s22, 0
      %p64 = por %p62, %p63
      %p65 = scmp.ne.s32.totalorder %s53, %s54
      %p66 = scmp.eq.s32.totalorder %s23, 1
      %p67 = por %p65, %p66
      %p69 = scmp.ne.s32.totalorder %s54, %s68
      %p70 = scmp.eq.s32.totalorder %s23, 0
      %p71 = por %p69, %p70
      %s73 = sadd.s32 %s72, 1
      %p76 = scmp.eq.s32.totalorder %s17, 1
      %p77 = scmp.ne.s32.totalorder %s72, %s74
      %p78 = scmp.eq.s32.totalorder %s17, 0
      %p79 = por %p77, %p78
      %p80 = scmp.ne.s32.totalorder %s72, %s74
      %p81 = scmp.eq.s32.totalorder %s22, 1
      %p82 = por %p80, %p81
      %p83 = scmp.ne.s32.totalorder %s74, %s75
      %p84 = scmp.eq.s32.totalorder %s22, 0
      %p85 = por %p83, %p84
      %p86 = scmp.ne.s32.totalorder %s74, %s75
      %p87 = scmp.eq.s32.totalorder %s23, 1
      %p88 = por %p86, %p87
      %p90 = scmp.ne.s32.totalorder %s75, %s89
      %p91 = scmp.eq.s32.totalorder %s23, 0
      %p92 = por %p90, %p91
      %s94 = sadd.s32 %s93, 1
      %p97 = scmp.eq.s32.totalorder %s17, 1
      %p98 = scmp.ne.s32.totalorder %s93, %s95
      %p99 = scmp.eq.s32.totalorder %s17, 0
      %p100 = por %p98, %p99
      %p101 = scmp.ne.s32.totalorder %s93, %s95
      %p102 = scmp.eq.s32.totalorder %s22, 1
      %p103 = por %p101, %p102
      %p104 = scmp.ne.s32.totalorder %s95, %s96
      %p105 = scmp.eq.s32.totalorder %s22, 0
      %p106 = por %p104, %p105
      %p107 = scmp.ne.s32.totalorder %s95, %s96
      %p108 = scmp.eq.s32.totalorder %s23, 1
      %p109 = por %p107, %p108
      %p111 = scmp.ne.s32.totalorder %s96, %s110
      %p112 = scmp.eq.s32.totalorder %s23, 0
      %p113 = por %p111, %p112
      %s115 = sadd.s32 %s114, 1
      %p118 = scmp.eq.s32.totalorder %s17, 1
      %p119 = scmp.ne.s32.totalorder %s114, %s116
      %p120 = scmp.eq.s32.totalorder %s17, 0
      %p121 = por %p119, %p120
      %p122 = scmp.ne.s32.totalorder %s114, %s116
      %p123 = scmp.eq.s32.totalorder %s22, 1
      %p124 = por %p122, %p123
      %p125 = scmp.ne.s32.totalorder %s116, %s117
      %p126 = scmp.eq.s32.totalorder %s22, 0
      %p127 = por %p125, %p126
      %p128 = scmp.ne.s32.totalorder %s116, %s117
      %p129 = scmp.eq.s32.totalorder %s23, 1
      %p130 = por %p128, %p129
      %p132 = scmp.ne.s32.totalorder %s117, %s131
      %p133 = scmp.eq.s32.totalorder %s23, 0
      %p134 = por %p132, %p133
      %s136 = sadd.s32 %s135, 1
      %p139 = scmp.eq.s32.totalorder %s17, 1
      %p140 = scmp.ne.s32.totalorder %s135, %s137
      %p141 = scmp.eq.s32.totalorder %s17, 0
      %p142 = por %p140, %p141
      %p143 = scmp.ne.s32.totalorder %s135, %s137
      %p144 = scmp.eq.s32.totalorder %s22, 1
      %p145 = por %p143, %p144
      %p146 = scmp.ne.s32.totalorder %s137, %s138
      %p147 = scmp.eq.s32.totalorder %s22, 0
      %p148 = por %p146, %p147
      %p149 = scmp.ne.s32.totalorder %s137, %s138
      %p150 = scmp.eq.s32.totalorder %s23, 1
      %p151 = por %p149, %p150
      %p153 = scmp.ne.s32.totalorder %s138, %s152
      %p154 = scmp.eq.s32.totalorder %s23, 0
      %p155 = por %p153, %p154
      %s157 = sadd.s32 %s156, 1
      %p160 = scmp.eq.s32.totalorder %s17, 1
      %p161 = scmp.ne.s32.totalorder %s156, %s158
      %p162 = scmp.eq.s32.totalorder %s17, 0
      %p163 = por %p161, %p162
      %p164 = scmp.ne.s32.totalorder %s156, %s158
      %p165 = scmp.eq.s32.totalorder %s22, 1
      %p166 = por %p164, %p165
      %p167 = scmp.ne.s32.totalorder %s158, %s159
      %p168 = scmp.eq.s32.totalorder %s22, 0
      %p169 = por %p167, %p168
      %p170 = scmp.ne.s32.totalorder %s158, %s159
      %p171 = scmp.eq.s32.totalorder %s23, 1
      %p172 = por %p170, %p171
      %p174 = scmp.ne.s32.totalorder %s159, %s173
      %p175 = scmp.eq.s32.totalorder %s23, 0
      %p176 = por %p174, %p175
      %s178 = sadd.s32 %s177, 1
      %p181 = scmp.eq.s32.totalorder %s17, 1
      %p182 = scmp.ne.s32.totalorder %s177, %s179
      %p183 = scmp.eq.s32.totalorder %s17, 0
      %p184 = por %p182, %p183
      %p185 = scmp.ne.s32.totalorder %s177, %s179
      %p186 = scmp.eq.s32.totalorder %s22, 1
      %p187 = por %p185, %p186
      %p188 = scmp.ne.s32.totalorder %s179, %s180
      %p189 = scmp.eq.s32.totalorder %s22, 0
      %p190 = por %p188, %p189
      %p191 = scmp.ne.s32.totalorder %s179, %s180
      %p192 = scmp.eq.s32.totalorder %s23, 1
      %p193 = por %p191, %p192
      %p195 = scmp.ne.s32.totalorder %s180, %s194
      %p196 = scmp.eq.s32.totalorder %s23, 0
      %p197 = por %p195, %p196
      %s198 = ssub.s32 %s17, %s24
      %p199 = scmp.eq.s32.totalorder %s198, 0
      %s201 = sadd.s32 %s200, 1
      %s202 = scalar_select %p199, %s200, %s201
      %p205 = pneg %p199
      %p206 = scmp.eq.s32.totalorder %s17, 1
      %p207 = por %p205, %p206
      %p208 = scmp.ne.s32.totalorder %s200, %s203
      %p209 = scmp.eq.s32.totalorder %s17, 0
      %p210 = por %p208, %p209
      %p211 = scmp.ne.s32.totalorder %s200, %s203
      %p212 = scmp.eq.s32.totalorder %s22, 1
      %p213 = por %p211, %p212
      %p214 = scmp.ne.s32.totalorder %s203, %s204
      %p215 = scmp.eq.s32.totalorder %s22, 0
      %p216 = por %p214, %p215
      %p217 = scmp.ne.s32.totalorder %s203, %s204
      %p218 = scmp.eq.s32.totalorder %s23, 1
      %p219 = por %p217, %p218
      %p221 = scmp.ne.s32.totalorder %s204, %s220
      %p222 = scmp.eq.s32.totalorder %s23, 0
      %p223 = por %p221, %p222
      %p224 = scmp.le.s32.totalorder 1, %s17
      %p225 = scmp.lt.s32.totalorder %s17, 3
      %p226 = pnand %p224, %p225
      %p227 = pneg %p226
      // Predicated region
      $region9: #{forward.1} parent=5 // pred_check
        _
      $region10: #{forward.1} parent=5 // pred_check_branch
        %229 = sbr.rel (%p226) target = $region12
      $region11: #{forward.1} parent=5 // pred_region
        %s230 = ssub.s32 %s17, 1
        // Predicated region
        $region13: #{forward.1} parent=11 // pred_check
          %p231 = pneg %p64
        $region14: #{forward.1} parent=11 // pred_check_branch
          %233 = sbr.rel (%p231) target = $region16
        $region15: #{forward.1} parent=11 // pred_region
          _
        $region16: #{forward.1} parent=11 // pred_fallthru
          _
        // Predicated region
        $region17: #{forward.1} parent=11 // pred_check
          %p234 = pneg %p85
        $region18: #{forward.1} parent=11 // pred_check_branch
          %236 = sbr.rel (%p234) target = $region20
        $region19: #{forward.1} parent=11 // pred_region
          _
        $region20: #{forward.1} parent=11 // pred_fallthru
          _
        // Predicated region
        $region21: #{forward.1} parent=11 // pred_check
          %p237 = pneg %p106
        $region22: #{forward.1} parent=11 // pred_check_branch
          %239 = sbr.rel (%p237) target = $region24
        $region23: #{forward.1} parent=11 // pred_region
          _
        $region24: #{forward.1} parent=11 // pred_fallthru
          _
        // Predicated region
        $region25: #{forward.1} parent=11 // pred_check
          %p240 = pneg %p127
        $region26: #{forward.1} parent=11 // pred_check_branch
          %242 = sbr.rel (%p240) target = $region28
        $region27: #{forward.1} parent=11 // pred_region
          _
        $region28: #{forward.1} parent=11 // pred_fallthru
          _
        // Predicated region
        $region29: #{forward.1} parent=11 // pred_check
          %p243 = pneg %p148
        $region30: #{forward.1} parent=11 // pred_check_branch
          %245 = sbr.rel (%p243) target = $region32
        $region31: #{forward.1} parent=11 // pred_region
          _
        $region32: #{forward.1} parent=11 // pred_fallthru
          _
        // Predicated region
        $region33: #{forward.1} parent=11 // pred_check
          %p246 = pneg %p169
        $region34: #{forward.1} parent=11 // pred_check_branch
          %248 = sbr.rel (%p246) target = $region36
        $region35: #{forward.1} parent=11 // pred_region
          _
        $region36: #{forward.1} parent=11 // pred_fallthru
          _
        // Predicated region
        $region37: #{forward.1} parent=11 // pred_check
          %p249 = pneg %p190
        $region38: #{forward.1} parent=11 // pred_check_branch
          %251 = sbr.rel (%p249) target = $region40
        $region39: #{forward.1} parent=11 // pred_region
          _
        $region40: #{forward.1} parent=11 // pred_fallthru
          _
      $region12: #{forward.1} parent=5 // pred_fallthru
        _
      %p252 = scmp.lt.s32.totalorder %s17, 2
      // Predicated region
      $region41: #{forward.1} parent=5 // pred_check
        %p253 = pneg %p252
      $region42: #{forward.1} parent=5 // pred_check_branch
        %255 = sbr.rel (%p253) target = $region44
      $region43: #{forward.1} parent=5 // pred_region
        // Predicated region
        $region45: #{forward.1} parent=43 // pred_check
          %p256 = pneg %p37
        $region46: #{forward.1} parent=43 // pred_check_branch
          %258 = sbr.rel (%p256) target = $region48
        $region47: #{forward.1} parent=43 // pred_region
          %s259 = sand.u32 %s27, 1
          %s260 = sand.u32 %s27, 1
          %s261 = smul.addr %s260, 288
          %s262 = scalar_lea.vmem [#allocation2], %s261
          %s263 = smul.u32 12, %s17
          %s264 = smul.addr %s263, 4
          %s265 = scalar_lea.vmem %s0, %s264
          // Predicated region
          $region49: #{forward.1} parent=47 // pred_check
            _
          $region50: #{forward.1} parent=47 // pred_check_branch
            %267 = sbr.rel (0) target = $region52
          $region51: #{forward.1} parent=47 // pred_region
            // Predicated region
            $region53: #{forward.1} parent=51 // pred_check
              _
            $region54: #{forward.1} parent=51 // pred_check_branch
              %269 = sbr.rel target = $region56
            $region55: #{forward.1} parent=51 // pred_region
              // Predicated region
              $region68: #{forward.1} parent=55 // pred_check
                _
              $region69: #{forward.1} parent=55 // pred_check_branch
                %426 = sbr.rel (0) target = $region71
              $region70: #{forward.1} parent=55 // pred_region
                loop: start=0, step=1, limit=1
                $region72: #{forward.1} parent=70 // loop_pre_header
                  _
                $region73: #{forward.1} parent=70 // loop_header
                  %s428 = sphi 0, %s432
                  %p429 = scmp.ge.s32.totalorder %s428, 1
                  %s433 = sphi %s265, %s265
                  %s434 = sphi %s262, %s262
                $region74: #{forward.1} parent=70 // loop_header_branch
                  %431 = sbr.rel (%p429) target = $region78
                $region75: #{forward.1} parent=70 // loop_body
                  _
                $region76: #{forward.1} parent=70 // loop_footer
                  %s432 = sadd.s32 1, %s428
                $region77: #{forward.1} parent=70 // loop_footer_branch
                  %427 = sbr.rel target = $region73
                $region78: #{forward.1} parent=70 // loop_exit
                  _
                loop: start=0, step=1, limit=1
                $region79: #{forward.1} parent=70 // loop_pre_header
                  _
                $region80: #{forward.1} parent=70 // loop_header
                  %s437 = sphi 0, %s441
                  %p438 = scmp.ge.s32.totalorder %s437, 1
                  %s442 = sphi %s265, %s265
                  %s443 = sphi %s262, %s262
                $region81: #{forward.1} parent=70 // loop_header_branch
                  %440 = sbr.rel (%p438) target = $region85
                $region82: #{forward.1} parent=70 // loop_body
                  %v444 = vld [vmem:[%s442] sm:$0xf]
                  %445 = vst [vmem:[%s443] sm:$0xf] %v444
                  %v446 = vld [vmem:[%s442 + $0x4] sm:$0xf]
                  %447 = vst [vmem:[%s443 + $0x4] sm:$0xf] %v446
                  %v448 = vld [vmem:[%s442 + $0x8] sm:$0xf]
                  %449 = vst [vmem:[%s443 + $0x8] sm:$0xf] %v448
                  %v450 = vld [vmem:[%s442 + $0xc] sm:$0xf]
                  %451 = vst [vmem:[%s443 + $0xc] sm:$0xf] %v450
                  %v452 = vld [vmem:[%s442 + $0x10] sm:$0xf]
                  %453 = vst [vmem:[%s443 + $0x10] sm:$0xf] %v452
                  %v454 = vld [vmem:[%s442 + $0x14] sm:$0xf]
                  %455 = vst [vmem:[%s443 + $0x14] sm:$0xf] %v454
                  %v456 = vld [vmem:[%s442 + $0x18] sm:$0xf]
                  %457 = vst [vmem:[%s443 + $0x18] sm:$0xf] %v456
                  %v458 = vld [vmem:[%s442 + $0x1c] sm:$0xf]
                  %459 = vst [vmem:[%s443 + $0x1c] sm:$0xf] %v458
                  %v460 = vld [vmem:[%s442 + $0x20] sm:$0xf]
                  %461 = vst [vmem:[%s443 + $0x20] sm:$0xf] %v460
                  %v462 = vld [vmem:[%s442 + $0x24] sm:$0xf]
                  %463 = vst [vmem:[%s443 + $0x24] sm:$0xf] %v462
                  %v464 = vld [vmem:[%s442 + $0x28] sm:$0xf]
                  %465 = vst [vmem:[%s443 + $0x28] sm:$0xf] %v464
                  %v466 = vld [vmem:[%s442 + $0x2c] sm:$0xf]
                  %467 = vst [vmem:[%s443 + $0x2c] sm:$0xf] %v466
                  %v468 = vld [vmem:[%s442 + $0x60] sm:$0xf]
                  %469 = vst [vmem:[%s443 + $0x30] sm:$0xf] %v468
                  %v470 = vld [vmem:[%s442 + $0x64] sm:$0xf]
                  %471 = vst [vmem:[%s443 + $0x34] sm:$0xf] %v470
                  %v472 = vld [vmem:[%s442 + $0x68] sm:$0xf]
                  %473 = vst [vmem:[%s443 + $0x38] sm:$0xf] %v472
                  %v474 = vld [vmem:[%s442 + $0x6c] sm:$0xf]
                  %475 = vst [vmem:[%s443 + $0x3c] sm:$0xf] %v474
                  %v476 = vld [vmem:[%s442 + $0x70] sm:$0xf]
                  %477 = vst [vmem:[%s443 + $0x40] sm:$0xf] %v476
                  %v478 = vld [vmem:[%s442 + $0x74] sm:$0xf]
                  %479 = vst [vmem:[%s443 + $0x44] sm:$0xf] %v478
                  %v480 = vld [vmem:[%s442 + $0x78] sm:$0xf]
                  %481 = vst [vmem:[%s443 + $0x48] sm:$0xf] %v480
                  %v482 = vld [vmem:[%s442 + $0x7c] sm:$0xf]
                  %483 = vst [vmem:[%s443 + $0x4c] sm:$0xf] %v482
                  %v484 = vld [vmem:[%s442 + $0x80] sm:$0xf]
                  %485 = vst [vmem:[%s443 + $0x50] sm:$0xf] %v484
                  %v486 = vld [vmem:[%s442 + $0x84] sm:$0xf]
                  %487 = vst [vmem:[%s443 + $0x54] sm:$0xf] %v486
                  %v488 = vld [vmem:[%s442 + $0x88] sm:$0xf]
                  %489 = vst [vmem:[%s443 + $0x58] sm:$0xf] %v488
                  %v490 = vld [vmem:[%s442 + $0x8c] sm:$0xf]
                  %491 = vst [vmem:[%s443 + $0x5c] sm:$0xf] %v490
                  %v492 = vld [vmem:[%s442 + $0xc0] sm:$0xf]
                  %493 = vst [vmem:[%s443 + $0x60] sm:$0xf] %v492
                  %v494 = vld [vmem:[%s442 + $0xc4] sm:$0xf]
                  %495 = vst [vmem:[%s443 + $0x64] sm:$0xf] %v494
                  %v496 = vld [vmem:[%s442 + $0xc8] sm:$0xf]
                  %497 = vst [vmem:[%s443 + $0x68] sm:$0xf] %v496
                  %v498 = vld [vmem:[%s442 + $0xcc] sm:$0xf]
                  %499 = vst [vmem:[%s443 + $0x6c] sm:$0xf] %v498
                  %v500 = vld [vmem:[%s442 + $0xd0] sm:$0xf]
                  %501 = vst [vmem:[%s443 + $0x70] sm:$0xf] %v500
                  %v502 = vld [vmem:[%s442 + $0xd4] sm:$0xf]
                  %503 = vst [vmem:[%s443 + $0x74] sm:$0xf] %v502
                  %v504 = vld [vmem:[%s442 + $0xd8] sm:$0xf]
                  %505 = vst [vmem:[%s443 + $0x78] sm:$0xf] %v504
                  %v506 = vld [vmem:[%s442 + $0xdc] sm:$0xf]
                  %507 = vst [vmem:[%s443 + $0x7c] sm:$0xf] %v506
                  %v508 = vld [vmem:[%s442 + $0xe0] sm:$0xf]
                  %509 = vst [vmem:[%s443 + $0x80] sm:$0xf] %v508
                  %v510 = vld [vmem:[%s442 + $0xe4] sm:$0xf]
                  %511 = vst [vmem:[%s443 + $0x84] sm:$0xf] %v510
                  %v512 = vld [vmem:[%s442 + $0xe8] sm:$0xf]
                  %513 = vst [vmem:[%s443 + $0x88] sm:$0xf] %v512
                  %v514 = vld [vmem:[%s442 + $0xec] sm:$0xf]
                  %515 = vst [vmem:[%s443 + $0x8c] sm:$0xf] %v514
                  %v516 = vld [vmem:[%s442 + $0x120] sm:$0xf]
                  %517 = vst [vmem:[%s443 + $0x90] sm:$0xf] %v516
                  %v518 = vld [vmem:[%s442 + $0x124] sm:$0xf]
                  %519 = vst [vmem:[%s443 + $0x94] sm:$0xf] %v518
                  %v520 = vld [vmem:[%s442 + $0x128] sm:$0xf]
                  %521 = vst [vmem:[%s443 + $0x98] sm:$0xf] %v520
                  %v522 = vld [vmem:[%s442 + $0x12c] sm:$0xf]
                  %523 = vst [vmem:[%s443 + $0x9c] sm:$0xf] %v522
                  %v524 = vld [vmem:[%s442 + $0x130] sm:$0xf]
                  %525 = vst [vmem:[%s443 + $0xa0] sm:$0xf] %v524
                  %v526 = vld [vmem:[%s442 + $0x134] sm:$0xf]
                  %527 = vst [vmem:[%s443 + $0xa4] sm:$0xf] %v526
                  %v528 = vld [vmem:[%s442 + $0x138] sm:$0xf]
                  %529 = vst [vmem:[%s443 + $0xa8] sm:$0xf] %v528
                  %v530 = vld [vmem:[%s442 + $0x13c] sm:$0xf]
                  %531 = vst [vmem:[%s443 + $0xac] sm:$0xf] %v530
                  %v532 = vld [vmem:[%s442 + $0x140] sm:$0xf]
                  %533 = vst [vmem:[%s443 + $0xb0] sm:$0xf] %v532
                  %v534 = vld [vmem:[%s442 + $0x144] sm:$0xf]
                  %535 = vst [vmem:[%s443 + $0xb4] sm:$0xf] %v534
                  %v536 = vld [vmem:[%s442 + $0x148] sm:$0xf]
                  %537 = vst [vmem:[%s443 + $0xb8] sm:$0xf] %v536
                  %v538 = vld [vmem:[%s442 + $0x14c] sm:$0xf]
                  %539 = vst [vmem:[%s443 + $0xbc] sm:$0xf] %v538
                  %v540 = vld [vmem:[%s442 + $0x180] sm:$0xf]
                  %541 = vst [vmem:[%s443 + $0xc0] sm:$0xf] %v540
                  %v542 = vld [vmem:[%s442 + $0x184] sm:$0xf]
                  %543 = vst [vmem:[%s443 + $0xc4] sm:$0xf] %v542
                  %v544 = vld [vmem:[%s442 + $0x188] sm:$0xf]
                  %545 = vst [vmem:[%s443 + $0xc8] sm:$0xf] %v544
                  %v546 = vld [vmem:[%s442 + $0x18c] sm:$0xf]
                  %547 = vst [vmem:[%s443 + $0xcc] sm:$0xf] %v546
                  %v548 = vld [vmem:[%s442 + $0x190] sm:$0xf]
                  %549 = vst [vmem:[%s443 + $0xd0] sm:$0xf] %v548
                  %v550 = vld [vmem:[%s442 + $0x194] sm:$0xf]
                  %551 = vst [vmem:[%s443 + $0xd4] sm:$0xf] %v550
                  %v552 = vld [vmem:[%s442 + $0x198] sm:$0xf]
                  %553 = vst [vmem:[%s443 + $0xd8] sm:$0xf] %v552
                  %v554 = vld [vmem:[%s442 + $0x19c] sm:$0xf]
                  %555 = vst [vmem:[%s443 + $0xdc] sm:$0xf] %v554
                  %v556 = vld [vmem:[%s442 + $0x1a0] sm:$0xf]
                  %557 = vst [vmem:[%s443 + $0xe0] sm:$0xf] %v556
                  %v558 = vld [vmem:[%s442 + $0x1a4] sm:$0xf]
                  %559 = vst [vmem:[%s443 + $0xe4] sm:$0xf] %v558
                  %v560 = vld [vmem:[%s442 + $0x1a8] sm:$0xf]
                  %561 = vst [vmem:[%s443 + $0xe8] sm:$0xf] %v560
                  %v562 = vld [vmem:[%s442 + $0x1ac] sm:$0xf]
                  %563 = vst [vmem:[%s443 + $0xec] sm:$0xf] %v562
                  %v564 = vld [vmem:[%s442 + $0x1e0] sm:$0xf]
                  %565 = vst [vmem:[%s443 + $0xf0] sm:$0xf] %v564
                  %v566 = vld [vmem:[%s442 + $0x1e4] sm:$0xf]
                  %567 = vst [vmem:[%s443 + $0xf4] sm:$0xf] %v566
                  %v568 = vld [vmem:[%s442 + $0x1e8] sm:$0xf]
                  %569 = vst [vmem:[%s443 + $0xf8] sm:$0xf] %v568
                  %v570 = vld [vmem:[%s442 + $0x1ec] sm:$0xf]
                  %571 = vst [vmem:[%s443 + $0xfc] sm:$0xf] %v570
                  %v572 = vld [vmem:[%s442 + $0x1f0] sm:$0xf]
                  %573 = vst [vmem:[%s443 + $0x100] sm:$0xf] %v572
                  %v574 = vld [vmem:[%s442 + $0x1f4] sm:$0xf]
                  %575 = vst [vmem:[%s443 + $0x104] sm:$0xf] %v574
                  %v576 = vld [vmem:[%s442 + $0x1f8] sm:$0xf]
                  %577 = vst [vmem:[%s443 + $0x108] sm:$0xf] %v576
                  %v578 = vld [vmem:[%s442 + $0x1fc] sm:$0xf]
                  %579 = vst [vmem:[%s443 + $0x10c] sm:$0xf] %v578
                  %v580 = vld [vmem:[%s442 + $0x200] sm:$0xf]
                  %581 = vst [vmem:[%s443 + $0x110] sm:$0xf] %v580
                  %v582 = vld [vmem:[%s442 + $0x204] sm:$0xf]
                  %583 = vst [vmem:[%s443 + $0x114] sm:$0xf] %v582
                  %v584 = vld [vmem:[%s442 + $0x208] sm:$0xf]
                  %585 = vst [vmem:[%s443 + $0x118] sm:$0xf] %v584
                  %v586 = vld [vmem:[%s442 + $0x20c] sm:$0xf]
                  %587 = vst [vmem:[%s443 + $0x11c] sm:$0xf] %v586
                $region83: #{forward.1} parent=70 // loop_footer
                  %s441 = sadd.s32 1, %s437
                $region84: #{forward.1} parent=70 // loop_footer_branch
                  %436 = sbr.rel target = $region80
                $region85: #{forward.1} parent=70 // loop_exit
                  _
              $region71: #{forward.1} parent=55 // pred_fallthru
                _
            $region56: #{forward.1} parent=51 // pred_fallthru
              _
            // Predicated region
            $region57: #{forward.1} parent=51 // pred_check
              _
            $region58: #{forward.1} parent=51 // pred_check_branch
              %271 = sbr.rel (0) target = $region60
            $region59: #{forward.1} parent=51 // pred_region
              loop: start=0, step=1, limit=1
              $region61: #{forward.1} parent=59 // loop_pre_header
                _
              $region62: #{forward.1} parent=59 // loop_header
                %s274 = sphi 0, %s278
                %p275 = scmp.ge.s32.totalorder %s274, 1
                %s279 = sphi %s265, %s265
                %s280 = sphi %s262, %s262
              $region63: #{forward.1} parent=59 // loop_header_branch
                %277 = sbr.rel (%p275) target = $region67
              $region64: #{forward.1} parent=59 // loop_body
                %v281 = vld [vmem:[%s279] sm:$0xf]
                %282 = vst [vmem:[%s280] sm:$0xf] %v281
                %v283 = vld [vmem:[%s279 + $0x4] sm:$0xf]
                %284 = vst [vmem:[%s280 + $0x4] sm:$0xf] %v283
                %v285 = vld [vmem:[%s279 + $0x8] sm:$0xf]
                %286 = vst [vmem:[%s280 + $0x8] sm:$0xf] %v285
                %v287 = vld [vmem:[%s279 + $0xc] sm:$0xf]
                %288 = vst [vmem:[%s280 + $0xc] sm:$0xf] %v287
                %v289 = vld [vmem:[%s279 + $0x10] sm:$0xf]
                %290 = vst [vmem:[%s280 + $0x10] sm:$0xf] %v289
                %v291 = vld [vmem:[%s279 + $0x14] sm:$0xf]
                %292 = vst [vmem:[%s280 + $0x14] sm:$0xf] %v291
                %v293 = vld [vmem:[%s279 + $0x18] sm:$0xf]
                %294 = vst [vmem:[%s280 + $0x18] sm:$0xf] %v293
                %v295 = vld [vmem:[%s279 + $0x1c] sm:$0xf]
                %296 = vst [vmem:[%s280 + $0x1c] sm:$0xf] %v295
                %v297 = vld [vmem:[%s279 + $0x20] sm:$0xf]
                %298 = vst [vmem:[%s280 + $0x20] sm:$0xf] %v297
                %v299 = vld [vmem:[%s279 + $0x24] sm:$0xf]
                %300 = vst [vmem:[%s280 + $0x24] sm:$0xf] %v299
                %v301 = vld [vmem:[%s279 + $0x28] sm:$0xf]
                %302 = vst [vmem:[%s280 + $0x28] sm:$0xf] %v301
                %v303 = vld [vmem:[%s279 + $0x2c] sm:$0xf]
                %304 = vst [vmem:[%s280 + $0x2c] sm:$0xf] %v303
                %v305 = vld [vmem:[%s279 + $0x60] sm:$0xf]
                %306 = vst [vmem:[%s280 + $0x30] sm:$0xf] %v305
                %v307 = vld [vmem:[%s279 + $0x64] sm:$0xf]
                %308 = vst [vmem:[%s280 + $0x34] sm:$0xf] %v307
                %v309 = vld [vmem:[%s279 + $0x68] sm:$0xf]
                %310 = vst [vmem:[%s280 + $0x38] sm:$0xf] %v309
                %v311 = vld [vmem:[%s279 + $0x6c] sm:$0xf]
                %312 = vst [vmem:[%s280 + $0x3c] sm:$0xf] %v311
                %v313 = vld [vmem:[%s279 + $0x70] sm:$0xf]
                %314 = vst [vmem:[%s280 + $0x40] sm:$0xf] %v313
                %v315 = vld [vmem:[%s279 + $0x74] sm:$0xf]
                %316 = vst [vmem:[%s280 + $0x44] sm:$0xf] %v315
                %v317 = vld [vmem:[%s279 + $0x78] sm:$0xf]
                %318 = vst [vmem:[%s280 + $0x48] sm:$0xf] %v317
                %v319 = vld [vmem:[%s279 + $0x7c] sm:$0xf]
                %320 = vst [vmem:[%s280 + $0x4c] sm:$0xf] %v319
                %v321 = vld [vmem:[%s279 + $0x80] sm:$0xf]
                %322 = vst [vmem:[%s280 + $0x50] sm:$0xf] %v321
                %v323 = vld [vmem:[%s279 + $0x84] sm:$0xf]
                %324 = vst [vmem:[%s280 + $0x54] sm:$0xf] %v323
                %v325 = vld [vmem:[%s279 + $0x88] sm:$0xf]
                %326 = vst [vmem:[%s280 + $0x58] sm:$0xf] %v325
                %v327 = vld [vmem:[%s279 + $0x8c] sm:$0xf]
                %328 = vst [vmem:[%s280 + $0x5c] sm:$0xf] %v327
                %v329 = vld [vmem:[%s279 + $0xc0] sm:$0xf]
                %330 = vst [vmem:[%s280 + $0x60] sm:$0xf] %v329
                %v331 = vld [vmem:[%s279 + $0xc4] sm:$0xf]
                %332 = vst [vmem:[%s280 + $0x64] sm:$0xf] %v331
                %v333 = vld [vmem:[%s279 + $0xc8] sm:$0xf]
                %334 = vst [vmem:[%s280 + $0x68] sm:$0xf] %v333
                %v335 = vld [vmem:[%s279 + $0xcc] sm:$0xf]
                %336 = vst [vmem:[%s280 + $0x6c] sm:$0xf] %v335
                %v337 = vld [vmem:[%s279 + $0xd0] sm:$0xf]
                %338 = vst [vmem:[%s280 + $0x70] sm:$0xf] %v337
                %v339 = vld [vmem:[%s279 + $0xd4] sm:$0xf]
                %340 = vst [vmem:[%s280 + $0x74] sm:$0xf] %v339
                %v341 = vld [vmem:[%s279 + $0xd8] sm:$0xf]
                %342 = vst [vmem:[%s280 + $0x78] sm:$0xf] %v341
                %v343 = vld [vmem:[%s279 + $0xdc] sm:$0xf]
                %344 = vst [vmem:[%s280 + $0x7c] sm:$0xf] %v343
                %v345 = vld [vmem:[%s279 + $0xe0] sm:$0xf]
                %346 = vst [vmem:[%s280 + $0x80] sm:$0xf] %v345
                %v347 = vld [vmem:[%s279 + $0xe4] sm:$0xf]
                %348 = vst [vmem:[%s280 + $0x84] sm:$0xf] %v347
                %v349 = vld [vmem:[%s279 + $0xe8] sm:$0xf]
                %350 = vst [vmem:[%s280 + $0x88] sm:$0xf] %v349
                %v351 = vld [vmem:[%s279 + $0xec] sm:$0xf]
                %352 = vst [vmem:[%s280 + $0x8c] sm:$0xf] %v351
                %v353 = vld [vmem:[%s279 + $0x120] sm:$0xf]
                %354 = vst [vmem:[%s280 + $0x90] sm:$0xf] %v353
                %v355 = vld [vmem:[%s279 + $0x124] sm:$0xf]
                %356 = vst [vmem:[%s280 + $0x94] sm:$0xf] %v355
                %v357 = vld [vmem:[%s279 + $0x128] sm:$0xf]
                %358 = vst [vmem:[%s280 + $0x98] sm:$0xf] %v357
                %v359 = vld [vmem:[%s279 + $0x12c] sm:$0xf]
                %360 = vst [vmem:[%s280 + $0x9c] sm:$0xf] %v359
                %v361 = vld [vmem:[%s279 + $0x130] sm:$0xf]
                %362 = vst [vmem:[%s280 + $0xa0] sm:$0xf] %v361
                %v363 = vld [vmem:[%s279 + $0x134] sm:$0xf]
                %364 = vst [vmem:[%s280 + $0xa4] sm:$0xf] %v363
                %v365 = vld [vmem:[%s279 + $0x138] sm:$0xf]
                %366 = vst [vmem:[%s280 + $0xa8] sm:$0xf] %v365
                %v367 = vld [vmem:[%s279 + $0x13c] sm:$0xf]
                %368 = vst [vmem:[%s280 + $0xac] sm:$0xf] %v367
                %v369 = vld [vmem:[%s279 + $0x140] sm:$0xf]
                %370 = vst [vmem:[%s280 + $0xb0] sm:$0xf] %v369
                %v371 = vld [vmem:[%s279 + $0x144] sm:$0xf]
                %372 = vst [vmem:[%s280 + $0xb4] sm:$0xf] %v371
                %v373 = vld [vmem:[%s279 + $0x148] sm:$0xf]
                %374 = vst [vmem:[%s280 + $0xb8] sm:$0xf] %v373
                %v375 = vld [vmem:[%s279 + $0x14c] sm:$0xf]
                %376 = vst [vmem:[%s280 + $0xbc] sm:$0xf] %v375
                %v377 = vld [vmem:[%s279 + $0x180] sm:$0xf]
                %378 = vst [vmem:[%s280 + $0xc0] sm:$0xf] %v377
                %v379 = vld [vmem:[%s279 + $0x184] sm:$0xf]
                %380 = vst [vmem:[%s280 + $0xc4] sm:$0xf] %v379
                %v381 = vld [vmem:[%s279 + $0x188] sm:$0xf]
                %382 = vst [vmem:[%s280 + $0xc8] sm:$0xf] %v381
                %v383 = vld [vmem:[%s279 + $0x18c] sm:$0xf]
                %384 = vst [vmem:[%s280 + $0xcc] sm:$0xf] %v383
                %v385 = vld [vmem:[%s279 + $0x190] sm:$0xf]
                %386 = vst [vmem:[%s280 + $0xd0] sm:$0xf] %v385
                %v387 = vld [vmem:[%s279 + $0x194] sm:$0xf]
                %388 = vst [vmem:[%s280 + $0xd4] sm:$0xf] %v387
                %v389 = vld [vmem:[%s279 + $0x198] sm:$0xf]
                %390 = vst [vmem:[%s280 + $0xd8] sm:$0xf] %v389
                %v391 = vld [vmem:[%s279 + $0x19c] sm:$0xf]
                %392 = vst [vmem:[%s280 + $0xdc] sm:$0xf] %v391
                %v393 = vld [vmem:[%s279 + $0x1a0] sm:$0xf]
                %394 = vst [vmem:[%s280 + $0xe0] sm:$0xf] %v393
                %v395 = vld [vmem:[%s279 + $0x1a4] sm:$0xf]
                %396 = vst [vmem:[%s280 + $0xe4] sm:$0xf] %v395
                %v397 = vld [vmem:[%s279 + $0x1a8] sm:$0xf]
                %398 = vst [vmem:[%s280 + $0xe8] sm:$0xf] %v397
                %v399 = vld [vmem:[%s279 + $0x1ac] sm:$0xf]
                %400 = vst [vmem:[%s280 + $0xec] sm:$0xf] %v399
                %v401 = vld [vmem:[%s279 + $0x1e0] sm:$0xf]
                %402 = vst [vmem:[%s280 + $0xf0] sm:$0xf] %v401
                %v403 = vld [vmem:[%s279 + $0x1e4] sm:$0xf]
                %404 = vst [vmem:[%s280 + $0xf4] sm:$0xf] %v403
                %v405 = vld [vmem:[%s279 + $0x1e8] sm:$0xf]
                %406 = vst [vmem:[%s280 + $0xf8] sm:$0xf] %v405
                %v407 = vld [vmem:[%s279 + $0x1ec] sm:$0xf]
                %408 = vst [vmem:[%s280 + $0xfc] sm:$0xf] %v407
                %v409 = vld [vmem:[%s279 + $0x1f0] sm:$0xf]
                %410 = vst [vmem:[%s280 + $0x100] sm:$0xf] %v409
                %v411 = vld [vmem:[%s279 + $0x1f4] sm:$0xf]
                %412 = vst [vmem:[%s280 + $0x104] sm:$0xf] %v411
                %v413 = vld [vmem:[%s279 + $0x1f8] sm:$0xf]
                %414 = vst [vmem:[%s280 + $0x108] sm:$0xf] %v413
                %v415 = vld [vmem:[%s279 + $0x1fc] sm:$0xf]
                %416 = vst [vmem:[%s280 + $0x10c] sm:$0xf] %v415
                %v417 = vld [vmem:[%s279 + $0x200] sm:$0xf]
                %418 = vst [vmem:[%s280 + $0x110] sm:$0xf] %v417
                %v419 = vld [vmem:[%s279 + $0x204] sm:$0xf]
                %420 = vst [vmem:[%s280 + $0x114] sm:$0xf] %v419
                %v421 = vld [vmem:[%s279 + $0x208] sm:$0xf]
                %422 = vst [vmem:[%s280 + $0x118] sm:$0xf] %v421
                %v423 = vld [vmem:[%s279 + $0x20c] sm:$0xf]
                %424 = vst [vmem:[%s280 + $0x11c] sm:$0xf] %v423
              $region65: #{forward.1} parent=59 // loop_footer
                %s278 = sadd.s32 1, %s274
              $region66: #{forward.1} parent=59 // loop_footer_branch
                %273 = sbr.rel target = $region62
              $region67: #{forward.1} parent=59 // loop_exit
                _
            $region60: #{forward.1} parent=51 // pred_fallthru
              _
          $region52: #{forward.1} parent=47 // pred_fallthru
            _
          %588 = vnop
        $region48: #{forward.1} parent=43 // pred_fallthru
          _
      $region44: #{forward.1} parent=5 // pred_fallthru
        _
      %p589 = scmp.le.s32.totalorder 1, %s17
      %p590 = scmp.lt.s32.totalorder %s17, 3
      %p591 = pnand %p589, %p590
      %p592 = pneg %p591
      // Predicated region
      $region86: #{forward.1} parent=5 // pred_check
        _
      $region87: #{forward.1} parent=5 // pred_check_branch
        %594 = sbr.rel (%p591) target = $region89
      $region88: #{forward.1} parent=5 // pred_region
        %s595 = ssub.s32 %s17, 1
        %s596 = sand.u32 %s30, 1
        %s597 = sand.u32 %s30, 1
        %s598 = smul.addr %s597, 288
        %s599 = scalar_lea.vmem [#allocation2], %s598
        // Predicated region
        $region90: #{forward.1} parent=88 // pred_check
          %p600 = pneg %p43
        $region91: #{forward.1} parent=88 // pred_check_branch
          %602 = sbr.rel (%p600) target = $region93
        $region92: #{forward.1} parent=88 // pred_region
          _
        $region93: #{forward.1} parent=88 // pred_fallthru
          _
        %s603 = sand.u32 %s30, 1
        %s604 = sand.u32 %s30, 1
        %s605 = smul.addr %s604, 288
        %s606 = scalar_lea.vmem [#allocation2], %s605
        %p607 = pneg %p43
        %p608 = pneg %p40
        %p609 = pneg %p64
        %p610 = pneg %p61
        %p611 = pneg %p85
        %p612 = pneg %p82
        %p613 = pneg %p106
        %p614 = pneg %p103
        %p615 = pneg %p127
        %p616 = pneg %p124
        %p617 = pneg %p148
        %p618 = pneg %p145
        %p619 = pneg %p169
        %p620 = pneg %p166
        %p621 = pneg %p190
        %p622 = pneg %p187
        %p623 = pneg %p216
        %p624 = pneg %p213
        %s625 = sand.u32 %s203, 1
        %s626 = scalar_lea.sflag [#allocation4], %s625
        %s627 = sand.u32 %s203, 1
        %s628 = smul.addr %s627, 8
        %s629 = scalar_lea.vmem [#allocation3], %s628
        %s630 = smul.u32 12, %s22
        %v632 = vld [vmem:[%s599] sm:$0xf]
        %v633 = vld [vmem:[%s599 + $0x4] sm:$0xf]
        %v634 = vld [vmem:[%s599 + $0x8] sm:$0xf]
        %v635 = vld [vmem:[%s599 + $0xc] sm:$0xf]
        %v636 = vld [vmem:[%s599 + $0x10] sm:$0xf]
        %v637 = vld [vmem:[%s599 + $0x14] sm:$0xf]
        %v638 = vld [vmem:[%s599 + $0x18] sm:$0xf]
        %v639 = vld [vmem:[%s599 + $0x1c] sm:$0xf]
        %v640 = vld [vmem:[%s599 + $0x20] sm:$0xf]
        %v641 = vld [vmem:[%s599 + $0x24] sm:$0xf]
        %v642 = vld [vmem:[%s599 + $0x28] sm:$0xf]
        %v643 = vld [vmem:[%s599 + $0x2c] sm:$0xf]
        %s644 = scalar_lea.vmem %s599, 48 [#allocation2]
        %v645 = vld [vmem:[%s644] sm:$0xf]
        %v646 = vld [vmem:[%s644 + $0x4] sm:$0xf]
        %v647 = vld [vmem:[%s644 + $0x8] sm:$0xf]
        %v648 = vld [vmem:[%s644 + $0xc] sm:$0xf]
        %v649 = vld [vmem:[%s644 + $0x10] sm:$0xf]
        %v650 = vld [vmem:[%s644 + $0x14] sm:$0xf]
        %v651 = vld [vmem:[%s644 + $0x18] sm:$0xf]
        %v652 = vld [vmem:[%s644 + $0x1c] sm:$0xf]
        %v653 = vld [vmem:[%s644 + $0x20] sm:$0xf]
        %v654 = vld [vmem:[%s644 + $0x24] sm:$0xf]
        %v655 = vld [vmem:[%s644 + $0x28] sm:$0xf]
        %v656 = vld [vmem:[%s644 + $0x2c] sm:$0xf]
        %s657 = scalar_lea.vmem %s599, 96 [#allocation2]
        %v658 = vld [vmem:[%s657] sm:$0xf]
        %v659 = vld [vmem:[%s657 + $0x4] sm:$0xf]
        %v660 = vld [vmem:[%s657 + $0x8] sm:$0xf]
        %v661 = vld [vmem:[%s657 + $0xc] sm:$0xf]
        %v662 = vld [vmem:[%s657 + $0x10] sm:$0xf]
        %v663 = vld [vmem:[%s657 + $0x14] sm:$0xf]
        %v664 = vld [vmem:[%s657 + $0x18] sm:$0xf]
        %v665 = vld [vmem:[%s657 + $0x1c] sm:$0xf]
        %v666 = vld [vmem:[%s657 + $0x20] sm:$0xf]
        %v667 = vld [vmem:[%s657 + $0x24] sm:$0xf]
        %v668 = vld [vmem:[%s657 + $0x28] sm:$0xf]
        %v669 = vld [vmem:[%s657 + $0x2c] sm:$0xf]
        %s670 = scalar_lea.vmem %s599, 144 [#allocation2]
        %v671 = vld [vmem:[%s670] sm:$0xf]
        %v672 = vld [vmem:[%s670 + $0x4] sm:$0xf]
        %v673 = vld [vmem:[%s670 + $0x8] sm:$0xf]
        %v674 = vld [vmem:[%s670 + $0xc] sm:$0xf]
        %v675 = vld [vmem:[%s670 + $0x10] sm:$0xf]
        %v676 = vld [vmem:[%s670 + $0x14] sm:$0xf]
        %v677 = vld [vmem:[%s670 + $0x18] sm:$0xf]
        %v678 = vld [vmem:[%s670 + $0x1c] sm:$0xf]
        %v679 = vld [vmem:[%s670 + $0x20] sm:$0xf]
        %v680 = vld [vmem:[%s670 + $0x24] sm:$0xf]
        %v681 = vld [vmem:[%s670 + $0x28] sm:$0xf]
        %v682 = vld [vmem:[%s670 + $0x2c] sm:$0xf]
        %s683 = scalar_lea.vmem %s599, 192 [#allocation2]
        %v684 = vld [vmem:[%s683] sm:$0xf]
        %v685 = vld [vmem:[%s683 + $0x4] sm:$0xf]
        %v686 = vld [vmem:[%s683 + $0x8] sm:$0xf]
        %v687 = vld [vmem:[%s683 + $0xc] sm:$0xf]
        %v688 = vld [vmem:[%s683 + $0x10] sm:$0xf]
        %v689 = vld [vmem:[%s683 + $0x14] sm:$0xf]
        %v690 = vld [vmem:[%s683 + $0x18] sm:$0xf]
        %v691 = vld [vmem:[%s683 + $0x1c] sm:$0xf]
        %v692 = vld [vmem:[%s683 + $0x20] sm:$0xf]
        %v693 = vld [vmem:[%s683 + $0x24] sm:$0xf]
        %v694 = vld [vmem:[%s683 + $0x28] sm:$0xf]
        %v695 = vld [vmem:[%s683 + $0x2c] sm:$0xf]
        %s696 = scalar_lea.vmem %s599, 240 [#allocation2]
        %v697 = vld [vmem:[%s696] sm:$0xf]
        %v698 = vld [vmem:[%s696 + $0x4] sm:$0xf]
        %v699 = vld [vmem:[%s696 + $0x8] sm:$0xf]
        %v700 = vld [vmem:[%s696 + $0xc] sm:$0xf]
        %v701 = vld [vmem:[%s696 + $0x10] sm:$0xf]
        %v702 = vld [vmem:[%s696 + $0x14] sm:$0xf]
        %v703 = vld [vmem:[%s696 + $0x18] sm:$0xf]
        %v704 = vld [vmem:[%s696 + $0x1c] sm:$0xf]
        %v705 = vld [vmem:[%s696 + $0x20] sm:$0xf]
        %v706 = vld [vmem:[%s696 + $0x24] sm:$0xf]
        %v707 = vld [vmem:[%s696 + $0x28] sm:$0xf]
        %v708 = vld [vmem:[%s696 + $0x2c] sm:$0xf]
        %v709 = vld [vmem:[%s1] sm:$0xff]
        %v710 = vld [vmem:[%s1 + $0x8] sm:$0xff]
        %v711 = vld [vmem:[%s1 + $0x10] sm:$0xff]
        %v712 = vld [vmem:[%s1 + $0x18] sm:$0x33]
        %s713 = scalar_lea.vmem %s1, 32
        %v714 = vld [vmem:[%s713] sm:$0xff]
        %v715 = vld [vmem:[%s713 + $0x8] sm:$0xff]
        %v716 = vld [vmem:[%s713 + $0x10] sm:$0xff]
        %v717 = vld [vmem:[%s713 + $0x18] sm:$0x33]
        %v730 = vunpack.c.l.b16 %v671
        %v731 = vunpack.c.l.b16 %v672
        %v732 = vunpack.c.l.b16 %v673
        %v733 = vunpack.c.l.b16 %v674
        %v734 = vunpack.c.l.b16 %v675
        %v735 = vunpack.c.l.b16 %v676
        %v736 = vunpack.c.l.b16 %v677
        %v737 = vunpack.c.l.b16 %v678
        %v738 = vunpack.c.l.b16 %v679
        %v739 = vunpack.c.l.b16 %v680
        %v740 = vunpack.c.l.b16 %v681
        %v741 = vunpack.c.l.b16 %v682
        %v742 = vpack.c.b16 %v731, %v730
        %v743 = vpack.c.b16 %v733, %v732
        %v744 = vpack.c.b16 %v735, %v734
        %v745 = vpack.c.b16 %v737, %v736
        %v746 = vpack.c.b16 %v739, %v738
        %v747 = vpack.c.b16 %v741, %v740
        %v752 = vunpack.c.l.b16 %v714
        %v753 = vunpack.c.h.b16 %v714
        %v754 = vunpack.c.l.b16 %v715
        %v755 = vunpack.c.h.b16 %v715
        %v756 = vunpack.c.l.b16 %v716
        %v757 = vunpack.c.h.b16 %v716
        %v758 = vunpack.c.l.b16 %v717
        %v759 = vunpack.c.h.b16 %v717
        %v760 = vpack.c.b16 %v754, %v752
        %v761 = vpack.c.b16 %v755, %v753
        %v762 = vpack.c.b16 %v758, %v756
        %v763 = vpack.c.b16 %v759, %v757
        %vm766 = vcmask 228352
        %v768 = vsel %vm766, %v742, 0
        %v771 = vsel %vm766, %v743, 0
        %v774 = vsel %vm766, %v744, 0
        %v777 = vsel %vm766, %v745, 0
        %v780 = vsel %vm766, %v746, 0
        %v783 = vsel %vm766, %v747, 0
        %vm785 = vcmask 1045504
        %v787 = vsel %vm785, %v762, 0
        %v790 = vsel %vm785, %v763, 0
        %792 = vmatprep.subr.bf16.mxu0 %v761
        %793 = vmatpush1.bf16.msra.mxu0 %v760
        %794 = vmatprep.subr.bf16.mxu0 %v790
        %795 = vmatpush1.bf16.msra.mxu0 %v787
        %796 = vmatprep.subr.bf16.mxu0 0
        %797 = vmatpush1.bf16.msra.mxu0 0
        %798 = vmatprep.subr.bf16.mxu0 0
        %799 = vmatpush1.bf16.msra.mxu0 0
        %800 = vmatprep.subr.bf16.mxu0 0
        %801 = vmatpush1.bf16.msra.mxu0 0
        %802 = vmatprep.subr.bf16.mxu0 0
        %803 = vmatpush1.bf16.msra.mxu0 0
        %804 = vmatprep.subr.bf16.mxu0 0
        %805 = vmatpush1.bf16.msra.mxu0 0
        %806 = vmatprep.subr.bf16.mxu0 0
        %807 = vmatpush1.bf16.msra.mxu0 0
        %808 = vmatprep.subr.bf16.mxu0 0
        %809 = vmatpush1.bf16.msra.mxu0 0
        %810 = vmatprep.subr.bf16.mxu0 0
        %811 = vmatpush1.bf16.msra.mxu0 0
        %812 = vmatprep.subr.bf16.mxu0 0
        %813 = vmatpush1.bf16.msra.mxu0 0
        %814 = vmatprep.subr.bf16.mxu0 0
        %815 = vmatpush1.bf16.msra.mxu0 0
        %816 = vmatprep.subr.bf16.mxu0 0
        %817 = vmatpush1.bf16.msra.mxu0 0
        %818 = vmatprep.subr.bf16.mxu0 0
        %819 = vmatpush1.bf16.msra.mxu0 0
        %820 = vmatprep.subr.bf16.mxu0 0
        %821 = vmatpush1.bf16.msra.mxu0 0
        %822 = vmatprep.subr.bf16.mxu0 0
        %823 = vmatpush1.bf16.msra.mxu0 0
        %824 = vmatprep.mubr.bf16.mxu0 0
        %825 = vmatmul.mubr.bf16.gmra.mrb[0].mxu0 %v768
        %v826 = vpop.f32.mrb[0].mxu0
        %v827 = vadd.f32 0.0, %v826
        %v828 = vpop.f32.mrb[0].mxu0
        %v829 = vadd.f32 0.0, %v828
        %v830 = vpop.f32.mrb[0].mxu0
        %v831 = vadd.f32 0.0, %v830
        %v832 = vpop.f32.mrb[0].mxu0
        %v833 = vadd.f32 0.0, %v832
        %834 = vmatprep.mubr.bf16.mxu0 0
        %835 = vmatmul.mubr.bf16.gmra.mrb[0].mxu0 %v771
        %v836 = vpop.f32.mrb[0].mxu0
        %v837 = vadd.f32 0.0, %v836
        %v838 = vpop.f32.mrb[0].mxu0
        %v839 = vadd.f32 0.0, %v838
        %v840 = vpop.f32.mrb[0].mxu0
        %v841 = vadd.f32 0.0, %v840
        %v842 = vpop.f32.mrb[0].mxu0
        %v843 = vadd.f32 0.0, %v842
        %844 = vmatprep.mubr.bf16.mxu0 0
        %845 = vmatmul.mubr.bf16.gmra.mrb[0].mxu0 %v774
        %v846 = vpop.f32.mrb[0].mxu0
        %v847 = vadd.f32 0.0, %v846
        %v848 = vpop.f32.mrb[0].mxu0
        %v849 = vadd.f32 0.0, %v848
        %v850 = vpop.f32.mrb[0].mxu0
        %v851 = vadd.f32 0.0, %v850
        %v852 = vpop.f32.mrb[0].mxu0
        %v853 = vadd.f32 0.0, %v852
        %854 = vmatprep.mubr.bf16.mxu0 0
        %855 = vmatmul.mubr.bf16.gmra.mrb[0].mxu0 %v777
        %v856 = vpop.f32.mrb[0].mxu0
        %v857 = vadd.f32 0.0, %v856
        %v858 = vpop.f32.mrb[0].mxu0
        %v859 = vadd.f32 0.0, %v858
        %v860 = vpop.f32.mrb[0].mxu0
        %v861 = vadd.f32 0.0, %v860
        %v862 = vpop.f32.mrb[0].mxu0
        %v863 = vadd.f32 0.0, %v862
        %864 = vmatprep.mubr.bf16.mxu0 0
        %865 = vmatmul.mubr.bf16.gmra.mrb[0].mxu0 %v780
        %v866 = vpop.f32.mrb[0].mxu0
        %v867 = vadd.f32 0.0, %v866
        %v868 = vpop.f32.mrb[0].mxu0
        %v869 = vadd.f32 0.0, %v868
        %v870 = vpop.f32.mrb[0].mxu0
        %v871 = vadd.f32 0.0, %v870
        %v872 = vpop.f32.mrb[0].mxu0
        %v873 = vadd.f32 0.0, %v872
        %874 = vmatprep.mubr.bf16.mxu0 0
        %875 = vmatmul.mubr.bf16.gmra.mrb[0].mxu0 %v783
        %v876 = vpop.f32.mrb[0].mxu0
        %v877 = vadd.f32 0.0, %v876
        %v878 = vpop.f32.mrb[0].mxu0
        %v879 = vadd.f32 0.0, %v878
        %v880 = vpop.f32.mrb[0].mxu0
        %v881 = vadd.f32 0.0, %v880
        %v882 = vpop.f32.mrb[0].mxu0
        %v883 = vadd.f32 0.0, %v882
        %884 = vdwg.mxu0
        %v897 = vunpack.c.l.b16 %v632
        %v898 = vunpack.c.l.b16 %v633
        %v899 = vunpack.c.l.b16 %v634
        %v900 = vunpack.c.l.b16 %v635
        %v901 = vunpack.c.l.b16 %v636
        %v902 = vunpack.c.l.b16 %v637
        %v903 = vunpack.c.l.b16 %v638
        %v904 = vunpack.c.l.b16 %v639
        %v905 = vunpack.c.l.b16 %v640
        %v906 = vunpack.c.l.b16 %v641
        %v907 = vunpack.c.l.b16 %v642
        %v908 = vunpack.c.l.b16 %v643
        %v909 = vpack.c.b16 %v898, %v897
        %v910 = vpack.c.b16 %v900, %v899
        %v911 = vpack.c.b16 %v902, %v901
        %v912 = vpack.c.b16 %v904, %v903
        %v913 = vpack.c.b16 %v906, %v905
        %v914 = vpack.c.b16 %v908, %v907
        %v919 = vunpack.c.l.b16 %v709
        %v920 = vunpack.c.h.b16 %v709
        %v921 = vunpack.c.l.b16 %v710
        %v922 = vunpack.c.h.b16 %v710
        %v923 = vunpack.c.l.b16 %v711
        %v924 = vunpack.c.h.b16 %v711
        %v925 = vunpack.c.l.b16 %v712
        %v926 = vunpack.c.h.b16 %v712
        %v927 = vpack.c.b16 %v921, %v919
        %v928 = vpack.c.b16 %v922, %v920
        %v929 = vpack.c.b16 %v925, %v923
        %v930 = vpack.c.b16 %v926, %v924
        %v934 = vsel %vm766, %v909, 0
        %v937 = vsel %vm766, %v910, 0
        %v940 = vsel %vm766, %v911, 0
        %v943 = vsel %vm766, %v912, 0
        %v946 = vsel %vm766, %v913, 0
        %v949 = vsel %vm766, %v914, 0
        %v952 = vsel %vm785, %v929, 0
        %v955 = vsel %vm785, %v930, 0
        %957 = vmatprep.subr.bf16.mxu0 %v928
        %958 = vmatpush1.bf16.msra.mxu0 %v927
        %959 = vmatprep.subr.bf16.mxu0 %v955
        %960 = vmatpush1.bf16.msra.mxu0 %v952
        %961 = vmatprep.subr.bf16.mxu0 0
        %962 = vmatpush1.bf16.msra.mxu0 0
        %963 = vmatprep.subr.bf16.mxu0 0
        %964 = vmatpush1.bf16.msra.mxu0 0
        %965 = vmatprep.subr.bf16.mxu0 0
        %966 = vmatpush1.bf16.msra.mxu0 0
        %967 = vmatprep.subr.bf16.mxu0 0
        %968 = vmatpush1.bf16.msra.mxu0 0
        %969 = vmatprep.subr.bf16.mxu0 0
        %970 = vmatpush1.bf16.msra.mxu0 0
        %971 = vmatprep.subr.bf16.mxu0 0
        %972 = vmatpush1.bf16.msra.mxu0 0
        %973 = vmatprep.subr.bf16.mxu0 0
        %974 = vmatpush1.bf16.msra.mxu0 0
        %975 = vmatprep.subr.bf16.mxu0 0
        %976 = vmatpush1.bf16.msra.mxu0 0
        %977 = vmatprep.subr.bf16.mxu0 0
        %978 = vmatpush1.bf16.msra.mxu0 0
        %979 = vmatprep.subr.bf16.mxu0 0
        %980 = vmatpush1.bf16.msra.mxu0 0
        %981 = vmatprep.subr.bf16.mxu0 0
        %982 = vmatpush1.bf16.msra.mxu0 0
        %983 = vmatprep.subr.bf16.mxu0 0
        %984 = vmatpush1.bf16.msra.mxu0 0
        %985 = vmatprep.subr.bf16.mxu0 0
        %986 = vmatpush1.bf16.msra.mxu0 0
        %987 = vmatprep.subr.bf16.mxu0 0
        %988 = vmatpush1.bf16.msra.mxu0 0
        %989 = vmatprep.mubr.bf16.mxu0 0
        %990 = vmatmul.mubr.bf16.gmra.mrb[0].mxu0 %v934
        %v991 = vpop.f32.mrb[0].mxu0
        %v992 = vadd.f32 %v827, %v991
        %v993 = vpop.f32.mrb[0].mxu0
        %v994 = vadd.f32 %v829, %v993
        %v995 = vpop.f32.mrb[0].mxu0
        %v996 = vadd.f32 %v831, %v995
        %v997 = vpop.f32.mrb[0].mxu0
        %v998 = vadd.f32 %v833, %v997
        %999 = vmatprep.mubr.bf16.mxu0 0
        %1000 = vmatmul.mubr.bf16.gmra.mrb[0].mxu0 %v937
        %v1001 = vpop.f32.mrb[0].mxu0
        %v1002 = vadd.f32 %v837, %v1001
        %v1003 = vpop.f32.mrb[0].mxu0
        %v1004 = vadd.f32 %v839, %v1003
        %v1005 = vpop.f32.mrb[0].mxu0
        %v1006 = vadd.f32 %v841, %v1005
        %v1007 = vpop.f32.mrb[0].mxu0
        %v1008 = vadd.f32 %v843, %v1007
        %1009 = vmatprep.mubr.bf16.mxu0 0
        %1010 = vmatmul.mubr.bf16.gmra.mrb[0].mxu0 %v940
        %v1011 = vpop.f32.mrb[0].mxu0
        %v1012 = vadd.f32 %v847, %v1011
        %v1013 = vpop.f32.mrb[0].mxu0
        %v1014 = vadd.f32 %v849, %v1013
        %v1015 = vpop.f32.mrb[0].mxu0
        %v1016 = vadd.f32 %v851, %v1015
        %v1017 = vpop.f32.mrb[0].mxu0
        %v1018 = vadd.f32 %v853, %v1017
        %1019 = vmatprep.mubr.bf16.mxu0 0
        %1020 = vmatmul.mubr.bf16.gmra.mrb[0].mxu0 %v943
        %v1021 = vpop.f32.mrb[0].mxu0
        %v1022 = vadd.f32 %v857, %v1021
        %v1023 = vpop.f32.mrb[0].mxu0
        %v1024 = vadd.f32 %v859, %v1023
        %v1025 = vpop.f32.mrb[0].mxu0
        %v1026 = vadd.f32 %v861, %v1025
        %v1027 = vpop.f32.mrb[0].mxu0
        %v1028 = vadd.f32 %v863, %v1027
        %1029 = vmatprep.mubr.bf16.mxu0 0
        %1030 = vmatmul.mubr.bf16.gmra.mrb[0].mxu0 %v946
        %v1031 = vpop.f32.mrb[0].mxu0
        %v1032 = vadd.f32 %v867, %v1031
        %v1033 = vpop.f32.mrb[0].mxu0
        %v1034 = vadd.f32 %v869, %v1033
        %v1035 = vpop.f32.mrb[0].mxu0
        %v1036 = vadd.f32 %v871, %v1035
        %v1037 = vpop.f32.mrb[0].mxu0
        %v1038 = vadd.f32 %v873, %v1037
        %1039 = vmatprep.mubr.bf16.mxu0 0
        %1040 = vmatmul.mubr.bf16.gmra.mrb[0].mxu0 %v949
        %v1041 = vpop.f32.mrb[0].mxu0
        %v1042 = vadd.f32 %v877, %v1041
        %v1043 = vpop.f32.mrb[0].mxu0
        %v1044 = vadd.f32 %v879, %v1043
        %v1045 = vpop.f32.mrb[0].mxu0
        %v1046 = vadd.f32 %v881, %v1045
        %v1047 = vpop.f32.mrb[0].mxu0
        %v1048 = vadd.f32 %v883, %v1047
        %1049 = vdwg.mxu0
        %s1050 = scalar_lea.vmem %s1, 64
        %v1051 = vld [vmem:[%s1050] sm:$0xff]
        %v1052 = vld [vmem:[%s1050 + $0x8] sm:$0xff]
        %v1053 = vld [vmem:[%s1050 + $0x10] sm:$0xff]
        %v1054 = vld [vmem:[%s1050 + $0x18] sm:$0x33]
        %v1067 = vunpack.c.l.b16 %v645
        %v1068 = vunpack.c.l.b16 %v646
        %v1069 = vunpack.c.l.b16 %v647
        %v1070 = vunpack.c.l.b16 %v648
        %v1071 = vunpack.c.l.b16 %v649
        %v1072 = vunpack.c.l.b16 %v650
        %v1073 = vunpack.c.l.b16 %v651
        %v1074 = vunpack.c.l.b16 %v652
        %v1075 = vunpack.c.l.b16 %v653
        %v1076 = vunpack.c.l.b16 %v654
        %v1077 = vunpack.c.l.b16 %v655
        %v1078 = vunpack.c.l.b16 %v656
        %v1079 = vpack.c.b16 %v1068, %v1067
        %v1080 = vpack.c.b16 %v1070, %v1069
        %v1081 = vpack.c.b16 %v1072, %v1071
        %v1082 = vpack.c.b16 %v1074, %v1073
        %v1083 = vpack.c.b16 %v1076, %v1075
        %v1084 = vpack.c.b16 %v1078, %v1077
        %v1089 = vunpack.c.l.b16 %v1051
        %v1090 = vunpack.c.h.b16 %v1051
        %v1091 = vunpack.c.l.b16 %v1052
        %v1092 = vunpack.c.h.b16 %v1052
        %v1093 = vunpack.c.l.b16 %v1053
        %v1094 = vunpack.c.h.b16 %v1053
        %v1095 = vunpack.c.l.b16 %v1054
        %v1096 = vunpack.c.h.b16 %v1054
        %v1097 = vpack.c.b16 %v1091, %v1089
        %v1098 = vpack.c.b16 %v1092, %v1090
        %v1099 = vpack.c.b16 %v1095, %v1093
        %v1100 = vpack.c.b16 %v1096, %v1094
        %v1104 = vsel %vm766, %v1079, 0
        %v1107 = vsel %vm766, %v1080, 0
        %v1110 = vsel %vm766, %v1081, 0
        %v1113 = vsel %vm766, %v1082, 0
        %v1116 = vsel %vm766, %v1083, 0
        %v1119 = vsel %vm766, %v1084, 0
        %v1122 = vsel %vm785, %v1099, 0
        %v1125 = vsel %vm785, %v1100, 0
        %1127 = vmatprep.subr.bf16.mxu0 %v1098
        %1128 = vmatpush1.bf16.msra.mxu0 %v1097
        %1129 = vmatprep.subr.bf16.mxu0 %v1125
        %1130 = vmatpush1.bf16.msra.mxu0 %v1122
        %1131 = vmatprep.subr.bf16.mxu0 0
        %1132 = vmatpush1.bf16.msra.mxu0 0
        %1133 = vmatprep.subr.bf16.mxu0 0
        %1134 = vmatpush1.bf16.msra.mxu0 0
        %1135 = vmatprep.subr.bf16.mxu0 0
        %1136 = vmatpush1.bf16.msra.mxu0 0
        %1137 = vmatprep.subr.bf16.mxu0 0
        %1138 = vmatpush1.bf16.msra.mxu0 0
        %1139 = vmatprep.subr.bf16.mxu0 0
        %1140 = vmatpush1.bf16.msra.mxu0 0
        %1141 = vmatprep.subr.bf16.mxu0 0
        %1142 = vmatpush1.bf16.msra.mxu0 0
        %1143 = vmatprep.subr.bf16.mxu0 0
        %1144 = vmatpush1.bf16.msra.mxu0 0
        %1145 = vmatprep.subr.bf16.mxu0 0
        %1146 = vmatpush1.bf16.msra.mxu0 0
        %1147 = vmatprep.subr.bf16.mxu0 0
        %1148 = vmatpush1.bf16.msra.mxu0 0
        %1149 = vmatprep.subr.bf16.mxu0 0
        %1150 = vmatpush1.bf16.msra.mxu0 0
        %1151 = vmatprep.subr.bf16.mxu0 0
        %1152 = vmatpush1.bf16.msra.mxu0 0
        %1153 = vmatprep.subr.bf16.mxu0 0
        %1154 = vmatpush1.bf16.msra.mxu0 0
        %1155 = vmatprep.subr.bf16.mxu0 0
        %1156 = vmatpush1.bf16.msra.mxu0 0
        %1157 = vmatprep.subr.bf16.mxu0 0
        %1158 = vmatpush1.bf16.msra.mxu0 0
        %1159 = vmatprep.mubr.bf16.mxu0 0
        %1160 = vmatmul.mubr.bf16.gmra.mrb[0].mxu0 %v1104
        %v1161 = vpop.f32.mrb[0].mxu0
        %v1162 = vadd.f32 0.0, %v1161
        %v1163 = vpop.f32.mrb[0].mxu0
        %v1164 = vadd.f32 0.0, %v1163
        %v1165 = vpop.f32.mrb[0].mxu0
        %v1166 = vadd.f32 0.0, %v1165
        %v1167 = vpop.f32.mrb[0].mxu0
        %v1168 = vadd.f32 0.0, %v1167
        %1169 = vmatprep.mubr.bf16.mxu0 0
        %1170 = vmatmul.mubr.bf16.gmra.mrb[0].mxu0 %v1107
        %v1171 = vpop.f32.mrb[0].mxu0
        %v1172 = vadd.f32 0.0, %v1171
        %v1173 = vpop.f32.mrb[0].mxu0
        %v1174 = vadd.f32 0.0, %v1173
        %v1175 = vpop.f32.mrb[0].mxu0
        %v1176 = vadd.f32 0.0, %v1175
        %v1177 = vpop.f32.mrb[0].mxu0
        %v1178 = vadd.f32 0.0, %v1177
        %1179 = vmatprep.mubr.bf16.mxu0 0
        %1180 = vmatmul.mubr.bf16.gmra.mrb[0].mxu0 %v1110
        %v1181 = vpop.f32.mrb[0].mxu0
        %v1182 = vadd.f32 0.0, %v1181
        %v1183 = vpop.f32.mrb[0].mxu0
        %v1184 = vadd.f32 0.0, %v1183
        %v1185 = vpop.f32.mrb[0].mxu0
        %v1186 = vadd.f32 0.0, %v1185
        %v1187 = vpop.f32.mrb[0].mxu0
        %v1188 = vadd.f32 0.0, %v1187
        %1189 = vmatprep.mubr.bf16.mxu0 0
        %1190 = vmatmul.mubr.bf16.gmra.mrb[0].mxu0 %v1113
        %v1191 = vpop.f32.mrb[0].mxu0
        %v1192 = vadd.f32 0.0, %v1191
        %v1193 = vpop.f32.mrb[0].mxu0
        %v1194 = vadd.f32 0.0, %v1193
        %v1195 = vpop.f32.mrb[0].mxu0
        %v1196 = vadd.f32 0.0, %v1195
        %v1197 = vpop.f32.mrb[0].mxu0
        %v1198 = vadd.f32 0.0, %v1197
        %1199 = vmatprep.mubr.bf16.mxu0 0
        %1200 = vmatmul.mubr.bf16.gmra.mrb[0].mxu0 %v1116
        %v1201 = vpop.f32.mrb[0].mxu0
        %v1202 = vadd.f32 0.0, %v1201
        %v1203 = vpop.f32.mrb[0].mxu0
        %v1204 = vadd.f32 0.0, %v1203
        %v1205 = vpop.f32.mrb[0].mxu0
        %v1206 = vadd.f32 0.0, %v1205
        %v1207 = vpop.f32.mrb[0].mxu0
        %v1208 = vadd.f32 0.0, %v1207
        %1209 = vmatprep.mubr.bf16.mxu0 0
        %1210 = vmatmul.mubr.bf16.gmra.mrb[0].mxu0 %v1119
        %v1211 = vpop.f32.mrb[0].mxu0
        %v1212 = vadd.f32 0.0, %v1211
        %v1213 = vpop.f32.mrb[0].mxu0
        %v1214 = vadd.f32 0.0, %v1213
        %v1215 = vpop.f32.mrb[0].mxu0
        %v1216 = vadd.f32 0.0, %v1215
        %v1217 = vpop.f32.mrb[0].mxu0
        %v1218 = vadd.f32 0.0, %v1217
        %1219 = vdwg.mxu0
        %v1220 = vadd.f32 %v992, %v1162
        %v1221 = vadd.f32 %v994, %v1164
        %v1222 = vadd.f32 %v996, %v1166
        %v1223 = vadd.f32 %v998, %v1168
        %v1224 = vadd.f32 %v1002, %v1172
        %v1225 = vadd.f32 %v1004, %v1174
        %v1226 = vadd.f32 %v1006, %v1176
        %v1227 = vadd.f32 %v1008, %v1178
        %v1228 = vadd.f32 %v1012, %v1182
        %v1229 = vadd.f32 %v1014, %v1184
        %v1230 = vadd.f32 %v1016, %v1186
        %v1231 = vadd.f32 %v1018, %v1188
        %v1232 = vadd.f32 %v1022, %v1192
        %v1233 = vadd.f32 %v1024, %v1194
        %v1234 = vadd.f32 %v1026, %v1196
        %v1235 = vadd.f32 %v1028, %v1198
        %v1236 = vadd.f32 %v1032, %v1202
        %v1237 = vadd.f32 %v1034, %v1204
        %v1238 = vadd.f32 %v1036, %v1206
        %v1239 = vadd.f32 %v1038, %v1208
        %v1240 = vadd.f32 %v1042, %v1212
        %v1241 = vadd.f32 %v1044, %v1214
        %v1242 = vadd.f32 %v1046, %v1216
        %v1243 = vadd.f32 %v1048, %v1218
        %s1244 = scalar_lea.vmem %s1, 96
        %v1245 = vld [vmem:[%s1244] sm:$0xff]
        %v1246 = vld [vmem:[%s1244 + $0x8] sm:$0xff]
        %v1247 = vld [vmem:[%s1244 + $0x10] sm:$0xff]
        %v1248 = vld [vmem:[%s1244 + $0x18] sm:$0x33]
        %v1261 = vunpack.c.l.b16 %v684
        %v1262 = vunpack.c.l.b16 %v685
        %v1263 = vunpack.c.l.b16 %v686
        %v1264 = vunpack.c.l.b16 %v687
        %v1265 = vunpack.c.l.b16 %v688
        %v1266 = vunpack.c.l.b16 %v689
        %v1267 = vunpack.c.l.b16 %v690
        %v1268 = vunpack.c.l.b16 %v691
        %v1269 = vunpack.c.l.b16 %v692
        %v1270 = vunpack.c.l.b16 %v693
        %v1271 = vunpack.c.l.b16 %v694
        %v1272 = vunpack.c.l.b16 %v695
        %v1273 = vpack.c.b16 %v1262, %v1261
        %v1274 = vpack.c.b16 %v1264, %v1263
        %v1275 = vpack.c.b16 %v1266, %v1265
        %v1276 = vpack.c.b16 %v1268, %v1267
        %v1277 = vpack.c.b16 %v1270, %v1269
        %v1278 = vpack.c.b16 %v1272, %v1271
        %v1283 = vunpack.c.l.b16 %v1245
        %v1284 = vunpack.c.h.b16 %v1245
        %v1285 = vunpack.c.l.b16 %v1246
        %v1286 = vunpack.c.h.b16 %v1246
        %v1287 = vunpack.c.l.b16 %v1247
        %v1288 = vunpack.c.h.b16 %v1247
        %v1289 = vunpack.c.l.b16 %v1248
        %v1290 = vunpack.c.h.b16 %v1248
        %v1291 = vpack.c.b16 %v1285, %v1283
        %v1292 = vpack.c.b16 %v1286, %v1284
        %v1293 = vpack.c.b16 %v1289, %v1287
        %v1294 = vpack.c.b16 %v1290, %v1288
        %v1298 = vsel %vm766, %v1273, 0
        %v1301 = vsel %vm766, %v1274, 0
        %v1304 = vsel %vm766, %v1275, 0
        %v1307 = vsel %vm766, %v1276, 0
        %v1310 = vsel %vm766, %v1277, 0
        %v1313 = vsel %vm766, %v1278, 0
        %v1316 = vsel %vm785, %v1293, 0
        %v1319 = vsel %vm785, %v1294, 0
        %1321 = vmatprep.subr.bf16.mxu0 %v1292
        %1322 = vmatpush1.bf16.msra.mxu0 %v1291
        %1323 = vmatprep.subr.bf16.mxu0 %v1319
        %1324 = vmatpush1.bf16.msra.mxu0 %v1316
        %1325 = vmatprep.subr.bf16.mxu0 0
        %1326 = vmatpush1.bf16.msra.mxu0 0
        %1327 = vmatprep.subr.bf16.mxu0 0
        %1328 = vmatpush1.bf16.msra.mxu0 0
        %1329 = vmatprep.subr.bf16.mxu0 0
        %1330 = vmatpush1.bf16.msra.mxu0 0
        %1331 = vmatprep.subr.bf16.mxu0 0
        %1332 = vmatpush1.bf16.msra.mxu0 0
        %1333 = vmatprep.subr.bf16.mxu0 0
        %1334 = vmatpush1.bf16.msra.mxu0 0
        %1335 = vmatprep.subr.bf16.mxu0 0
        %1336 = vmatpush1.bf16.msra.mxu0 0
        %1337 = vmatprep.subr.bf16.mxu0 0
        %1338 = vmatpush1.bf16.msra.mxu0 0
        %1339 = vmatprep.subr.bf16.mxu0 0
        %1340 = vmatpush1.bf16.msra.mxu0 0
        %1341 = vmatprep.subr.bf16.mxu0 0
        %1342 = vmatpush1.bf16.msra.mxu0 0
        %1343 = vmatprep.subr.bf16.mxu0 0
        %1344 = vmatpush1.bf16.msra.mxu0 0
        %1345 = vmatprep.subr.bf16.mxu0 0
        %1346 = vmatpush1.bf16.msra.mxu0 0
        %1347 = vmatprep.subr.bf16.mxu0 0
        %1348 = vmatpush1.bf16.msra.mxu0 0
        %1349 = vmatprep.subr.bf16.mxu0 0
        %1350 = vmatpush1.bf16.msra.mxu0 0
        %1351 = vmatprep.subr.bf16.mxu0 0
        %1352 = vmatpush1.bf16.msra.mxu0 0
        %1353 = vmatprep.mubr.bf16.mxu0 0
        %1354 = vmatmul.mubr.bf16.gmra.mrb[0].mxu0 %v1298
        %v1355 = vpop.f32.mrb[0].mxu0
        %v1356 = vadd.f32 0.0, %v1355
        %v1357 = vpop.f32.mrb[0].mxu0
        %v1358 = vadd.f32 0.0, %v1357
        %v1359 = vpop.f32.mrb[0].mxu0
        %v1360 = vadd.f32 0.0, %v1359
        %v1361 = vpop.f32.mrb[0].mxu0
        %v1362 = vadd.f32 0.0, %v1361
        %1363 = vmatprep.mubr.bf16.mxu0 0
        %1364 = vmatmul.mubr.bf16.gmra.mrb[0].mxu0 %v1301
        %v1365 = vpop.f32.mrb[0].mxu0
        %v1366 = vadd.f32 0.0, %v1365
        %v1367 = vpop.f32.mrb[0].mxu0
        %v1368 = vadd.f32 0.0, %v1367
        %v1369 = vpop.f32.mrb[0].mxu0
        %v1370 = vadd.f32 0.0, %v1369
        %v1371 = vpop.f32.mrb[0].mxu0
        %v1372 = vadd.f32 0.0, %v1371
        %1373 = vmatprep.mubr.bf16.mxu0 0
        %1374 = vmatmul.mubr.bf16.gmra.mrb[0].mxu0 %v1304
        %v1375 = vpop.f32.mrb[0].mxu0
        %v1376 = vadd.f32 0.0, %v1375
        %v1377 = vpop.f32.mrb[0].mxu0
        %v1378 = vadd.f32 0.0, %v1377
        %v1379 = vpop.f32.mrb[0].mxu0
        %v1380 = vadd.f32 0.0, %v1379
        %v1381 = vpop.f32.mrb[0].mxu0
        %v1382 = vadd.f32 0.0, %v1381
        %1383 = vmatprep.mubr.bf16.mxu0 0
        %1384 = vmatmul.mubr.bf16.gmra.mrb[0].mxu0 %v1307
        %v1385 = vpop.f32.mrb[0].mxu0
        %v1386 = vadd.f32 0.0, %v1385
        %v1387 = vpop.f32.mrb[0].mxu0
        %v1388 = vadd.f32 0.0, %v1387
        %v1389 = vpop.f32.mrb[0].mxu0
        %v1390 = vadd.f32 0.0, %v1389
        %v1391 = vpop.f32.mrb[0].mxu0
        %v1392 = vadd.f32 0.0, %v1391
        %1393 = vmatprep.mubr.bf16.mxu0 0
        %1394 = vmatmul.mubr.bf16.gmra.mrb[0].mxu0 %v1310
        %v1395 = vpop.f32.mrb[0].mxu0
        %v1396 = vadd.f32 0.0, %v1395
        %v1397 = vpop.f32.mrb[0].mxu0
        %v1398 = vadd.f32 0.0, %v1397
        %v1399 = vpop.f32.mrb[0].mxu0
        %v1400 = vadd.f32 0.0, %v1399
        %v1401 = vpop.f32.mrb[0].mxu0
        %v1402 = vadd.f32 0.0, %v1401
        %1403 = vmatprep.mubr.bf16.mxu0 0
        %1404 = vmatmul.mubr.bf16.gmra.mrb[0].mxu0 %v1313
        %v1405 = vpop.f32.mrb[0].mxu0
        %v1406 = vadd.f32 0.0, %v1405
        %v1407 = vpop.f32.mrb[0].mxu0
        %v1408 = vadd.f32 0.0, %v1407
        %v1409 = vpop.f32.mrb[0].mxu0
        %v1410 = vadd.f32 0.0, %v1409
        %v1411 = vpop.f32.mrb[0].mxu0
        %v1412 = vadd.f32 0.0, %v1411
        %1413 = vdwg.mxu0
        %v1414 = vadd.f32 %v1220, %v1356
        %v1415 = vadd.f32 %v1221, %v1358
        %v1416 = vadd.f32 %v1222, %v1360
        %v1417 = vadd.f32 %v1223, %v1362
        %v1418 = vadd.f32 %v1224, %v1366
        %v1419 = vadd.f32 %v1225, %v1368
        %v1420 = vadd.f32 %v1226, %v1370
        %v1421 = vadd.f32 %v1227, %v1372
        %v1422 = vadd.f32 %v1228, %v1376
        %v1423 = vadd.f32 %v1229, %v1378
        %v1424 = vadd.f32 %v1230, %v1380
        %v1425 = vadd.f32 %v1231, %v1382
        %v1426 = vadd.f32 %v1232, %v1386
        %v1427 = vadd.f32 %v1233, %v1388
        %v1428 = vadd.f32 %v1234, %v1390
        %v1429 = vadd.f32 %v1235, %v1392
        %v1430 = vadd.f32 %v1236, %v1396
        %v1431 = vadd.f32 %v1237, %v1398
        %v1432 = vadd.f32 %v1238, %v1400
        %v1433 = vadd.f32 %v1239, %v1402
        %v1434 = vadd.f32 %v1240, %v1406
        %v1435 = vadd.f32 %v1241, %v1408
        %v1436 = vadd.f32 %v1242, %v1410
        %v1437 = vadd.f32 %v1243, %v1412
        %s1438 = scalar_lea.vmem %s1, 128
        %v1439 = vld [vmem:[%s1438] sm:$0xff]
        %v1440 = vld [vmem:[%s1438 + $0x8] sm:$0xff]
        %v1441 = vld [vmem:[%s1438 + $0x10] sm:$0xff]
        %v1442 = vld [vmem:[%s1438 + $0x18] sm:$0x33]
        %v1455 = vunpack.c.l.b16 %v658
        %v1456 = vunpack.c.l.b16 %v659
        %v1457 = vunpack.c.l.b16 %v660
        %v1458 = vunpack.c.l.b16 %v661
        %v1459 = vunpack.c.l.b16 %v662
        %v1460 = vunpack.c.l.b16 %v663
        %v1461 = vunpack.c.l.b16 %v664
        %v1462 = vunpack.c.l.b16 %v665
        %v1463 = vunpack.c.l.b16 %v666
        %v1464 = vunpack.c.l.b16 %v667
        %v1465 = vunpack.c.l.b16 %v668
        %v1466 = vunpack.c.l.b16 %v669
        %v1467 = vpack.c.b16 %v1456, %v1455
        %v1468 = vpack.c.b16 %v1458, %v1457
        %v1469 = vpack.c.b16 %v1460, %v1459
        %v1470 = vpack.c.b16 %v1462, %v1461
        %v1471 = vpack.c.b16 %v1464, %v1463
        %v1472 = vpack.c.b16 %v1466, %v1465
        %v1477 = vunpack.c.l.b16 %v1439
        %v1478 = vunpack.c.h.b16 %v1439
        %v1479 = vunpack.c.l.b16 %v1440
        %v1480 = vunpack.c.h.b16 %v1440
        %v1481 = vunpack.c.l.b16 %v1441
        %v1482 = vunpack.c.h.b16 %v1441
        %v1483 = vunpack.c.l.b16 %v1442
        %v1484 = vunpack.c.h.b16 %v1442
        %v1485 = vpack.c.b16 %v1479, %v1477
        %v1486 = vpack.c.b16 %v1480, %v1478
        %v1487 = vpack.c.b16 %v1483, %v1481
        %v1488 = vpack.c.b16 %v1484, %v1482
        %v1492 = vsel %vm766, %v1467, 0
        %v1495 = vsel %vm766, %v1468, 0
        %v1498 = vsel %vm766, %v1469, 0
        %v1501 = vsel %vm766, %v1470, 0
        %v1504 = vsel %vm766, %v1471, 0
        %v1507 = vsel %vm766, %v1472, 0
        %v1510 = vsel %vm785, %v1487, 0
        %v1513 = vsel %vm785, %v1488, 0
        %1515 = vmatprep.subr.bf16.mxu0 %v1486
        %1516 = vmatpush1.bf16.msra.mxu0 %v1485
        %1517 = vmatprep.subr.bf16.mxu0 %v1513
        %1518 = vmatpush1.bf16.msra.mxu0 %v1510
        %1519 = vmatprep.subr.bf16.mxu0 0
        %1520 = vmatpush1.bf16.msra.mxu0 0
        %1521 = vmatprep.subr.bf16.mxu0 0
        %1522 = vmatpush1.bf16.msra.mxu0 0
        %1523 = vmatprep.subr.bf16.mxu0 0
        %1524 = vmatpush1.bf16.msra.mxu0 0
        %1525 = vmatprep.subr.bf16.mxu0 0
        %1526 = vmatpush1.bf16.msra.mxu0 0
        %1527 = vmatprep.subr.bf16.mxu0 0
        %1528 = vmatpush1.bf16.msra.mxu0 0
        %1529 = vmatprep.subr.bf16.mxu0 0
        %1530 = vmatpush1.bf16.msra.mxu0 0
        %1531 = vmatprep.subr.bf16.mxu0 0
        %1532 = vmatpush1.bf16.msra.mxu0 0
        %1533 = vmatprep.subr.bf16.mxu0 0
        %1534 = vmatpush1.bf16.msra.mxu0 0
        %1535 = vmatprep.subr.bf16.mxu0 0
        %1536 = vmatpush1.bf16.msra.mxu0 0
        %1537 = vmatprep.subr.bf16.mxu0 0
        %1538 = vmatpush1.bf16.msra.mxu0 0
        %1539 = vmatprep.subr.bf16.mxu0 0
        %1540 = vmatpush1.bf16.msra.mxu0 0
        %1541 = vmatprep.subr.bf16.mxu0 0
        %1542 = vmatpush1.bf16.msra.mxu0 0
        %1543 = vmatprep.subr.bf16.mxu0 0
        %1544 = vmatpush1.bf16.msra.mxu0 0
        %1545 = vmatprep.subr.bf16.mxu0 0
        %1546 = vmatpush1.bf16.msra.mxu0 0
        %1547 = vmatprep.mubr.bf16.mxu0 0
        %1548 = vmatmul.mubr.bf16.gmra.mrb[0].mxu0 %v1492
        %v1549 = vpop.f32.mrb[0].mxu0
        %v1550 = vadd.f32 0.0, %v1549
        %v1551 = vpop.f32.mrb[0].mxu0
        %v1552 = vadd.f32 0.0, %v1551
        %v1553 = vpop.f32.mrb[0].mxu0
        %v1554 = vadd.f32 0.0, %v1553
        %v1555 = vpop.f32.mrb[0].mxu0
        %v1556 = vadd.f32 0.0, %v1555
        %1557 = vmatprep.mubr.bf16.mxu0 0
        %1558 = vmatmul.mubr.bf16.gmra.mrb[0].mxu0 %v1495
        %v1559 = vpop.f32.mrb[0].mxu0
        %v1560 = vadd.f32 0.0, %v1559
        %v1561 = vpop.f32.mrb[0].mxu0
        %v1562 = vadd.f32 0.0, %v1561
        %v1563 = vpop.f32.mrb[0].mxu0
        %v1564 = vadd.f32 0.0, %v1563
        %v1565 = vpop.f32.mrb[0].mxu0
        %v1566 = vadd.f32 0.0, %v1565
        %1567 = vmatprep.mubr.bf16.mxu0 0
        %1568 = vmatmul.mubr.bf16.gmra.mrb[0].mxu0 %v1498
        %v1569 = vpop.f32.mrb[0].mxu0
        %v1570 = vadd.f32 0.0, %v1569
        %v1571 = vpop.f32.mrb[0].mxu0
        %v1572 = vadd.f32 0.0, %v1571
        %v1573 = vpop.f32.mrb[0].mxu0
        %v1574 = vadd.f32 0.0, %v1573
        %v1575 = vpop.f32.mrb[0].mxu0
        %v1576 = vadd.f32 0.0, %v1575
        %1577 = vmatprep.mubr.bf16.mxu0 0
        %1578 = vmatmul.mubr.bf16.gmra.mrb[0].mxu0 %v1501
        %v1579 = vpop.f32.mrb[0].mxu0
        %v1580 = vadd.f32 0.0, %v1579
        %v1581 = vpop.f32.mrb[0].mxu0
        %v1582 = vadd.f32 0.0, %v1581
        %v1583 = vpop.f32.mrb[0].mxu0
        %v1584 = vadd.f32 0.0, %v1583
        %v1585 = vpop.f32.mrb[0].mxu0
        %v1586 = vadd.f32 0.0, %v1585
        %1587 = vmatprep.mubr.bf16.mxu0 0
        %1588 = vmatmul.mubr.bf16.gmra.mrb[0].mxu0 %v1504
        %v1589 = vpop.f32.mrb[0].mxu0
        %v1590 = vadd.f32 0.0, %v1589
        %v1591 = vpop.f32.mrb[0].mxu0
        %v1592 = vadd.f32 0.0, %v1591
        %v1593 = vpop.f32.mrb[0].mxu0
        %v1594 = vadd.f32 0.0, %v1593
        %v1595 = vpop.f32.mrb[0].mxu0
        %v1596 = vadd.f32 0.0, %v1595
        %1597 = vmatprep.mubr.bf16.mxu0 0
        %1598 = vmatmul.mubr.bf16.gmra.mrb[0].mxu0 %v1507
        %v1599 = vpop.f32.mrb[0].mxu0
        %v1600 = vadd.f32 0.0, %v1599
        %v1601 = vpop.f32.mrb[0].mxu0
        %v1602 = vadd.f32 0.0, %v1601
        %v1603 = vpop.f32.mrb[0].mxu0
        %v1604 = vadd.f32 0.0, %v1603
        %v1605 = vpop.f32.mrb[0].mxu0
        %v1606 = vadd.f32 0.0, %v1605
        %1607 = vdwg.mxu0
        %v1608 = vadd.f32 %v1414, %v1550
        %v1609 = vadd.f32 %v1415, %v1552
        %v1610 = vadd.f32 %v1416, %v1554
        %v1611 = vadd.f32 %v1417, %v1556
        %v1612 = vadd.f32 %v1418, %v1560
        %v1613 = vadd.f32 %v1419, %v1562
        %v1614 = vadd.f32 %v1420, %v1564
        %v1615 = vadd.f32 %v1421, %v1566
        %v1616 = vadd.f32 %v1422, %v1570
        %v1617 = vadd.f32 %v1423, %v1572
        %v1618 = vadd.f32 %v1424, %v1574
        %v1619 = vadd.f32 %v1425, %v1576
        %v1620 = vadd.f32 %v1426, %v1580
        %v1621 = vadd.f32 %v1427, %v1582
        %v1622 = vadd.f32 %v1428, %v1584
        %v1623 = vadd.f32 %v1429, %v1586
        %v1624 = vadd.f32 %v1430, %v1590
        %v1625 = vadd.f32 %v1431, %v1592
        %v1626 = vadd.f32 %v1432, %v1594
        %v1627 = vadd.f32 %v1433, %v1596
        %v1628 = vadd.f32 %v1434, %v1600
        %v1629 = vadd.f32 %v1435, %v1602
        %v1630 = vadd.f32 %v1436, %v1604
        %v1631 = vadd.f32 %v1437, %v1606
        %s1632 = scalar_lea.vmem %s1, 160
        %v1633 = vld [vmem:[%s1632] sm:$0xff]
        %v1634 = vld [vmem:[%s1632 + $0x8] sm:$0xff]
        %v1635 = vld [vmem:[%s1632 + $0x10] sm:$0xff]
        %v1636 = vld [vmem:[%s1632 + $0x18] sm:$0x33]
        %s1637 = scalar_lea.vmem %s1, 192
        %v1638 = vld [vmem:[%s1637] sm:$0xff]
        %v1639 = vld [vmem:[%s1637 + $0x8] sm:$0xff]
        %v1640 = vld [vmem:[%s1637 + $0x10] sm:$0xff]
        %v1641 = vld [vmem:[%s1637 + $0x18] sm:$0x33]
        %v1646 = vunpack.c.l.b16 %v1638
        %v1647 = vunpack.c.h.b16 %v1638
        %v1648 = vunpack.c.l.b16 %v1639
        %v1649 = vunpack.c.h.b16 %v1639
        %v1650 = vunpack.c.l.b16 %v1640
        %v1651 = vunpack.c.h.b16 %v1640
        %v1652 = vunpack.c.l.b16 %v1641
        %v1653 = vunpack.c.h.b16 %v1641
        %v1654 = vpack.c.b16 %v1648, %v1646
        %v1655 = vpack.c.b16 %v1649, %v1647
        %v1656 = vpack.c.b16 %v1652, %v1650
        %v1657 = vpack.c.b16 %v1653, %v1651
        %v1661 = vsel %vm785, %v1656, 0
        %v1664 = vsel %vm785, %v1657, 0
        %1666 = vmatprep.subr.bf16.mxu0 %v1655
        %1667 = vmatpush1.bf16.msra.mxu0 %v1654
        %1668 = vmatprep.subr.bf16.mxu0 %v1664
        %1669 = vmatpush1.bf16.msra.mxu0 %v1661
        %1670 = vmatprep.subr.bf16.mxu0 0
        %1671 = vmatpush1.bf16.msra.mxu0 0
        %1672 = vmatprep.subr.bf16.mxu0 0
        %1673 = vmatpush1.bf16.msra.mxu0 0
        %1674 = vmatprep.subr.bf16.mxu0 0
        %1675 = vmatpush1.bf16.msra.mxu0 0
        %1676 = vmatprep.subr.bf16.mxu0 0
        %1677 = vmatpush1.bf16.msra.mxu0 0
        %1678 = vmatprep.subr.bf16.mxu0 0
        %1679 = vmatpush1.bf16.msra.mxu0 0
        %1680 = vmatprep.subr.bf16.mxu0 0
        %1681 = vmatpush1.bf16.msra.mxu0 0
        %1682 = vmatprep.subr.bf16.mxu0 0
        %1683 = vmatpush1.bf16.msra.mxu0 0
        %1684 = vmatprep.subr.bf16.mxu0 0
        %1685 = vmatpush1.bf16.msra.mxu0 0
        %1686 = vmatprep.subr.bf16.mxu0 0
        %1687 = vmatpush1.bf16.msra.mxu0 0
        %1688 = vmatprep.subr.bf16.mxu0 0
        %1689 = vmatpush1.bf16.msra.mxu0 0
        %1690 = vmatprep.subr.bf16.mxu0 0
        %1691 = vmatpush1.bf16.msra.mxu0 0
        %1692 = vmatprep.subr.bf16.mxu0 0
        %1693 = vmatpush1.bf16.msra.mxu0 0
        %1694 = vmatprep.subr.bf16.mxu0 0
        %1695 = vmatpush1.bf16.msra.mxu0 0
        %1696 = vmatprep.subr.bf16.mxu0 0
        %1697 = vmatpush1.bf16.msra.mxu0 0
        %1698 = vmatprep.mubr.bf16.mxu0 0
        %1699 = vmatmul.mubr.bf16.gmra.mrb[0].mxu0 %v768
        %v1700 = vpop.f32.mrb[0].mxu0
        %v1701 = vadd.f32 0.0, %v1700
        %v1702 = vpop.f32.mrb[0].mxu0
        %v1703 = vadd.f32 0.0, %v1702
        %v1704 = vpop.f32.mrb[0].mxu0
        %v1705 = vadd.f32 0.0, %v1704
        %v1706 = vpop.f32.mrb[0].mxu0
        %v1707 = vadd.f32 0.0, %v1706
        %1708 = vmatprep.mubr.bf16.mxu0 0
        %1709 = vmatmul.mubr.bf16.gmra.mrb[0].mxu0 %v771
        %v1710 = vpop.f32.mrb[0].mxu0
        %v1711 = vadd.f32 0.0, %v1710
        %v1712 = vpop.f32.mrb[0].mxu0
        %v1713 = vadd.f32 0.0, %v1712
        %v1714 = vpop.f32.mrb[0].mxu0
        %v1715 = vadd.f32 0.0, %v1714
        %v1716 = vpop.f32.mrb[0].mxu0
        %v1717 = vadd.f32 0.0, %v1716
        %1718 = vmatprep.mubr.bf16.mxu0 0
        %1719 = vmatmul.mubr.bf16.gmra.mrb[0].mxu0 %v774
        %v1720 = vpop.f32.mrb[0].mxu0
        %v1721 = vadd.f32 0.0, %v1720
        %v1722 = vpop.f32.mrb[0].mxu0
        %v1723 = vadd.f32 0.0, %v1722
        %v1724 = vpop.f32.mrb[0].mxu0
        %v1725 = vadd.f32 0.0, %v1724
        %v1726 = vpop.f32.mrb[0].mxu0
        %v1727 = vadd.f32 0.0, %v1726
        %1728 = vmatprep.mubr.bf16.mxu0 0
        %1729 = vmatmul.mubr.bf16.gmra.mrb[0].mxu0 %v777
        %v1730 = vpop.f32.mrb[0].mxu0
        %v1731 = vadd.f32 0.0, %v1730
        %v1732 = vpop.f32.mrb[0].mxu0
        %v1733 = vadd.f32 0.0, %v1732
        %v1734 = vpop.f32.mrb[0].mxu0
        %v1735 = vadd.f32 0.0, %v1734
        %v1736 = vpop.f32.mrb[0].mxu0
        %v1737 = vadd.f32 0.0, %v1736
        %1738 = vmatprep.mubr.bf16.mxu0 0
        %1739 = vmatmul.mubr.bf16.gmra.mrb[0].mxu0 %v780
        %v1740 = vpop.f32.mrb[0].mxu0
        %v1741 = vadd.f32 0.0, %v1740
        %v1742 = vpop.f32.mrb[0].mxu0
        %v1743 = vadd.f32 0.0, %v1742
        %v1744 = vpop.f32.mrb[0].mxu0
        %v1745 = vadd.f32 0.0, %v1744
        %v1746 = vpop.f32.mrb[0].mxu0
        %v1747 = vadd.f32 0.0, %v1746
        %1748 = vmatprep.mubr.bf16.mxu0 0
        %1749 = vmatmul.mubr.bf16.gmra.mrb[0].mxu0 %v783
        %v1750 = vpop.f32.mrb[0].mxu0
        %v1751 = vadd.f32 0.0, %v1750
        %v1752 = vpop.f32.mrb[0].mxu0
        %v1753 = vadd.f32 0.0, %v1752
        %v1754 = vpop.f32.mrb[0].mxu0
        %v1755 = vadd.f32 0.0, %v1754
        %v1756 = vpop.f32.mrb[0].mxu0
        %v1757 = vadd.f32 0.0, %v1756
        %1758 = vdwg.mxu0
        %v1763 = vunpack.c.l.b16 %v1633
        %v1764 = vunpack.c.h.b16 %v1633
        %v1765 = vunpack.c.l.b16 %v1634
        %v1766 = vunpack.c.h.b16 %v1634
        %v1767 = vunpack.c.l.b16 %v1635
        %v1768 = vunpack.c.h.b16 %v1635
        %v1769 = vunpack.c.l.b16 %v1636
        %v1770 = vunpack.c.h.b16 %v1636
        %v1771 = vpack.c.b16 %v1765, %v1763
        %v1772 = vpack.c.b16 %v1766, %v1764
        %v1773 = vpack.c.b16 %v1769, %v1767
        %v1774 = vpack.c.b16 %v1770, %v1768
        %v1778 = vsel %vm785, %v1773, 0
        %v1781 = vsel %vm785, %v1774, 0
        %1783 = vmatprep.subr.bf16.mxu0 %v1772
        %1784 = vmatpush1.bf16.msra.mxu0 %v1771
        %1785 = vmatprep.subr.bf16.mxu0 %v1781
        %1786 = vmatpush1.bf16.msra.mxu0 %v1778
        %1787 = vmatprep.subr.bf16.mxu0 0
        %1788 = vmatpush1.bf16.msra.mxu0 0
        %1789 = vmatprep.subr.bf16.mxu0 0
        %1790 = vmatpush1.bf16.msra.mxu0 0
        %1791 = vmatprep.subr.bf16.mxu0 0
        %1792 = vmatpush1.bf16.msra.mxu0 0
        %1793 = vmatprep.subr.bf16.mxu0 0
        %1794 = vmatpush1.bf16.msra.mxu0 0
        %1795 = vmatprep.subr.bf16.mxu0 0
        %1796 = vmatpush1.bf16.msra.mxu0 0
        %1797 = vmatprep.subr.bf16.mxu0 0
        %1798 = vmatpush1.bf16.msra.mxu0 0
        %1799 = vmatprep.subr.bf16.mxu0 0
        %1800 = vmatpush1.bf16.msra.mxu0 0
        %1801 = vmatprep.subr.bf16.mxu0 0
        %1802 = vmatpush1.bf16.msra.mxu0 0
        %1803 = vmatprep.subr.bf16.mxu0 0
        %1804 = vmatpush1.bf16.msra.mxu0 0
        %1805 = vmatprep.subr.bf16.mxu0 0
        %1806 = vmatpush1.bf16.msra.mxu0 0
        %1807 = vmatprep.subr.bf16.mxu0 0
        %1808 = vmatpush1.bf16.msra.mxu0 0
        %1809 = vmatprep.subr.bf16.mxu0 0
        %1810 = vmatpush1.bf16.msra.mxu0 0
        %1811 = vmatprep.subr.bf16.mxu0 0
        %1812 = vmatpush1.bf16.msra.mxu0 0
        %1813 = vmatprep.subr.bf16.mxu0 0
        %1814 = vmatpush1.bf16.msra.mxu0 0
        %1815 = vmatprep.mubr.bf16.mxu0 0
        %1816 = vmatmul.mubr.bf16.gmra.mrb[0].mxu0 %v934
        %v1817 = vpop.f32.mrb[0].mxu0
        %v1818 = vadd.f32 %v1701, %v1817
        %v1819 = vpop.f32.mrb[0].mxu0
        %v1820 = vadd.f32 %v1703, %v1819
        %v1821 = vpop.f32.mrb[0].mxu0
        %v1822 = vadd.f32 %v1705, %v1821
        %v1823 = vpop.f32.mrb[0].mxu0
        %v1824 = vadd.f32 %v1707, %v1823
        %1825 = vmatprep.mubr.bf16.mxu0 0
        %1826 = vmatmul.mubr.bf16.gmra.mrb[0].mxu0 %v937
        %v1827 = vpop.f32.mrb[0].mxu0
        %v1828 = vadd.f32 %v1711, %v1827
        %v1829 = vpop.f32.mrb[0].mxu0
        %v1830 = vadd.f32 %v1713, %v1829
        %v1831 = vpop.f32.mrb[0].mxu0
        %v1832 = vadd.f32 %v1715, %v1831
        %v1833 = vpop.f32.mrb[0].mxu0
        %v1834 = vadd.f32 %v1717, %v1833
        %1835 = vmatprep.mubr.bf16.mxu0 0
        %1836 = vmatmul.mubr.bf16.gmra.mrb[0].mxu0 %v940
        %v1837 = vpop.f32.mrb[0].mxu0
        %v1838 = vadd.f32 %v1721, %v1837
        %v1839 = vpop.f32.mrb[0].mxu0
        %v1840 = vadd.f32 %v1723, %v1839
        %v1841 = vpop.f32.mrb[0].mxu0
        %v1842 = vadd.f32 %v1725, %v1841
        %v1843 = vpop.f32.mrb[0].mxu0
        %v1844 = vadd.f32 %v1727, %v1843
        %1845 = vmatprep.mubr.bf16.mxu0 0
        %1846 = vmatmul.mubr.bf16.gmra.mrb[0].mxu0 %v943
        %v1847 = vpop.f32.mrb[0].mxu0
        %v1848 = vadd.f32 %v1731, %v1847
        %v1849 = vpop.f32.mrb[0].mxu0
        %v1850 = vadd.f32 %v1733, %v1849
        %v1851 = vpop.f32.mrb[0].mxu0
        %v1852 = vadd.f32 %v1735, %v1851
        %v1853 = vpop.f32.mrb[0].mxu0
        %v1854 = vadd.f32 %v1737, %v1853
        %1855 = vmatprep.mubr.bf16.mxu0 0
        %1856 = vmatmul.mubr.bf16.gmra.mrb[0].mxu0 %v946
        %v1857 = vpop.f32.mrb[0].mxu0
        %v1858 = vadd.f32 %v1741, %v1857
        %v1859 = vpop.f32.mrb[0].mxu0
        %v1860 = vadd.f32 %v1743, %v1859
        %v1861 = vpop.f32.mrb[0].mxu0
        %v1862 = vadd.f32 %v1745, %v1861
        %v1863 = vpop.f32.mrb[0].mxu0
        %v1864 = vadd.f32 %v1747, %v1863
        %1865 = vmatprep.mubr.bf16.mxu0 0
        %1866 = vmatmul.mubr.bf16.gmra.mrb[0].mxu0 %v949
        %v1867 = vpop.f32.mrb[0].mxu0
        %v1868 = vadd.f32 %v1751, %v1867
        %v1869 = vpop.f32.mrb[0].mxu0
        %v1870 = vadd.f32 %v1753, %v1869
        %v1871 = vpop.f32.mrb[0].mxu0
        %v1872 = vadd.f32 %v1755, %v1871
        %v1873 = vpop.f32.mrb[0].mxu0
        %v1874 = vadd.f32 %v1757, %v1873
        %1875 = vdwg.mxu0
        %s1876 = scalar_lea.vmem %s1, 224
        %v1877 = vld [vmem:[%s1876] sm:$0xff]
        %v1878 = vld [vmem:[%s1876 + $0x8] sm:$0xff]
        %v1879 = vld [vmem:[%s1876 + $0x10] sm:$0xff]
        %v1880 = vld [vmem:[%s1876 + $0x18] sm:$0x33]
        %v1885 = vunpack.c.l.b16 %v1877
        %v1886 = vunpack.c.h.b16 %v1877
        %v1887 = vunpack.c.l.b16 %v1878
        %v1888 = vunpack.c.h.b16 %v1878
        %v1889 = vunpack.c.l.b16 %v1879
        %v1890 = vunpack.c.h.b16 %v1879
        %v1891 = vunpack.c.l.b16 %v1880
        %v1892 = vunpack.c.h.b16 %v1880
        %v1893 = vpack.c.b16 %v1887, %v1885
        %v1894 = vpack.c.b16 %v1888, %v1886
        %v1895 = vpack.c.b16 %v1891, %v1889
        %v1896 = vpack.c.b16 %v1892, %v1890
        %v1900 = vsel %vm785, %v1895, 0
        %v1903 = vsel %vm785, %v1896, 0
        %1905 = vmatprep.subr.bf16.mxu0 %v1894
        %1906 = vmatpush1.bf16.msra.mxu0 %v1893
        %1907 = vmatprep.subr.bf16.mxu0 %v1903
        %1908 = vmatpush1.bf16.msra.mxu0 %v1900
        %1909 = vmatprep.subr.bf16.mxu0 0
        %1910 = vmatpush1.bf16.msra.mxu0 0
        %1911 = vmatprep.subr.bf16.mxu0 0
        %1912 = vmatpush1.bf16.msra.mxu0 0
        %1913 = vmatprep.subr.bf16.mxu0 0
        %1914 = vmatpush1.bf16.msra.mxu0 0
        %1915 = vmatprep.subr.bf16.mxu0 0
        %1916 = vmatpush1.bf16.msra.mxu0 0
        %1917 = vmatprep.subr.bf16.mxu0 0
        %1918 = vmatpush1.bf16.msra.mxu0 0
        %1919 = vmatprep.subr.bf16.mxu0 0
        %1920 = vmatpush1.bf16.msra.mxu0 0
        %1921 = vmatprep.subr.bf16.mxu0 0
        %1922 = vmatpush1.bf16.msra.mxu0 0
        %1923 = vmatprep.subr.bf16.mxu0 0
        %1924 = vmatpush1.bf16.msra.mxu0 0
        %1925 = vmatprep.subr.bf16.mxu0 0
        %1926 = vmatpush1.bf16.msra.mxu0 0
        %1927 = vmatprep.subr.bf16.mxu0 0
        %1928 = vmatpush1.bf16.msra.mxu0 0
        %1929 = vmatprep.subr.bf16.mxu0 0
        %1930 = vmatpush1.bf16.msra.mxu0 0
        %1931 = vmatprep.subr.bf16.mxu0 0
        %1932 = vmatpush1.bf16.msra.mxu0 0
        %1933 = vmatprep.subr.bf16.mxu0 0
        %1934 = vmatpush1.bf16.msra.mxu0 0
        %1935 = vmatprep.subr.bf16.mxu0 0
        %1936 = vmatpush1.bf16.msra.mxu0 0
        %1937 = vmatprep.mubr.bf16.mxu0 0
        %1938 = vmatmul.mubr.bf16.gmra.mrb[0].mxu0 %v1104
        %v1939 = vpop.f32.mrb[0].mxu0
        %v1940 = vadd.f32 0.0, %v1939
        %v1941 = vpop.f32.mrb[0].mxu0
        %v1942 = vadd.f32 0.0, %v1941
        %v1943 = vpop.f32.mrb[0].mxu0
        %v1944 = vadd.f32 0.0, %v1943
        %v1945 = vpop.f32.mrb[0].mxu0
        %v1946 = vadd.f32 0.0, %v1945
        %1947 = vmatprep.mubr.bf16.mxu0 0
        %1948 = vmatmul.mubr.bf16.gmra.mrb[0].mxu0 %v1107
        %v1949 = vpop.f32.mrb[0].mxu0
        %v1950 = vadd.f32 0.0, %v1949
        %v1951 = vpop.f32.mrb[0].mxu0
        %v1952 = vadd.f32 0.0, %v1951
        %v1953 = vpop.f32.mrb[0].mxu0
        %v1954 = vadd.f32 0.0, %v1953
        %v1955 = vpop.f32.mrb[0].mxu0
        %v1956 = vadd.f32 0.0, %v1955
        %1957 = vmatprep.mubr.bf16.mxu0 0
        %1958 = vmatmul.mubr.bf16.gmra.mrb[0].mxu0 %v1110
        %v1959 = vpop.f32.mrb[0].mxu0
        %v1960 = vadd.f32 0.0, %v1959
        %v1961 = vpop.f32.mrb[0].mxu0
        %v1962 = vadd.f32 0.0, %v1961
        %v1963 = vpop.f32.mrb[0].mxu0
        %v1964 = vadd.f32 0.0, %v1963
        %v1965 = vpop.f32.mrb[0].mxu0
        %v1966 = vadd.f32 0.0, %v1965
        %1967 = vmatprep.mubr.bf16.mxu0 0
        %1968 = vmatmul.mubr.bf16.gmra.mrb[0].mxu0 %v1113
        %v1969 = vpop.f32.mrb[0].mxu0
        %v1970 = vadd.f32 0.0, %v1969
        %v1971 = vpop.f32.mrb[0].mxu0
        %v1972 = vadd.f32 0.0, %v1971
        %v1973 = vpop.f32.mrb[0].mxu0
        %v1974 = vadd.f32 0.0, %v1973
        %v1975 = vpop.f32.mrb[0].mxu0
        %v1976 = vadd.f32 0.0, %v1975
        %1977 = vmatprep.mubr.bf16.mxu0 0
        %1978 = vmatmul.mubr.bf16.gmra.mrb[0].mxu0 %v1116
        %v1979 = vpop.f32.mrb[0].mxu0
        %v1980 = vadd.f32 0.0, %v1979
        %v1981 = vpop.f32.mrb[0].mxu0
        %v1982 = vadd.f32 0.0, %v1981
        %v1983 = vpop.f32.mrb[0].mxu0
        %v1984 = vadd.f32 0.0, %v1983
        %v1985 = vpop.f32.mrb[0].mxu0
        %v1986 = vadd.f32 0.0, %v1985
        %1987 = vmatprep.mubr.bf16.mxu0 0
        %1988 = vmatmul.mubr.bf16.gmra.mrb[0].mxu0 %v1119
        %v1989 = vpop.f32.mrb[0].mxu0
        %v1990 = vadd.f32 0.0, %v1989
        %v1991 = vpop.f32.mrb[0].mxu0
        %v1992 = vadd.f32 0.0, %v1991
        %v1993 = vpop.f32.mrb[0].mxu0
        %v1994 = vadd.f32 0.0, %v1993
        %v1995 = vpop.f32.mrb[0].mxu0
        %v1996 = vadd.f32 0.0, %v1995
        %1997 = vdwg.mxu0
        %v1998 = vadd.f32 %v1818, %v1940
        %v1999 = vadd.f32 %v1820, %v1942
        %v2000 = vadd.f32 %v1822, %v1944
        %v2001 = vadd.f32 %v1824, %v1946
        %v2002 = vadd.f32 %v1828, %v1950
        %v2003 = vadd.f32 %v1830, %v1952
        %v2004 = vadd.f32 %v1832, %v1954
        %v2005 = vadd.f32 %v1834, %v1956
        %v2006 = vadd.f32 %v1838, %v1960
        %v2007 = vadd.f32 %v1840, %v1962
        %v2008 = vadd.f32 %v1842, %v1964
        %v2009 = vadd.f32 %v1844, %v1966
        %v2010 = vadd.f32 %v1848, %v1970
        %v2011 = vadd.f32 %v1850, %v1972
        %v2012 = vadd.f32 %v1852, %v1974
        %v2013 = vadd.f32 %v1854, %v1976
        %v2014 = vadd.f32 %v1858, %v1980
        %v2015 = vadd.f32 %v1860, %v1982
        %v2016 = vadd.f32 %v1862, %v1984
        %v2017 = vadd.f32 %v1864, %v1986
        %v2018 = vadd.f32 %v1868, %v1990
        %v2019 = vadd.f32 %v1870, %v1992
        %v2020 = vadd.f32 %v1872, %v1994
        %v2021 = vadd.f32 %v1874, %v1996
        %s2022 = scalar_lea.vmem %s1, 256
        %v2023 = vld [vmem:[%s2022] sm:$0xff]
        %v2024 = vld [vmem:[%s2022 + $0x8] sm:$0xff]
        %v2025 = vld [vmem:[%s2022 + $0x10] sm:$0xff]
        %v2026 = vld [vmem:[%s2022 + $0x18] sm:$0x33]
        %v2031 = vunpack.c.l.b16 %v2023
        %v2032 = vunpack.c.h.b16 %v2023
        %v2033 = vunpack.c.l.b16 %v2024
        %v2034 = vunpack.c.h.b16 %v2024
        %v2035 = vunpack.c.l.b16 %v2025
        %v2036 = vunpack.c.h.b16 %v2025
        %v2037 = vunpack.c.l.b16 %v2026
        %v2038 = vunpack.c.h.b16 %v2026
        %v2039 = vpack.c.b16 %v2033, %v2031
        %v2040 = vpack.c.b16 %v2034, %v2032
        %v2041 = vpack.c.b16 %v2037, %v2035
        %v2042 = vpack.c.b16 %v2038, %v2036
        %v2046 = vsel %vm785, %v2041, 0
        %v2049 = vsel %vm785, %v2042, 0
        %2051 = vmatprep.subr.bf16.mxu0 %v2040
        %2052 = vmatpush1.bf16.msra.mxu0 %v2039
        %2053 = vmatprep.subr.bf16.mxu0 %v2049
        %2054 = vmatpush1.bf16.msra.mxu0 %v2046
        %2055 = vmatprep.subr.bf16.mxu0 0
        %2056 = vmatpush1.bf16.msra.mxu0 0
        %2057 = vmatprep.subr.bf16.mxu0 0
        %2058 = vmatpush1.bf16.msra.mxu0 0
        %2059 = vmatprep.subr.bf16.mxu0 0
        %2060 = vmatpush1.bf16.msra.mxu0 0
        %2061 = vmatprep.subr.bf16.mxu0 0
        %2062 = vmatpush1.bf16.msra.mxu0 0
        %2063 = vmatprep.subr.bf16.mxu0 0
        %2064 = vmatpush1.bf16.msra.mxu0 0
        %2065 = vmatprep.subr.bf16.mxu0 0
        %2066 = vmatpush1.bf16.msra.mxu0 0
        %2067 = vmatprep.subr.bf16.mxu0 0
        %2068 = vmatpush1.bf16.msra.mxu0 0
        %2069 = vmatprep.subr.bf16.mxu0 0
        %2070 = vmatpush1.bf16.msra.mxu0 0
        %2071 = vmatprep.subr.bf16.mxu0 0
        %2072 = vmatpush1.bf16.msra.mxu0 0
        %2073 = vmatprep.subr.bf16.mxu0 0
        %2074 = vmatpush1.bf16.msra.mxu0 0
        %2075 = vmatprep.subr.bf16.mxu0 0
        %2076 = vmatpush1.bf16.msra.mxu0 0
        %2077 = vmatprep.subr.bf16.mxu0 0
        %2078 = vmatpush1.bf16.msra.mxu0 0
        %2079 = vmatprep.subr.bf16.mxu0 0
        %2080 = vmatpush1.bf16.msra.mxu0 0
        %2081 = vmatprep.subr.bf16.mxu0 0
        %2082 = vmatpush1.bf16.msra.mxu0 0
        %2083 = vmatprep.mubr.bf16.mxu0 0
        %2084 = vmatmul.mubr.bf16.gmra.mrb[0].mxu0 %v1298
        %v2085 = vpop.f32.mrb[0].mxu0
        %v2086 = vadd.f32 0.0, %v2085
        %v2087 = vpop.f32.mrb[0].mxu0
        %v2088 = vadd.f32 0.0, %v2087
        %v2089 = vpop.f32.mrb[0].mxu0
        %v2090 = vadd.f32 0.0, %v2089
        %v2091 = vpop.f32.mrb[0].mxu0
        %v2092 = vadd.f32 0.0, %v2091
        %2093 = vmatprep.mubr.bf16.mxu0 0
        %2094 = vmatmul.mubr.bf16.gmra.mrb[0].mxu0 %v1301
        %v2095 = vpop.f32.mrb[0].mxu0
        %v2096 = vadd.f32 0.0, %v2095
        %v2097 = vpop.f32.mrb[0].mxu0
        %v2098 = vadd.f32 0.0, %v2097
        %v2099 = vpop.f32.mrb[0].mxu0
        %v2100 = vadd.f32 0.0, %v2099
        %v2101 = vpop.f32.mrb[0].mxu0
        %v2102 = vadd.f32 0.0, %v2101
        %2103 = vmatprep.mubr.bf16.mxu0 0
        %2104 = vmatmul.mubr.bf16.gmra.mrb[0].mxu0 %v1304
        %v2105 = vpop.f32.mrb[0].mxu0
        %v2106 = vadd.f32 0.0, %v2105
        %v2107 = vpop.f32.mrb[0].mxu0
        %v2108 = vadd.f32 0.0, %v2107
        %v2109 = vpop.f32.mrb[0].mxu0
        %v2110 = vadd.f32 0.0, %v2109
        %v2111 = vpop.f32.mrb[0].mxu0
        %v2112 = vadd.f32 0.0, %v2111
        %2113 = vmatprep.mubr.bf16.mxu0 0
        %2114 = vmatmul.mubr.bf16.gmra.mrb[0].mxu0 %v1307
        %v2115 = vpop.f32.mrb[0].mxu0
        %v2116 = vadd.f32 0.0, %v2115
        %v2117 = vpop.f32.mrb[0].mxu0
        %v2118 = vadd.f32 0.0, %v2117
        %v2119 = vpop.f32.mrb[0].mxu0
        %v2120 = vadd.f32 0.0, %v2119
        %v2121 = vpop.f32.mrb[0].mxu0
        %v2122 = vadd.f32 0.0, %v2121
        %2123 = vmatprep.mubr.bf16.mxu0 0
        %2124 = vmatmul.mubr.bf16.gmra.mrb[0].mxu0 %v1310
        %v2125 = vpop.f32.mrb[0].mxu0
        %v2126 = vadd.f32 0.0, %v2125
        %v2127 = vpop.f32.mrb[0].mxu0
        %v2128 = vadd.f32 0.0, %v2127
        %v2129 = vpop.f32.mrb[0].mxu0
        %v2130 = vadd.f32 0.0, %v2129
        %v2131 = vpop.f32.mrb[0].mxu0
        %v2132 = vadd.f32 0.0, %v2131
        %2133 = vmatprep.mubr.bf16.mxu0 0
        %2134 = vmatmul.mubr.bf16.gmra.mrb[0].mxu0 %v1313
        %v2135 = vpop.f32.mrb[0].mxu0
        %v2136 = vadd.f32 0.0, %v2135
        %v2137 = vpop.f32.mrb[0].mxu0
        %v2138 = vadd.f32 0.0, %v2137
        %v2139 = vpop.f32.mrb[0].mxu0
        %v2140 = vadd.f32 0.0, %v2139
        %v2141 = vpop.f32.mrb[0].mxu0
        %v2142 = vadd.f32 0.0, %v2141
        %2143 = vdwg.mxu0
        %v2144 = vadd.f32 %v1998, %v2086
        %v2145 = vadd.f32 %v1999, %v2088
        %v2146 = vadd.f32 %v2000, %v2090
        %v2147 = vadd.f32 %v2001, %v2092
        %v2148 = vadd.f32 %v2002, %v2096
        %v2149 = vadd.f32 %v2003, %v2098
        %v2150 = vadd.f32 %v2004, %v2100
        %v2151 = vadd.f32 %v2005, %v2102
        %v2152 = vadd.f32 %v2006, %v2106
        %v2153 = vadd.f32 %v2007, %v2108
        %v2154 = vadd.f32 %v2008, %v2110
        %v2155 = vadd.f32 %v2009, %v2112
        %v2156 = vadd.f32 %v2010, %v2116
        %v2157 = vadd.f32 %v2011, %v2118
        %v2158 = vadd.f32 %v2012, %v2120
        %v2159 = vadd.f32 %v2013, %v2122
        %v2160 = vadd.f32 %v2014, %v2126
        %v2161 = vadd.f32 %v2015, %v2128
        %v2162 = vadd.f32 %v2016, %v2130
        %v2163 = vadd.f32 %v2017, %v2132
        %v2164 = vadd.f32 %v2018, %v2136
        %v2165 = vadd.f32 %v2019, %v2138
        %v2166 = vadd.f32 %v2020, %v2140
        %v2167 = vadd.f32 %v2021, %v2142
        %s2168 = scalar_lea.vmem %s1, 288
        %v2169 = vld [vmem:[%s2168] sm:$0xff]
        %v2170 = vld [vmem:[%s2168 + $0x8] sm:$0xff]
        %v2171 = vld [vmem:[%s2168 + $0x10] sm:$0xff]
        %v2172 = vld [vmem:[%s2168 + $0x18] sm:$0x33]
        %v2177 = vunpack.c.l.b16 %v2169
        %v2178 = vunpack.c.h.b16 %v2169
        %v2179 = vunpack.c.l.b16 %v2170
        %v2180 = vunpack.c.h.b16 %v2170
        %v2181 = vunpack.c.l.b16 %v2171
        %v2182 = vunpack.c.h.b16 %v2171
        %v2183 = vunpack.c.l.b16 %v2172
        %v2184 = vunpack.c.h.b16 %v2172
        %v2185 = vpack.c.b16 %v2179, %v2177
        %v2186 = vpack.c.b16 %v2180, %v2178
        %v2187 = vpack.c.b16 %v2183, %v2181
        %v2188 = vpack.c.b16 %v2184, %v2182
        %v2192 = vsel %vm785, %v2187, 0
        %v2195 = vsel %vm785, %v2188, 0
        %2197 = vmatprep.subr.bf16.mxu0 %v2186
        %2198 = vmatpush1.bf16.msra.mxu0 %v2185
        %2199 = vmatprep.subr.bf16.mxu0 %v2195
        %2200 = vmatpush1.bf16.msra.mxu0 %v2192
        %2201 = vmatprep.subr.bf16.mxu0 0
        %2202 = vmatpush1.bf16.msra.mxu0 0
        %2203 = vmatprep.subr.bf16.mxu0 0
        %2204 = vmatpush1.bf16.msra.mxu0 0
        %2205 = vmatprep.subr.bf16.mxu0 0
        %2206 = vmatpush1.bf16.msra.mxu0 0
        %2207 = vmatprep.subr.bf16.mxu0 0
        %2208 = vmatpush1.bf16.msra.mxu0 0
        %2209 = vmatprep.subr.bf16.mxu0 0
        %2210 = vmatpush1.bf16.msra.mxu0 0
        %2211 = vmatprep.subr.bf16.mxu0 0
        %2212 = vmatpush1.bf16.msra.mxu0 0
        %2213 = vmatprep.subr.bf16.mxu0 0
        %2214 = vmatpush1.bf16.msra.mxu0 0
        %2215 = vmatprep.subr.bf16.mxu0 0
        %2216 = vmatpush1.bf16.msra.mxu0 0
        %2217 = vmatprep.subr.bf16.mxu0 0
        %2218 = vmatpush1.bf16.msra.mxu0 0
        %2219 = vmatprep.subr.bf16.mxu0 0
        %2220 = vmatpush1.bf16.msra.mxu0 0
        %2221 = vmatprep.subr.bf16.mxu0 0
        %2222 = vmatpush1.bf16.msra.mxu0 0
        %2223 = vmatprep.subr.bf16.mxu0 0
        %2224 = vmatpush1.bf16.msra.mxu0 0
        %2225 = vmatprep.subr.bf16.mxu0 0
        %2226 = vmatpush1.bf16.msra.mxu0 0
        %2227 = vmatprep.subr.bf16.mxu0 0
        %2228 = vmatpush1.bf16.msra.mxu0 0
        %2229 = vmatprep.mubr.bf16.mxu0 0
        %2230 = vmatmul.mubr.bf16.gmra.mrb[0].mxu0 %v1492
        %v2231 = vpop.f32.mrb[0].mxu0
        %v2232 = vadd.f32 0.0, %v2231
        %v2233 = vpop.f32.mrb[0].mxu0
        %v2234 = vadd.f32 0.0, %v2233
        %v2235 = vpop.f32.mrb[0].mxu0
        %v2236 = vadd.f32 0.0, %v2235
        %v2237 = vpop.f32.mrb[0].mxu0
        %v2238 = vadd.f32 0.0, %v2237
        %2239 = vmatprep.mubr.bf16.mxu0 0
        %2240 = vmatmul.mubr.bf16.gmra.mrb[0].mxu0 %v1495
        %v2241 = vpop.f32.mrb[0].mxu0
        %v2242 = vadd.f32 0.0, %v2241
        %v2243 = vpop.f32.mrb[0].mxu0
        %v2244 = vadd.f32 0.0, %v2243
        %v2245 = vpop.f32.mrb[0].mxu0
        %v2246 = vadd.f32 0.0, %v2245
        %v2247 = vpop.f32.mrb[0].mxu0
        %v2248 = vadd.f32 0.0, %v2247
        %2249 = vmatprep.mubr.bf16.mxu0 0
        %2250 = vmatmul.mubr.bf16.gmra.mrb[0].mxu0 %v1498
        %v2251 = vpop.f32.mrb[0].mxu0
        %v2252 = vadd.f32 0.0, %v2251
        %v2253 = vpop.f32.mrb[0].mxu0
        %v2254 = vadd.f32 0.0, %v2253
        %v2255 = vpop.f32.mrb[0].mxu0
        %v2256 = vadd.f32 0.0, %v2255
        %v2257 = vpop.f32.mrb[0].mxu0
        %v2258 = vadd.f32 0.0, %v2257
        %2259 = vmatprep.mubr.bf16.mxu0 0
        %2260 = vmatmul.mubr.bf16.gmra.mrb[0].mxu0 %v1501
        %v2261 = vpop.f32.mrb[0].mxu0
        %v2262 = vadd.f32 0.0, %v2261
        %v2263 = vpop.f32.mrb[0].mxu0
        %v2264 = vadd.f32 0.0, %v2263
        %v2265 = vpop.f32.mrb[0].mxu0
        %v2266 = vadd.f32 0.0, %v2265
        %v2267 = vpop.f32.mrb[0].mxu0
        %v2268 = vadd.f32 0.0, %v2267
        %2269 = vmatprep.mubr.bf16.mxu0 0
        %2270 = vmatmul.mubr.bf16.gmra.mrb[0].mxu0 %v1504
        %v2271 = vpop.f32.mrb[0].mxu0
        %v2272 = vadd.f32 0.0, %v2271
        %v2273 = vpop.f32.mrb[0].mxu0
        %v2274 = vadd.f32 0.0, %v2273
        %v2275 = vpop.f32.mrb[0].mxu0
        %v2276 = vadd.f32 0.0, %v2275
        %v2277 = vpop.f32.mrb[0].mxu0
        %v2278 = vadd.f32 0.0, %v2277
        %2279 = vmatprep.mubr.bf16.mxu0 0
        %2280 = vmatmul.mubr.bf16.gmra.mrb[0].mxu0 %v1507
        %v2281 = vpop.f32.mrb[0].mxu0
        %v2282 = vadd.f32 0.0, %v2281
        %v2283 = vpop.f32.mrb[0].mxu0
        %v2284 = vadd.f32 0.0, %v2283
        %v2285 = vpop.f32.mrb[0].mxu0
        %v2286 = vadd.f32 0.0, %v2285
        %v2287 = vpop.f32.mrb[0].mxu0
        %v2288 = vadd.f32 0.0, %v2287
        %2289 = vdwg.mxu0
        %v2290 = vadd.f32 %v2144, %v2232
        %v2291 = vadd.f32 %v2145, %v2234
        %v2292 = vadd.f32 %v2146, %v2236
        %v2293 = vadd.f32 %v2147, %v2238
        %v2294 = vadd.f32 %v2148, %v2242
        %v2295 = vadd.f32 %v2149, %v2244
        %v2296 = vadd.f32 %v2150, %v2246
        %v2297 = vadd.f32 %v2151, %v2248
        %v2298 = vadd.f32 %v2152, %v2252
        %v2299 = vadd.f32 %v2153, %v2254
        %v2300 = vadd.f32 %v2154, %v2256
        %v2301 = vadd.f32 %v2155, %v2258
        %v2302 = vadd.f32 %v2156, %v2262
        %v2303 = vadd.f32 %v2157, %v2264
        %v2304 = vadd.f32 %v2158, %v2266
        %v2305 = vadd.f32 %v2159, %v2268
        %v2306 = vadd.f32 %v2160, %v2272
        %v2307 = vadd.f32 %v2161, %v2274
        %v2308 = vadd.f32 %v2162, %v2276
        %v2309 = vadd.f32 %v2163, %v2278
        %v2310 = vadd.f32 %v2164, %v2282
        %v2311 = vadd.f32 %v2165, %v2284
        %v2312 = vadd.f32 %v2166, %v2286
        %v2313 = vadd.f32 %v2167, %v2288
        %2314 = vmatprep.subr.bf16.mxu0 %v761
        %2315 = vmatpush1.bf16.msra.mxu0 %v760
        %2316 = vmatprep.subr.bf16.mxu0 %v790
        %2317 = vmatpush1.bf16.msra.mxu0 %v787
        %2318 = vmatprep.subr.bf16.mxu0 0
        %2319 = vmatpush1.bf16.msra.mxu0 0
        %2320 = vmatprep.subr.bf16.mxu0 0
        %2321 = vmatpush1.bf16.msra.mxu0 0
        %2322 = vmatprep.subr.bf16.mxu0 0
        %2323 = vmatpush1.bf16.msra.mxu0 0
        %2324 = vmatprep.subr.bf16.mxu0 0
        %2325 = vmatpush1.bf16.msra.mxu0 0
        %2326 = vmatprep.subr.bf16.mxu0 0
        %2327 = vmatpush1.bf16.msra.mxu0 0
        %2328 = vmatprep.subr.bf16.mxu0 0
        %2329 = vmatpush1.bf16.msra.mxu0 0
        %2330 = vmatprep.subr.bf16.mxu0 0
        %2331 = vmatpush1.bf16.msra.mxu0 0
        %2332 = vmatprep.subr.bf16.mxu0 0
        %2333 = vmatpush1.bf16.msra.mxu0 0
        %2334 = vmatprep.subr.bf16.mxu0 0
        %2335 = vmatpush1.bf16.msra.mxu0 0
        %2336 = vmatprep.subr.bf16.mxu0 0
        %2337 = vmatpush1.bf16.msra.mxu0 0
        %2338 = vmatprep.subr.bf16.mxu0 0
        %2339 = vmatpush1.bf16.msra.mxu0 0
        %2340 = vmatprep.subr.bf16.mxu0 0
        %2341 = vmatpush1.bf16.msra.mxu0 0
        %2342 = vmatprep.subr.bf16.mxu0 0
        %2343 = vmatpush1.bf16.msra.mxu0 0
        %2344 = vmatprep.subr.bf16.mxu0 0
        %2345 = vmatpush1.bf16.msra.mxu0 0
        %2346 = vmatprep.mubr.bf16.mxu0 0
        %2347 = vmatmul.mubr.bf16.gmra.mrb[0].mxu0 %v1104
        %v2348 = vpop.f32.mrb[0].mxu0
        %v2349 = vadd.f32 0.0, %v2348
        %v2350 = vpop.f32.mrb[0].mxu0
        %v2351 = vadd.f32 0.0, %v2350
        %v2352 = vpop.f32.mrb[0].mxu0
        %v2353 = vadd.f32 0.0, %v2352
        %v2354 = vpop.f32.mrb[0].mxu0
        %v2355 = vadd.f32 0.0, %v2354
        %2356 = vmatprep.mubr.bf16.mxu0 0
        %2357 = vmatmul.mubr.bf16.gmra.mrb[0].mxu0 %v1107
        %v2358 = vpop.f32.mrb[0].mxu0
        %v2359 = vadd.f32 0.0, %v2358
        %v2360 = vpop.f32.mrb[0].mxu0
        %v2361 = vadd.f32 0.0, %v2360
        %v2362 = vpop.f32.mrb[0].mxu0
        %v2363 = vadd.f32 0.0, %v2362
        %v2364 = vpop.f32.mrb[0].mxu0
        %v2365 = vadd.f32 0.0, %v2364
        %2366 = vmatprep.mubr.bf16.mxu0 0
        %2367 = vmatmul.mubr.bf16.gmra.mrb[0].mxu0 %v1110
        %v2368 = vpop.f32.mrb[0].mxu0
        %v2369 = vadd.f32 0.0, %v2368
        %v2370 = vpop.f32.mrb[0].mxu0
        %v2371 = vadd.f32 0.0, %v2370
        %v2372 = vpop.f32.mrb[0].mxu0
        %v2373 = vadd.f32 0.0, %v2372
        %v2374 = vpop.f32.mrb[0].mxu0
        %v2375 = vadd.f32 0.0, %v2374
        %2376 = vmatprep.mubr.bf16.mxu0 0
        %2377 = vmatmul.mubr.bf16.gmra.mrb[0].mxu0 %v1113
        %v2378 = vpop.f32.mrb[0].mxu0
        %v2379 = vadd.f32 0.0, %v2378
        %v2380 = vpop.f32.mrb[0].mxu0
        %v2381 = vadd.f32 0.0, %v2380
        %v2382 = vpop.f32.mrb[0].mxu0
        %v2383 = vadd.f32 0.0, %v2382
        %v2384 = vpop.f32.mrb[0].mxu0
        %v2385 = vadd.f32 0.0, %v2384
        %2386 = vmatprep.mubr.bf16.mxu0 0
        %2387 = vmatmul.mubr.bf16.gmra.mrb[0].mxu0 %v1116
        %v2388 = vpop.f32.mrb[0].mxu0
        %v2389 = vadd.f32 0.0, %v2388
        %v2390 = vpop.f32.mrb[0].mxu0
        %v2391 = vadd.f32 0.0, %v2390
        %v2392 = vpop.f32.mrb[0].mxu0
        %v2393 = vadd.f32 0.0, %v2392
        %v2394 = vpop.f32.mrb[0].mxu0
        %v2395 = vadd.f32 0.0, %v2394
        %2396 = vmatprep.mubr.bf16.mxu0 0
        %2397 = vmatmul.mubr.bf16.gmra.mrb[0].mxu0 %v1119
        %v2398 = vpop.f32.mrb[0].mxu0
        %v2399 = vadd.f32 0.0, %v2398
        %v2400 = vpop.f32.mrb[0].mxu0
        %v2401 = vadd.f32 0.0, %v2400
        %v2402 = vpop.f32.mrb[0].mxu0
        %v2403 = vadd.f32 0.0, %v2402
        %v2404 = vpop.f32.mrb[0].mxu0
        %v2405 = vadd.f32 0.0, %v2404
        %2406 = vdwg.mxu0
        %2407 = vmatprep.subr.bf16.mxu0 %v928
        %2408 = vmatpush1.bf16.msra.mxu0 %v927
        %2409 = vmatprep.subr.bf16.mxu0 %v955
        %2410 = vmatpush1.bf16.msra.mxu0 %v952
        %2411 = vmatprep.subr.bf16.mxu0 0
        %2412 = vmatpush1.bf16.msra.mxu0 0
        %2413 = vmatprep.subr.bf16.mxu0 0
        %2414 = vmatpush1.bf16.msra.mxu0 0
        %2415 = vmatprep.subr.bf16.mxu0 0
        %2416 = vmatpush1.bf16.msra.mxu0 0
        %2417 = vmatprep.subr.bf16.mxu0 0
        %2418 = vmatpush1.bf16.msra.mxu0 0
        %2419 = vmatprep.subr.bf16.mxu0 0
        %2420 = vmatpush1.bf16.msra.mxu0 0
        %2421 = vmatprep.subr.bf16.mxu0 0
        %2422 = vmatpush1.bf16.msra.mxu0 0
        %2423 = vmatprep.subr.bf16.mxu0 0
        %2424 = vmatpush1.bf16.msra.mxu0 0
        %2425 = vmatprep.subr.bf16.mxu0 0
        %2426 = vmatpush1.bf16.msra.mxu0 0
        %2427 = vmatprep.subr.bf16.mxu0 0
        %2428 = vmatpush1.bf16.msra.mxu0 0
        %2429 = vmatprep.subr.bf16.mxu0 0
        %2430 = vmatpush1.bf16.msra.mxu0 0
        %2431 = vmatprep.subr.bf16.mxu0 0
        %2432 = vmatpush1.bf16.msra.mxu0 0
        %2433 = vmatprep.subr.bf16.mxu0 0
        %2434 = vmatpush1.bf16.msra.mxu0 0
        %2435 = vmatprep.subr.bf16.mxu0 0
        %2436 = vmatpush1.bf16.msra.mxu0 0
        %2437 = vmatprep.subr.bf16.mxu0 0
        %2438 = vmatpush1.bf16.msra.mxu0 0
        %2439 = vmatprep.mubr.bf16.mxu0 0
        %2440 = vmatmul.mubr.bf16.gmra.mrb[0].mxu0 %v768
        %v2441 = vpop.f32.mrb[0].mxu0
        %v2442 = vadd.f32 %v2349, %v2441
        %v2443 = vpop.f32.mrb[0].mxu0
        %v2444 = vadd.f32 %v2351, %v2443
        %v2445 = vpop.f32.mrb[0].mxu0
        %v2446 = vadd.f32 %v2353, %v2445
        %v2447 = vpop.f32.mrb[0].mxu0
        %v2448 = vadd.f32 %v2355, %v2447
        %2449 = vmatprep.mubr.bf16.mxu0 0
        %2450 = vmatmul.mubr.bf16.gmra.mrb[0].mxu0 %v771
        %v2451 = vpop.f32.mrb[0].mxu0
        %v2452 = vadd.f32 %v2359, %v2451
        %v2453 = vpop.f32.mrb[0].mxu0
        %v2454 = vadd.f32 %v2361, %v2453
        %v2455 = vpop.f32.mrb[0].mxu0
        %v2456 = vadd.f32 %v2363, %v2455
        %v2457 = vpop.f32.mrb[0].mxu0
        %v2458 = vadd.f32 %v2365, %v2457
        %2459 = vmatprep.mubr.bf16.mxu0 0
        %2460 = vmatmul.mubr.bf16.gmra.mrb[0].mxu0 %v774
        %v2461 = vpop.f32.mrb[0].mxu0
        %v2462 = vadd.f32 %v2369, %v2461
        %v2463 = vpop.f32.mrb[0].mxu0
        %v2464 = vadd.f32 %v2371, %v2463
        %v2465 = vpop.f32.mrb[0].mxu0
        %v2466 = vadd.f32 %v2373, %v2465
        %v2467 = vpop.f32.mrb[0].mxu0
        %v2468 = vadd.f32 %v2375, %v2467
        %2469 = vmatprep.mubr.bf16.mxu0 0
        %2470 = vmatmul.mubr.bf16.gmra.mrb[0].mxu0 %v777
        %v2471 = vpop.f32.mrb[0].mxu0
        %v2472 = vadd.f32 %v2379, %v2471
        %v2473 = vpop.f32.mrb[0].mxu0
        %v2474 = vadd.f32 %v2381, %v2473
        %v2475 = vpop.f32.mrb[0].mxu0
        %v2476 = vadd.f32 %v2383, %v2475
        %v2477 = vpop.f32.mrb[0].mxu0
        %v2478 = vadd.f32 %v2385, %v2477
        %2479 = vmatprep.mubr.bf16.mxu0 0
        %2480 = vmatmul.mubr.bf16.gmra.mrb[0].mxu0 %v780
        %v2481 = vpop.f32.mrb[0].mxu0
        %v2482 = vadd.f32 %v2389, %v2481
        %v2483 = vpop.f32.mrb[0].mxu0
        %v2484 = vadd.f32 %v2391, %v2483
        %v2485 = vpop.f32.mrb[0].mxu0
        %v2486 = vadd.f32 %v2393, %v2485
        %v2487 = vpop.f32.mrb[0].mxu0
        %v2488 = vadd.f32 %v2395, %v2487
        %2489 = vmatprep.mubr.bf16.mxu0 0
        %2490 = vmatmul.mubr.bf16.gmra.mrb[0].mxu0 %v783
        %v2491 = vpop.f32.mrb[0].mxu0
        %v2492 = vadd.f32 %v2399, %v2491
        %v2493 = vpop.f32.mrb[0].mxu0
        %v2494 = vadd.f32 %v2401, %v2493
        %v2495 = vpop.f32.mrb[0].mxu0
        %v2496 = vadd.f32 %v2403, %v2495
        %v2497 = vpop.f32.mrb[0].mxu0
        %v2498 = vadd.f32 %v2405, %v2497
        %2499 = vdwg.mxu0
        %2500 = vmatprep.subr.bf16.mxu0 %v1098
        %2501 = vmatpush1.bf16.msra.mxu0 %v1097
        %2502 = vmatprep.subr.bf16.mxu0 %v1125
        %2503 = vmatpush1.bf16.msra.mxu0 %v1122
        %2504 = vmatprep.subr.bf16.mxu0 0
        %2505 = vmatpush1.bf16.msra.mxu0 0
        %2506 = vmatprep.subr.bf16.mxu0 0
        %2507 = vmatpush1.bf16.msra.mxu0 0
        %2508 = vmatprep.subr.bf16.mxu0 0
        %2509 = vmatpush1.bf16.msra.mxu0 0
        %2510 = vmatprep.subr.bf16.mxu0 0
        %2511 = vmatpush1.bf16.msra.mxu0 0
        %2512 = vmatprep.subr.bf16.mxu0 0
        %2513 = vmatpush1.bf16.msra.mxu0 0
        %2514 = vmatprep.subr.bf16.mxu0 0
        %2515 = vmatpush1.bf16.msra.mxu0 0
        %2516 = vmatprep.subr.bf16.mxu0 0
        %2517 = vmatpush1.bf16.msra.mxu0 0
        %2518 = vmatprep.subr.bf16.mxu0 0
        %2519 = vmatpush1.bf16.msra.mxu0 0
        %2520 = vmatprep.subr.bf16.mxu0 0
        %2521 = vmatpush1.bf16.msra.mxu0 0
        %2522 = vmatprep.subr.bf16.mxu0 0
        %2523 = vmatpush1.bf16.msra.mxu0 0
        %2524 = vmatprep.subr.bf16.mxu0 0
        %2525 = vmatpush1.bf16.msra.mxu0 0
        %2526 = vmatprep.subr.bf16.mxu0 0
        %2527 = vmatpush1.bf16.msra.mxu0 0
        %2528 = vmatprep.subr.bf16.mxu0 0
        %2529 = vmatpush1.bf16.msra.mxu0 0
        %2530 = vmatprep.subr.bf16.mxu0 0
        %2531 = vmatpush1.bf16.msra.mxu0 0
        %2532 = vmatprep.mubr.bf16.mxu0 0
        %2533 = vmatmul.mubr.bf16.gmra.mrb[0].mxu0 %v1298
        %v2534 = vpop.f32.mrb[0].mxu0
        %v2535 = vadd.f32 0.0, %v2534
        %v2536 = vpop.f32.mrb[0].mxu0
        %v2537 = vadd.f32 0.0, %v2536
        %v2538 = vpop.f32.mrb[0].mxu0
        %v2539 = vadd.f32 0.0, %v2538
        %v2540 = vpop.f32.mrb[0].mxu0
        %v2541 = vadd.f32 0.0, %v2540
        %2542 = vmatprep.mubr.bf16.mxu0 0
        %2543 = vmatmul.mubr.bf16.gmra.mrb[0].mxu0 %v1301
        %v2544 = vpop.f32.mrb[0].mxu0
        %v2545 = vadd.f32 0.0, %v2544
        %v2546 = vpop.f32.mrb[0].mxu0
        %v2547 = vadd.f32 0.0, %v2546
        %v2548 = vpop.f32.mrb[0].mxu0
        %v2549 = vadd.f32 0.0, %v2548
        %v2550 = vpop.f32.mrb[0].mxu0
        %v2551 = vadd.f32 0.0, %v2550
        %2552 = vmatprep.mubr.bf16.mxu0 0
        %2553 = vmatmul.mubr.bf16.gmra.mrb[0].mxu0 %v1304
        %v2554 = vpop.f32.mrb[0].mxu0
        %v2555 = vadd.f32 0.0, %v2554
        %v2556 = vpop.f32.mrb[0].mxu0
        %v2557 = vadd.f32 0.0, %v2556
        %v2558 = vpop.f32.mrb[0].mxu0
        %v2559 = vadd.f32 0.0, %v2558
        %v2560 = vpop.f32.mrb[0].mxu0
        %v2561 = vadd.f32 0.0, %v2560
        %2562 = vmatprep.mubr.bf16.mxu0 0
        %2563 = vmatmul.mubr.bf16.gmra.mrb[0].mxu0 %v1307
        %v2564 = vpop.f32.mrb[0].mxu0
        %v2565 = vadd.f32 0.0, %v2564
        %v2566 = vpop.f32.mrb[0].mxu0
        %v2567 = vadd.f32 0.0, %v2566
        %v2568 = vpop.f32.mrb[0].mxu0
        %v2569 = vadd.f32 0.0, %v2568
        %v2570 = vpop.f32.mrb[0].mxu0
        %v2571 = vadd.f32 0.0, %v2570
        %2572 = vmatprep.mubr.bf16.mxu0 0
        %2573 = vmatmul.mubr.bf16.gmra.mrb[0].mxu0 %v1310
        %v2574 = vpop.f32.mrb[0].mxu0
        %v2575 = vadd.f32 0.0, %v2574
        %v2576 = vpop.f32.mrb[0].mxu0
        %v2577 = vadd.f32 0.0, %v2576
        %v2578 = vpop.f32.mrb[0].mxu0
        %v2579 = vadd.f32 0.0, %v2578
        %v2580 = vpop.f32.mrb[0].mxu0
        %v2581 = vadd.f32 0.0, %v2580
        %2582 = vmatprep.mubr.bf16.mxu0 0
        %2583 = vmatmul.mubr.bf16.gmra.mrb[0].mxu0 %v1313
        %v2584 = vpop.f32.mrb[0].mxu0
        %v2585 = vadd.f32 0.0, %v2584
        %v2586 = vpop.f32.mrb[0].mxu0
        %v2587 = vadd.f32 0.0, %v2586
        %v2588 = vpop.f32.mrb[0].mxu0
        %v2589 = vadd.f32 0.0, %v2588
        %v2590 = vpop.f32.mrb[0].mxu0
        %v2591 = vadd.f32 0.0, %v2590
        %2592 = vdwg.mxu0
        %v2593 = vadd.f32 %v2442, %v2535
        %v2594 = vadd.f32 %v2444, %v2537
        %v2595 = vadd.f32 %v2446, %v2539
        %v2596 = vadd.f32 %v2448, %v2541
        %v2597 = vadd.f32 %v2452, %v2545
        %v2598 = vadd.f32 %v2454, %v2547
        %v2599 = vadd.f32 %v2456, %v2549
        %v2600 = vadd.f32 %v2458, %v2551
        %v2601 = vadd.f32 %v2462, %v2555
        %v2602 = vadd.f32 %v2464, %v2557
        %v2603 = vadd.f32 %v2466, %v2559
        %v2604 = vadd.f32 %v2468, %v2561
        %v2605 = vadd.f32 %v2472, %v2565
        %v2606 = vadd.f32 %v2474, %v2567
        %v2607 = vadd.f32 %v2476, %v2569
        %v2608 = vadd.f32 %v2478, %v2571
        %v2609 = vadd.f32 %v2482, %v2575
        %v2610 = vadd.f32 %v2484, %v2577
        %v2611 = vadd.f32 %v2486, %v2579
        %v2612 = vadd.f32 %v2488, %v2581
        %v2613 = vadd.f32 %v2492, %v2585
        %v2614 = vadd.f32 %v2494, %v2587
        %v2615 = vadd.f32 %v2496, %v2589
        %v2616 = vadd.f32 %v2498, %v2591
        %2617 = vmatprep.subr.bf16.mxu0 %v1292
        %2618 = vmatpush1.bf16.msra.mxu0 %v1291
        %2619 = vmatprep.subr.bf16.mxu0 %v1319
        %2620 = vmatpush1.bf16.msra.mxu0 %v1316
        %2621 = vmatprep.subr.bf16.mxu0 0
        %2622 = vmatpush1.bf16.msra.mxu0 0
        %2623 = vmatprep.subr.bf16.mxu0 0
        %2624 = vmatpush1.bf16.msra.mxu0 0
        %2625 = vmatprep.subr.bf16.mxu0 0
        %2626 = vmatpush1.bf16.msra.mxu0 0
        %2627 = vmatprep.subr.bf16.mxu0 0
        %2628 = vmatpush1.bf16.msra.mxu0 0
        %2629 = vmatprep.subr.bf16.mxu0 0
        %2630 = vmatpush1.bf16.msra.mxu0 0
        %2631 = vmatprep.subr.bf16.mxu0 0
        %2632 = vmatpush1.bf16.msra.mxu0 0
        %2633 = vmatprep.subr.bf16.mxu0 0
        %2634 = vmatpush1.bf16.msra.mxu0 0
        %2635 = vmatprep.subr.bf16.mxu0 0
        %2636 = vmatpush1.bf16.msra.mxu0 0
        %2637 = vmatprep.subr.bf16.mxu0 0
        %2638 = vmatpush1.bf16.msra.mxu0 0
        %2639 = vmatprep.subr.bf16.mxu0 0
        %2640 = vmatpush1.bf16.msra.mxu0 0
        %2641 = vmatprep.subr.bf16.mxu0 0
        %2642 = vmatpush1.bf16.msra.mxu0 0
        %2643 = vmatprep.subr.bf16.mxu0 0
        %2644 = vmatpush1.bf16.msra.mxu0 0
        %2645 = vmatprep.subr.bf16.mxu0 0
        %2646 = vmatpush1.bf16.msra.mxu0 0
        %2647 = vmatprep.subr.bf16.mxu0 0
        %2648 = vmatpush1.bf16.msra.mxu0 0
        %2649 = vmatprep.mubr.bf16.mxu0 0
        %2650 = vmatmul.mubr.bf16.gmra.mrb[0].mxu0 %v1492
        %v2651 = vpop.f32.mrb[0].mxu0
        %v2652 = vadd.f32 0.0, %v2651
        %v2653 = vpop.f32.mrb[0].mxu0
        %v2654 = vadd.f32 0.0, %v2653
        %v2655 = vpop.f32.mrb[0].mxu0
        %v2656 = vadd.f32 0.0, %v2655
        %v2657 = vpop.f32.mrb[0].mxu0
        %v2658 = vadd.f32 0.0, %v2657
        %2659 = vmatprep.mubr.bf16.mxu0 0
        %2660 = vmatmul.mubr.bf16.gmra.mrb[0].mxu0 %v1495
        %v2661 = vpop.f32.mrb[0].mxu0
        %v2662 = vadd.f32 0.0, %v2661
        %v2663 = vpop.f32.mrb[0].mxu0
        %v2664 = vadd.f32 0.0, %v2663
        %v2665 = vpop.f32.mrb[0].mxu0
        %v2666 = vadd.f32 0.0, %v2665
        %v2667 = vpop.f32.mrb[0].mxu0
        %v2668 = vadd.f32 0.0, %v2667
        %2669 = vmatprep.mubr.bf16.mxu0 0
        %2670 = vmatmul.mubr.bf16.gmra.mrb[0].mxu0 %v1498
        %v2671 = vpop.f32.mrb[0].mxu0
        %v2672 = vadd.f32 0.0, %v2671
        %v2673 = vpop.f32.mrb[0].mxu0
        %v2674 = vadd.f32 0.0, %v2673
        %v2675 = vpop.f32.mrb[0].mxu0
        %v2676 = vadd.f32 0.0, %v2675
        %v2677 = vpop.f32.mrb[0].mxu0
        %v2678 = vadd.f32 0.0, %v2677
        %2679 = vmatprep.mubr.bf16.mxu0 0
        %2680 = vmatmul.mubr.bf16.gmra.mrb[0].mxu0 %v1501
        %v2681 = vpop.f32.mrb[0].mxu0
        %v2682 = vadd.f32 0.0, %v2681
        %v2683 = vpop.f32.mrb[0].mxu0
        %v2684 = vadd.f32 0.0, %v2683
        %v2685 = vpop.f32.mrb[0].mxu0
        %v2686 = vadd.f32 0.0, %v2685
        %v2687 = vpop.f32.mrb[0].mxu0
        %v2688 = vadd.f32 0.0, %v2687
        %2689 = vmatprep.mubr.bf16.mxu0 0
        %2690 = vmatmul.mubr.bf16.gmra.mrb[0].mxu0 %v1504
        %v2691 = vpop.f32.mrb[0].mxu0
        %v2692 = vadd.f32 0.0, %v2691
        %v2693 = vpop.f32.mrb[0].mxu0
        %v2694 = vadd.f32 0.0, %v2693
        %v2695 = vpop.f32.mrb[0].mxu0
        %v2696 = vadd.f32 0.0, %v2695
        %v2697 = vpop.f32.mrb[0].mxu0
        %v2698 = vadd.f32 0.0, %v2697
        %2699 = vmatprep.mubr.bf16.mxu0 0
        %2700 = vmatmul.mubr.bf16.gmra.mrb[0].mxu0 %v1507
        %v2701 = vpop.f32.mrb[0].mxu0
        %v2702 = vadd.f32 0.0, %v2701
        %v2703 = vpop.f32.mrb[0].mxu0
        %v2704 = vadd.f32 0.0, %v2703
        %v2705 = vpop.f32.mrb[0].mxu0
        %v2706 = vadd.f32 0.0, %v2705
        %v2707 = vpop.f32.mrb[0].mxu0
        %v2708 = vadd.f32 0.0, %v2707
        %2709 = vdwg.mxu0
        %v2710 = vadd.f32 %v2593, %v2652
        %v2711 = vadd.f32 %v2594, %v2654
        %v2712 = vadd.f32 %v2595, %v2656
        %v2713 = vadd.f32 %v2596, %v2658
        %v2714 = vadd.f32 %v2597, %v2662
        %v2715 = vadd.f32 %v2598, %v2664
        %v2716 = vadd.f32 %v2599, %v2666
        %v2717 = vadd.f32 %v2600, %v2668
        %v2718 = vadd.f32 %v2601, %v2672
        %v2719 = vadd.f32 %v2602, %v2674
        %v2720 = vadd.f32 %v2603, %v2676
        %v2721 = vadd.f32 %v2604, %v2678
        %v2722 = vadd.f32 %v2605, %v2682
        %v2723 = vadd.f32 %v2606, %v2684
        %v2724 = vadd.f32 %v2607, %v2686
        %v2725 = vadd.f32 %v2608, %v2688
        %v2726 = vadd.f32 %v2609, %v2692
        %v2727 = vadd.f32 %v2610, %v2694
        %v2728 = vadd.f32 %v2611, %v2696
        %v2729 = vadd.f32 %v2612, %v2698
        %v2730 = vadd.f32 %v2613, %v2702
        %v2731 = vadd.f32 %v2614, %v2704
        %v2732 = vadd.f32 %v2615, %v2706
        %v2733 = vadd.f32 %v2616, %v2708
        %v2746 = vunpack.c.l.b16 %v697
        %v2747 = vunpack.c.l.b16 %v698
        %v2748 = vunpack.c.l.b16 %v699
        %v2749 = vunpack.c.l.b16 %v700
        %v2750 = vunpack.c.l.b16 %v701
        %v2751 = vunpack.c.l.b16 %v702
        %v2752 = vunpack.c.l.b16 %v703
        %v2753 = vunpack.c.l.b16 %v704
        %v2754 = vunpack.c.l.b16 %v705
        %v2755 = vunpack.c.l.b16 %v706
        %v2756 = vunpack.c.l.b16 %v707
        %v2757 = vunpack.c.l.b16 %v708
        %v2758 = vpack.c.b16 %v2747, %v2746
        %v2759 = vpack.c.b16 %v2749, %v2748
        %v2760 = vpack.c.b16 %v2751, %v2750
        %v2761 = vpack.c.b16 %v2753, %v2752
        %v2762 = vpack.c.b16 %v2755, %v2754
        %v2763 = vpack.c.b16 %v2757, %v2756
        %v2765 = vsel %vm766, %v2758, 0
        %v2768 = vsel %vm766, %v2759, 0
        %v2771 = vsel %vm766, %v2760, 0
        %v2774 = vsel %vm766, %v2761, 0
        %v2777 = vsel %vm766, %v2762, 0
        %v2780 = vsel %vm766, %v2763, 0
        %2782 = vmatprep.subr.bf16.mxu0 %v1486
        %2783 = vmatpush1.bf16.msra.mxu0 %v1485
        %2784 = vmatprep.subr.bf16.mxu0 %v1513
        %2785 = vmatpush1.bf16.msra.mxu0 %v1510
        %2786 = vmatprep.subr.bf16.mxu0 0
        %2787 = vmatpush1.bf16.msra.mxu0 0
        %2788 = vmatprep.subr.bf16.mxu0 0
        %2789 = vmatpush1.bf16.msra.mxu0 0
        %2790 = vmatprep.subr.bf16.mxu0 0
        %2791 = vmatpush1.bf16.msra.mxu0 0
        %2792 = vmatprep.subr.bf16.mxu0 0
        %2793 = vmatpush1.bf16.msra.mxu0 0
        %2794 = vmatprep.subr.bf16.mxu0 0
        %2795 = vmatpush1.bf16.msra.mxu0 0
        %2796 = vmatprep.subr.bf16.mxu0 0
        %2797 = vmatpush1.bf16.msra.mxu0 0
        %2798 = vmatprep.subr.bf16.mxu0 0
        %2799 = vmatpush1.bf16.msra.mxu0 0
        %2800 = vmatprep.subr.bf16.mxu0 0
        %2801 = vmatpush1.bf16.msra.mxu0 0
        %2802 = vmatprep.subr.bf16.mxu0 0
        %2803 = vmatpush1.bf16.msra.mxu0 0
        %2804 = vmatprep.subr.bf16.mxu0 0
        %2805 = vmatpush1.bf16.msra.mxu0 0
        %2806 = vmatprep.subr.bf16.mxu0 0
        %2807 = vmatpush1.bf16.msra.mxu0 0
        %2808 = vmatprep.subr.bf16.mxu0 0
        %2809 = vmatpush1.bf16.msra.mxu0 0
        %2810 = vmatprep.subr.bf16.mxu0 0
        %2811 = vmatpush1.bf16.msra.mxu0 0
        %2812 = vmatprep.subr.bf16.mxu0 0
        %2813 = vmatpush1.bf16.msra.mxu0 0
        %2814 = vmatprep.mubr.bf16.mxu0 0
        %2815 = vmatmul.mubr.bf16.gmra.mrb[0].mxu0 %v2765
        %v2816 = vpop.f32.mrb[0].mxu0
        %v2817 = vadd.f32 0.0, %v2816
        %v2818 = vpop.f32.mrb[0].mxu0
        %v2819 = vadd.f32 0.0, %v2818
        %v2820 = vpop.f32.mrb[0].mxu0
        %v2821 = vadd.f32 0.0, %v2820
        %v2822 = vpop.f32.mrb[0].mxu0
        %v2823 = vadd.f32 0.0, %v2822
        %2824 = vmatprep.mubr.bf16.mxu0 0
        %2825 = vmatmul.mubr.bf16.gmra.mrb[0].mxu0 %v2768
        %v2826 = vpop.f32.mrb[0].mxu0
        %v2827 = vadd.f32 0.0, %v2826
        %v2828 = vpop.f32.mrb[0].mxu0
        %v2829 = vadd.f32 0.0, %v2828
        %v2830 = vpop.f32.mrb[0].mxu0
        %v2831 = vadd.f32 0.0, %v2830
        %v2832 = vpop.f32.mrb[0].mxu0
        %v2833 = vadd.f32 0.0, %v2832
        %2834 = vmatprep.mubr.bf16.mxu0 0
        %2835 = vmatmul.mubr.bf16.gmra.mrb[0].mxu0 %v2771
        %v2836 = vpop.f32.mrb[0].mxu0
        %v2837 = vadd.f32 0.0, %v2836
        %v2838 = vpop.f32.mrb[0].mxu0
        %v2839 = vadd.f32 0.0, %v2838
        %v2840 = vpop.f32.mrb[0].mxu0
        %v2841 = vadd.f32 0.0, %v2840
        %v2842 = vpop.f32.mrb[0].mxu0
        %v2843 = vadd.f32 0.0, %v2842
        %2844 = vmatprep.mubr.bf16.mxu0 0
        %2845 = vmatmul.mubr.bf16.gmra.mrb[0].mxu0 %v2774
        %v2846 = vpop.f32.mrb[0].mxu0
        %v2847 = vadd.f32 0.0, %v2846
        %v2848 = vpop.f32.mrb[0].mxu0
        %v2849 = vadd.f32 0.0, %v2848
        %v2850 = vpop.f32.mrb[0].mxu0
        %v2851 = vadd.f32 0.0, %v2850
        %v2852 = vpop.f32.mrb[0].mxu0
        %v2853 = vadd.f32 0.0, %v2852
        %2854 = vmatprep.mubr.bf16.mxu0 0
        %2855 = vmatmul.mubr.bf16.gmra.mrb[0].mxu0 %v2777
        %v2856 = vpop.f32.mrb[0].mxu0
        %v2857 = vadd.f32 0.0, %v2856
        %v2858 = vpop.f32.mrb[0].mxu0
        %v2859 = vadd.f32 0.0, %v2858
        %v2860 = vpop.f32.mrb[0].mxu0
        %v2861 = vadd.f32 0.0, %v2860
        %v2862 = vpop.f32.mrb[0].mxu0
        %v2863 = vadd.f32 0.0, %v2862
        %2864 = vmatprep.mubr.bf16.mxu0 0
        %2865 = vmatmul.mubr.bf16.gmra.mrb[0].mxu0 %v2780
        %v2866 = vpop.f32.mrb[0].mxu0
        %v2867 = vadd.f32 0.0, %v2866
        %v2868 = vpop.f32.mrb[0].mxu0
        %v2869 = vadd.f32 0.0, %v2868
        %v2870 = vpop.f32.mrb[0].mxu0
        %v2871 = vadd.f32 0.0, %v2870
        %v2872 = vpop.f32.mrb[0].mxu0
        %v2873 = vadd.f32 0.0, %v2872
        %2874 = vdwg.mxu0
        %v2875 = vadd.f32 %v2710, %v2817
        %v2876 = vadd.f32 %v2711, %v2819
        %v2877 = vadd.f32 %v2712, %v2821
        %v2878 = vadd.f32 %v2713, %v2823
        %v2879 = vadd.f32 %v2714, %v2827
        %v2880 = vadd.f32 %v2715, %v2829
        %v2881 = vadd.f32 %v2716, %v2831
        %v2882 = vadd.f32 %v2717, %v2833
        %v2883 = vadd.f32 %v2718, %v2837
        %v2884 = vadd.f32 %v2719, %v2839
        %v2885 = vadd.f32 %v2720, %v2841
        %v2886 = vadd.f32 %v2721, %v2843
        %v2887 = vadd.f32 %v2722, %v2847
        %v2888 = vadd.f32 %v2723, %v2849
        %v2889 = vadd.f32 %v2724, %v2851
        %v2890 = vadd.f32 %v2725, %v2853
        %v2891 = vadd.f32 %v2726, %v2857
        %v2892 = vadd.f32 %v2727, %v2859
        %v2893 = vadd.f32 %v2728, %v2861
        %v2894 = vadd.f32 %v2729, %v2863
        %v2895 = vadd.f32 %v2730, %v2867
        %v2896 = vadd.f32 %v2731, %v2869
        %v2897 = vadd.f32 %v2732, %v2871
        %v2898 = vadd.f32 %v2733, %v2873
        %2899 = vmatprep.subr.bf16.mxu0 %v1655
        %2900 = vmatpush1.bf16.msra.mxu0 %v1654
        %2901 = vmatprep.subr.bf16.mxu0 %v1664
        %2902 = vmatpush1.bf16.msra.mxu0 %v1661
        %2903 = vmatprep.subr.bf16.mxu0 0
        %2904 = vmatpush1.bf16.msra.mxu0 0
        %2905 = vmatprep.subr.bf16.mxu0 0
        %2906 = vmatpush1.bf16.msra.mxu0 0
        %2907 = vmatprep.subr.bf16.mxu0 0
        %2908 = vmatpush1.bf16.msra.mxu0 0
        %2909 = vmatprep.subr.bf16.mxu0 0
        %2910 = vmatpush1.bf16.msra.mxu0 0
        %2911 = vmatprep.subr.bf16.mxu0 0
        %2912 = vmatpush1.bf16.msra.mxu0 0
        %2913 = vmatprep.subr.bf16.mxu0 0
        %2914 = vmatpush1.bf16.msra.mxu0 0
        %2915 = vmatprep.subr.bf16.mxu0 0
        %2916 = vmatpush1.bf16.msra.mxu0 0
        %2917 = vmatprep.subr.bf16.mxu0 0
        %2918 = vmatpush1.bf16.msra.mxu0 0
        %2919 = vmatprep.subr.bf16.mxu0 0
        %2920 = vmatpush1.bf16.msra.mxu0 0
        %2921 = vmatprep.subr.bf16.mxu0 0
        %2922 = vmatpush1.bf16.msra.mxu0 0
        %2923 = vmatprep.subr.bf16.mxu0 0
        %2924 = vmatpush1.bf16.msra.mxu0 0
        %2925 = vmatprep.subr.bf16.mxu0 0
        %2926 = vmatpush1.bf16.msra.mxu0 0
        %2927 = vmatprep.subr.bf16.mxu0 0
        %2928 = vmatpush1.bf16.msra.mxu0 0
        %2929 = vmatprep.subr.bf16.mxu0 0
        %2930 = vmatpush1.bf16.msra.mxu0 0
        %2931 = vmatprep.mubr.bf16.mxu0 0
        %2932 = vmatmul.mubr.bf16.gmra.mrb[0].mxu0 %v1104
        %v2933 = vpop.f32.mrb[0].mxu0
        %v2934 = vadd.f32 0.0, %v2933
        %v2935 = vpop.f32.mrb[0].mxu0
        %v2936 = vadd.f32 0.0, %v2935
        %v2937 = vpop.f32.mrb[0].mxu0
        %v2938 = vadd.f32 0.0, %v2937
        %v2939 = vpop.f32.mrb[0].mxu0
        %v2940 = vadd.f32 0.0, %v2939
        %2941 = vmatprep.mubr.bf16.mxu0 0
        %2942 = vmatmul.mubr.bf16.gmra.mrb[0].mxu0 %v1107
        %v2943 = vpop.f32.mrb[0].mxu0
        %v2944 = vadd.f32 0.0, %v2943
        %v2945 = vpop.f32.mrb[0].mxu0
        %v2946 = vadd.f32 0.0, %v2945
        %v2947 = vpop.f32.mrb[0].mxu0
        %v2948 = vadd.f32 0.0, %v2947
        %v2949 = vpop.f32.mrb[0].mxu0
        %v2950 = vadd.f32 0.0, %v2949
        %2951 = vmatprep.mubr.bf16.mxu0 0
        %2952 = vmatmul.mubr.bf16.gmra.mrb[0].mxu0 %v1110
        %v2953 = vpop.f32.mrb[0].mxu0
        %v2954 = vadd.f32 0.0, %v2953
        %v2955 = vpop.f32.mrb[0].mxu0
        %v2956 = vadd.f32 0.0, %v2955
        %v2957 = vpop.f32.mrb[0].mxu0
        %v2958 = vadd.f32 0.0, %v2957
        %v2959 = vpop.f32.mrb[0].mxu0
        %v2960 = vadd.f32 0.0, %v2959
        %2961 = vmatprep.mubr.bf16.mxu0 0
        %2962 = vmatmul.mubr.bf16.gmra.mrb[0].mxu0 %v1113
        %v2963 = vpop.f32.mrb[0].mxu0
        %v2964 = vadd.f32 0.0, %v2963
        %v2965 = vpop.f32.mrb[0].mxu0
        %v2966 = vadd.f32 0.0, %v2965
        %v2967 = vpop.f32.mrb[0].mxu0
        %v2968 = vadd.f32 0.0, %v2967
        %v2969 = vpop.f32.mrb[0].mxu0
        %v2970 = vadd.f32 0.0, %v2969
        %2971 = vmatprep.mubr.bf16.mxu0 0
        %2972 = vmatmul.mubr.bf16.gmra.mrb[0].mxu0 %v1116
        %v2973 = vpop.f32.mrb[0].mxu0
        %v2974 = vadd.f32 0.0, %v2973
        %v2975 = vpop.f32.mrb[0].mxu0
        %v2976 = vadd.f32 0.0, %v2975
        %v2977 = vpop.f32.mrb[0].mxu0
        %v2978 = vadd.f32 0.0, %v2977
        %v2979 = vpop.f32.mrb[0].mxu0
        %v2980 = vadd.f32 0.0, %v2979
        %2981 = vmatprep.mubr.bf16.mxu0 0
        %2982 = vmatmul.mubr.bf16.gmra.mrb[0].mxu0 %v1119
        %v2983 = vpop.f32.mrb[0].mxu0
        %v2984 = vadd.f32 0.0, %v2983
        %v2985 = vpop.f32.mrb[0].mxu0
        %v2986 = vadd.f32 0.0, %v2985
        %v2987 = vpop.f32.mrb[0].mxu0
        %v2988 = vadd.f32 0.0, %v2987
        %v2989 = vpop.f32.mrb[0].mxu0
        %v2990 = vadd.f32 0.0, %v2989
        %2991 = vdwg.mxu0
        %2992 = vmatprep.subr.bf16.mxu0 %v1772
        %2993 = vmatpush1.bf16.msra.mxu0 %v1771
        %2994 = vmatprep.subr.bf16.mxu0 %v1781
        %2995 = vmatpush1.bf16.msra.mxu0 %v1778
        %2996 = vmatprep.subr.bf16.mxu0 0
        %2997 = vmatpush1.bf16.msra.mxu0 0
        %2998 = vmatprep.subr.bf16.mxu0 0
        %2999 = vmatpush1.bf16.msra.mxu0 0
        %3000 = vmatprep.subr.bf16.mxu0 0
        %3001 = vmatpush1.bf16.msra.mxu0 0
        %3002 = vmatprep.subr.bf16.mxu0 0
        %3003 = vmatpush1.bf16.msra.mxu0 0
        %3004 = vmatprep.subr.bf16.mxu0 0
        %3005 = vmatpush1.bf16.msra.mxu0 0
        %3006 = vmatprep.subr.bf16.mxu0 0
        %3007 = vmatpush1.bf16.msra.mxu0 0
        %3008 = vmatprep.subr.bf16.mxu0 0
        %3009 = vmatpush1.bf16.msra.mxu0 0
        %3010 = vmatprep.subr.bf16.mxu0 0
        %3011 = vmatpush1.bf16.msra.mxu0 0
        %3012 = vmatprep.subr.bf16.mxu0 0
        %3013 = vmatpush1.bf16.msra.mxu0 0
        %3014 = vmatprep.subr.bf16.mxu0 0
        %3015 = vmatpush1.bf16.msra.mxu0 0
        %3016 = vmatprep.subr.bf16.mxu0 0
        %3017 = vmatpush1.bf16.msra.mxu0 0
        %3018 = vmatprep.subr.bf16.mxu0 0
        %3019 = vmatpush1.bf16.msra.mxu0 0
        %3020 = vmatprep.subr.bf16.mxu0 0
        %3021 = vmatpush1.bf16.msra.mxu0 0
        %3022 = vmatprep.subr.bf16.mxu0 0
        %3023 = vmatpush1.bf16.msra.mxu0 0
        %3024 = vmatprep.mubr.bf16.mxu0 0
        %3025 = vmatmul.mubr.bf16.gmra.mrb[0].mxu0 %v768
        %v3026 = vpop.f32.mrb[0].mxu0
        %v3027 = vadd.f32 %v2934, %v3026
        %v3028 = vpop.f32.mrb[0].mxu0
        %v3029 = vadd.f32 %v2936, %v3028
        %v3030 = vpop.f32.mrb[0].mxu0
        %v3031 = vadd.f32 %v2938, %v3030
        %v3032 = vpop.f32.mrb[0].mxu0
        %v3033 = vadd.f32 %v2940, %v3032
        %3034 = vmatprep.mubr.bf16.mxu0 0
        %3035 = vmatmul.mubr.bf16.gmra.mrb[0].mxu0 %v771
        %v3036 = vpop.f32.mrb[0].mxu0
        %v3037 = vadd.f32 %v2944, %v3036
        %v3038 = vpop.f32.mrb[0].mxu0
        %v3039 = vadd.f32 %v2946, %v3038
        %v3040 = vpop.f32.mrb[0].mxu0
        %v3041 = vadd.f32 %v2948, %v3040
        %v3042 = vpop.f32.mrb[0].mxu0
        %v3043 = vadd.f32 %v2950, %v3042
        %3044 = vmatprep.mubr.bf16.mxu0 0
        %3045 = vmatmul.mubr.bf16.gmra.mrb[0].mxu0 %v774
        %v3046 = vpop.f32.mrb[0].mxu0
        %v3047 = vadd.f32 %v2954, %v3046
        %v3048 = vpop.f32.mrb[0].mxu0
        %v3049 = vadd.f32 %v2956, %v3048
        %v3050 = vpop.f32.mrb[0].mxu0
        %v3051 = vadd.f32 %v2958, %v3050
        %v3052 = vpop.f32.mrb[0].mxu0
        %v3053 = vadd.f32 %v2960, %v3052
        %3054 = vmatprep.mubr.bf16.mxu0 0
        %3055 = vmatmul.mubr.bf16.gmra.mrb[0].mxu0 %v777
        %v3056 = vpop.f32.mrb[0].mxu0
        %v3057 = vadd.f32 %v2964, %v3056
        %v3058 = vpop.f32.mrb[0].mxu0
        %v3059 = vadd.f32 %v2966, %v3058
        %v3060 = vpop.f32.mrb[0].mxu0
        %v3061 = vadd.f32 %v2968, %v3060
        %v3062 = vpop.f32.mrb[0].mxu0
        %v3063 = vadd.f32 %v2970, %v3062
        %3064 = vmatprep.mubr.bf16.mxu0 0
        %3065 = vmatmul.mubr.bf16.gmra.mrb[0].mxu0 %v780
        %v3066 = vpop.f32.mrb[0].mxu0
        %v3067 = vadd.f32 %v2974, %v3066
        %v3068 = vpop.f32.mrb[0].mxu0
        %v3069 = vadd.f32 %v2976, %v3068
        %v3070 = vpop.f32.mrb[0].mxu0
        %v3071 = vadd.f32 %v2978, %v3070
        %v3072 = vpop.f32.mrb[0].mxu0
        %v3073 = vadd.f32 %v2980, %v3072
        %3074 = vmatprep.mubr.bf16.mxu0 0
        %3075 = vmatmul.mubr.bf16.gmra.mrb[0].mxu0 %v783
        %v3076 = vpop.f32.mrb[0].mxu0
        %v3077 = vadd.f32 %v2984, %v3076
        %v3078 = vpop.f32.mrb[0].mxu0
        %v3079 = vadd.f32 %v2986, %v3078
        %v3080 = vpop.f32.mrb[0].mxu0
        %v3081 = vadd.f32 %v2988, %v3080
        %v3082 = vpop.f32.mrb[0].mxu0
        %v3083 = vadd.f32 %v2990, %v3082
        %3084 = vdwg.mxu0
        %3085 = vmatprep.subr.bf16.mxu0 %v1894
        %3086 = vmatpush1.bf16.msra.mxu0 %v1893
        %3087 = vmatprep.subr.bf16.mxu0 %v1903
        %3088 = vmatpush1.bf16.msra.mxu0 %v1900
        %3089 = vmatprep.subr.bf16.mxu0 0
        %3090 = vmatpush1.bf16.msra.mxu0 0
        %3091 = vmatprep.subr.bf16.mxu0 0
        %3092 = vmatpush1.bf16.msra.mxu0 0
        %3093 = vmatprep.subr.bf16.mxu0 0
        %3094 = vmatpush1.bf16.msra.mxu0 0
        %3095 = vmatprep.subr.bf16.mxu0 0
        %3096 = vmatpush1.bf16.msra.mxu0 0
        %3097 = vmatprep.subr.bf16.mxu0 0
        %3098 = vmatpush1.bf16.msra.mxu0 0
        %3099 = vmatprep.subr.bf16.mxu0 0
        %3100 = vmatpush1.bf16.msra.mxu0 0
        %3101 = vmatprep.subr.bf16.mxu0 0
        %3102 = vmatpush1.bf16.msra.mxu0 0
        %3103 = vmatprep.subr.bf16.mxu0 0
        %3104 = vmatpush1.bf16.msra.mxu0 0
        %3105 = vmatprep.subr.bf16.mxu0 0
        %3106 = vmatpush1.bf16.msra.mxu0 0
        %3107 = vmatprep.subr.bf16.mxu0 0
        %3108 = vmatpush1.bf16.msra.mxu0 0
        %3109 = vmatprep.subr.bf16.mxu0 0
        %3110 = vmatpush1.bf16.msra.mxu0 0
        %3111 = vmatprep.subr.bf16.mxu0 0
        %3112 = vmatpush1.bf16.msra.mxu0 0
        %3113 = vmatprep.subr.bf16.mxu0 0
        %3114 = vmatpush1.bf16.msra.mxu0 0
        %3115 = vmatprep.subr.bf16.mxu0 0
        %3116 = vmatpush1.bf16.msra.mxu0 0
        %3117 = vmatprep.mubr.bf16.mxu0 0
        %3118 = vmatmul.mubr.bf16.gmra.mrb[0].mxu0 %v1298
        %v3119 = vpop.f32.mrb[0].mxu0
        %v3120 = vadd.f32 0.0, %v3119
        %v3121 = vpop.f32.mrb[0].mxu0
        %v3122 = vadd.f32 0.0, %v3121
        %v3123 = vpop.f32.mrb[0].mxu0
        %v3124 = vadd.f32 0.0, %v3123
        %v3125 = vpop.f32.mrb[0].mxu0
        %v3126 = vadd.f32 0.0, %v3125
        %3127 = vmatprep.mubr.bf16.mxu0 0
        %3128 = vmatmul.mubr.bf16.gmra.mrb[0].mxu0 %v1301
        %v3129 = vpop.f32.mrb[0].mxu0
        %v3130 = vadd.f32 0.0, %v3129
        %v3131 = vpop.f32.mrb[0].mxu0
        %v3132 = vadd.f32 0.0, %v3131
        %v3133 = vpop.f32.mrb[0].mxu0
        %v3134 = vadd.f32 0.0, %v3133
        %v3135 = vpop.f32.mrb[0].mxu0
        %v3136 = vadd.f32 0.0, %v3135
        %3137 = vmatprep.mubr.bf16.mxu0 0
        %3138 = vmatmul.mubr.bf16.gmra.mrb[0].mxu0 %v1304
        %v3139 = vpop.f32.mrb[0].mxu0
        %v3140 = vadd.f32 0.0, %v3139
        %v3141 = vpop.f32.mrb[0].mxu0
        %v3142 = vadd.f32 0.0, %v3141
        %v3143 = vpop.f32.mrb[0].mxu0
        %v3144 = vadd.f32 0.0, %v3143
        %v3145 = vpop.f32.mrb[0].mxu0
        %v3146 = vadd.f32 0.0, %v3145
        %3147 = vmatprep.mubr.bf16.mxu0 0
        %3148 = vmatmul.mubr.bf16.gmra.mrb[0].mxu0 %v1307
        %v3149 = vpop.f32.mrb[0].mxu0
        %v3150 = vadd.f32 0.0, %v3149
        %v3151 = vpop.f32.mrb[0].mxu0
        %v3152 = vadd.f32 0.0, %v3151
        %v3153 = vpop.f32.mrb[0].mxu0
        %v3154 = vadd.f32 0.0, %v3153
        %v3155 = vpop.f32.mrb[0].mxu0
        %v3156 = vadd.f32 0.0, %v3155
        %3157 = vmatprep.mubr.bf16.mxu0 0
        %3158 = vmatmul.mubr.bf16.gmra.mrb[0].mxu0 %v1310
        %v3159 = vpop.f32.mrb[0].mxu0
        %v3160 = vadd.f32 0.0, %v3159
        %v3161 = vpop.f32.mrb[0].mxu0
        %v3162 = vadd.f32 0.0, %v3161
        %v3163 = vpop.f32.mrb[0].mxu0
        %v3164 = vadd.f32 0.0, %v3163
        %v3165 = vpop.f32.mrb[0].mxu0
        %v3166 = vadd.f32 0.0, %v3165
        %3167 = vmatprep.mubr.bf16.mxu0 0
        %3168 = vmatmul.mubr.bf16.gmra.mrb[0].mxu0 %v1313
        %v3169 = vpop.f32.mrb[0].mxu0
        %v3170 = vadd.f32 0.0, %v3169
        %v3171 = vpop.f32.mrb[0].mxu0
        %v3172 = vadd.f32 0.0, %v3171
        %v3173 = vpop.f32.mrb[0].mxu0
        %v3174 = vadd.f32 0.0, %v3173
        %v3175 = vpop.f32.mrb[0].mxu0
        %v3176 = vadd.f32 0.0, %v3175
        %3177 = vdwg.mxu0
        %v3178 = vadd.f32 %v3027, %v3120
        %v3179 = vadd.f32 %v3029, %v3122
        %v3180 = vadd.f32 %v3031, %v3124
        %v3181 = vadd.f32 %v3033, %v3126
        %v3182 = vadd.f32 %v3037, %v3130
        %v3183 = vadd.f32 %v3039, %v3132
        %v3184 = vadd.f32 %v3041, %v3134
        %v3185 = vadd.f32 %v3043, %v3136
        %v3186 = vadd.f32 %v3047, %v3140
        %v3187 = vadd.f32 %v3049, %v3142
        %v3188 = vadd.f32 %v3051, %v3144
        %v3189 = vadd.f32 %v3053, %v3146
        %v3190 = vadd.f32 %v3057, %v3150
        %v3191 = vadd.f32 %v3059, %v3152
        %v3192 = vadd.f32 %v3061, %v3154
        %v3193 = vadd.f32 %v3063, %v3156
        %v3194 = vadd.f32 %v3067, %v3160
        %v3195 = vadd.f32 %v3069, %v3162
        %v3196 = vadd.f32 %v3071, %v3164
        %v3197 = vadd.f32 %v3073, %v3166
        %v3198 = vadd.f32 %v3077, %v3170
        %v3199 = vadd.f32 %v3079, %v3172
        %v3200 = vadd.f32 %v3081, %v3174
        %v3201 = vadd.f32 %v3083, %v3176
        %3202 = vmatprep.subr.bf16.mxu0 %v2040
        %3203 = vmatpush1.bf16.msra.mxu0 %v2039
        %3204 = vmatprep.subr.bf16.mxu0 %v2049
        %3205 = vmatpush1.bf16.msra.mxu0 %v2046
        %3206 = vmatprep.subr.bf16.mxu0 0
        %3207 = vmatpush1.bf16.msra.mxu0 0
        %3208 = vmatprep.subr.bf16.mxu0 0
        %3209 = vmatpush1.bf16.msra.mxu0 0
        %3210 = vmatprep.subr.bf16.mxu0 0
        %3211 = vmatpush1.bf16.msra.mxu0 0
        %3212 = vmatprep.subr.bf16.mxu0 0
        %3213 = vmatpush1.bf16.msra.mxu0 0
        %3214 = vmatprep.subr.bf16.mxu0 0
        %3215 = vmatpush1.bf16.msra.mxu0 0
        %3216 = vmatprep.subr.bf16.mxu0 0
        %3217 = vmatpush1.bf16.msra.mxu0 0
        %3218 = vmatprep.subr.bf16.mxu0 0
        %3219 = vmatpush1.bf16.msra.mxu0 0
        %3220 = vmatprep.subr.bf16.mxu0 0
        %3221 = vmatpush1.bf16.msra.mxu0 0
        %3222 = vmatprep.subr.bf16.mxu0 0
        %3223 = vmatpush1.bf16.msra.mxu0 0
        %3224 = vmatprep.subr.bf16.mxu0 0
        %3225 = vmatpush1.bf16.msra.mxu0 0
        %3226 = vmatprep.subr.bf16.mxu0 0
        %3227 = vmatpush1.bf16.msra.mxu0 0
        %3228 = vmatprep.subr.bf16.mxu0 0
        %3229 = vmatpush1.bf16.msra.mxu0 0
        %3230 = vmatprep.subr.bf16.mxu0 0
        %3231 = vmatpush1.bf16.msra.mxu0 0
        %3232 = vmatprep.subr.bf16.mxu0 0
        %3233 = vmatpush1.bf16.msra.mxu0 0
        %3234 = vmatprep.mubr.bf16.mxu0 0
        %3235 = vmatmul.mubr.bf16.gmra.mrb[0].mxu0 %v1492
        %v3236 = vpop.f32.mrb[0].mxu0
        %v3237 = vadd.f32 0.0, %v3236
        %v3238 = vpop.f32.mrb[0].mxu0
        %v3239 = vadd.f32 0.0, %v3238
        %v3240 = vpop.f32.mrb[0].mxu0
        %v3241 = vadd.f32 0.0, %v3240
        %v3242 = vpop.f32.mrb[0].mxu0
        %v3243 = vadd.f32 0.0, %v3242
        %3244 = vmatprep.mubr.bf16.mxu0 0
        %3245 = vmatmul.mubr.bf16.gmra.mrb[0].mxu0 %v1495
        %v3246 = vpop.f32.mrb[0].mxu0
        %v3247 = vadd.f32 0.0, %v3246
        %v3248 = vpop.f32.mrb[0].mxu0
        %v3249 = vadd.f32 0.0, %v3248
        %v3250 = vpop.f32.mrb[0].mxu0
        %v3251 = vadd.f32 0.0, %v3250
        %v3252 = vpop.f32.mrb[0].mxu0
        %v3253 = vadd.f32 0.0, %v3252
        %3254 = vmatprep.mubr.bf16.mxu0 0
        %3255 = vmatmul.mubr.bf16.gmra.mrb[0].mxu0 %v1498
        %v3256 = vpop.f32.mrb[0].mxu0
        %v3257 = vadd.f32 0.0, %v3256
        %v3258 = vpop.f32.mrb[0].mxu0
        %v3259 = vadd.f32 0.0, %v3258
        %v3260 = vpop.f32.mrb[0].mxu0
        %v3261 = vadd.f32 0.0, %v3260
        %v3262 = vpop.f32.mrb[0].mxu0
        %v3263 = vadd.f32 0.0, %v3262
        %3264 = vmatprep.mubr.bf16.mxu0 0
        %3265 = vmatmul.mubr.bf16.gmra.mrb[0].mxu0 %v1501
        %v3266 = vpop.f32.mrb[0].mxu0
        %v3267 = vadd.f32 0.0, %v3266
        %v3268 = vpop.f32.mrb[0].mxu0
        %v3269 = vadd.f32 0.0, %v3268
        %v3270 = vpop.f32.mrb[0].mxu0
        %v3271 = vadd.f32 0.0, %v3270
        %v3272 = vpop.f32.mrb[0].mxu0
        %v3273 = vadd.f32 0.0, %v3272
        %3274 = vmatprep.mubr.bf16.mxu0 0
        %3275 = vmatmul.mubr.bf16.gmra.mrb[0].mxu0 %v1504
        %v3276 = vpop.f32.mrb[0].mxu0
        %v3277 = vadd.f32 0.0, %v3276
        %v3278 = vpop.f32.mrb[0].mxu0
        %v3279 = vadd.f32 0.0, %v3278
        %v3280 = vpop.f32.mrb[0].mxu0
        %v3281 = vadd.f32 0.0, %v3280
        %v3282 = vpop.f32.mrb[0].mxu0
        %v3283 = vadd.f32 0.0, %v3282
        %3284 = vmatprep.mubr.bf16.mxu0 0
        %3285 = vmatmul.mubr.bf16.gmra.mrb[0].mxu0 %v1507
        %v3286 = vpop.f32.mrb[0].mxu0
        %v3287 = vadd.f32 0.0, %v3286
        %v3288 = vpop.f32.mrb[0].mxu0
        %v3289 = vadd.f32 0.0, %v3288
        %v3290 = vpop.f32.mrb[0].mxu0
        %v3291 = vadd.f32 0.0, %v3290
        %v3292 = vpop.f32.mrb[0].mxu0
        %v3293 = vadd.f32 0.0, %v3292
        %3294 = vdwg.mxu0
        %v3295 = vadd.f32 %v3178, %v3237
        %v3296 = vadd.f32 %v3179, %v3239
        %v3297 = vadd.f32 %v3180, %v3241
        %v3298 = vadd.f32 %v3181, %v3243
        %v3299 = vadd.f32 %v3182, %v3247
        %v3300 = vadd.f32 %v3183, %v3249
        %v3301 = vadd.f32 %v3184, %v3251
        %v3302 = vadd.f32 %v3185, %v3253
        %v3303 = vadd.f32 %v3186, %v3257
        %v3304 = vadd.f32 %v3187, %v3259
        %v3305 = vadd.f32 %v3188, %v3261
        %v3306 = vadd.f32 %v3189, %v3263
        %v3307 = vadd.f32 %v3190, %v3267
        %v3308 = vadd.f32 %v3191, %v3269
        %v3309 = vadd.f32 %v3192, %v3271
        %v3310 = vadd.f32 %v3193, %v3273
        %v3311 = vadd.f32 %v3194, %v3277
        %v3312 = vadd.f32 %v3195, %v3279
        %v3313 = vadd.f32 %v3196, %v3281
        %v3314 = vadd.f32 %v3197, %v3283
        %v3315 = vadd.f32 %v3198, %v3287
        %v3316 = vadd.f32 %v3199, %v3289
        %v3317 = vadd.f32 %v3200, %v3291
        %v3318 = vadd.f32 %v3201, %v3293
        %3319 = vmatprep.subr.bf16.mxu0 %v2186
        %3320 = vmatpush1.bf16.msra.mxu0 %v2185
        %3321 = vmatprep.subr.bf16.mxu0 %v2195
        %3322 = vmatpush1.bf16.msra.mxu0 %v2192
        %3323 = vmatprep.subr.bf16.mxu0 0
        %3324 = vmatpush1.bf16.msra.mxu0 0
        %3325 = vmatprep.subr.bf16.mxu0 0
        %3326 = vmatpush1.bf16.msra.mxu0 0
        %3327 = vmatprep.subr.bf16.mxu0 0
        %3328 = vmatpush1.bf16.msra.mxu0 0
        %3329 = vmatprep.subr.bf16.mxu0 0
        %3330 = vmatpush1.bf16.msra.mxu0 0
        %3331 = vmatprep.subr.bf16.mxu0 0
        %3332 = vmatpush1.bf16.msra.mxu0 0
        %3333 = vmatprep.subr.bf16.mxu0 0
        %3334 = vmatpush1.bf16.msra.mxu0 0
        %3335 = vmatprep.subr.bf16.mxu0 0
        %3336 = vmatpush1.bf16.msra.mxu0 0
        %3337 = vmatprep.subr.bf16.mxu0 0
        %3338 = vmatpush1.bf16.msra.mxu0 0
        %3339 = vmatprep.subr.bf16.mxu0 0
        %3340 = vmatpush1.bf16.msra.mxu0 0
        %3341 = vmatprep.subr.bf16.mxu0 0
        %3342 = vmatpush1.bf16.msra.mxu0 0
        %3343 = vmatprep.subr.bf16.mxu0 0
        %3344 = vmatpush1.bf16.msra.mxu0 0
        %3345 = vmatprep.subr.bf16.mxu0 0
        %3346 = vmatpush1.bf16.msra.mxu0 0
        %3347 = vmatprep.subr.bf16.mxu0 0
        %3348 = vmatpush1.bf16.msra.mxu0 0
        %3349 = vmatprep.subr.bf16.mxu0 0
        %3350 = vmatpush1.bf16.msra.mxu0 0
        %3351 = vmatprep.mubr.bf16.mxu0 0
        %3352 = vmatmul.mubr.bf16.gmra.mrb[0].mxu0 %v2765
        %v3353 = vpop.f32.mrb[0].mxu0
        %v3354 = vadd.f32 0.0, %v3353
        %v3355 = vpop.f32.mrb[0].mxu0
        %v3356 = vadd.f32 0.0, %v3355
        %v3357 = vpop.f32.mrb[0].mxu0
        %v3358 = vadd.f32 0.0, %v3357
        %v3359 = vpop.f32.mrb[0].mxu0
        %v3360 = vadd.f32 0.0, %v3359
        %3361 = vmatprep.mubr.bf16.mxu0 0
        %3362 = vmatmul.mubr.bf16.gmra.mrb[0].mxu0 %v2768
        %v3363 = vpop.f32.mrb[0].mxu0
        %v3364 = vadd.f32 0.0, %v3363
        %v3365 = vpop.f32.mrb[0].mxu0
        %v3366 = vadd.f32 0.0, %v3365
        %v3367 = vpop.f32.mrb[0].mxu0
        %v3368 = vadd.f32 0.0, %v3367
        %v3369 = vpop.f32.mrb[0].mxu0
        %v3370 = vadd.f32 0.0, %v3369
        %3371 = vmatprep.mubr.bf16.mxu0 0
        %3372 = vmatmul.mubr.bf16.gmra.mrb[0].mxu0 %v2771
        %v3373 = vpop.f32.mrb[0].mxu0
        %v3374 = vadd.f32 0.0, %v3373
        %v3375 = vpop.f32.mrb[0].mxu0
        %v3376 = vadd.f32 0.0, %v3375
        %v3377 = vpop.f32.mrb[0].mxu0
        %v3378 = vadd.f32 0.0, %v3377
        %v3379 = vpop.f32.mrb[0].mxu0
        %v3380 = vadd.f32 0.0, %v3379
        %3381 = vmatprep.mubr.bf16.mxu0 0
        %3382 = vmatmul.mubr.bf16.gmra.mrb[0].mxu0 %v2774
        %v3383 = vpop.f32.mrb[0].mxu0
        %v3384 = vadd.f32 0.0, %v3383
        %v3385 = vpop.f32.mrb[0].mxu0
        %v3386 = vadd.f32 0.0, %v3385
        %v3387 = vpop.f32.mrb[0].mxu0
        %v3388 = vadd.f32 0.0, %v3387
        %v3389 = vpop.f32.mrb[0].mxu0
        %v3390 = vadd.f32 0.0, %v3389
        %3391 = vmatprep.mubr.bf16.mxu0 0
        %3392 = vmatmul.mubr.bf16.gmra.mrb[0].mxu0 %v2777
        %v3393 = vpop.f32.mrb[0].mxu0
        %v3394 = vadd.f32 0.0, %v3393
        %v3395 = vpop.f32.mrb[0].mxu0
        %v3396 = vadd.f32 0.0, %v3395
        %v3397 = vpop.f32.mrb[0].mxu0
        %v3398 = vadd.f32 0.0, %v3397
        %v3399 = vpop.f32.mrb[0].mxu0
        %v3400 = vadd.f32 0.0, %v3399
        %3401 = vmatprep.mubr.bf16.mxu0 0
        %3402 = vmatmul.mubr.bf16.gmra.mrb[0].mxu0 %v2780
        %v3403 = vpop.f32.mrb[0].mxu0
        %v3404 = vadd.f32 0.0, %v3403
        %v3405 = vpop.f32.mrb[0].mxu0
        %v3406 = vadd.f32 0.0, %v3405
        %v3407 = vpop.f32.mrb[0].mxu0
        %v3408 = vadd.f32 0.0, %v3407
        %v3409 = vpop.f32.mrb[0].mxu0
        %v3410 = vadd.f32 0.0, %v3409
        %3411 = vdwg.mxu0
        %v3412 = vadd.f32 %v3295, %v3354
        %v3413 = vadd.f32 %v3296, %v3356
        %v3414 = vadd.f32 %v3297, %v3358
        %v3415 = vadd.f32 %v3298, %v3360
        %v3416 = vadd.f32 %v3299, %v3364
        %v3417 = vadd.f32 %v3300, %v3366
        %v3418 = vadd.f32 %v3301, %v3368
        %v3419 = vadd.f32 %v3302, %v3370
        %v3420 = vadd.f32 %v3303, %v3374
        %v3421 = vadd.f32 %v3304, %v3376
        %v3422 = vadd.f32 %v3305, %v3378
        %v3423 = vadd.f32 %v3306, %v3380
        %v3424 = vadd.f32 %v3307, %v3384
        %v3425 = vadd.f32 %v3308, %v3386
        %v3426 = vadd.f32 %v3309, %v3388
        %v3427 = vadd.f32 %v3310, %v3390
        %v3428 = vadd.f32 %v3311, %v3394
        %v3429 = vadd.f32 %v3312, %v3396
        %v3430 = vadd.f32 %v3313, %v3398
        %v3431 = vadd.f32 %v3314, %v3400
        %v3432 = vadd.f32 %v3315, %v3404
        %v3433 = vadd.f32 %v3316, %v3406
        %v3434 = vadd.f32 %v3317, %v3408
        %v3435 = vadd.f32 %v3318, %v3410
        %v3436 = vmax.f32 %v1608, %v2290
        %v3437 = vmax.f32 %v1609, %v2291
        %v3438 = vmax.f32 %v1610, %v2292
        %v3439 = vmax.f32 %v1611, %v2293
        %v3440 = vmax.f32 %v1612, %v2294
        %v3441 = vmax.f32 %v1613, %v2295
        %v3442 = vmax.f32 %v1614, %v2296
        %v3443 = vmax.f32 %v1615, %v2297
        %v3444 = vmax.f32 %v1616, %v2298
        %v3445 = vmax.f32 %v1617, %v2299
        %v3446 = vmax.f32 %v1618, %v2300
        %v3447 = vmax.f32 %v1619, %v2301
        %v3448 = vmax.f32 %v1620, %v2302
        %v3449 = vmax.f32 %v1621, %v2303
        %v3450 = vmax.f32 %v1622, %v2304
        %v3451 = vmax.f32 %v1623, %v2305
        %v3452 = vmax.f32 %v1624, %v2306
        %v3453 = vmax.f32 %v1625, %v2307
        %v3454 = vmax.f32 %v1626, %v2308
        %v3455 = vmax.f32 %v1627, %v2309
        %v3456 = vmax.f32 %v1628, %v2310
        %v3457 = vmax.f32 %v1629, %v2311
        %v3458 = vmax.f32 %v1630, %v2312
        %v3459 = vmax.f32 %v1631, %v2313
        %v3460 = vmax.f32 %v2875, %v3412
        %v3461 = vmax.f32 %v2876, %v3413
        %v3462 = vmax.f32 %v2877, %v3414
        %v3463 = vmax.f32 %v2878, %v3415
        %v3464 = vmax.f32 %v2879, %v3416
        %v3465 = vmax.f32 %v2880, %v3417
        %v3466 = vmax.f32 %v2881, %v3418
        %v3467 = vmax.f32 %v2882, %v3419
        %v3468 = vmax.f32 %v2883, %v3420
        %v3469 = vmax.f32 %v2884, %v3421
        %v3470 = vmax.f32 %v2885, %v3422
        %v3471 = vmax.f32 %v2886, %v3423
        %v3472 = vmax.f32 %v2887, %v3424
        %v3473 = vmax.f32 %v2888, %v3425
        %v3474 = vmax.f32 %v2889, %v3426
        %v3475 = vmax.f32 %v2890, %v3427
        %v3476 = vmax.f32 %v2891, %v3428
        %v3477 = vmax.f32 %v2892, %v3429
        %v3478 = vmax.f32 %v2893, %v3430
        %v3479 = vmax.f32 %v2894, %v3431
        %v3480 = vmax.f32 %v2895, %v3432
        %v3481 = vmax.f32 %v2896, %v3433
        %v3482 = vmax.f32 %v2897, %v3434
        %v3483 = vmax.f32 %v2898, %v3435
        %v3484 = vmax.f32 %v3436, %v3460
        %v3485 = vmax.f32 %v3437, %v3461
        %v3486 = vmax.f32 %v3438, %v3462
        %v3487 = vmax.f32 %v3439, %v3463
        %v3488 = vmax.f32 %v3440, %v3464
        %v3489 = vmax.f32 %v3441, %v3465
        %v3490 = vmax.f32 %v3442, %v3466
        %v3491 = vmax.f32 %v3443, %v3467
        %v3492 = vmax.f32 %v3444, %v3468
        %v3493 = vmax.f32 %v3445, %v3469
        %v3494 = vmax.f32 %v3446, %v3470
        %v3495 = vmax.f32 %v3447, %v3471
        %v3496 = vmax.f32 %v3448, %v3472
        %v3497 = vmax.f32 %v3449, %v3473
        %v3498 = vmax.f32 %v3450, %v3474
        %v3499 = vmax.f32 %v3451, %v3475
        %v3500 = vmax.f32 %v3452, %v3476
        %v3501 = vmax.f32 %v3453, %v3477
        %v3502 = vmax.f32 %v3454, %v3478
        %v3503 = vmax.f32 %v3455, %v3479
        %v3504 = vmax.f32 %v3456, %v3480
        %v3505 = vmax.f32 %v3457, %v3481
        %v3506 = vmax.f32 %v3458, %v3482
        %v3507 = vmax.f32 %v3459, %v3483
        %v3508 = vld [vmem:[%s2] sm:$0x3]
        %v3510 = vlaneseq
        %v3511 = vshrl.u32 %v3510, 7
        %v3512 = vsub.s32 0, %v3511
        %v3513 = vrot.slane %v3508, %v3512
        %v3514 = vlaneseq
        %v3515 = vshrl.u32 %v3514, 7
        %v3516 = vsub.s32 1, %v3515
        %v3517 = vrot.slane %v3508, %v3516
        %v3520 = vadd.f32 %v3484, %v3513
        %v3521 = vadd.f32 %v3485, %v3517
        %v3522 = vadd.f32 %v3486, %v3513
        %v3523 = vadd.f32 %v3487, %v3517
        %v3524 = vadd.f32 %v3488, %v3513
        %v3525 = vadd.f32 %v3489, %v3517
        %v3526 = vadd.f32 %v3490, %v3513
        %v3527 = vadd.f32 %v3491, %v3517
        %v3528 = vadd.f32 %v3492, %v3513
        %v3529 = vadd.f32 %v3493, %v3517
        %v3530 = vadd.f32 %v3494, %v3513
        %v3531 = vadd.f32 %v3495, %v3517
        %v3532 = vadd.f32 %v3496, %v3513
        %v3533 = vadd.f32 %v3497, %v3517
        %v3534 = vadd.f32 %v3498, %v3513
        %v3535 = vadd.f32 %v3499, %v3517
        %v3536 = vadd.f32 %v3500, %v3513
        %v3537 = vadd.f32 %v3501, %v3517
        %v3538 = vadd.f32 %v3502, %v3513
        %v3539 = vadd.f32 %v3503, %v3517
        %v3540 = vadd.f32 %v3504, %v3513
        %v3541 = vadd.f32 %v3505, %v3517
        %v3542 = vadd.f32 %v3506, %v3513
        %v3543 = vadd.f32 %v3507, %v3517
        %v3544 = vmax.f32 %v3520, 0.0
        %v3545 = vmax.f32 %v3521, 0.0
        %v3546 = vmax.f32 %v3522, 0.0
        %v3547 = vmax.f32 %v3523, 0.0
        %v3548 = vmax.f32 %v3524, 0.0
        %v3549 = vmax.f32 %v3525, 0.0
        %v3550 = vmax.f32 %v3526, 0.0
        %v3551 = vmax.f32 %v3527, 0.0
        %v3552 = vmax.f32 %v3528, 0.0
        %v3553 = vmax.f32 %v3529, 0.0
        %v3554 = vmax.f32 %v3530, 0.0
        %v3555 = vmax.f32 %v3531, 0.0
        %v3556 = vmax.f32 %v3532, 0.0
        %v3557 = vmax.f32 %v3533, 0.0
        %v3558 = vmax.f32 %v3534, 0.0
        %v3559 = vmax.f32 %v3535, 0.0
        %v3560 = vmax.f32 %v3536, 0.0
        %v3561 = vmax.f32 %v3537, 0.0
        %v3562 = vmax.f32 %v3538, 0.0
        %v3563 = vmax.f32 %v3539, 0.0
        %v3564 = vmax.f32 %v3540, 0.0
        %v3565 = vmax.f32 %v3541, 0.0
        %v3566 = vmax.f32 %v3542, 0.0
        %v3567 = vmax.f32 %v3543, 0.0
        %v3568 = vpack.c.bf16 %v3546, %v3544
        %v3569 = vpack.c.bf16 %v3547, %v3545
        %v3570 = vpack.c.bf16 %v3550, %v3548
        %v3571 = vpack.c.bf16 %v3551, %v3549
        %v3572 = vpack.c.bf16 %v3554, %v3552
        %v3573 = vpack.c.bf16 %v3555, %v3553
        %v3574 = vpack.c.bf16 %v3558, %v3556
        %v3575 = vpack.c.bf16 %v3559, %v3557
        %v3576 = vpack.c.bf16 %v3562, %v3560
        %v3577 = vpack.c.bf16 %v3563, %v3561
        %v3578 = vpack.c.bf16 %v3566, %v3564
        %v3579 = vpack.c.bf16 %v3567, %v3565
        %v3580 = vld [vmem:[%s3] sm:$0xf]
        %v3581 = vld [vmem:[%s3 + $0x4] sm:$0xf]
        %v3582 = vld [vmem:[%s3 + $0x8] sm:$0xf]
        %v3583 = vld [vmem:[%s3 + $0xc] sm:$0xf]
        %v3584 = vld [vmem:[%s3 + $0x10] sm:$0xf]
        %v3585 = vld [vmem:[%s3 + $0x14] sm:$0xf]
        %v3586 = vld [vmem:[%s3 + $0x18] sm:$0xf]
        %v3587 = vld [vmem:[%s3 + $0x1c] sm:$0xf]
        %v3588 = vld [vmem:[%s3 + $0x20] sm:$0xf]
        %v3589 = vld [vmem:[%s3 + $0x24] sm:$0xf]
        %v3590 = vld [vmem:[%s3 + $0x28] sm:$0xf]
        %v3591 = vld [vmem:[%s3 + $0x2c] sm:$0xf]
        %v3592 = vld [vmem:[%s3 + $0x30] sm:$0xf]
        %v3593 = vld [vmem:[%s3 + $0x34] sm:$0xf]
        %v3594 = vld [vmem:[%s3 + $0x38] sm:$0xf]
        %v3595 = vld [vmem:[%s3 + $0x3c] sm:$0xf]
        %v3596 = vld [vmem:[%s3 + $0x40] sm:$0xf]
        %v3597 = vld [vmem:[%s3 + $0x44] sm:$0xf]
        %v3598 = vld [vmem:[%s3 + $0x48] sm:$0xf]
        %v3599 = vld [vmem:[%s3 + $0x4c] sm:$0xf]
        %v3600 = vld [vmem:[%s3 + $0x50] sm:$0xf]
        %v3601 = vld [vmem:[%s3 + $0x54] sm:$0xf]
        %v3602 = vld [vmem:[%s3 + $0x58] sm:$0xf]
        %v3603 = vld [vmem:[%s3 + $0x5c] sm:$0xf]
        %s3604 = scalar_lea.vmem %s3, 96
        %v3605 = vld [vmem:[%s3604] sm:$0xf]
        %v3606 = vld [vmem:[%s3604 + $0x4] sm:$0xf]
        %v3607 = vld [vmem:[%s3604 + $0x8] sm:$0xf]
        %v3608 = vld [vmem:[%s3604 + $0xc] sm:$0xf]
        %v3609 = vld [vmem:[%s3604 + $0x10] sm:$0xf]
        %v3610 = vld [vmem:[%s3604 + $0x14] sm:$0xf]
        %v3611 = vld [vmem:[%s3604 + $0x18] sm:$0xf]
        %v3612 = vld [vmem:[%s3604 + $0x1c] sm:$0xf]
        %v3613 = vld [vmem:[%s3604 + $0x20] sm:$0xf]
        %v3614 = vld [vmem:[%s3604 + $0x24] sm:$0xf]
        %v3615 = vld [vmem:[%s3604 + $0x28] sm:$0xf]
        %v3616 = vld [vmem:[%s3604 + $0x2c] sm:$0xf]
        %v3617 = vld [vmem:[%s3604 + $0x30] sm:$0xf]
        %v3618 = vld [vmem:[%s3604 + $0x34] sm:$0xf]
        %v3619 = vld [vmem:[%s3604 + $0x38] sm:$0xf]
        %v3620 = vld [vmem:[%s3604 + $0x3c] sm:$0xf]
        %v3621 = vld [vmem:[%s3604 + $0x40] sm:$0xf]
        %v3622 = vld [vmem:[%s3604 + $0x44] sm:$0xf]
        %v3623 = vld [vmem:[%s3604 + $0x48] sm:$0xf]
        %v3624 = vld [vmem:[%s3604 + $0x4c] sm:$0xf]
        %v3625 = vld [vmem:[%s3604 + $0x50] sm:$0xf]
        %v3626 = vld [vmem:[%s3604 + $0x54] sm:$0xf]
        %v3627 = vld [vmem:[%s3604 + $0x58] sm:$0xf]
        %v3628 = vld [vmem:[%s3604 + $0x5c] sm:$0xf]
        %vm3629 = vsmask.f32 7424
        %v3631 = vshrl.u32 %v3568, 16
        %v3633 = vshll.u32 %v3568, 16
        %v3635 = vrot.slane %v3633, 1
        %v3636 = vor.u32 %v3631, %v3635
        %v3638 = vshll.u32 %v3570, 16
        %v3640 = vrot.slane %v3638, 1
        %v3641 = vsel %vm3629, %v3636, %v3640
        %v3643 = vshrl.u32 %v3569, 16
        %v3645 = vshll.u32 %v3569, 16
        %v3647 = vrot.slane %v3645, 1
        %v3648 = vor.u32 %v3643, %v3647
        %v3650 = vshll.u32 %v3571, 16
        %v3652 = vrot.slane %v3650, 1
        %v3653 = vsel %vm3629, %v3648, %v3652
        %v3654 = vshrl.u32 %v3570, 16
        %v3656 = vor.u32 %v3654, %v3640
        %v3658 = vshll.u32 %v3572, 16
        %v3660 = vrot.slane %v3658, 1
        %v3661 = vsel %vm3629, %v3656, %v3660
        %v3662 = vshrl.u32 %v3571, 16
        %v3664 = vor.u32 %v3662, %v3652
        %v3666 = vshll.u32 %v3573, 16
        %v3668 = vrot.slane %v3666, 1
        %v3669 = vsel %vm3629, %v3664, %v3668
        %v3670 = vshrl.u32 %v3572, 16
        %v3672 = vor.u32 %v3670, %v3660
        %v3674 = vshll.u32 %v3574, 16
        %v3676 = vrot.slane %v3674, 1
        %v3677 = vsel %vm3629, %v3672, %v3676
        %v3678 = vshrl.u32 %v3573, 16
        %v3680 = vor.u32 %v3678, %v3668
        %v3682 = vshll.u32 %v3575, 16
        %v3684 = vrot.slane %v3682, 1
        %v3685 = vsel %vm3629, %v3680, %v3684
        %v3686 = vshrl.u32 %v3574, 16
        %v3688 = vor.u32 %v3686, %v3676
        %v3690 = vshll.u32 %v3576, 16
        %v3692 = vrot.slane %v3690, 1
        %v3693 = vsel %vm3629, %v3688, %v3692
        %v3694 = vshrl.u32 %v3575, 16
        %v3696 = vor.u32 %v3694, %v3684
        %v3698 = vshll.u32 %v3577, 16
        %v3700 = vrot.slane %v3698, 1
        %v3701 = vsel %vm3629, %v3696, %v3700
        %v3702 = vshrl.u32 %v3576, 16
        %v3704 = vor.u32 %v3702, %v3692
        %v3706 = vshll.u32 %v3578, 16
        %v3708 = vrot.slane %v3706, 1
        %v3709 = vsel %vm3629, %v3704, %v3708
        %v3710 = vshrl.u32 %v3577, 16
        %v3712 = vor.u32 %v3710, %v3700
        %v3714 = vshll.u32 %v3579, 16
        %v3716 = vrot.slane %v3714, 1
        %v3717 = vsel %vm3629, %v3712, %v3716
        %v3718 = vshrl.u32 %v3578, 16
        %v3720 = vor.u32 %v3718, %v3708
        %v3721 = vshrl.u32 %v3579, 16
        %v3723 = vor.u32 %v3721, %v3716
        %v3754 = vunpack.c.l.b16 %v3605
        %v3755 = vunpack.c.l.b16 %v3606
        %v3756 = vunpack.c.l.b16 %v3607
        %v3757 = vunpack.c.l.b16 %v3608
        %v3758 = vunpack.c.l.b16 %v3609
        %v3759 = vunpack.c.l.b16 %v3610
        %v3760 = vunpack.c.l.b16 %v3611
        %v3761 = vunpack.c.l.b16 %v3612
        %v3762 = vunpack.c.l.b16 %v3613
        %v3763 = vunpack.c.l.b16 %v3614
        %v3764 = vunpack.c.l.b16 %v3615
        %v3765 = vunpack.c.l.b16 %v3616
        %v3766 = vunpack.c.l.b16 %v3617
        %v3767 = vunpack.c.l.b16 %v3618
        %v3768 = vunpack.c.l.b16 %v3619
        %v3769 = vunpack.c.l.b16 %v3620
        %v3770 = vunpack.c.l.b16 %v3621
        %v3771 = vunpack.c.l.b16 %v3622
        %v3772 = vunpack.c.l.b16 %v3623
        %v3773 = vunpack.c.l.b16 %v3624
        %v3774 = vunpack.c.l.b16 %v3625
        %v3775 = vunpack.c.l.b16 %v3626
        %v3776 = vunpack.c.l.b16 %v3627
        %v3777 = vunpack.c.l.b16 %v3628
        %v3778 = vpack.c.b16 %v3755, %v3754
        %v3779 = vpack.c.b16 %v3757, %v3756
        %v3780 = vpack.c.b16 %v3759, %v3758
        %v3781 = vpack.c.b16 %v3761, %v3760
        %v3782 = vpack.c.b16 %v3763, %v3762
        %v3783 = vpack.c.b16 %v3765, %v3764
        %v3784 = vpack.c.b16 %v3767, %v3766
        %v3785 = vpack.c.b16 %v3769, %v3768
        %v3786 = vpack.c.b16 %v3771, %v3770
        %v3787 = vpack.c.b16 %v3773, %v3772
        %v3788 = vpack.c.b16 %v3775, %v3774
        %v3789 = vpack.c.b16 %v3777, %v3776
        %vm3802 = vcmask 523264
        %v3804 = vsel %vm3802, %v3653, 0
        %v3807 = vsel %vm3802, %v3669, 0
        %v3810 = vsel %vm3802, %v3685, 0
        %v3813 = vsel %vm3802, %v3701, 0
        %v3816 = vsel %vm3802, %v3717, 0
        %v3819 = vsel %vm3802, %v3723, 0
        %3821 = vmatprep.subr.bf16.mxu0 0
        %3822 = vmatpush1.bf16.msra.mxu0 %v3778
        %3823 = vmatprep.subr.bf16.mxu0 0
        %3824 = vmatpush1.bf16.msra.mxu0 %v3779
        %3825 = vmatprep.subr.bf16.mxu0 0
        %3826 = vmatpush1.bf16.msra.mxu0 %v3780
        %3827 = vmatprep.subr.bf16.mxu0 0
        %3828 = vmatpush1.bf16.msra.mxu0 %v3781
        %3829 = vmatprep.subr.bf16.mxu0 0
        %3830 = vmatpush1.bf16.msra.mxu0 %v3782
        %3831 = vmatprep.subr.bf16.mxu0 0
        %3832 = vmatpush1.bf16.msra.mxu0 %v3783
        %3833 = vmatprep.subr.bf16.mxu0 0
        %3834 = vmatpush1.bf16.msra.mxu0 %v3784
        %3835 = vmatprep.subr.bf16.mxu0 0
        %3836 = vmatpush1.bf16.msra.mxu0 %v3785
        %3837 = vmatprep.subr.bf16.mxu0 0
        %3838 = vmatpush1.bf16.msra.mxu0 %v3786
        %3839 = vmatprep.subr.bf16.mxu0 0
        %3840 = vmatpush1.bf16.msra.mxu0 %v3787
        %3841 = vmatprep.subr.bf16.mxu0 0
        %3842 = vmatpush1.bf16.msra.mxu0 %v3788
        %3843 = vmatprep.subr.bf16.mxu0 0
        %3844 = vmatpush1.bf16.msra.mxu0 %v3789
        %3845 = vmatprep.subr.bf16.mxu0 0
        %3846 = vmatpush1.bf16.msra.mxu0 0
        %3847 = vmatprep.subr.bf16.mxu0 0
        %3848 = vmatpush1.bf16.msra.mxu0 0
        %3849 = vmatprep.subr.bf16.mxu0 0
        %3850 = vmatpush1.bf16.msra.mxu0 0
        %3851 = vmatprep.subr.bf16.mxu0 0
        %3852 = vmatpush1.bf16.msra.mxu0 0
        %3853 = vmatprep.mubr.bf16.mxu0 %v3804
        %3854 = vmatmul.mubr.bf16.gmra.mrb[0].mxu0 %v3641
        %v3855 = vpop.f32.mrb[0].mxu0
        %v3856 = vadd.f32 0.0, %v3855
        %v3857 = vpop.f32.mrb[0].mxu0
        %v3858 = vpop.f32.mrb[0].mxu0
        %v3859 = vadd.f32 0.0, %v3858
        %v3860 = vpop.f32.mrb[0].mxu0
        %3861 = vmatprep.mubr.bf16.mxu0 %v3807
        %3862 = vmatmul.mubr.bf16.gmra.mrb[0].mxu0 %v3661
        %v3863 = vpop.f32.mrb[0].mxu0
        %v3864 = vadd.f32 0.0, %v3863
        %v3865 = vpop.f32.mrb[0].mxu0
        %v3866 = vpop.f32.mrb[0].mxu0
        %v3867 = vadd.f32 0.0, %v3866
        %v3868 = vpop.f32.mrb[0].mxu0
        %3869 = vmatprep.mubr.bf16.mxu0 %v3810
        %3870 = vmatmul.mubr.bf16.gmra.mrb[0].mxu0 %v3677
        %v3871 = vpop.f32.mrb[0].mxu0
        %v3872 = vadd.f32 0.0, %v3871
        %v3873 = vpop.f32.mrb[0].mxu0
        %v3874 = vpop.f32.mrb[0].mxu0
        %v3875 = vadd.f32 0.0, %v3874
        %v3876 = vpop.f32.mrb[0].mxu0
        %3877 = vmatprep.mubr.bf16.mxu0 %v3813
        %3878 = vmatmul.mubr.bf16.gmra.mrb[0].mxu0 %v3693
        %v3879 = vpop.f32.mrb[0].mxu0
        %v3880 = vadd.f32 0.0, %v3879
        %v3881 = vpop.f32.mrb[0].mxu0
        %v3882 = vpop.f32.mrb[0].mxu0
        %v3883 = vadd.f32 0.0, %v3882
        %v3884 = vpop.f32.mrb[0].mxu0
        %3885 = vmatprep.mubr.bf16.mxu0 %v3816
        %3886 = vmatmul.mubr.bf16.gmra.mrb[0].mxu0 %v3709
        %v3887 = vpop.f32.mrb[0].mxu0
        %v3888 = vadd.f32 0.0, %v3887
        %v3889 = vpop.f32.mrb[0].mxu0
        %v3890 = vpop.f32.mrb[0].mxu0
        %v3891 = vadd.f32 0.0, %v3890
        %v3892 = vpop.f32.mrb[0].mxu0
        %3893 = vmatprep.mubr.bf16.mxu0 %v3819
        %3894 = vmatmul.mubr.bf16.gmra.mrb[0].mxu0 %v3720
        %v3895 = vpop.f32.mrb[0].mxu0
        %v3896 = vadd.f32 0.0, %v3895
        %v3897 = vpop.f32.mrb[0].mxu0
        %v3898 = vpop.f32.mrb[0].mxu0
        %v3899 = vadd.f32 0.0, %v3898
        %v3900 = vpop.f32.mrb[0].mxu0
        %3901 = vdwg.mxu0
        %v3926 = vunpack.c.l.b16 %v3580
        %v3927 = vunpack.c.l.b16 %v3581
        %v3928 = vunpack.c.l.b16 %v3582
        %v3929 = vunpack.c.l.b16 %v3583
        %v3930 = vunpack.c.l.b16 %v3584
        %v3931 = vunpack.c.l.b16 %v3585
        %v3932 = vunpack.c.l.b16 %v3586
        %v3933 = vunpack.c.l.b16 %v3587
        %v3934 = vunpack.c.l.b16 %v3588
        %v3935 = vunpack.c.l.b16 %v3589
        %v3936 = vunpack.c.l.b16 %v3590
        %v3937 = vunpack.c.l.b16 %v3591
        %v3938 = vunpack.c.l.b16 %v3592
        %v3939 = vunpack.c.l.b16 %v3593
        %v3940 = vunpack.c.l.b16 %v3594
        %v3941 = vunpack.c.l.b16 %v3595
        %v3942 = vunpack.c.l.b16 %v3596
        %v3943 = vunpack.c.l.b16 %v3597
        %v3944 = vunpack.c.l.b16 %v3598
        %v3945 = vunpack.c.l.b16 %v3599
        %v3946 = vunpack.c.l.b16 %v3600
        %v3947 = vunpack.c.l.b16 %v3601
        %v3948 = vunpack.c.l.b16 %v3602
        %v3949 = vunpack.c.l.b16 %v3603
        %v3950 = vpack.c.b16 %v3927, %v3926
        %v3951 = vpack.c.b16 %v3929, %v3928
        %v3952 = vpack.c.b16 %v3931, %v3930
        %v3953 = vpack.c.b16 %v3933, %v3932
        %v3954 = vpack.c.b16 %v3935, %v3934
        %v3955 = vpack.c.b16 %v3937, %v3936
        %v3956 = vpack.c.b16 %v3939, %v3938
        %v3957 = vpack.c.b16 %v3941, %v3940
        %v3958 = vpack.c.b16 %v3943, %v3942
        %v3959 = vpack.c.b16 %v3945, %v3944
        %v3960 = vpack.c.b16 %v3947, %v3946
        %v3961 = vpack.c.b16 %v3949, %v3948
        %v3974 = vsel %vm3802, %v3569, 0
        %v3976 = vsel %vm3802, %v3571, 0
        %v3978 = vsel %vm3802, %v3573, 0
        %v3980 = vsel %vm3802, %v3575, 0
        %v3982 = vsel %vm3802, %v3577, 0
        %v3984 = vsel %vm3802, %v3579, 0
        %3986 = vmatprep.subr.bf16.mxu0 0
        %3987 = vmatpush1.bf16.msra.mxu0 %v3950
        %3988 = vmatprep.subr.bf16.mxu0 0
        %3989 = vmatpush1.bf16.msra.mxu0 %v3951
        %3990 = vmatprep.subr.bf16.mxu0 0
        %3991 = vmatpush1.bf16.msra.mxu0 %v3952
        %3992 = vmatprep.subr.bf16.mxu0 0
        %3993 = vmatpush1.bf16.msra.mxu0 %v3953
        %3994 = vmatprep.subr.bf16.mxu0 0
        %3995 = vmatpush1.bf16.msra.mxu0 %v3954
        %3996 = vmatprep.subr.bf16.mxu0 0
        %3997 = vmatpush1.bf16.msra.mxu0 %v3955
        %3998 = vmatprep.subr.bf16.mxu0 0
        %3999 = vmatpush1.bf16.msra.mxu0 %v3956
        %4000 = vmatprep.subr.bf16.mxu0 0
        %4001 = vmatpush1.bf16.msra.mxu0 %v3957
        %4002 = vmatprep.subr.bf16.mxu0 0
        %4003 = vmatpush1.bf16.msra.mxu0 %v3958
        %4004 = vmatprep.subr.bf16.mxu0 0
        %4005 = vmatpush1.bf16.msra.mxu0 %v3959
        %4006 = vmatprep.subr.bf16.mxu0 0
        %4007 = vmatpush1.bf16.msra.mxu0 %v3960
        %4008 = vmatprep.subr.bf16.mxu0 0
        %4009 = vmatpush1.bf16.msra.mxu0 %v3961
        %4010 = vmatprep.subr.bf16.mxu0 0
        %4011 = vmatpush1.bf16.msra.mxu0 0
        %4012 = vmatprep.subr.bf16.mxu0 0
        %4013 = vmatpush1.bf16.msra.mxu0 0
        %4014 = vmatprep.subr.bf16.mxu0 0
        %4015 = vmatpush1.bf16.msra.mxu0 0
        %4016 = vmatprep.subr.bf16.mxu0 0
        %4017 = vmatpush1.bf16.msra.mxu0 0
        %4018 = vmatprep.mubr.bf16.mxu0 %v3974
        %4019 = vmatmul.mubr.bf16.gmra.mrb[0].mxu0 %v3568
        %v4020 = vpop.f32.mrb[0].mxu0
        %v4021 = vadd.f32 %v3856, %v4020
        %v4022 = vpop.f32.mrb[0].mxu0
        %v4023 = vpop.f32.mrb[0].mxu0
        %v4024 = vadd.f32 %v3859, %v4023
        %v4025 = vpop.f32.mrb[0].mxu0
        %4026 = vmatprep.mubr.bf16.mxu0 %v3976
        %4027 = vmatmul.mubr.bf16.gmra.mrb[0].mxu0 %v3570
        %v4028 = vpop.f32.mrb[0].mxu0
        %v4029 = vadd.f32 %v3864, %v4028
        %v4030 = vpop.f32.mrb[0].mxu0
        %v4031 = vpop.f32.mrb[0].mxu0
        %v4032 = vadd.f32 %v3867, %v4031
        %v4033 = vpop.f32.mrb[0].mxu0
        %4034 = vmatprep.mubr.bf16.mxu0 %v3978
        %4035 = vmatmul.mubr.bf16.gmra.mrb[0].mxu0 %v3572
        %v4036 = vpop.f32.mrb[0].mxu0
        %v4037 = vadd.f32 %v3872, %v4036
        %v4038 = vpop.f32.mrb[0].mxu0
        %v4039 = vpop.f32.mrb[0].mxu0
        %v4040 = vadd.f32 %v3875, %v4039
        %v4041 = vpop.f32.mrb[0].mxu0
        %4042 = vmatprep.mubr.bf16.mxu0 %v3980
        %4043 = vmatmul.mubr.bf16.gmra.mrb[0].mxu0 %v3574
        %v4044 = vpop.f32.mrb[0].mxu0
        %v4045 = vadd.f32 %v3880, %v4044
        %v4046 = vpop.f32.mrb[0].mxu0
        %v4047 = vpop.f32.mrb[0].mxu0
        %v4048 = vadd.f32 %v3883, %v4047
        %v4049 = vpop.f32.mrb[0].mxu0
        %4050 = vmatprep.mubr.bf16.mxu0 %v3982
        %4051 = vmatmul.mubr.bf16.gmra.mrb[0].mxu0 %v3576
        %v4052 = vpop.f32.mrb[0].mxu0
        %v4053 = vadd.f32 %v3888, %v4052
        %v4054 = vpop.f32.mrb[0].mxu0
        %v4055 = vpop.f32.mrb[0].mxu0
        %v4056 = vadd.f32 %v3891, %v4055
        %v4057 = vpop.f32.mrb[0].mxu0
        %4058 = vmatprep.mubr.bf16.mxu0 %v3984
        %4059 = vmatmul.mubr.bf16.gmra.mrb[0].mxu0 %v3578
        %v4060 = vpop.f32.mrb[0].mxu0
        %v4061 = vadd.f32 %v3896, %v4060
        %v4062 = vpop.f32.mrb[0].mxu0
        %v4063 = vpop.f32.mrb[0].mxu0
        %v4064 = vadd.f32 %v3899, %v4063
        %v4065 = vpop.f32.mrb[0].mxu0
        %4066 = vdwg.mxu0
        %s4067 = scalar_lea.vmem %s3, 192
        %v4068 = vld [vmem:[%s4067] sm:$0xf]
        %v4069 = vld [vmem:[%s4067 + $0x4] sm:$0xf]
        %v4070 = vld [vmem:[%s4067 + $0x8] sm:$0xf]
        %v4071 = vld [vmem:[%s4067 + $0xc] sm:$0xf]
        %v4072 = vld [vmem:[%s4067 + $0x10] sm:$0xf]
        %v4073 = vld [vmem:[%s4067 + $0x14] sm:$0xf]
        %v4074 = vld [vmem:[%s4067 + $0x18] sm:$0xf]
        %v4075 = vld [vmem:[%s4067 + $0x1c] sm:$0xf]
        %v4076 = vld [vmem:[%s4067 + $0x20] sm:$0xf]
        %v4077 = vld [vmem:[%s4067 + $0x24] sm:$0xf]
        %v4078 = vld [vmem:[%s4067 + $0x28] sm:$0xf]
        %v4079 = vld [vmem:[%s4067 + $0x2c] sm:$0xf]
        %v4080 = vld [vmem:[%s4067 + $0x30] sm:$0xf]
        %v4081 = vld [vmem:[%s4067 + $0x34] sm:$0xf]
        %v4082 = vld [vmem:[%s4067 + $0x38] sm:$0xf]
        %v4083 = vld [vmem:[%s4067 + $0x3c] sm:$0xf]
        %v4084 = vld [vmem:[%s4067 + $0x40] sm:$0xf]
        %v4085 = vld [vmem:[%s4067 + $0x44] sm:$0xf]
        %v4086 = vld [vmem:[%s4067 + $0x48] sm:$0xf]
        %v4087 = vld [vmem:[%s4067 + $0x4c] sm:$0xf]
        %v4088 = vld [vmem:[%s4067 + $0x50] sm:$0xf]
        %v4089 = vld [vmem:[%s4067 + $0x54] sm:$0xf]
        %v4090 = vld [vmem:[%s4067 + $0x58] sm:$0xf]
        %v4091 = vld [vmem:[%s4067 + $0x5c] sm:$0xf]
        %vm4104 = vcmask 1046528
        %v4105 = vrot.slane %v3568, 1
        %v4106 = vrot.slane %v3570, 1
        %v4107 = vsel %vm4104, %v4105, %v4106
        %v4108 = vrot.slane %v3569, 1
        %v4109 = vrot.slane %v3571, 1
        %v4110 = vsel %vm4104, %v4108, %v4109
        %v4111 = vrot.slane %v3572, 1
        %v4112 = vsel %vm4104, %v4106, %v4111
        %v4113 = vrot.slane %v3573, 1
        %v4114 = vsel %vm4104, %v4109, %v4113
        %v4115 = vrot.slane %v3574, 1
        %v4116 = vsel %vm4104, %v4111, %v4115
        %v4117 = vrot.slane %v3575, 1
        %v4118 = vsel %vm4104, %v4113, %v4117
        %v4119 = vrot.slane %v3576, 1
        %v4120 = vsel %vm4104, %v4115, %v4119
        %v4121 = vrot.slane %v3577, 1
        %v4122 = vsel %vm4104, %v4117, %v4121
        %v4123 = vrot.slane %v3578, 1
        %v4124 = vsel %vm4104, %v4119, %v4123
        %v4125 = vrot.slane %v3579, 1
        %v4126 = vsel %vm4104, %v4121, %v4125
        %v4157 = vunpack.c.l.b16 %v4068
        %v4158 = vunpack.c.l.b16 %v4069
        %v4159 = vunpack.c.l.b16 %v4070
        %v4160 = vunpack.c.l.b16 %v4071
        %v4161 = vunpack.c.l.b16 %v4072
        %v4162 = vunpack.c.l.b16 %v4073
        %v4163 = vunpack.c.l.b16 %v4074
        %v4164 = vunpack.c.l.b16 %v4075
        %v4165 = vunpack.c.l.b16 %v4076
        %v4166 = vunpack.c.l.b16 %v4077
        %v4167 = vunpack.c.l.b16 %v4078
        %v4168 = vunpack.c.l.b16 %v4079
        %v4169 = vunpack.c.l.b16 %v4080
        %v4170 = vunpack.c.l.b16 %v4081
        %v4171 = vunpack.c.l.b16 %v4082
        %v4172 = vunpack.c.l.b16 %v4083
        %v4173 = vunpack.c.l.b16 %v4084
        %v4174 = vunpack.c.l.b16 %v4085
        %v4175 = vunpack.c.l.b16 %v4086
        %v4176 = vunpack.c.l.b16 %v4087
        %v4177 = vunpack.c.l.b16 %v4088
        %v4178 = vunpack.c.l.b16 %v4089
        %v4179 = vunpack.c.l.b16 %v4090
        %v4180 = vunpack.c.l.b16 %v4091
        %v4181 = vpack.c.b16 %v4158, %v4157
        %v4182 = vpack.c.b16 %v4160, %v4159
        %v4183 = vpack.c.b16 %v4162, %v4161
        %v4184 = vpack.c.b16 %v4164, %v4163
        %v4185 = vpack.c.b16 %v4166, %v4165
        %v4186 = vpack.c.b16 %v4168, %v4167
        %v4187 = vpack.c.b16 %v4170, %v4169
        %v4188 = vpack.c.b16 %v4172, %v4171
        %v4189 = vpack.c.b16 %v4174, %v4173
        %v4190 = vpack.c.b16 %v4176, %v4175
        %v4191 = vpack.c.b16 %v4178, %v4177
        %v4192 = vpack.c.b16 %v4180, %v4179
        %v4206 = vsel %vm3802, %v4110, 0
        %v4209 = vsel %vm3802, %v4114, 0
        %v4212 = vsel %vm3802, %v4118, 0
        %v4215 = vsel %vm3802, %v4122, 0
        %v4218 = vsel %vm3802, %v4126, 0
        %v4221 = vsel %vm3802, %v4125, 0
        %4223 = vmatprep.subr.bf16.mxu0 0
        %4224 = vmatpush1.bf16.msra.mxu0 %v4181
        %4225 = vmatprep.subr.bf16.mxu0 0
        %4226 = vmatpush1.bf16.msra.mxu0 %v4182
        %4227 = vmatprep.subr.bf16.mxu0 0
        %4228 = vmatpush1.bf16.msra.mxu0 %v4183
        %4229 = vmatprep.subr.bf16.mxu0 0
        %4230 = vmatpush1.bf16.msra.mxu0 %v4184
        %4231 = vmatprep.subr.bf16.mxu0 0
        %4232 = vmatpush1.bf16.msra.mxu0 %v4185
        %4233 = vmatprep.subr.bf16.mxu0 0
        %4234 = vmatpush1.bf16.msra.mxu0 %v4186
        %4235 = vmatprep.subr.bf16.mxu0 0
        %4236 = vmatpush1.bf16.msra.mxu0 %v4187
        %4237 = vmatprep.subr.bf16.mxu0 0
        %4238 = vmatpush1.bf16.msra.mxu0 %v4188
        %4239 = vmatprep.subr.bf16.mxu0 0
        %4240 = vmatpush1.bf16.msra.mxu0 %v4189
        %4241 = vmatprep.subr.bf16.mxu0 0
        %4242 = vmatpush1.bf16.msra.mxu0 %v4190
        %4243 = vmatprep.subr.bf16.mxu0 0
        %4244 = vmatpush1.bf16.msra.mxu0 %v4191
        %4245 = vmatprep.subr.bf16.mxu0 0
        %4246 = vmatpush1.bf16.msra.mxu0 %v4192
        %4247 = vmatprep.subr.bf16.mxu0 0
        %4248 = vmatpush1.bf16.msra.mxu0 0
        %4249 = vmatprep.subr.bf16.mxu0 0
        %4250 = vmatpush1.bf16.msra.mxu0 0
        %4251 = vmatprep.subr.bf16.mxu0 0
        %4252 = vmatpush1.bf16.msra.mxu0 0
        %4253 = vmatprep.subr.bf16.mxu0 0
        %4254 = vmatpush1.bf16.msra.mxu0 0
        %4255 = vmatprep.mubr.bf16.mxu0 %v4206
        %4256 = vmatmul.mubr.bf16.gmra.mrb[0].mxu0 %v4107
        %v4257 = vpop.f32.mrb[0].mxu0
        %v4258 = vadd.f32 0.0, %v4257
        %v4259 = vpop.f32.mrb[0].mxu0
        %v4260 = vpop.f32.mrb[0].mxu0
        %v4261 = vadd.f32 0.0, %v4260
        %v4262 = vpop.f32.mrb[0].mxu0
        %4263 = vmatprep.mubr.bf16.mxu0 %v4209
        %4264 = vmatmul.mubr.bf16.gmra.mrb[0].mxu0 %v4112
        %v4265 = vpop.f32.mrb[0].mxu0
        %v4266 = vadd.f32 0.0, %v4265
        %v4267 = vpop.f32.mrb[0].mxu0
        %v4268 = vpop.f32.mrb[0].mxu0
        %v4269 = vadd.f32 0.0, %v4268
        %v4270 = vpop.f32.mrb[0].mxu0
        %4271 = vmatprep.mubr.bf16.mxu0 %v4212
        %4272 = vmatmul.mubr.bf16.gmra.mrb[0].mxu0 %v4116
        %v4273 = vpop.f32.mrb[0].mxu0
        %v4274 = vadd.f32 0.0, %v4273
        %v4275 = vpop.f32.mrb[0].mxu0
        %v4276 = vpop.f32.mrb[0].mxu0
        %v4277 = vadd.f32 0.0, %v4276
        %v4278 = vpop.f32.mrb[0].mxu0
        %4279 = vmatprep.mubr.bf16.mxu0 %v4215
        %4280 = vmatmul.mubr.bf16.gmra.mrb[0].mxu0 %v4120
        %v4281 = vpop.f32.mrb[0].mxu0
        %v4282 = vadd.f32 0.0, %v4281
        %v4283 = vpop.f32.mrb[0].mxu0
        %v4284 = vpop.f32.mrb[0].mxu0
        %v4285 = vadd.f32 0.0, %v4284
        %v4286 = vpop.f32.mrb[0].mxu0
        %4287 = vmatprep.mubr.bf16.mxu0 %v4218
        %4288 = vmatmul.mubr.bf16.gmra.mrb[0].mxu0 %v4124
        %v4289 = vpop.f32.mrb[0].mxu0
        %v4290 = vadd.f32 0.0, %v4289
        %v4291 = vpop.f32.mrb[0].mxu0
        %v4292 = vpop.f32.mrb[0].mxu0
        %v4293 = vadd.f32 0.0, %v4292
        %v4294 = vpop.f32.mrb[0].mxu0
        %4295 = vmatprep.mubr.bf16.mxu0 %v4221
        %4296 = vmatmul.mubr.bf16.gmra.mrb[0].mxu0 %v4123
        %v4297 = vpop.f32.mrb[0].mxu0
        %v4298 = vadd.f32 0.0, %v4297
        %v4299 = vpop.f32.mrb[0].mxu0
        %v4300 = vpop.f32.mrb[0].mxu0
        %v4301 = vadd.f32 0.0, %v4300
        %v4302 = vpop.f32.mrb[0].mxu0
        %4303 = vdwg.mxu0
        %v4304 = vadd.f32 %v4021, %v4258
        %v4305 = vadd.f32 %v4024, %v4261
        %v4306 = vadd.f32 %v4029, %v4266
        %v4307 = vadd.f32 %v4032, %v4269
        %v4308 = vadd.f32 %v4037, %v4274
        %v4309 = vadd.f32 %v4040, %v4277
        %v4310 = vadd.f32 %v4045, %v4282
        %v4311 = vadd.f32 %v4048, %v4285
        %v4312 = vadd.f32 %v4053, %v4290
        %v4313 = vadd.f32 %v4056, %v4293
        %v4314 = vadd.f32 %v4061, %v4298
        %v4315 = vadd.f32 %v4064, %v4301
        %s4316 = scalar_lea.vmem %s3, 288
        %v4317 = vld [vmem:[%s4316] sm:$0xf]
        %v4318 = vld [vmem:[%s4316 + $0x4] sm:$0xf]
        %v4319 = vld [vmem:[%s4316 + $0x8] sm:$0xf]
        %v4320 = vld [vmem:[%s4316 + $0xc] sm:$0xf]
        %v4321 = vld [vmem:[%s4316 + $0x10] sm:$0xf]
        %v4322 = vld [vmem:[%s4316 + $0x14] sm:$0xf]
        %v4323 = vld [vmem:[%s4316 + $0x18] sm:$0xf]
        %v4324 = vld [vmem:[%s4316 + $0x1c] sm:$0xf]
        %v4325 = vld [vmem:[%s4316 + $0x20] sm:$0xf]
        %v4326 = vld [vmem:[%s4316 + $0x24] sm:$0xf]
        %v4327 = vld [vmem:[%s4316 + $0x28] sm:$0xf]
        %v4328 = vld [vmem:[%s4316 + $0x2c] sm:$0xf]
        %v4329 = vld [vmem:[%s4316 + $0x30] sm:$0xf]
        %v4330 = vld [vmem:[%s4316 + $0x34] sm:$0xf]
        %v4331 = vld [vmem:[%s4316 + $0x38] sm:$0xf]
        %v4332 = vld [vmem:[%s4316 + $0x3c] sm:$0xf]
        %v4333 = vld [vmem:[%s4316 + $0x40] sm:$0xf]
        %v4334 = vld [vmem:[%s4316 + $0x44] sm:$0xf]
        %v4335 = vld [vmem:[%s4316 + $0x48] sm:$0xf]
        %v4336 = vld [vmem:[%s4316 + $0x4c] sm:$0xf]
        %v4337 = vld [vmem:[%s4316 + $0x50] sm:$0xf]
        %v4338 = vld [vmem:[%s4316 + $0x54] sm:$0xf]
        %v4339 = vld [vmem:[%s4316 + $0x58] sm:$0xf]
        %v4340 = vld [vmem:[%s4316 + $0x5c] sm:$0xf]
        %vm4341 = vsmask.f32 6400
        %v4342 = vrot.slane %v3631, 1
        %v4343 = vrot.slane %v3633, 2
        %v4344 = vor.u32 %v4342, %v4343
        %v4345 = vrot.slane %v3654, 1
        %v4346 = vrot.slane %v3638, 2
        %v4347 = vor.u32 %v4345, %v4346
        %v4348 = vsel %vm4341, %v4344, %v4347
        %v4349 = vrot.slane %v3643, 1
        %v4350 = vrot.slane %v3645, 2
        %v4351 = vor.u32 %v4349, %v4350
        %v4352 = vrot.slane %v3662, 1
        %v4353 = vrot.slane %v3650, 2
        %v4354 = vor.u32 %v4352, %v4353
        %v4355 = vsel %vm4341, %v4351, %v4354
        %v4356 = vrot.slane %v3670, 1
        %v4357 = vrot.slane %v3658, 2
        %v4358 = vor.u32 %v4356, %v4357
        %v4359 = vsel %vm4341, %v4347, %v4358
        %v4360 = vrot.slane %v3678, 1
        %v4361 = vrot.slane %v3666, 2
        %v4362 = vor.u32 %v4360, %v4361
        %v4363 = vsel %vm4341, %v4354, %v4362
        %v4364 = vrot.slane %v3686, 1
        %v4365 = vrot.slane %v3674, 2
        %v4366 = vor.u32 %v4364, %v4365
        %v4367 = vsel %vm4341, %v4358, %v4366
        %v4368 = vrot.slane %v3694, 1
        %v4369 = vrot.slane %v3682, 2
        %v4370 = vor.u32 %v4368, %v4369
        %v4371 = vsel %vm4341, %v4362, %v4370
        %v4372 = vrot.slane %v3702, 1
        %v4373 = vrot.slane %v3690, 2
        %v4374 = vor.u32 %v4372, %v4373
        %v4375 = vsel %vm4341, %v4366, %v4374
        %v4376 = vrot.slane %v3710, 1
        %v4377 = vrot.slane %v3698, 2
        %v4378 = vor.u32 %v4376, %v4377
        %v4379 = vsel %vm4341, %v4370, %v4378
        %v4380 = vrot.slane %v3718, 1
        %v4381 = vrot.slane %v3706, 2
        %v4382 = vor.u32 %v4380, %v4381
        %v4383 = vsel %vm4341, %v4374, %v4382
        %v4384 = vrot.slane %v3721, 1
        %v4385 = vrot.slane %v3714, 2
        %v4386 = vor.u32 %v4384, %v4385
        %v4387 = vsel %vm4341, %v4378, %v4386
        %v4418 = vunpack.c.l.b16 %v4317
        %v4419 = vunpack.c.l.b16 %v4318
        %v4420 = vunpack.c.l.b16 %v4319
        %v4421 = vunpack.c.l.b16 %v4320
        %v4422 = vunpack.c.l.b16 %v4321
        %v4423 = vunpack.c.l.b16 %v4322
        %v4424 = vunpack.c.l.b16 %v4323
        %v4425 = vunpack.c.l.b16 %v4324
        %v4426 = vunpack.c.l.b16 %v4325
        %v4427 = vunpack.c.l.b16 %v4326
        %v4428 = vunpack.c.l.b16 %v4327
        %v4429 = vunpack.c.l.b16 %v4328
        %v4430 = vunpack.c.l.b16 %v4329
        %v4431 = vunpack.c.l.b16 %v4330
        %v4432 = vunpack.c.l.b16 %v4331
        %v4433 = vunpack.c.l.b16 %v4332
        %v4434 = vunpack.c.l.b16 %v4333
        %v4435 = vunpack.c.l.b16 %v4334
        %v4436 = vunpack.c.l.b16 %v4335
        %v4437 = vunpack.c.l.b16 %v4336
        %v4438 = vunpack.c.l.b16 %v4337
        %v4439 = vunpack.c.l.b16 %v4338
        %v4440 = vunpack.c.l.b16 %v4339
        %v4441 = vunpack.c.l.b16 %v4340
        %v4442 = vpack.c.b16 %v4419, %v4418
        %v4443 = vpack.c.b16 %v4421, %v4420
        %v4444 = vpack.c.b16 %v4423, %v4422
        %v4445 = vpack.c.b16 %v4425, %v4424
        %v4446 = vpack.c.b16 %v4427, %v4426
        %v4447 = vpack.c.b16 %v4429, %v4428
        %v4448 = vpack.c.b16 %v4431, %v4430
        %v4449 = vpack.c.b16 %v4433, %v4432
        %v4450 = vpack.c.b16 %v4435, %v4434
        %v4451 = vpack.c.b16 %v4437, %v4436
        %v4452 = vpack.c.b16 %v4439, %v4438
        %v4453 = vpack.c.b16 %v4441, %v4440
        %v4467 = vsel %vm3802, %v4355, 0
        %v4470 = vsel %vm3802, %v4363, 0
        %v4473 = vsel %vm3802, %v4371, 0
        %v4476 = vsel %vm3802, %v4379, 0
        %v4479 = vsel %vm3802, %v4387, 0
        %v4482 = vsel %vm3802, %v4386, 0
        %4484 = vmatprep.subr.bf16.mxu0 0
        %4485 = vmatpush1.bf16.msra.mxu0 %v4442
        %4486 = vmatprep.subr.bf16.mxu0 0
        %4487 = vmatpush1.bf16.msra.mxu0 %v4443
        %4488 = vmatprep.subr.bf16.mxu0 0
        %4489 = vmatpush1.bf16.msra.mxu0 %v4444
        %4490 = vmatprep.subr.bf16.mxu0 0
        %4491 = vmatpush1.bf16.msra.mxu0 %v4445
        %4492 = vmatprep.subr.bf16.mxu0 0
        %4493 = vmatpush1.bf16.msra.mxu0 %v4446
        %4494 = vmatprep.subr.bf16.mxu0 0
        %4495 = vmatpush1.bf16.msra.mxu0 %v4447
        %4496 = vmatprep.subr.bf16.mxu0 0
        %4497 = vmatpush1.bf16.msra.mxu0 %v4448
        %4498 = vmatprep.subr.bf16.mxu0 0
        %4499 = vmatpush1.bf16.msra.mxu0 %v4449
        %4500 = vmatprep.subr.bf16.mxu0 0
        %4501 = vmatpush1.bf16.msra.mxu0 %v4450
        %4502 = vmatprep.subr.bf16.mxu0 0
        %4503 = vmatpush1.bf16.msra.mxu0 %v4451
        %4504 = vmatprep.subr.bf16.mxu0 0
        %4505 = vmatpush1.bf16.msra.mxu0 %v4452
        %4506 = vmatprep.subr.bf16.mxu0 0
        %4507 = vmatpush1.bf16.msra.mxu0 %v4453
        %4508 = vmatprep.subr.bf16.mxu0 0
        %4509 = vmatpush1.bf16.msra.mxu0 0
        %4510 = vmatprep.subr.bf16.mxu0 0
        %4511 = vmatpush1.bf16.msra.mxu0 0
        %4512 = vmatprep.subr.bf16.mxu0 0
        %4513 = vmatpush1.bf16.msra.mxu0 0
        %4514 = vmatprep.subr.bf16.mxu0 0
        %4515 = vmatpush1.bf16.msra.mxu0 0
        %4516 = vmatprep.mubr.bf16.mxu0 %v4467
        %4517 = vmatmul.mubr.bf16.gmra.mrb[0].mxu0 %v4348
        %v4518 = vpop.f32.mrb[0].mxu0
        %v4519 = vadd.f32 0.0, %v4518
        %v4520 = vpop.f32.mrb[0].mxu0
        %v4521 = vpop.f32.mrb[0].mxu0
        %v4522 = vadd.f32 0.0, %v4521
        %v4523 = vpop.f32.mrb[0].mxu0
        %4524 = vmatprep.mubr.bf16.mxu0 %v4470
        %4525 = vmatmul.mubr.bf16.gmra.mrb[0].mxu0 %v4359
        %v4526 = vpop.f32.mrb[0].mxu0
        %v4527 = vadd.f32 0.0, %v4526
        %v4528 = vpop.f32.mrb[0].mxu0
        %v4529 = vpop.f32.mrb[0].mxu0
        %v4530 = vadd.f32 0.0, %v4529
        %v4531 = vpop.f32.mrb[0].mxu0
        %4532 = vmatprep.mubr.bf16.mxu0 %v4473
        %4533 = vmatmul.mubr.bf16.gmra.mrb[0].mxu0 %v4367
        %v4534 = vpop.f32.mrb[0].mxu0
        %v4535 = vadd.f32 0.0, %v4534
        %v4536 = vpop.f32.mrb[0].mxu0
        %v4537 = vpop.f32.mrb[0].mxu0
        %v4538 = vadd.f32 0.0, %v4537
        %v4539 = vpop.f32.mrb[0].mxu0
        %4540 = vmatprep.mubr.bf16.mxu0 %v4476
        %4541 = vmatmul.mubr.bf16.gmra.mrb[0].mxu0 %v4375
        %v4542 = vpop.f32.mrb[0].mxu0
        %v4543 = vadd.f32 0.0, %v4542
        %v4544 = vpop.f32.mrb[0].mxu0
        %v4545 = vpop.f32.mrb[0].mxu0
        %v4546 = vadd.f32 0.0, %v4545
        %v4547 = vpop.f32.mrb[0].mxu0
        %4548 = vmatprep.mubr.bf16.mxu0 %v4479
        %4549 = vmatmul.mubr.bf16.gmra.mrb[0].mxu0 %v4383
        %v4550 = vpop.f32.mrb[0].mxu0
        %v4551 = vadd.f32 0.0, %v4550
        %v4552 = vpop.f32.mrb[0].mxu0
        %v4553 = vpop.f32.mrb[0].mxu0
        %v4554 = vadd.f32 0.0, %v4553
        %v4555 = vpop.f32.mrb[0].mxu0
        %4556 = vmatprep.mubr.bf16.mxu0 %v4482
        %4557 = vmatmul.mubr.bf16.gmra.mrb[0].mxu0 %v4382
        %v4558 = vpop.f32.mrb[0].mxu0
        %v4559 = vadd.f32 0.0, %v4558
        %v4560 = vpop.f32.mrb[0].mxu0
        %v4561 = vpop.f32.mrb[0].mxu0
        %v4562 = vadd.f32 0.0, %v4561
        %v4563 = vpop.f32.mrb[0].mxu0
        %4564 = vdwg.mxu0
        %v4565 = vadd.f32 %v4304, %v4519
        %v4566 = vadd.f32 %v4305, %v4522
        %v4567 = vadd.f32 %v4306, %v4527
        %v4568 = vadd.f32 %v4307, %v4530
        %v4569 = vadd.f32 %v4308, %v4535
        %v4570 = vadd.f32 %v4309, %v4538
        %v4571 = vadd.f32 %v4310, %v4543
        %v4572 = vadd.f32 %v4311, %v4546
        %v4573 = vadd.f32 %v4312, %v4551
        %v4574 = vadd.f32 %v4313, %v4554
        %v4575 = vadd.f32 %v4314, %v4559
        %v4576 = vadd.f32 %v4315, %v4562
        %s4577 = scalar_lea.vmem %s3, 384
        %v4578 = vld [vmem:[%s4577] sm:$0xf]
        %v4579 = vld [vmem:[%s4577 + $0x4] sm:$0xf]
        %v4580 = vld [vmem:[%s4577 + $0x8] sm:$0xf]
        %v4581 = vld [vmem:[%s4577 + $0xc] sm:$0xf]
        %v4582 = vld [vmem:[%s4577 + $0x10] sm:$0xf]
        %v4583 = vld [vmem:[%s4577 + $0x14] sm:$0xf]
        %v4584 = vld [vmem:[%s4577 + $0x18] sm:$0xf]
        %v4585 = vld [vmem:[%s4577 + $0x1c] sm:$0xf]
        %v4586 = vld [vmem:[%s4577 + $0x20] sm:$0xf]
        %v4587 = vld [vmem:[%s4577 + $0x24] sm:$0xf]
        %v4588 = vld [vmem:[%s4577 + $0x28] sm:$0xf]
        %v4589 = vld [vmem:[%s4577 + $0x2c] sm:$0xf]
        %v4590 = vld [vmem:[%s4577 + $0x30] sm:$0xf]
        %v4591 = vld [vmem:[%s4577 + $0x34] sm:$0xf]
        %v4592 = vld [vmem:[%s4577 + $0x38] sm:$0xf]
        %v4593 = vld [vmem:[%s4577 + $0x3c] sm:$0xf]
        %v4594 = vld [vmem:[%s4577 + $0x40] sm:$0xf]
        %v4595 = vld [vmem:[%s4577 + $0x44] sm:$0xf]
        %v4596 = vld [vmem:[%s4577 + $0x48] sm:$0xf]
        %v4597 = vld [vmem:[%s4577 + $0x4c] sm:$0xf]
        %v4598 = vld [vmem:[%s4577 + $0x50] sm:$0xf]
        %v4599 = vld [vmem:[%s4577 + $0x54] sm:$0xf]
        %v4600 = vld [vmem:[%s4577 + $0x58] sm:$0xf]
        %v4601 = vld [vmem:[%s4577 + $0x5c] sm:$0xf]
        %vm4602 = vcmask 1045504
        %v4603 = vrot.slane %v3568, 2
        %v4604 = vrot.slane %v3570, 2
        %v4605 = vsel %vm4602, %v4603, %v4604
        %v4606 = vrot.slane %v3569, 2
        %v4607 = vrot.slane %v3571, 2
        %v4608 = vsel %vm4602, %v4606, %v4607
        %v4609 = vrot.slane %v3572, 2
        %v4610 = vsel %vm4602, %v4604, %v4609
        %v4611 = vrot.slane %v3573, 2
        %v4612 = vsel %vm4602, %v4607, %v4611
        %v4613 = vrot.slane %v3574, 2
        %v4614 = vsel %vm4602, %v4609, %v4613
        %v4615 = vrot.slane %v3575, 2
        %v4616 = vsel %vm4602, %v4611, %v4615
        %v4617 = vrot.slane %v3576, 2
        %v4618 = vsel %vm4602, %v4613, %v4617
        %v4619 = vrot.slane %v3577, 2
        %v4620 = vsel %vm4602, %v4615, %v4619
        %v4621 = vrot.slane %v3578, 2
        %v4622 = vsel %vm4602, %v4617, %v4621
        %v4623 = vrot.slane %v3579, 2
        %v4624 = vsel %vm4602, %v4619, %v4623
        %v4655 = vunpack.c.l.b16 %v4578
        %v4656 = vunpack.c.l.b16 %v4579
        %v4657 = vunpack.c.l.b16 %v4580
        %v4658 = vunpack.c.l.b16 %v4581
        %v4659 = vunpack.c.l.b16 %v4582
        %v4660 = vunpack.c.l.b16 %v4583
        %v4661 = vunpack.c.l.b16 %v4584
        %v4662 = vunpack.c.l.b16 %v4585
        %v4663 = vunpack.c.l.b16 %v4586
        %v4664 = vunpack.c.l.b16 %v4587
        %v4665 = vunpack.c.l.b16 %v4588
        %v4666 = vunpack.c.l.b16 %v4589
        %v4667 = vunpack.c.l.b16 %v4590
        %v4668 = vunpack.c.l.b16 %v4591
        %v4669 = vunpack.c.l.b16 %v4592
        %v4670 = vunpack.c.l.b16 %v4593
        %v4671 = vunpack.c.l.b16 %v4594
        %v4672 = vunpack.c.l.b16 %v4595
        %v4673 = vunpack.c.l.b16 %v4596
        %v4674 = vunpack.c.l.b16 %v4597
        %v4675 = vunpack.c.l.b16 %v4598
        %v4676 = vunpack.c.l.b16 %v4599
        %v4677 = vunpack.c.l.b16 %v4600
        %v4678 = vunpack.c.l.b16 %v4601
        %v4679 = vpack.c.b16 %v4656, %v4655
        %v4680 = vpack.c.b16 %v4658, %v4657
        %v4681 = vpack.c.b16 %v4660, %v4659
        %v4682 = vpack.c.b16 %v4662, %v4661
        %v4683 = vpack.c.b16 %v4664, %v4663
        %v4684 = vpack.c.b16 %v4666, %v4665
        %v4685 = vpack.c.b16 %v4668, %v4667
        %v4686 = vpack.c.b16 %v4670, %v4669
        %v4687 = vpack.c.b16 %v4672, %v4671
        %v4688 = vpack.c.b16 %v4674, %v4673
        %v4689 = vpack.c.b16 %v4676, %v4675
        %v4690 = vpack.c.b16 %v4678, %v4677
        %v4704 = vsel %vm3802, %v4608, 0
        %v4707 = vsel %vm3802, %v4612, 0
        %v4710 = vsel %vm3802, %v4616, 0
        %v4713 = vsel %vm3802, %v4620, 0
        %v4716 = vsel %vm3802, %v4624, 0
        %v4719 = vsel %vm3802, %v4623, 0
        %4721 = vmatprep.subr.bf16.mxu0 0
        %4722 = vmatpush1.bf16.msra.mxu0 %v4679
        %4723 = vmatprep.subr.bf16.mxu0 0
        %4724 = vmatpush1.bf16.msra.mxu0 %v4680
        %4725 = vmatprep.subr.bf16.mxu0 0
        %4726 = vmatpush1.bf16.msra.mxu0 %v4681
        %4727 = vmatprep.subr.bf16.mxu0 0
        %4728 = vmatpush1.bf16.msra.mxu0 %v4682
        %4729 = vmatprep.subr.bf16.mxu0 0
        %4730 = vmatpush1.bf16.msra.mxu0 %v4683
        %4731 = vmatprep.subr.bf16.mxu0 0
        %4732 = vmatpush1.bf16.msra.mxu0 %v4684
        %4733 = vmatprep.subr.bf16.mxu0 0
        %4734 = vmatpush1.bf16.msra.mxu0 %v4685
        %4735 = vmatprep.subr.bf16.mxu0 0
        %4736 = vmatpush1.bf16.msra.mxu0 %v4686
        %4737 = vmatprep.subr.bf16.mxu0 0
        %4738 = vmatpush1.bf16.msra.mxu0 %v4687
        %4739 = vmatprep.subr.bf16.mxu0 0
        %4740 = vmatpush1.bf16.msra.mxu0 %v4688
        %4741 = vmatprep.subr.bf16.mxu0 0
        %4742 = vmatpush1.bf16.msra.mxu0 %v4689
        %4743 = vmatprep.subr.bf16.mxu0 0
        %4744 = vmatpush1.bf16.msra.mxu0 %v4690
        %4745 = vmatprep.subr.bf16.mxu0 0
        %4746 = vmatpush1.bf16.msra.mxu0 0
        %4747 = vmatprep.subr.bf16.mxu0 0
        %4748 = vmatpush1.bf16.msra.mxu0 0
        %4749 = vmatprep.subr.bf16.mxu0 0
        %4750 = vmatpush1.bf16.msra.mxu0 0
        %4751 = vmatprep.subr.bf16.mxu0 0
        %4752 = vmatpush1.bf16.msra.mxu0 0
        %4753 = vmatprep.mubr.bf16.mxu0 %v4704
        %4754 = vmatmul.mubr.bf16.gmra.mrb[0].mxu0 %v4605
        %v4755 = vpop.f32.mrb[0].mxu0
        %v4756 = vadd.f32 0.0, %v4755
        %v4757 = vpop.f32.mrb[0].mxu0
        %v4758 = vpop.f32.mrb[0].mxu0
        %v4759 = vadd.f32 0.0, %v4758
        %v4760 = vpop.f32.mrb[0].mxu0
        %4761 = vmatprep.mubr.bf16.mxu0 %v4707
        %4762 = vmatmul.mubr.bf16.gmra.mrb[0].mxu0 %v4610
        %v4763 = vpop.f32.mrb[0].mxu0
        %v4764 = vadd.f32 0.0, %v4763
        %v4765 = vpop.f32.mrb[0].mxu0
        %v4766 = vpop.f32.mrb[0].mxu0
        %v4767 = vadd.f32 0.0, %v4766
        %v4768 = vpop.f32.mrb[0].mxu0
        %4769 = vmatprep.mubr.bf16.mxu0 %v4710
        %4770 = vmatmul.mubr.bf16.gmra.mrb[0].mxu0 %v4614
        %v4771 = vpop.f32.mrb[0].mxu0
        %v4772 = vadd.f32 0.0, %v4771
        %v4773 = vpop.f32.mrb[0].mxu0
        %v4774 = vpop.f32.mrb[0].mxu0
        %v4775 = vadd.f32 0.0, %v4774
        %v4776 = vpop.f32.mrb[0].mxu0
        %4777 = vmatprep.mubr.bf16.mxu0 %v4713
        %4778 = vmatmul.mubr.bf16.gmra.mrb[0].mxu0 %v4618
        %v4779 = vpop.f32.mrb[0].mxu0
        %v4780 = vadd.f32 0.0, %v4779
        %v4781 = vpop.f32.mrb[0].mxu0
        %v4782 = vpop.f32.mrb[0].mxu0
        %v4783 = vadd.f32 0.0, %v4782
        %v4784 = vpop.f32.mrb[0].mxu0
        %4785 = vmatprep.mubr.bf16.mxu0 %v4716
        %4786 = vmatmul.mubr.bf16.gmra.mrb[0].mxu0 %v4622
        %v4787 = vpop.f32.mrb[0].mxu0
        %v4788 = vadd.f32 0.0, %v4787
        %v4789 = vpop.f32.mrb[0].mxu0
        %v4790 = vpop.f32.mrb[0].mxu0
        %v4791 = vadd.f32 0.0, %v4790
        %v4792 = vpop.f32.mrb[0].mxu0
        %4793 = vmatprep.mubr.bf16.mxu0 %v4719
        %4794 = vmatmul.mubr.bf16.gmra.mrb[0].mxu0 %v4621
        %v4795 = vpop.f32.mrb[0].mxu0
        %v4796 = vadd.f32 0.0, %v4795
        %v4797 = vpop.f32.mrb[0].mxu0
        %v4798 = vpop.f32.mrb[0].mxu0
        %v4799 = vadd.f32 0.0, %v4798
        %v4800 = vpop.f32.mrb[0].mxu0
        %4801 = vdwg.mxu0
        %v4802 = vadd.f32 %v4565, %v4756
        %v4803 = vadd.f32 %v4566, %v4759
        %v4804 = vadd.f32 %v4567, %v4764
        %v4805 = vadd.f32 %v4568, %v4767
        %v4806 = vadd.f32 %v4569, %v4772
        %v4807 = vadd.f32 %v4570, %v4775
        %v4808 = vadd.f32 %v4571, %v4780
        %v4809 = vadd.f32 %v4572, %v4783
        %v4810 = vadd.f32 %v4573, %v4788
        %v4811 = vadd.f32 %v4574, %v4791
        %v4812 = vadd.f32 %v4575, %v4796
        %v4813 = vadd.f32 %v4576, %v4799
        %s4814 = scalar_lea.vmem %s3, 480
        %v4815 = vld [vmem:[%s4814] sm:$0xf]
        %v4816 = vld [vmem:[%s4814 + $0x4] sm:$0xf]
        %v4817 = vld [vmem:[%s4814 + $0x8] sm:$0xf]
        %v4818 = vld [vmem:[%s4814 + $0xc] sm:$0xf]
        %v4819 = vld [vmem:[%s4814 + $0x10] sm:$0xf]
        %v4820 = vld [vmem:[%s4814 + $0x14] sm:$0xf]
        %v4821 = vld [vmem:[%s4814 + $0x18] sm:$0xf]
        %v4822 = vld [vmem:[%s4814 + $0x1c] sm:$0xf]
        %v4823 = vld [vmem:[%s4814 + $0x20] sm:$0xf]
        %v4824 = vld [vmem:[%s4814 + $0x24] sm:$0xf]
        %v4825 = vld [vmem:[%s4814 + $0x28] sm:$0xf]
        %v4826 = vld [vmem:[%s4814 + $0x2c] sm:$0xf]
        %v4827 = vld [vmem:[%s4814 + $0x30] sm:$0xf]
        %v4828 = vld [vmem:[%s4814 + $0x34] sm:$0xf]
        %v4829 = vld [vmem:[%s4814 + $0x38] sm:$0xf]
        %v4830 = vld [vmem:[%s4814 + $0x3c] sm:$0xf]
        %v4831 = vld [vmem:[%s4814 + $0x40] sm:$0xf]
        %v4832 = vld [vmem:[%s4814 + $0x44] sm:$0xf]
        %v4833 = vld [vmem:[%s4814 + $0x48] sm:$0xf]
        %v4834 = vld [vmem:[%s4814 + $0x4c] sm:$0xf]
        %v4835 = vld [vmem:[%s4814 + $0x50] sm:$0xf]
        %v4836 = vld [vmem:[%s4814 + $0x54] sm:$0xf]
        %v4837 = vld [vmem:[%s4814 + $0x58] sm:$0xf]
        %v4838 = vld [vmem:[%s4814 + $0x5c] sm:$0xf]
        %s4839 = scalar_lea.vmem %s3, 576
        %v4840 = vld [vmem:[%s4839] sm:$0xf]
        %v4841 = vld [vmem:[%s4839 + $0x4] sm:$0xf]
        %v4842 = vld [vmem:[%s4839 + $0x8] sm:$0xf]
        %v4843 = vld [vmem:[%s4839 + $0xc] sm:$0xf]
        %v4844 = vld [vmem:[%s4839 + $0x10] sm:$0xf]
        %v4845 = vld [vmem:[%s4839 + $0x14] sm:$0xf]
        %v4846 = vld [vmem:[%s4839 + $0x18] sm:$0xf]
        %v4847 = vld [vmem:[%s4839 + $0x1c] sm:$0xf]
        %v4848 = vld [vmem:[%s4839 + $0x20] sm:$0xf]
        %v4849 = vld [vmem:[%s4839 + $0x24] sm:$0xf]
        %v4850 = vld [vmem:[%s4839 + $0x28] sm:$0xf]
        %v4851 = vld [vmem:[%s4839 + $0x2c] sm:$0xf]
        %v4852 = vld [vmem:[%s4839 + $0x30] sm:$0xf]
        %v4853 = vld [vmem:[%s4839 + $0x34] sm:$0xf]
        %v4854 = vld [vmem:[%s4839 + $0x38] sm:$0xf]
        %v4855 = vld [vmem:[%s4839 + $0x3c] sm:$0xf]
        %v4856 = vld [vmem:[%s4839 + $0x40] sm:$0xf]
        %v4857 = vld [vmem:[%s4839 + $0x44] sm:$0xf]
        %v4858 = vld [vmem:[%s4839 + $0x48] sm:$0xf]
        %v4859 = vld [vmem:[%s4839 + $0x4c] sm:$0xf]
        %v4860 = vld [vmem:[%s4839 + $0x50] sm:$0xf]
        %v4861 = vld [vmem:[%s4839 + $0x54] sm:$0xf]
        %v4862 = vld [vmem:[%s4839 + $0x58] sm:$0xf]
        %v4863 = vld [vmem:[%s4839 + $0x5c] sm:$0xf]
        %v4888 = vunpack.c.l.b16 %v4840
        %v4889 = vunpack.c.l.b16 %v4841
        %v4890 = vunpack.c.l.b16 %v4842
        %v4891 = vunpack.c.l.b16 %v4843
        %v4892 = vunpack.c.l.b16 %v4844
        %v4893 = vunpack.c.l.b16 %v4845
        %v4894 = vunpack.c.l.b16 %v4846
        %v4895 = vunpack.c.l.b16 %v4847
        %v4896 = vunpack.c.l.b16 %v4848
        %v4897 = vunpack.c.l.b16 %v4849
        %v4898 = vunpack.c.l.b16 %v4850
        %v4899 = vunpack.c.l.b16 %v4851
        %v4900 = vunpack.c.l.b16 %v4852
        %v4901 = vunpack.c.l.b16 %v4853
        %v4902 = vunpack.c.l.b16 %v4854
        %v4903 = vunpack.c.l.b16 %v4855
        %v4904 = vunpack.c.l.b16 %v4856
        %v4905 = vunpack.c.l.b16 %v4857
        %v4906 = vunpack.c.l.b16 %v4858
        %v4907 = vunpack.c.l.b16 %v4859
        %v4908 = vunpack.c.l.b16 %v4860
        %v4909 = vunpack.c.l.b16 %v4861
        %v4910 = vunpack.c.l.b16 %v4862
        %v4911 = vunpack.c.l.b16 %v4863
        %v4912 = vpack.c.b16 %v4889, %v4888
        %v4913 = vpack.c.b16 %v4891, %v4890
        %v4914 = vpack.c.b16 %v4893, %v4892
        %v4915 = vpack.c.b16 %v4895, %v4894
        %v4916 = vpack.c.b16 %v4897, %v4896
        %v4917 = vpack.c.b16 %v4899, %v4898
        %v4918 = vpack.c.b16 %v4901, %v4900
        %v4919 = vpack.c.b16 %v4903, %v4902
        %v4920 = vpack.c.b16 %v4905, %v4904
        %v4921 = vpack.c.b16 %v4907, %v4906
        %v4922 = vpack.c.b16 %v4909, %v4908
        %v4923 = vpack.c.b16 %v4911, %v4910
        %4936 = vmatprep.subr.bf16.mxu0 0
        %4937 = vmatpush1.bf16.msra.mxu0 %v4912
        %4938 = vmatprep.subr.bf16.mxu0 0
        %4939 = vmatpush1.bf16.msra.mxu0 %v4913
        %4940 = vmatprep.subr.bf16.mxu0 0
        %4941 = vmatpush1.bf16.msra.mxu0 %v4914
        %4942 = vmatprep.subr.bf16.mxu0 0
        %4943 = vmatpush1.bf16.msra.mxu0 %v4915
        %4944 = vmatprep.subr.bf16.mxu0 0
        %4945 = vmatpush1.bf16.msra.mxu0 %v4916
        %4946 = vmatprep.subr.bf16.mxu0 0
        %4947 = vmatpush1.bf16.msra.mxu0 %v4917
        %4948 = vmatprep.subr.bf16.mxu0 0
        %4949 = vmatpush1.bf16.msra.mxu0 %v4918
        %4950 = vmatprep.subr.bf16.mxu0 0
        %4951 = vmatpush1.bf16.msra.mxu0 %v4919
        %4952 = vmatprep.subr.bf16.mxu0 0
        %4953 = vmatpush1.bf16.msra.mxu0 %v4920
        %4954 = vmatprep.subr.bf16.mxu0 0
        %4955 = vmatpush1.bf16.msra.mxu0 %v4921
        %4956 = vmatprep.subr.bf16.mxu0 0
        %4957 = vmatpush1.bf16.msra.mxu0 %v4922
        %4958 = vmatprep.subr.bf16.mxu0 0
        %4959 = vmatpush1.bf16.msra.mxu0 %v4923
        %4960 = vmatprep.subr.bf16.mxu0 0
        %4961 = vmatpush1.bf16.msra.mxu0 0
        %4962 = vmatprep.subr.bf16.mxu0 0
        %4963 = vmatpush1.bf16.msra.mxu0 0
        %4964 = vmatprep.subr.bf16.mxu0 0
        %4965 = vmatpush1.bf16.msra.mxu0 0
        %4966 = vmatprep.subr.bf16.mxu0 0
        %4967 = vmatpush1.bf16.msra.mxu0 0
        %4968 = vmatprep.mubr.bf16.mxu0 %v3804
        %4969 = vmatmul.mubr.bf16.gmra.mrb[0].mxu0 %v3641
        %v4970 = vpop.f32.mrb[0].mxu0
        %v4971 = vadd.f32 0.0, %v4970
        %v4972 = vpop.f32.mrb[0].mxu0
        %v4973 = vpop.f32.mrb[0].mxu0
        %v4974 = vadd.f32 0.0, %v4973
        %v4975 = vpop.f32.mrb[0].mxu0
        %4976 = vmatprep.mubr.bf16.mxu0 %v3807
        %4977 = vmatmul.mubr.bf16.gmra.mrb[0].mxu0 %v3661
        %v4978 = vpop.f32.mrb[0].mxu0
        %v4979 = vadd.f32 0.0, %v4978
        %v4980 = vpop.f32.mrb[0].mxu0
        %v4981 = vpop.f32.mrb[0].mxu0
        %v4982 = vadd.f32 0.0, %v4981
        %v4983 = vpop.f32.mrb[0].mxu0
        %4984 = vmatprep.mubr.bf16.mxu0 %v3810
        %4985 = vmatmul.mubr.bf16.gmra.mrb[0].mxu0 %v3677
        %v4986 = vpop.f32.mrb[0].mxu0
        %v4987 = vadd.f32 0.0, %v4986
        %v4988 = vpop.f32.mrb[0].mxu0
        %v4989 = vpop.f32.mrb[0].mxu0
        %v4990 = vadd.f32 0.0, %v4989
        %v4991 = vpop.f32.mrb[0].mxu0
        %4992 = vmatprep.mubr.bf16.mxu0 %v3813
        %4993 = vmatmul.mubr.bf16.gmra.mrb[0].mxu0 %v3693
        %v4994 = vpop.f32.mrb[0].mxu0
        %v4995 = vadd.f32 0.0, %v4994
        %v4996 = vpop.f32.mrb[0].mxu0
        %v4997 = vpop.f32.mrb[0].mxu0
        %v4998 = vadd.f32 0.0, %v4997
        %v4999 = vpop.f32.mrb[0].mxu0
        %5000 = vmatprep.mubr.bf16.mxu0 %v3816
        %5001 = vmatmul.mubr.bf16.gmra.mrb[0].mxu0 %v3709
        %v5002 = vpop.f32.mrb[0].mxu0
        %v5003 = vadd.f32 0.0, %v5002
        %v5004 = vpop.f32.mrb[0].mxu0
        %v5005 = vpop.f32.mrb[0].mxu0
        %v5006 = vadd.f32 0.0, %v5005
        %v5007 = vpop.f32.mrb[0].mxu0
        %5008 = vmatprep.mubr.bf16.mxu0 %v3819
        %5009 = vmatmul.mubr.bf16.gmra.mrb[0].mxu0 %v3720
        %v5010 = vpop.f32.mrb[0].mxu0
        %v5011 = vadd.f32 0.0, %v5010
        %v5012 = vpop.f32.mrb[0].mxu0
        %v5013 = vpop.f32.mrb[0].mxu0
        %v5014 = vadd.f32 0.0, %v5013
        %v5015 = vpop.f32.mrb[0].mxu0
        %5016 = vdwg.mxu0
        %v5041 = vunpack.c.l.b16 %v4815
        %v5042 = vunpack.c.l.b16 %v4816
        %v5043 = vunpack.c.l.b16 %v4817
        %v5044 = vunpack.c.l.b16 %v4818
        %v5045 = vunpack.c.l.b16 %v4819
        %v5046 = vunpack.c.l.b16 %v4820
        %v5047 = vunpack.c.l.b16 %v4821
        %v5048 = vunpack.c.l.b16 %v4822
        %v5049 = vunpack.c.l.b16 %v4823
        %v5050 = vunpack.c.l.b16 %v4824
        %v5051 = vunpack.c.l.b16 %v4825
        %v5052 = vunpack.c.l.b16 %v4826
        %v5053 = vunpack.c.l.b16 %v4827
        %v5054 = vunpack.c.l.b16 %v4828
        %v5055 = vunpack.c.l.b16 %v4829
        %v5056 = vunpack.c.l.b16 %v4830
        %v5057 = vunpack.c.l.b16 %v4831
        %v5058 = vunpack.c.l.b16 %v4832
        %v5059 = vunpack.c.l.b16 %v4833
        %v5060 = vunpack.c.l.b16 %v4834
        %v5061 = vunpack.c.l.b16 %v4835
        %v5062 = vunpack.c.l.b16 %v4836
        %v5063 = vunpack.c.l.b16 %v4837
        %v5064 = vunpack.c.l.b16 %v4838
        %v5065 = vpack.c.b16 %v5042, %v5041
        %v5066 = vpack.c.b16 %v5044, %v5043
        %v5067 = vpack.c.b16 %v5046, %v5045
        %v5068 = vpack.c.b16 %v5048, %v5047
        %v5069 = vpack.c.b16 %v5050, %v5049
        %v5070 = vpack.c.b16 %v5052, %v5051
        %v5071 = vpack.c.b16 %v5054, %v5053
        %v5072 = vpack.c.b16 %v5056, %v5055
        %v5073 = vpack.c.b16 %v5058, %v5057
        %v5074 = vpack.c.b16 %v5060, %v5059
        %v5075 = vpack.c.b16 %v5062, %v5061
        %v5076 = vpack.c.b16 %v5064, %v5063
        %5089 = vmatprep.subr.bf16.mxu0 0
        %5090 = vmatpush1.bf16.msra.mxu0 %v5065
        %5091 = vmatprep.subr.bf16.mxu0 0
        %5092 = vmatpush1.bf16.msra.mxu0 %v5066
        %5093 = vmatprep.subr.bf16.mxu0 0
        %5094 = vmatpush1.bf16.msra.mxu0 %v5067
        %5095 = vmatprep.subr.bf16.mxu0 0
        %5096 = vmatpush1.bf16.msra.mxu0 %v5068
        %5097 = vmatprep.subr.bf16.mxu0 0
        %5098 = vmatpush1.bf16.msra.mxu0 %v5069
        %5099 = vmatprep.subr.bf16.mxu0 0
        %5100 = vmatpush1.bf16.msra.mxu0 %v5070
        %5101 = vmatprep.subr.bf16.mxu0 0
        %5102 = vmatpush1.bf16.msra.mxu0 %v5071
        %5103 = vmatprep.subr.bf16.mxu0 0
        %5104 = vmatpush1.bf16.msra.mxu0 %v5072
        %5105 = vmatprep.subr.bf16.mxu0 0
        %5106 = vmatpush1.bf16.msra.mxu0 %v5073
        %5107 = vmatprep.subr.bf16.mxu0 0
        %5108 = vmatpush1.bf16.msra.mxu0 %v5074
        %5109 = vmatprep.subr.bf16.mxu0 0
        %5110 = vmatpush1.bf16.msra.mxu0 %v5075
        %5111 = vmatprep.subr.bf16.mxu0 0
        %5112 = vmatpush1.bf16.msra.mxu0 %v5076
        %5113 = vmatprep.subr.bf16.mxu0 0
        %5114 = vmatpush1.bf16.msra.mxu0 0
        %5115 = vmatprep.subr.bf16.mxu0 0
        %5116 = vmatpush1.bf16.msra.mxu0 0
        %5117 = vmatprep.subr.bf16.mxu0 0
        %5118 = vmatpush1.bf16.msra.mxu0 0
        %5119 = vmatprep.subr.bf16.mxu0 0
        %5120 = vmatpush1.bf16.msra.mxu0 0
        %5121 = vmatprep.mubr.bf16.mxu0 %v3974
        %5122 = vmatmul.mubr.bf16.gmra.mrb[0].mxu0 %v3568
        %v5123 = vpop.f32.mrb[0].mxu0
        %v5124 = vadd.f32 %v4971, %v5123
        %v5125 = vpop.f32.mrb[0].mxu0
        %v5126 = vpop.f32.mrb[0].mxu0
        %v5127 = vadd.f32 %v4974, %v5126
        %v5128 = vpop.f32.mrb[0].mxu0
        %5129 = vmatprep.mubr.bf16.mxu0 %v3976
        %5130 = vmatmul.mubr.bf16.gmra.mrb[0].mxu0 %v3570
        %v5131 = vpop.f32.mrb[0].mxu0
        %v5132 = vadd.f32 %v4979, %v5131
        %v5133 = vpop.f32.mrb[0].mxu0
        %v5134 = vpop.f32.mrb[0].mxu0
        %v5135 = vadd.f32 %v4982, %v5134
        %v5136 = vpop.f32.mrb[0].mxu0
        %5137 = vmatprep.mubr.bf16.mxu0 %v3978
        %5138 = vmatmul.mubr.bf16.gmra.mrb[0].mxu0 %v3572
        %v5139 = vpop.f32.mrb[0].mxu0
        %v5140 = vadd.f32 %v4987, %v5139
        %v5141 = vpop.f32.mrb[0].mxu0
        %v5142 = vpop.f32.mrb[0].mxu0
        %v5143 = vadd.f32 %v4990, %v5142
        %v5144 = vpop.f32.mrb[0].mxu0
        %5145 = vmatprep.mubr.bf16.mxu0 %v3980
        %5146 = vmatmul.mubr.bf16.gmra.mrb[0].mxu0 %v3574
        %v5147 = vpop.f32.mrb[0].mxu0
        %v5148 = vadd.f32 %v4995, %v5147
        %v5149 = vpop.f32.mrb[0].mxu0
        %v5150 = vpop.f32.mrb[0].mxu0
        %v5151 = vadd.f32 %v4998, %v5150
        %v5152 = vpop.f32.mrb[0].mxu0
        %5153 = vmatprep.mubr.bf16.mxu0 %v3982
        %5154 = vmatmul.mubr.bf16.gmra.mrb[0].mxu0 %v3576
        %v5155 = vpop.f32.mrb[0].mxu0
        %v5156 = vadd.f32 %v5003, %v5155
        %v5157 = vpop.f32.mrb[0].mxu0
        %v5158 = vpop.f32.mrb[0].mxu0
        %v5159 = vadd.f32 %v5006, %v5158
        %v5160 = vpop.f32.mrb[0].mxu0
        %5161 = vmatprep.mubr.bf16.mxu0 %v3984
        %5162 = vmatmul.mubr.bf16.gmra.mrb[0].mxu0 %v3578
        %v5163 = vpop.f32.mrb[0].mxu0
        %v5164 = vadd.f32 %v5011, %v5163
        %v5165 = vpop.f32.mrb[0].mxu0
        %v5166 = vpop.f32.mrb[0].mxu0
        %v5167 = vadd.f32 %v5014, %v5166
        %v5168 = vpop.f32.mrb[0].mxu0
        %5169 = vdwg.mxu0
        %s5170 = scalar_lea.vmem %s3, 672
        %v5171 = vld [vmem:[%s5170] sm:$0xf]
        %v5172 = vld [vmem:[%s5170 + $0x4] sm:$0xf]
        %v5173 = vld [vmem:[%s5170 + $0x8] sm:$0xf]
        %v5174 = vld [vmem:[%s5170 + $0xc] sm:$0xf]
        %v5175 = vld [vmem:[%s5170 + $0x10] sm:$0xf]
        %v5176 = vld [vmem:[%s5170 + $0x14] sm:$0xf]
        %v5177 = vld [vmem:[%s5170 + $0x18] sm:$0xf]
        %v5178 = vld [vmem:[%s5170 + $0x1c] sm:$0xf]
        %v5179 = vld [vmem:[%s5170 + $0x20] sm:$0xf]
        %v5180 = vld [vmem:[%s5170 + $0x24] sm:$0xf]
        %v5181 = vld [vmem:[%s5170 + $0x28] sm:$0xf]
        %v5182 = vld [vmem:[%s5170 + $0x2c] sm:$0xf]
        %v5183 = vld [vmem:[%s5170 + $0x30] sm:$0xf]
        %v5184 = vld [vmem:[%s5170 + $0x34] sm:$0xf]
        %v5185 = vld [vmem:[%s5170 + $0x38] sm:$0xf]
        %v5186 = vld [vmem:[%s5170 + $0x3c] sm:$0xf]
        %v5187 = vld [vmem:[%s5170 + $0x40] sm:$0xf]
        %v5188 = vld [vmem:[%s5170 + $0x44] sm:$0xf]
        %v5189 = vld [vmem:[%s5170 + $0x48] sm:$0xf]
        %v5190 = vld [vmem:[%s5170 + $0x4c] sm:$0xf]
        %v5191 = vld [vmem:[%s5170 + $0x50] sm:$0xf]
        %v5192 = vld [vmem:[%s5170 + $0x54] sm:$0xf]
        %v5193 = vld [vmem:[%s5170 + $0x58] sm:$0xf]
        %v5194 = vld [vmem:[%s5170 + $0x5c] sm:$0xf]
        %v5219 = vunpack.c.l.b16 %v5171
        %v5220 = vunpack.c.l.b16 %v5172
        %v5221 = vunpack.c.l.b16 %v5173
        %v5222 = vunpack.c.l.b16 %v5174
        %v5223 = vunpack.c.l.b16 %v5175
        %v5224 = vunpack.c.l.b16 %v5176
        %v5225 = vunpack.c.l.b16 %v5177
        %v5226 = vunpack.c.l.b16 %v5178
        %v5227 = vunpack.c.l.b16 %v5179
        %v5228 = vunpack.c.l.b16 %v5180
        %v5229 = vunpack.c.l.b16 %v5181
        %v5230 = vunpack.c.l.b16 %v5182
        %v5231 = vunpack.c.l.b16 %v5183
        %v5232 = vunpack.c.l.b16 %v5184
        %v5233 = vunpack.c.l.b16 %v5185
        %v5234 = vunpack.c.l.b16 %v5186
        %v5235 = vunpack.c.l.b16 %v5187
        %v5236 = vunpack.c.l.b16 %v5188
        %v5237 = vunpack.c.l.b16 %v5189
        %v5238 = vunpack.c.l.b16 %v5190
        %v5239 = vunpack.c.l.b16 %v5191
        %v5240 = vunpack.c.l.b16 %v5192
        %v5241 = vunpack.c.l.b16 %v5193
        %v5242 = vunpack.c.l.b16 %v5194
        %v5243 = vpack.c.b16 %v5220, %v5219
        %v5244 = vpack.c.b16 %v5222, %v5221
        %v5245 = vpack.c.b16 %v5224, %v5223
        %v5246 = vpack.c.b16 %v5226, %v5225
        %v5247 = vpack.c.b16 %v5228, %v5227
        %v5248 = vpack.c.b16 %v5230, %v5229
        %v5249 = vpack.c.b16 %v5232, %v5231
        %v5250 = vpack.c.b16 %v5234, %v5233
        %v5251 = vpack.c.b16 %v5236, %v5235
        %v5252 = vpack.c.b16 %v5238, %v5237
        %v5253 = vpack.c.b16 %v5240, %v5239
        %v5254 = vpack.c.b16 %v5242, %v5241
        %5267 = vmatprep.subr.bf16.mxu0 0
        %5268 = vmatpush1.bf16.msra.mxu0 %v5243
        %5269 = vmatprep.subr.bf16.mxu0 0
        %5270 = vmatpush1.bf16.msra.mxu0 %v5244
        %5271 = vmatprep.subr.bf16.mxu0 0
        %5272 = vmatpush1.bf16.msra.mxu0 %v5245
        %5273 = vmatprep.subr.bf16.mxu0 0
        %5274 = vmatpush1.bf16.msra.mxu0 %v5246
        %5275 = vmatprep.subr.bf16.mxu0 0
        %5276 = vmatpush1.bf16.msra.mxu0 %v5247
        %5277 = vmatprep.subr.bf16.mxu0 0
        %5278 = vmatpush1.bf16.msra.mxu0 %v5248
        %5279 = vmatprep.subr.bf16.mxu0 0
        %5280 = vmatpush1.bf16.msra.mxu0 %v5249
        %5281 = vmatprep.subr.bf16.mxu0 0
        %5282 = vmatpush1.bf16.msra.mxu0 %v5250
        %5283 = vmatprep.subr.bf16.mxu0 0
        %5284 = vmatpush1.bf16.msra.mxu0 %v5251
        %5285 = vmatprep.subr.bf16.mxu0 0
        %5286 = vmatpush1.bf16.msra.mxu0 %v5252
        %5287 = vmatprep.subr.bf16.mxu0 0
        %5288 = vmatpush1.bf16.msra.mxu0 %v5253
        %5289 = vmatprep.subr.bf16.mxu0 0
        %5290 = vmatpush1.bf16.msra.mxu0 %v5254
        %5291 = vmatprep.subr.bf16.mxu0 0
        %5292 = vmatpush1.bf16.msra.mxu0 0
        %5293 = vmatprep.subr.bf16.mxu0 0
        %5294 = vmatpush1.bf16.msra.mxu0 0
        %5295 = vmatprep.subr.bf16.mxu0 0
        %5296 = vmatpush1.bf16.msra.mxu0 0
        %5297 = vmatprep.subr.bf16.mxu0 0
        %5298 = vmatpush1.bf16.msra.mxu0 0
        %5299 = vmatprep.mubr.bf16.mxu0 %v4206
        %5300 = vmatmul.mubr.bf16.gmra.mrb[0].mxu0 %v4107
        %v5301 = vpop.f32.mrb[0].mxu0
        %v5302 = vadd.f32 0.0, %v5301
        %v5303 = vpop.f32.mrb[0].mxu0
        %v5304 = vpop.f32.mrb[0].mxu0
        %v5305 = vadd.f32 0.0, %v5304
        %v5306 = vpop.f32.mrb[0].mxu0
        %5307 = vmatprep.mubr.bf16.mxu0 %v4209
        %5308 = vmatmul.mubr.bf16.gmra.mrb[0].mxu0 %v4112
        %v5309 = vpop.f32.mrb[0].mxu0
        %v5310 = vadd.f32 0.0, %v5309
        %v5311 = vpop.f32.mrb[0].mxu0
        %v5312 = vpop.f32.mrb[0].mxu0
        %v5313 = vadd.f32 0.0, %v5312
        %v5314 = vpop.f32.mrb[0].mxu0
        %5315 = vmatprep.mubr.bf16.mxu0 %v4212
        %5316 = vmatmul.mubr.bf16.gmra.mrb[0].mxu0 %v4116
        %v5317 = vpop.f32.mrb[0].mxu0
        %v5318 = vadd.f32 0.0, %v5317
        %v5319 = vpop.f32.mrb[0].mxu0
        %v5320 = vpop.f32.mrb[0].mxu0
        %v5321 = vadd.f32 0.0, %v5320
        %v5322 = vpop.f32.mrb[0].mxu0
        %5323 = vmatprep.mubr.bf16.mxu0 %v4215
        %5324 = vmatmul.mubr.bf16.gmra.mrb[0].mxu0 %v4120
        %v5325 = vpop.f32.mrb[0].mxu0
        %v5326 = vadd.f32 0.0, %v5325
        %v5327 = vpop.f32.mrb[0].mxu0
        %v5328 = vpop.f32.mrb[0].mxu0
        %v5329 = vadd.f32 0.0, %v5328
        %v5330 = vpop.f32.mrb[0].mxu0
        %5331 = vmatprep.mubr.bf16.mxu0 %v4218
        %5332 = vmatmul.mubr.bf16.gmra.mrb[0].mxu0 %v4124
        %v5333 = vpop.f32.mrb[0].mxu0
        %v5334 = vadd.f32 0.0, %v5333
        %v5335 = vpop.f32.mrb[0].mxu0
        %v5336 = vpop.f32.mrb[0].mxu0
        %v5337 = vadd.f32 0.0, %v5336
        %v5338 = vpop.f32.mrb[0].mxu0
        %5339 = vmatprep.mubr.bf16.mxu0 %v4221
        %5340 = vmatmul.mubr.bf16.gmra.mrb[0].mxu0 %v4123
        %v5341 = vpop.f32.mrb[0].mxu0
        %v5342 = vadd.f32 0.0, %v5341
        %v5343 = vpop.f32.mrb[0].mxu0
        %v5344 = vpop.f32.mrb[0].mxu0
        %v5345 = vadd.f32 0.0, %v5344
        %v5346 = vpop.f32.mrb[0].mxu0
        %5347 = vdwg.mxu0
        %v5348 = vadd.f32 %v5124, %v5302
        %v5349 = vadd.f32 %v5127, %v5305
        %v5350 = vadd.f32 %v5132, %v5310
        %v5351 = vadd.f32 %v5135, %v5313
        %v5352 = vadd.f32 %v5140, %v5318
        %v5353 = vadd.f32 %v5143, %v5321
        %v5354 = vadd.f32 %v5148, %v5326
        %v5355 = vadd.f32 %v5151, %v5329
        %v5356 = vadd.f32 %v5156, %v5334
        %v5357 = vadd.f32 %v5159, %v5337
        %v5358 = vadd.f32 %v5164, %v5342
        %v5359 = vadd.f32 %v5167, %v5345
        %s5360 = scalar_lea.vmem %s3, 768
        %v5361 = vld [vmem:[%s5360] sm:$0xf]
        %v5362 = vld [vmem:[%s5360 + $0x4] sm:$0xf]
        %v5363 = vld [vmem:[%s5360 + $0x8] sm:$0xf]
        %v5364 = vld [vmem:[%s5360 + $0xc] sm:$0xf]
        %v5365 = vld [vmem:[%s5360 + $0x10] sm:$0xf]
        %v5366 = vld [vmem:[%s5360 + $0x14] sm:$0xf]
        %v5367 = vld [vmem:[%s5360 + $0x18] sm:$0xf]
        %v5368 = vld [vmem:[%s5360 + $0x1c] sm:$0xf]
        %v5369 = vld [vmem:[%s5360 + $0x20] sm:$0xf]
        %v5370 = vld [vmem:[%s5360 + $0x24] sm:$0xf]
        %v5371 = vld [vmem:[%s5360 + $0x28] sm:$0xf]
        %v5372 = vld [vmem:[%s5360 + $0x2c] sm:$0xf]
        %v5373 = vld [vmem:[%s5360 + $0x30] sm:$0xf]
        %v5374 = vld [vmem:[%s5360 + $0x34] sm:$0xf]
        %v5375 = vld [vmem:[%s5360 + $0x38] sm:$0xf]
        %v5376 = vld [vmem:[%s5360 + $0x3c] sm:$0xf]
        %v5377 = vld [vmem:[%s5360 + $0x40] sm:$0xf]
        %v5378 = vld [vmem:[%s5360 + $0x44] sm:$0xf]
        %v5379 = vld [vmem:[%s5360 + $0x48] sm:$0xf]
        %v5380 = vld [vmem:[%s5360 + $0x4c] sm:$0xf]
        %v5381 = vld [vmem:[%s5360 + $0x50] sm:$0xf]
        %v5382 = vld [vmem:[%s5360 + $0x54] sm:$0xf]
        %v5383 = vld [vmem:[%s5360 + $0x58] sm:$0xf]
        %v5384 = vld [vmem:[%s5360 + $0x5c] sm:$0xf]
        %v5409 = vunpack.c.l.b16 %v5361
        %v5410 = vunpack.c.l.b16 %v5362
        %v5411 = vunpack.c.l.b16 %v5363
        %v5412 = vunpack.c.l.b16 %v5364
        %v5413 = vunpack.c.l.b16 %v5365
        %v5414 = vunpack.c.l.b16 %v5366
        %v5415 = vunpack.c.l.b16 %v5367
        %v5416 = vunpack.c.l.b16 %v5368
        %v5417 = vunpack.c.l.b16 %v5369
        %v5418 = vunpack.c.l.b16 %v5370
        %v5419 = vunpack.c.l.b16 %v5371
        %v5420 = vunpack.c.l.b16 %v5372
        %v5421 = vunpack.c.l.b16 %v5373
        %v5422 = vunpack.c.l.b16 %v5374
        %v5423 = vunpack.c.l.b16 %v5375
        %v5424 = vunpack.c.l.b16 %v5376
        %v5425 = vunpack.c.l.b16 %v5377
        %v5426 = vunpack.c.l.b16 %v5378
        %v5427 = vunpack.c.l.b16 %v5379
        %v5428 = vunpack.c.l.b16 %v5380
        %v5429 = vunpack.c.l.b16 %v5381
        %v5430 = vunpack.c.l.b16 %v5382
        %v5431 = vunpack.c.l.b16 %v5383
        %v5432 = vunpack.c.l.b16 %v5384
        %v5433 = vpack.c.b16 %v5410, %v5409
        %v5434 = vpack.c.b16 %v5412, %v5411
        %v5435 = vpack.c.b16 %v5414, %v5413
        %v5436 = vpack.c.b16 %v5416, %v5415
        %v5437 = vpack.c.b16 %v5418, %v5417
        %v5438 = vpack.c.b16 %v5420, %v5419
        %v5439 = vpack.c.b16 %v5422, %v5421
        %v5440 = vpack.c.b16 %v5424, %v5423
        %v5441 = vpack.c.b16 %v5426, %v5425
        %v5442 = vpack.c.b16 %v5428, %v5427
        %v5443 = vpack.c.b16 %v5430, %v5429
        %v5444 = vpack.c.b16 %v5432, %v5431
        %5457 = vmatprep.subr.bf16.mxu0 0
        %5458 = vmatpush1.bf16.msra.mxu0 %v5433
        %5459 = vmatprep.subr.bf16.mxu0 0
        %5460 = vmatpush1.bf16.msra.mxu0 %v5434
        %5461 = vmatprep.subr.bf16.mxu0 0
        %5462 = vmatpush1.bf16.msra.mxu0 %v5435
        %5463 = vmatprep.subr.bf16.mxu0 0
        %5464 = vmatpush1.bf16.msra.mxu0 %v5436
        %5465 = vmatprep.subr.bf16.mxu0 0
        %5466 = vmatpush1.bf16.msra.mxu0 %v5437
        %5467 = vmatprep.subr.bf16.mxu0 0
        %5468 = vmatpush1.bf16.msra.mxu0 %v5438
        %5469 = vmatprep.subr.bf16.mxu0 0
        %5470 = vmatpush1.bf16.msra.mxu0 %v5439
        %5471 = vmatprep.subr.bf16.mxu0 0
        %5472 = vmatpush1.bf16.msra.mxu0 %v5440
        %5473 = vmatprep.subr.bf16.mxu0 0
        %5474 = vmatpush1.bf16.msra.mxu0 %v5441
        %5475 = vmatprep.subr.bf16.mxu0 0
        %5476 = vmatpush1.bf16.msra.mxu0 %v5442
        %5477 = vmatprep.subr.bf16.mxu0 0
        %5478 = vmatpush1.bf16.msra.mxu0 %v5443
        %5479 = vmatprep.subr.bf16.mxu0 0
        %5480 = vmatpush1.bf16.msra.mxu0 %v5444
        %5481 = vmatprep.subr.bf16.mxu0 0
        %5482 = vmatpush1.bf16.msra.mxu0 0
        %5483 = vmatprep.subr.bf16.mxu0 0
        %5484 = vmatpush1.bf16.msra.mxu0 0
        %5485 = vmatprep.subr.bf16.mxu0 0
        %5486 = vmatpush1.bf16.msra.mxu0 0
        %5487 = vmatprep.subr.bf16.mxu0 0
        %5488 = vmatpush1.bf16.msra.mxu0 0
        %5489 = vmatprep.mubr.bf16.mxu0 %v4467
        %5490 = vmatmul.mubr.bf16.gmra.mrb[0].mxu0 %v4348
        %v5491 = vpop.f32.mrb[0].mxu0
        %v5492 = vadd.f32 0.0, %v5491
        %v5493 = vpop.f32.mrb[0].mxu0
        %v5494 = vpop.f32.mrb[0].mxu0
        %v5495 = vadd.f32 0.0, %v5494
        %v5496 = vpop.f32.mrb[0].mxu0
        %5497 = vmatprep.mubr.bf16.mxu0 %v4470
        %5498 = vmatmul.mubr.bf16.gmra.mrb[0].mxu0 %v4359
        %v5499 = vpop.f32.mrb[0].mxu0
        %v5500 = vadd.f32 0.0, %v5499
        %v5501 = vpop.f32.mrb[0].mxu0
        %v5502 = vpop.f32.mrb[0].mxu0
        %v5503 = vadd.f32 0.0, %v5502
        %v5504 = vpop.f32.mrb[0].mxu0
        %5505 = vmatprep.mubr.bf16.mxu0 %v4473
        %5506 = vmatmul.mubr.bf16.gmra.mrb[0].mxu0 %v4367
        %v5507 = vpop.f32.mrb[0].mxu0
        %v5508 = vadd.f32 0.0, %v5507
        %v5509 = vpop.f32.mrb[0].mxu0
        %v5510 = vpop.f32.mrb[0].mxu0
        %v5511 = vadd.f32 0.0, %v5510
        %v5512 = vpop.f32.mrb[0].mxu0
        %5513 = vmatprep.mubr.bf16.mxu0 %v4476
        %5514 = vmatmul.mubr.bf16.gmra.mrb[0].mxu0 %v4375
        %v5515 = vpop.f32.mrb[0].mxu0
        %v5516 = vadd.f32 0.0, %v5515
        %v5517 = vpop.f32.mrb[0].mxu0
        %v5518 = vpop.f32.mrb[0].mxu0
        %v5519 = vadd.f32 0.0, %v5518
        %v5520 = vpop.f32.mrb[0].mxu0
        %5521 = vmatprep.mubr.bf16.mxu0 %v4479
        %5522 = vmatmul.mubr.bf16.gmra.mrb[0].mxu0 %v4383
        %v5523 = vpop.f32.mrb[0].mxu0
        %v5524 = vadd.f32 0.0, %v5523
        %v5525 = vpop.f32.mrb[0].mxu0
        %v5526 = vpop.f32.mrb[0].mxu0
        %v5527 = vadd.f32 0.0, %v5526
        %v5528 = vpop.f32.mrb[0].mxu0
        %5529 = vmatprep.mubr.bf16.mxu0 %v4482
        %5530 = vmatmul.mubr.bf16.gmra.mrb[0].mxu0 %v4382
        %v5531 = vpop.f32.mrb[0].mxu0
        %v5532 = vadd.f32 0.0, %v5531
        %v5533 = vpop.f32.mrb[0].mxu0
        %v5534 = vpop.f32.mrb[0].mxu0
        %v5535 = vadd.f32 0.0, %v5534
        %v5536 = vpop.f32.mrb[0].mxu0
        %5537 = vdwg.mxu0
        %v5538 = vadd.f32 %v5348, %v5492
        %v5539 = vadd.f32 %v5349, %v5495
        %v5540 = vadd.f32 %v5350, %v5500
        %v5541 = vadd.f32 %v5351, %v5503
        %v5542 = vadd.f32 %v5352, %v5508
        %v5543 = vadd.f32 %v5353, %v5511
        %v5544 = vadd.f32 %v5354, %v5516
        %v5545 = vadd.f32 %v5355, %v5519
        %v5546 = vadd.f32 %v5356, %v5524
        %v5547 = vadd.f32 %v5357, %v5527
        %v5548 = vadd.f32 %v5358, %v5532
        %v5549 = vadd.f32 %v5359, %v5535
        %s5550 = scalar_lea.vmem %s3, 864
        %v5551 = vld [vmem:[%s5550] sm:$0xf]
        %v5552 = vld [vmem:[%s5550 + $0x4] sm:$0xf]
        %v5553 = vld [vmem:[%s5550 + $0x8] sm:$0xf]
        %v5554 = vld [vmem:[%s5550 + $0xc] sm:$0xf]
        %v5555 = vld [vmem:[%s5550 + $0x10] sm:$0xf]
        %v5556 = vld [vmem:[%s5550 + $0x14] sm:$0xf]
        %v5557 = vld [vmem:[%s5550 + $0x18] sm:$0xf]
        %v5558 = vld [vmem:[%s5550 + $0x1c] sm:$0xf]
        %v5559 = vld [vmem:[%s5550 + $0x20] sm:$0xf]
        %v5560 = vld [vmem:[%s5550 + $0x24] sm:$0xf]
        %v5561 = vld [vmem:[%s5550 + $0x28] sm:$0xf]
        %v5562 = vld [vmem:[%s5550 + $0x2c] sm:$0xf]
        %v5563 = vld [vmem:[%s5550 + $0x30] sm:$0xf]
        %v5564 = vld [vmem:[%s5550 + $0x34] sm:$0xf]
        %v5565 = vld [vmem:[%s5550 + $0x38] sm:$0xf]
        %v5566 = vld [vmem:[%s5550 + $0x3c] sm:$0xf]
        %v5567 = vld [vmem:[%s5550 + $0x40] sm:$0xf]
        %v5568 = vld [vmem:[%s5550 + $0x44] sm:$0xf]
        %v5569 = vld [vmem:[%s5550 + $0x48] sm:$0xf]
        %v5570 = vld [vmem:[%s5550 + $0x4c] sm:$0xf]
        %v5571 = vld [vmem:[%s5550 + $0x50] sm:$0xf]
        %v5572 = vld [vmem:[%s5550 + $0x54] sm:$0xf]
        %v5573 = vld [vmem:[%s5550 + $0x58] sm:$0xf]
        %v5574 = vld [vmem:[%s5550 + $0x5c] sm:$0xf]
        %v5599 = vunpack.c.l.b16 %v5551
        %v5600 = vunpack.c.l.b16 %v5552
        %v5601 = vunpack.c.l.b16 %v5553
        %v5602 = vunpack.c.l.b16 %v5554
        %v5603 = vunpack.c.l.b16 %v5555
        %v5604 = vunpack.c.l.b16 %v5556
        %v5605 = vunpack.c.l.b16 %v5557
        %v5606 = vunpack.c.l.b16 %v5558
        %v5607 = vunpack.c.l.b16 %v5559
        %v5608 = vunpack.c.l.b16 %v5560
        %v5609 = vunpack.c.l.b16 %v5561
        %v5610 = vunpack.c.l.b16 %v5562
        %v5611 = vunpack.c.l.b16 %v5563
        %v5612 = vunpack.c.l.b16 %v5564
        %v5613 = vunpack.c.l.b16 %v5565
        %v5614 = vunpack.c.l.b16 %v5566
        %v5615 = vunpack.c.l.b16 %v5567
        %v5616 = vunpack.c.l.b16 %v5568
        %v5617 = vunpack.c.l.b16 %v5569
        %v5618 = vunpack.c.l.b16 %v5570
        %v5619 = vunpack.c.l.b16 %v5571
        %v5620 = vunpack.c.l.b16 %v5572
        %v5621 = vunpack.c.l.b16 %v5573
        %v5622 = vunpack.c.l.b16 %v5574
        %v5623 = vpack.c.b16 %v5600, %v5599
        %v5624 = vpack.c.b16 %v5602, %v5601
        %v5625 = vpack.c.b16 %v5604, %v5603
        %v5626 = vpack.c.b16 %v5606, %v5605
        %v5627 = vpack.c.b16 %v5608, %v5607
        %v5628 = vpack.c.b16 %v5610, %v5609
        %v5629 = vpack.c.b16 %v5612, %v5611
        %v5630 = vpack.c.b16 %v5614, %v5613
        %v5631 = vpack.c.b16 %v5616, %v5615
        %v5632 = vpack.c.b16 %v5618, %v5617
        %v5633 = vpack.c.b16 %v5620, %v5619
        %v5634 = vpack.c.b16 %v5622, %v5621
        %5647 = vmatprep.subr.bf16.mxu0 0
        %5648 = vmatpush1.bf16.msra.mxu0 %v5623
        %5649 = vmatprep.subr.bf16.mxu0 0
        %5650 = vmatpush1.bf16.msra.mxu0 %v5624
        %5651 = vmatprep.subr.bf16.mxu0 0
        %5652 = vmatpush1.bf16.msra.mxu0 %v5625
        %5653 = vmatprep.subr.bf16.mxu0 0
        %5654 = vmatpush1.bf16.msra.mxu0 %v5626
        %5655 = vmatprep.subr.bf16.mxu0 0
        %5656 = vmatpush1.bf16.msra.mxu0 %v5627
        %5657 = vmatprep.subr.bf16.mxu0 0
        %5658 = vmatpush1.bf16.msra.mxu0 %v5628
        %5659 = vmatprep.subr.bf16.mxu0 0
        %5660 = vmatpush1.bf16.msra.mxu0 %v5629
        %5661 = vmatprep.subr.bf16.mxu0 0
        %5662 = vmatpush1.bf16.msra.mxu0 %v5630
        %5663 = vmatprep.subr.bf16.mxu0 0
        %5664 = vmatpush1.bf16.msra.mxu0 %v5631
        %5665 = vmatprep.subr.bf16.mxu0 0
        %5666 = vmatpush1.bf16.msra.mxu0 %v5632
        %5667 = vmatprep.subr.bf16.mxu0 0
        %5668 = vmatpush1.bf16.msra.mxu0 %v5633
        %5669 = vmatprep.subr.bf16.mxu0 0
        %5670 = vmatpush1.bf16.msra.mxu0 %v5634
        %5671 = vmatprep.subr.bf16.mxu0 0
        %5672 = vmatpush1.bf16.msra.mxu0 0
        %5673 = vmatprep.subr.bf16.mxu0 0
        %5674 = vmatpush1.bf16.msra.mxu0 0
        %5675 = vmatprep.subr.bf16.mxu0 0
        %5676 = vmatpush1.bf16.msra.mxu0 0
        %5677 = vmatprep.subr.bf16.mxu0 0
        %5678 = vmatpush1.bf16.msra.mxu0 0
        %5679 = vmatprep.mubr.bf16.mxu0 %v4704
        %5680 = vmatmul.mubr.bf16.gmra.mrb[0].mxu0 %v4605
        %v5681 = vpop.f32.mrb[0].mxu0
        %v5682 = vadd.f32 0.0, %v5681
        %v5683 = vpop.f32.mrb[0].mxu0
        %v5684 = vpop.f32.mrb[0].mxu0
        %v5685 = vadd.f32 0.0, %v5684
        %v5686 = vpop.f32.mrb[0].mxu0
        %5687 = vmatprep.mubr.bf16.mxu0 %v4707
        %5688 = vmatmul.mubr.bf16.gmra.mrb[0].mxu0 %v4610
        %v5689 = vpop.f32.mrb[0].mxu0
        %v5690 = vadd.f32 0.0, %v5689
        %v5691 = vpop.f32.mrb[0].mxu0
        %v5692 = vpop.f32.mrb[0].mxu0
        %v5693 = vadd.f32 0.0, %v5692
        %v5694 = vpop.f32.mrb[0].mxu0
        %5695 = vmatprep.mubr.bf16.mxu0 %v4710
        %5696 = vmatmul.mubr.bf16.gmra.mrb[0].mxu0 %v4614
        %v5697 = vpop.f32.mrb[0].mxu0
        %v5698 = vadd.f32 0.0, %v5697
        %v5699 = vpop.f32.mrb[0].mxu0
        %v5700 = vpop.f32.mrb[0].mxu0
        %v5701 = vadd.f32 0.0, %v5700
        %v5702 = vpop.f32.mrb[0].mxu0
        %5703 = vmatprep.mubr.bf16.mxu0 %v4713
        %5704 = vmatmul.mubr.bf16.gmra.mrb[0].mxu0 %v4618
        %v5705 = vpop.f32.mrb[0].mxu0
        %v5706 = vadd.f32 0.0, %v5705
        %v5707 = vpop.f32.mrb[0].mxu0
        %v5708 = vpop.f32.mrb[0].mxu0
        %v5709 = vadd.f32 0.0, %v5708
        %v5710 = vpop.f32.mrb[0].mxu0
        %5711 = vmatprep.mubr.bf16.mxu0 %v4716
        %5712 = vmatmul.mubr.bf16.gmra.mrb[0].mxu0 %v4622
        %v5713 = vpop.f32.mrb[0].mxu0
        %v5714 = vadd.f32 0.0, %v5713
        %v5715 = vpop.f32.mrb[0].mxu0
        %v5716 = vpop.f32.mrb[0].mxu0
        %v5717 = vadd.f32 0.0, %v5716
        %v5718 = vpop.f32.mrb[0].mxu0
        %5719 = vmatprep.mubr.bf16.mxu0 %v4719
        %5720 = vmatmul.mubr.bf16.gmra.mrb[0].mxu0 %v4621
        %v5721 = vpop.f32.mrb[0].mxu0
        %v5722 = vadd.f32 0.0, %v5721
        %v5723 = vpop.f32.mrb[0].mxu0
        %v5724 = vpop.f32.mrb[0].mxu0
        %v5725 = vadd.f32 0.0, %v5724
        %v5726 = vpop.f32.mrb[0].mxu0
        %5727 = vdwg.mxu0
        %v5728 = vadd.f32 %v5538, %v5682
        %v5729 = vadd.f32 %v5539, %v5685
        %v5730 = vadd.f32 %v5540, %v5690
        %v5731 = vadd.f32 %v5541, %v5693
        %v5732 = vadd.f32 %v5542, %v5698
        %v5733 = vadd.f32 %v5543, %v5701
        %v5734 = vadd.f32 %v5544, %v5706
        %v5735 = vadd.f32 %v5545, %v5709
        %v5736 = vadd.f32 %v5546, %v5714
        %v5737 = vadd.f32 %v5547, %v5717
        %v5738 = vadd.f32 %v5548, %v5722
        %v5739 = vadd.f32 %v5549, %v5725
        %v5740 = vmax.f32 %v4802, %v5728
        %v5741 = vmax.f32 %v4803, %v5729
        %v5742 = vmax.f32 %v4804, %v5730
        %v5743 = vmax.f32 %v4805, %v5731
        %v5744 = vmax.f32 %v4806, %v5732
        %v5745 = vmax.f32 %v4807, %v5733
        %v5746 = vmax.f32 %v4808, %v5734
        %v5747 = vmax.f32 %v4809, %v5735
        %v5748 = vmax.f32 %v4810, %v5736
        %v5749 = vmax.f32 %v4811, %v5737
        %v5750 = vmax.f32 %v4812, %v5738
        %v5751 = vmax.f32 %v4813, %v5739
        %v5752 = vld [vmem:[%s4] sm:$0x1]
        %v5754 = vlaneseq
        %v5755 = vshrl.u32 %v5754, 7
        %v5756 = vsub.s32 0, %v5755
        %v5757 = vrot.slane %v5752, %v5756
        %v5759 = vadd.f32 %v5740, %v5757
        %v5760 = vadd.f32 %v5741, %v5757
        %v5761 = vadd.f32 %v5742, %v5757
        %v5762 = vadd.f32 %v5743, %v5757
        %v5763 = vadd.f32 %v5744, %v5757
        %v5764 = vadd.f32 %v5745, %v5757
        %v5765 = vadd.f32 %v5746, %v5757
        %v5766 = vadd.f32 %v5747, %v5757
        %v5767 = vadd.f32 %v5748, %v5757
        %v5768 = vadd.f32 %v5749, %v5757
        %v5769 = vadd.f32 %v5750, %v5757
        %v5770 = vadd.f32 %v5751, %v5757
        %vm5783 = vcmask 1046528
        %v5784 = vrot.slane %v5759, 1
        %v5785 = vrot.slane %v5760, 1
        %v5786 = vsel %vm5783, %v5784, %v5785
        %v5787 = vrot.slane %v5761, 1
        %v5788 = vsel %vm5783, %v5785, %v5787
        %v5789 = vrot.slane %v5762, 1
        %v5790 = vsel %vm5783, %v5787, %v5789
        %v5791 = vrot.slane %v5763, 1
        %v5792 = vsel %vm5783, %v5789, %v5791
        %v5793 = vrot.slane %v5764, 1
        %v5794 = vsel %vm5783, %v5791, %v5793
        %v5795 = vrot.slane %v5765, 1
        %v5796 = vsel %vm5783, %v5793, %v5795
        %v5797 = vrot.slane %v5766, 1
        %v5798 = vsel %vm5783, %v5795, %v5797
        %v5799 = vrot.slane %v5767, 1
        %v5800 = vsel %vm5783, %v5797, %v5799
        %v5801 = vrot.slane %v5768, 1
        %v5802 = vsel %vm5783, %v5799, %v5801
        %v5803 = vrot.slane %v5769, 1
        %v5804 = vsel %vm5783, %v5801, %v5803
        %v5805 = vrot.slane %v5770, 1
        %v5806 = vsel %vm5783, %v5803, %v5805
        %v5819 = vmax.f32 %v5759, %v5786
        %v5820 = vmax.f32 %v5760, %v5788
        %v5821 = vmax.f32 %v5761, %v5790
        %v5822 = vmax.f32 %v5762, %v5792
        %v5823 = vmax.f32 %v5763, %v5794
        %v5824 = vmax.f32 %v5764, %v5796
        %v5825 = vmax.f32 %v5765, %v5798
        %v5826 = vmax.f32 %v5766, %v5800
        %v5827 = vmax.f32 %v5767, %v5802
        %v5828 = vmax.f32 %v5768, %v5804
        %v5829 = vmax.f32 %v5769, %v5806
        %v5830 = vmax.f32 %v5770, %v5805
        %v5831 = vmax.f32 %v5819, 0.0
        %v5832 = vmax.f32 %v5820, 0.0
        %v5833 = vmax.f32 %v5821, 0.0
        %v5834 = vmax.f32 %v5822, 0.0
        %v5835 = vmax.f32 %v5823, 0.0
        %v5836 = vmax.f32 %v5824, 0.0
        %v5837 = vmax.f32 %v5825, 0.0
        %v5838 = vmax.f32 %v5826, 0.0
        %v5839 = vmax.f32 %v5827, 0.0
        %v5840 = vmax.f32 %v5828, 0.0
        %v5841 = vmax.f32 %v5829, 0.0
        %v5842 = vmax.f32 %v5830, 0.0
        %v5843 = vpack.c.bf16 %v5832, %v5831
        %v5844 = vpack.c.bf16 %v5834, %v5833
        %v5845 = vpack.c.bf16 %v5836, %v5835
        %v5846 = vpack.c.bf16 %v5838, %v5837
        %v5847 = vpack.c.bf16 %v5840, %v5839
        %v5848 = vpack.c.bf16 %v5842, %v5841
        %v5849 = vld [vmem:[%s7] sm:$0xf]
        %vm5850 = vcmask 744448
        %v5852 = vsel %vm5850, %v5849, 0
        %vm5854 = vcmask 1044480
        %v5855 = vsel %vm5854, 4294967295, 65535
        %v5856 = vsel %vm785, %v5855, 0
        %v5858 = vand.u32 %v5848, %v5856
        %5860 = vmatprep.subr.bf16.mxu0 0
        %5861 = vmatpush1.bf16.msra.mxu0 %v5843
        %5862 = vmatprep.subr.bf16.mxu0 0
        %5863 = vmatpush1.bf16.msra.mxu0 %v5844
        %5864 = vmatprep.subr.bf16.mxu0 0
        %5865 = vmatpush1.bf16.msra.mxu0 %v5845
        %5866 = vmatprep.subr.bf16.mxu0 0
        %5867 = vmatpush1.bf16.msra.mxu0 %v5846
        %5868 = vmatprep.subr.bf16.mxu0 0
        %5869 = vmatpush1.bf16.msra.mxu0 %v5847
        %5870 = vmatprep.subr.bf16.mxu0 0
        %5871 = vmatpush1.bf16.msra.mxu0 %v5858
        %5872 = vmatprep.subr.bf16.mxu0 0
        %5873 = vmatpush1.bf16.msra.mxu0 0
        %5874 = vmatprep.subr.bf16.mxu0 0
        %5875 = vmatpush1.bf16.msra.mxu0 0
        %5876 = vmatprep.subr.bf16.mxu0 0
        %5877 = vmatpush1.bf16.msra.mxu0 0
        %5878 = vmatprep.subr.bf16.mxu0 0
        %5879 = vmatpush1.bf16.msra.mxu0 0
        %5880 = vmatprep.subr.bf16.mxu0 0
        %5881 = vmatpush1.bf16.msra.mxu0 0
        %5882 = vmatprep.subr.bf16.mxu0 0
        %5883 = vmatpush1.bf16.msra.mxu0 0
        %5884 = vmatprep.subr.bf16.mxu0 0
        %5885 = vmatpush1.bf16.msra.mxu0 0
        %5886 = vmatprep.subr.bf16.mxu0 0
        %5887 = vmatpush1.bf16.msra.mxu0 0
        %5888 = vmatprep.subr.bf16.mxu0 0
        %5889 = vmatpush1.bf16.msra.mxu0 0
        %5890 = vmatprep.subr.bf16.mxu0 0
        %5891 = vmatpush1.bf16.msra.mxu0 0
        %5892 = vmatprep.mubr.bf16.mxu0 0
        %5893 = vmatmul.mubr.bf16.gmra.mrb[0].mxu0 %v5852
        %v5894 = vpop.f32.mrb[0].mxu0
        %v5895 = vadd.f32 0.0, %v5894
        %v5896 = vpop.f32.mrb[0].mxu0
        %v5897 = vpop.f32.mrb[0].mxu0
        %v5898 = vpop.f32.mrb[0].mxu0
        %5899 = vdwg.mxu0
        %v5900 = vpack.c.bf16 %v5895, %v5895
        %v5901 = vld [vmem:[%s5] sm:$0xf]
        %v5902 = vld [vmem:[%s5 + $0x4] sm:$0xf]
        %v5903 = vld [vmem:[%s5 + $0x8] sm:$0xf]
        %v5904 = vld [vmem:[%s5 + $0xc] sm:$0xf]
        %v5905 = vld [vmem:[%s5 + $0x10] sm:$0xf]
        %v5906 = vld [vmem:[%s5 + $0x14] sm:$0xf]
        %v5907 = vld [vmem:[%s5 + $0x18] sm:$0xf]
        %v5908 = vld [vmem:[%s5 + $0x1c] sm:$0xf]
        %v5909 = vld [vmem:[%s5 + $0x20] sm:$0xf]
        %v5910 = vld [vmem:[%s5 + $0x24] sm:$0xf]
        %v5911 = vld [vmem:[%s5 + $0x28] sm:$0xf]
        %v5912 = vld [vmem:[%s5 + $0x2c] sm:$0xf]
        %v5913 = vld [vmem:[%s5 + $0x30] sm:$0xf]
        %v5914 = vld [vmem:[%s5 + $0x34] sm:$0xf]
        %v5915 = vld [vmem:[%s5 + $0x38] sm:$0xf]
        %v5916 = vld [vmem:[%s5 + $0x3c] sm:$0xf]
        %s5917 = scalar_lea.vmem %s7, 4
        %v5918 = vld [vmem:[%s5917] sm:$0xf]
        %v5920 = vsel %vm5850, %v5918, 0
        %5922 = vmatprep.subr.bf16.mxu0 0
        %5923 = vmatpush1.bf16.msra.mxu0 %v5843
        %5924 = vmatprep.subr.bf16.mxu0 0
        %5925 = vmatpush1.bf16.msra.mxu0 %v5844
        %5926 = vmatprep.subr.bf16.mxu0 0
        %5927 = vmatpush1.bf16.msra.mxu0 %v5845
        %5928 = vmatprep.subr.bf16.mxu0 0
        %5929 = vmatpush1.bf16.msra.mxu0 %v5846
        %5930 = vmatprep.subr.bf16.mxu0 0
        %5931 = vmatpush1.bf16.msra.mxu0 %v5847
        %5932 = vmatprep.subr.bf16.mxu0 0
        %5933 = vmatpush1.bf16.msra.mxu0 %v5858
        %5934 = vmatprep.subr.bf16.mxu0 0
        %5935 = vmatpush1.bf16.msra.mxu0 0
        %5936 = vmatprep.subr.bf16.mxu0 0
        %5937 = vmatpush1.bf16.msra.mxu0 0
        %5938 = vmatprep.subr.bf16.mxu0 0
        %5939 = vmatpush1.bf16.msra.mxu0 0
        %5940 = vmatprep.subr.bf16.mxu0 0
        %5941 = vmatpush1.bf16.msra.mxu0 0
        %5942 = vmatprep.subr.bf16.mxu0 0
        %5943 = vmatpush1.bf16.msra.mxu0 0
        %5944 = vmatprep.subr.bf16.mxu0 0
        %5945 = vmatpush1.bf16.msra.mxu0 0
        %5946 = vmatprep.subr.bf16.mxu0 0
        %5947 = vmatpush1.bf16.msra.mxu0 0
        %5948 = vmatprep.subr.bf16.mxu0 0
        %5949 = vmatpush1.bf16.msra.mxu0 0
        %5950 = vmatprep.subr.bf16.mxu0 0
        %5951 = vmatpush1.bf16.msra.mxu0 0
        %5952 = vmatprep.subr.bf16.mxu0 0
        %5953 = vmatpush1.bf16.msra.mxu0 0
        %5954 = vmatprep.mubr.bf16.mxu0 0
        %5955 = vmatmul.mubr.bf16.gmra.mrb[0].mxu0 %v5920
        %v5956 = vpop.f32.mrb[0].mxu0
        %v5957 = vadd.f32 0.0, %v5956
        %v5958 = vpop.f32.mrb[0].mxu0
        %v5959 = vpop.f32.mrb[0].mxu0
        %v5960 = vpop.f32.mrb[0].mxu0
        %5961 = vdwg.mxu0
        %v5962 = vpack.c.bf16 %v5957, %v5957
        %s5963 = scalar_lea.vmem %s5, 64
        %v5964 = vld [vmem:[%s5963] sm:$0xf]
        %v5965 = vld [vmem:[%s5963 + $0x4] sm:$0xf]
        %v5966 = vld [vmem:[%s5963 + $0x8] sm:$0xf]
        %v5967 = vld [vmem:[%s5963 + $0xc] sm:$0xf]
        %v5968 = vld [vmem:[%s5963 + $0x10] sm:$0xf]
        %v5969 = vld [vmem:[%s5963 + $0x14] sm:$0xf]
        %v5970 = vld [vmem:[%s5963 + $0x18] sm:$0xf]
        %v5971 = vld [vmem:[%s5963 + $0x1c] sm:$0xf]
        %v5972 = vld [vmem:[%s5963 + $0x20] sm:$0xf]
        %v5973 = vld [vmem:[%s5963 + $0x24] sm:$0xf]
        %v5974 = vld [vmem:[%s5963 + $0x28] sm:$0xf]
        %v5975 = vld [vmem:[%s5963 + $0x2c] sm:$0xf]
        %v5976 = vld [vmem:[%s5963 + $0x30] sm:$0xf]
        %v5977 = vld [vmem:[%s5963 + $0x34] sm:$0xf]
        %v5978 = vld [vmem:[%s5963 + $0x38] sm:$0xf]
        %v5979 = vld [vmem:[%s5963 + $0x3c] sm:$0xf]
        %v5996 = vunpack.c.l.b16 %v5964
        %v5997 = vunpack.c.l.b16 %v5965
        %v5998 = vunpack.c.l.b16 %v5966
        %v5999 = vunpack.c.l.b16 %v5967
        %v6000 = vunpack.c.l.b16 %v5968
        %v6001 = vunpack.c.l.b16 %v5969
        %v6002 = vunpack.c.l.b16 %v5970
        %v6003 = vunpack.c.l.b16 %v5971
        %v6004 = vunpack.c.l.b16 %v5972
        %v6005 = vunpack.c.l.b16 %v5973
        %v6006 = vunpack.c.l.b16 %v5974
        %v6007 = vunpack.c.l.b16 %v5975
        %v6008 = vunpack.c.l.b16 %v5976
        %v6009 = vunpack.c.l.b16 %v5977
        %v6010 = vunpack.c.l.b16 %v5978
        %v6011 = vunpack.c.l.b16 %v5979
        %v6012 = vpack.c.b16 %v5997, %v5996
        %v6013 = vpack.c.b16 %v5999, %v5998
        %v6014 = vpack.c.b16 %v6001, %v6000
        %v6015 = vpack.c.b16 %v6003, %v6002
        %v6016 = vpack.c.b16 %v6005, %v6004
        %v6017 = vpack.c.b16 %v6007, %v6006
        %v6018 = vpack.c.b16 %v6009, %v6008
        %v6019 = vpack.c.b16 %v6011, %v6010
        %6028 = vmatprep.subr.bf16.mxu0 0
        %6029 = vmatpush1.bf16.msra.mxu0 %v6012
        %6030 = vmatprep.subr.bf16.mxu0 0
        %6031 = vmatpush1.bf16.msra.mxu0 %v6013
        %6032 = vmatprep.subr.bf16.mxu0 0
        %6033 = vmatpush1.bf16.msra.mxu0 %v6014
        %6034 = vmatprep.subr.bf16.mxu0 0
        %6035 = vmatpush1.bf16.msra.mxu0 %v6015
        %6036 = vmatprep.subr.bf16.mxu0 0
        %6037 = vmatpush1.bf16.msra.mxu0 %v6016
        %6038 = vmatprep.subr.bf16.mxu0 0
        %6039 = vmatpush1.bf16.msra.mxu0 %v6017
        %6040 = vmatprep.subr.bf16.mxu0 0
        %6041 = vmatpush1.bf16.msra.mxu0 %v6018
        %6042 = vmatprep.subr.bf16.mxu0 0
        %6043 = vmatpush1.bf16.msra.mxu0 %v6019
        %6044 = vmatprep.subr.bf16.mxu0 0
        %6045 = vmatpush1.bf16.msra.mxu0 0
        %6046 = vmatprep.subr.bf16.mxu0 0
        %6047 = vmatpush1.bf16.msra.mxu0 0
        %6048 = vmatprep.subr.bf16.mxu0 0
        %6049 = vmatpush1.bf16.msra.mxu0 0
        %6050 = vmatprep.subr.bf16.mxu0 0
        %6051 = vmatpush1.bf16.msra.mxu0 0
        %6052 = vmatprep.subr.bf16.mxu0 0
        %6053 = vmatpush1.bf16.msra.mxu0 0
        %6054 = vmatprep.subr.bf16.mxu0 0
        %6055 = vmatpush1.bf16.msra.mxu0 0
        %6056 = vmatprep.subr.bf16.mxu0 0
        %6057 = vmatpush1.bf16.msra.mxu0 0
        %6058 = vmatprep.subr.bf16.mxu0 0
        %6059 = vmatpush1.bf16.msra.mxu0 0
        %6060 = vmatprep.mubr.bf16.mxu0 0
        %6061 = vmatmul.mubr.bf16.gmra.mrb[0].mxu0 %v5962
        %v6062 = vpop.f32.mrb[0].mxu0
        %v6063 = vadd.f32 0.0, %v6062
        %v6064 = vpop.f32.mrb[0].mxu0
        %v6065 = vpop.f32.mrb[0].mxu0
        %v6066 = vpop.f32.mrb[0].mxu0
        %6067 = vdwg.mxu0
        %v6084 = vunpack.c.l.b16 %v5901
        %v6085 = vunpack.c.l.b16 %v5902
        %v6086 = vunpack.c.l.b16 %v5903
        %v6087 = vunpack.c.l.b16 %v5904
        %v6088 = vunpack.c.l.b16 %v5905
        %v6089 = vunpack.c.l.b16 %v5906
        %v6090 = vunpack.c.l.b16 %v5907
        %v6091 = vunpack.c.l.b16 %v5908
        %v6092 = vunpack.c.l.b16 %v5909
        %v6093 = vunpack.c.l.b16 %v5910
        %v6094 = vunpack.c.l.b16 %v5911
        %v6095 = vunpack.c.l.b16 %v5912
        %v6096 = vunpack.c.l.b16 %v5913
        %v6097 = vunpack.c.l.b16 %v5914
        %v6098 = vunpack.c.l.b16 %v5915
        %v6099 = vunpack.c.l.b16 %v5916
        %v6100 = vpack.c.b16 %v6085, %v6084
        %v6101 = vpack.c.b16 %v6087, %v6086
        %v6102 = vpack.c.b16 %v6089, %v6088
        %v6103 = vpack.c.b16 %v6091, %v6090
        %v6104 = vpack.c.b16 %v6093, %v6092
        %v6105 = vpack.c.b16 %v6095, %v6094
        %v6106 = vpack.c.b16 %v6097, %v6096
        %v6107 = vpack.c.b16 %v6099, %v6098
        %6116 = vmatprep.subr.bf16.mxu0 0
        %6117 = vmatpush1.bf16.msra.mxu0 %v6100
        %6118 = vmatprep.subr.bf16.mxu0 0
        %6119 = vmatpush1.bf16.msra.mxu0 %v6101
        %6120 = vmatprep.subr.bf16.mxu0 0
        %6121 = vmatpush1.bf16.msra.mxu0 %v6102
        %6122 = vmatprep.subr.bf16.mxu0 0
        %6123 = vmatpush1.bf16.msra.mxu0 %v6103
        %6124 = vmatprep.subr.bf16.mxu0 0
        %6125 = vmatpush1.bf16.msra.mxu0 %v6104
        %6126 = vmatprep.subr.bf16.mxu0 0
        %6127 = vmatpush1.bf16.msra.mxu0 %v6105
        %6128 = vmatprep.subr.bf16.mxu0 0
        %6129 = vmatpush1.bf16.msra.mxu0 %v6106
        %6130 = vmatprep.subr.bf16.mxu0 0
        %6131 = vmatpush1.bf16.msra.mxu0 %v6107
        %6132 = vmatprep.subr.bf16.mxu0 0
        %6133 = vmatpush1.bf16.msra.mxu0 0
        %6134 = vmatprep.subr.bf16.mxu0 0
        %6135 = vmatpush1.bf16.msra.mxu0 0
        %6136 = vmatprep.subr.bf16.mxu0 0
        %6137 = vmatpush1.bf16.msra.mxu0 0
        %6138 = vmatprep.subr.bf16.mxu0 0
        %6139 = vmatpush1.bf16.msra.mxu0 0
        %6140 = vmatprep.subr.bf16.mxu0 0
        %6141 = vmatpush1.bf16.msra.mxu0 0
        %6142 = vmatprep.subr.bf16.mxu0 0
        %6143 = vmatpush1.bf16.msra.mxu0 0
        %6144 = vmatprep.subr.bf16.mxu0 0
        %6145 = vmatpush1.bf16.msra.mxu0 0
        %6146 = vmatprep.subr.bf16.mxu0 0
        %6147 = vmatpush1.bf16.msra.mxu0 0
        %6148 = vmatprep.mubr.bf16.mxu0 0
        %6149 = vmatmul.mubr.bf16.gmra.mrb[0].mxu0 %v5900
        %v6150 = vpop.f32.mrb[0].mxu0
        %v6151 = vadd.f32 %v6063, %v6150
        %v6152 = vpop.f32.mrb[0].mxu0
        %v6153 = vpop.f32.mrb[0].mxu0
        %v6154 = vpop.f32.mrb[0].mxu0
        %6155 = vdwg.mxu0
        %s6156 = scalar_lea.vmem %s7, 8
        %v6157 = vld [vmem:[%s6156] sm:$0xf]
        %v6159 = vsel %vm5850, %v6157, 0
        %6161 = vmatprep.subr.bf16.mxu0 0
        %6162 = vmatpush1.bf16.msra.mxu0 %v5843
        %6163 = vmatprep.subr.bf16.mxu0 0
        %6164 = vmatpush1.bf16.msra.mxu0 %v5844
        %6165 = vmatprep.subr.bf16.mxu0 0
        %6166 = vmatpush1.bf16.msra.mxu0 %v5845
        %6167 = vmatprep.subr.bf16.mxu0 0
        %6168 = vmatpush1.bf16.msra.mxu0 %v5846
        %6169 = vmatprep.subr.bf16.mxu0 0
        %6170 = vmatpush1.bf16.msra.mxu0 %v5847
        %6171 = vmatprep.subr.bf16.mxu0 0
        %6172 = vmatpush1.bf16.msra.mxu0 %v5858
        %6173 = vmatprep.subr.bf16.mxu0 0
        %6174 = vmatpush1.bf16.msra.mxu0 0
        %6175 = vmatprep.subr.bf16.mxu0 0
        %6176 = vmatpush1.bf16.msra.mxu0 0
        %6177 = vmatprep.subr.bf16.mxu0 0
        %6178 = vmatpush1.bf16.msra.mxu0 0
        %6179 = vmatprep.subr.bf16.mxu0 0
        %6180 = vmatpush1.bf16.msra.mxu0 0
        %6181 = vmatprep.subr.bf16.mxu0 0
        %6182 = vmatpush1.bf16.msra.mxu0 0
        %6183 = vmatprep.subr.bf16.mxu0 0
        %6184 = vmatpush1.bf16.msra.mxu0 0
        %6185 = vmatprep.subr.bf16.mxu0 0
        %6186 = vmatpush1.bf16.msra.mxu0 0
        %6187 = vmatprep.subr.bf16.mxu0 0
        %6188 = vmatpush1.bf16.msra.mxu0 0
        %6189 = vmatprep.subr.bf16.mxu0 0
        %6190 = vmatpush1.bf16.msra.mxu0 0
        %6191 = vmatprep.subr.bf16.mxu0 0
        %6192 = vmatpush1.bf16.msra.mxu0 0
        %6193 = vmatprep.mubr.bf16.mxu0 0
        %6194 = vmatmul.mubr.bf16.gmra.mrb[0].mxu0 %v6159
        %v6195 = vpop.f32.mrb[0].mxu0
        %v6196 = vadd.f32 0.0, %v6195
        %v6197 = vpop.f32.mrb[0].mxu0
        %v6198 = vpop.f32.mrb[0].mxu0
        %v6199 = vpop.f32.mrb[0].mxu0
        %6200 = vdwg.mxu0
        %v6201 = vpack.c.bf16 %v6196, %v6196
        %s6202 = scalar_lea.vmem %s5, 128
        %v6203 = vld [vmem:[%s6202] sm:$0xf]
        %v6204 = vld [vmem:[%s6202 + $0x4] sm:$0xf]
        %v6205 = vld [vmem:[%s6202 + $0x8] sm:$0xf]
        %v6206 = vld [vmem:[%s6202 + $0xc] sm:$0xf]
        %v6207 = vld [vmem:[%s6202 + $0x10] sm:$0xf]
        %v6208 = vld [vmem:[%s6202 + $0x14] sm:$0xf]
        %v6209 = vld [vmem:[%s6202 + $0x18] sm:$0xf]
        %v6210 = vld [vmem:[%s6202 + $0x1c] sm:$0xf]
        %v6211 = vld [vmem:[%s6202 + $0x20] sm:$0xf]
        %v6212 = vld [vmem:[%s6202 + $0x24] sm:$0xf]
        %v6213 = vld [vmem:[%s6202 + $0x28] sm:$0xf]
        %v6214 = vld [vmem:[%s6202 + $0x2c] sm:$0xf]
        %v6215 = vld [vmem:[%s6202 + $0x30] sm:$0xf]
        %v6216 = vld [vmem:[%s6202 + $0x34] sm:$0xf]
        %v6217 = vld [vmem:[%s6202 + $0x38] sm:$0xf]
        %v6218 = vld [vmem:[%s6202 + $0x3c] sm:$0xf]
        %v6235 = vunpack.c.l.b16 %v6203
        %v6236 = vunpack.c.l.b16 %v6204
        %v6237 = vunpack.c.l.b16 %v6205
        %v6238 = vunpack.c.l.b16 %v6206
        %v6239 = vunpack.c.l.b16 %v6207
        %v6240 = vunpack.c.l.b16 %v6208
        %v6241 = vunpack.c.l.b16 %v6209
        %v6242 = vunpack.c.l.b16 %v6210
        %v6243 = vunpack.c.l.b16 %v6211
        %v6244 = vunpack.c.l.b16 %v6212
        %v6245 = vunpack.c.l.b16 %v6213
        %v6246 = vunpack.c.l.b16 %v6214
        %v6247 = vunpack.c.l.b16 %v6215
        %v6248 = vunpack.c.l.b16 %v6216
        %v6249 = vunpack.c.l.b16 %v6217
        %v6250 = vunpack.c.l.b16 %v6218
        %v6251 = vpack.c.b16 %v6236, %v6235
        %v6252 = vpack.c.b16 %v6238, %v6237
        %v6253 = vpack.c.b16 %v6240, %v6239
        %v6254 = vpack.c.b16 %v6242, %v6241
        %v6255 = vpack.c.b16 %v6244, %v6243
        %v6256 = vpack.c.b16 %v6246, %v6245
        %v6257 = vpack.c.b16 %v6248, %v6247
        %v6258 = vpack.c.b16 %v6250, %v6249
        %6267 = vmatprep.subr.bf16.mxu0 0
        %6268 = vmatpush1.bf16.msra.mxu0 %v6251
        %6269 = vmatprep.subr.bf16.mxu0 0
        %6270 = vmatpush1.bf16.msra.mxu0 %v6252
        %6271 = vmatprep.subr.bf16.mxu0 0
        %6272 = vmatpush1.bf16.msra.mxu0 %v6253
        %6273 = vmatprep.subr.bf16.mxu0 0
        %6274 = vmatpush1.bf16.msra.mxu0 %v6254
        %6275 = vmatprep.subr.bf16.mxu0 0
        %6276 = vmatpush1.bf16.msra.mxu0 %v6255
        %6277 = vmatprep.subr.bf16.mxu0 0
        %6278 = vmatpush1.bf16.msra.mxu0 %v6256
        %6279 = vmatprep.subr.bf16.mxu0 0
        %6280 = vmatpush1.bf16.msra.mxu0 %v6257
        %6281 = vmatprep.subr.bf16.mxu0 0
        %6282 = vmatpush1.bf16.msra.mxu0 %v6258
        %6283 = vmatprep.subr.bf16.mxu0 0
        %6284 = vmatpush1.bf16.msra.mxu0 0
        %6285 = vmatprep.subr.bf16.mxu0 0
        %6286 = vmatpush1.bf16.msra.mxu0 0
        %6287 = vmatprep.subr.bf16.mxu0 0
        %6288 = vmatpush1.bf16.msra.mxu0 0
        %6289 = vmatprep.subr.bf16.mxu0 0
        %6290 = vmatpush1.bf16.msra.mxu0 0
        %6291 = vmatprep.subr.bf16.mxu0 0
        %6292 = vmatpush1.bf16.msra.mxu0 0
        %6293 = vmatprep.subr.bf16.mxu0 0
        %6294 = vmatpush1.bf16.msra.mxu0 0
        %6295 = vmatprep.subr.bf16.mxu0 0
        %6296 = vmatpush1.bf16.msra.mxu0 0
        %6297 = vmatprep.subr.bf16.mxu0 0
        %6298 = vmatpush1.bf16.msra.mxu0 0
        %6299 = vmatprep.mubr.bf16.mxu0 0
        %6300 = vmatmul.mubr.bf16.gmra.mrb[0].mxu0 %v6201
        %v6301 = vpop.f32.mrb[0].mxu0
        %v6302 = vadd.f32 0.0, %v6301
        %v6303 = vpop.f32.mrb[0].mxu0
        %v6304 = vpop.f32.mrb[0].mxu0
        %v6305 = vpop.f32.mrb[0].mxu0
        %6306 = vdwg.mxu0
        %v6307 = vadd.f32 %v6151, %v6302
        %s6308 = scalar_lea.vmem %s7, 12
        %v6309 = vld [vmem:[%s6308] sm:$0xf]
        %v6311 = vsel %vm5850, %v6309, 0
        %6313 = vmatprep.subr.bf16.mxu0 0
        %6314 = vmatpush1.bf16.msra.mxu0 %v5843
        %6315 = vmatprep.subr.bf16.mxu0 0
        %6316 = vmatpush1.bf16.msra.mxu0 %v5844
        %6317 = vmatprep.subr.bf16.mxu0 0
        %6318 = vmatpush1.bf16.msra.mxu0 %v5845
        %6319 = vmatprep.subr.bf16.mxu0 0
        %6320 = vmatpush1.bf16.msra.mxu0 %v5846
        %6321 = vmatprep.subr.bf16.mxu0 0
        %6322 = vmatpush1.bf16.msra.mxu0 %v5847
        %6323 = vmatprep.subr.bf16.mxu0 0
        %6324 = vmatpush1.bf16.msra.mxu0 %v5858
        %6325 = vmatprep.subr.bf16.mxu0 0
        %6326 = vmatpush1.bf16.msra.mxu0 0
        %6327 = vmatprep.subr.bf16.mxu0 0
        %6328 = vmatpush1.bf16.msra.mxu0 0
        %6329 = vmatprep.subr.bf16.mxu0 0
        %6330 = vmatpush1.bf16.msra.mxu0 0
        %6331 = vmatprep.subr.bf16.mxu0 0
        %6332 = vmatpush1.bf16.msra.mxu0 0
        %6333 = vmatprep.subr.bf16.mxu0 0
        %6334 = vmatpush1.bf16.msra.mxu0 0
        %6335 = vmatprep.subr.bf16.mxu0 0
        %6336 = vmatpush1.bf16.msra.mxu0 0
        %6337 = vmatprep.subr.bf16.mxu0 0
        %6338 = vmatpush1.bf16.msra.mxu0 0
        %6339 = vmatprep.subr.bf16.mxu0 0
        %6340 = vmatpush1.bf16.msra.mxu0 0
        %6341 = vmatprep.subr.bf16.mxu0 0
        %6342 = vmatpush1.bf16.msra.mxu0 0
        %6343 = vmatprep.subr.bf16.mxu0 0
        %6344 = vmatpush1.bf16.msra.mxu0 0
        %6345 = vmatprep.mubr.bf16.mxu0 0
        %6346 = vmatmul.mubr.bf16.gmra.mrb[0].mxu0 %v6311
        %v6347 = vpop.f32.mrb[0].mxu0
        %v6348 = vadd.f32 0.0, %v6347
        %v6349 = vpop.f32.mrb[0].mxu0
        %v6350 = vpop.f32.mrb[0].mxu0
        %v6351 = vpop.f32.mrb[0].mxu0
        %6352 = vdwg.mxu0
        %v6353 = vpack.c.bf16 %v6348, %v6348
        %s6354 = scalar_lea.vmem %s5, 192
        %v6355 = vld [vmem:[%s6354] sm:$0xf]
        %v6356 = vld [vmem:[%s6354 + $0x4] sm:$0xf]
        %v6357 = vld [vmem:[%s6354 + $0x8] sm:$0xf]
        %v6358 = vld [vmem:[%s6354 + $0xc] sm:$0xf]
        %v6359 = vld [vmem:[%s6354 + $0x10] sm:$0xf]
        %v6360 = vld [vmem:[%s6354 + $0x14] sm:$0xf]
        %v6361 = vld [vmem:[%s6354 + $0x18] sm:$0xf]
        %v6362 = vld [vmem:[%s6354 + $0x1c] sm:$0xf]
        %v6363 = vld [vmem:[%s6354 + $0x20] sm:$0xf]
        %v6364 = vld [vmem:[%s6354 + $0x24] sm:$0xf]
        %v6365 = vld [vmem:[%s6354 + $0x28] sm:$0xf]
        %v6366 = vld [vmem:[%s6354 + $0x2c] sm:$0xf]
        %v6367 = vld [vmem:[%s6354 + $0x30] sm:$0xf]
        %v6368 = vld [vmem:[%s6354 + $0x34] sm:$0xf]
        %v6369 = vld [vmem:[%s6354 + $0x38] sm:$0xf]
        %v6370 = vld [vmem:[%s6354 + $0x3c] sm:$0xf]
        %v6387 = vunpack.c.l.b16 %v6355
        %v6388 = vunpack.c.l.b16 %v6356
        %v6389 = vunpack.c.l.b16 %v6357
        %v6390 = vunpack.c.l.b16 %v6358
        %v6391 = vunpack.c.l.b16 %v6359
        %v6392 = vunpack.c.l.b16 %v6360
        %v6393 = vunpack.c.l.b16 %v6361
        %v6394 = vunpack.c.l.b16 %v6362
        %v6395 = vunpack.c.l.b16 %v6363
        %v6396 = vunpack.c.l.b16 %v6364
        %v6397 = vunpack.c.l.b16 %v6365
        %v6398 = vunpack.c.l.b16 %v6366
        %v6399 = vunpack.c.l.b16 %v6367
        %v6400 = vunpack.c.l.b16 %v6368
        %v6401 = vunpack.c.l.b16 %v6369
        %v6402 = vunpack.c.l.b16 %v6370
        %v6403 = vpack.c.b16 %v6388, %v6387
        %v6404 = vpack.c.b16 %v6390, %v6389
        %v6405 = vpack.c.b16 %v6392, %v6391
        %v6406 = vpack.c.b16 %v6394, %v6393
        %v6407 = vpack.c.b16 %v6396, %v6395
        %v6408 = vpack.c.b16 %v6398, %v6397
        %v6409 = vpack.c.b16 %v6400, %v6399
        %v6410 = vpack.c.b16 %v6402, %v6401
        %6419 = vmatprep.subr.bf16.mxu0 0
        %6420 = vmatpush1.bf16.msra.mxu0 %v6403
        %6421 = vmatprep.subr.bf16.mxu0 0
        %6422 = vmatpush1.bf16.msra.mxu0 %v6404
        %6423 = vmatprep.subr.bf16.mxu0 0
        %6424 = vmatpush1.bf16.msra.mxu0 %v6405
        %6425 = vmatprep.subr.bf16.mxu0 0
        %6426 = vmatpush1.bf16.msra.mxu0 %v6406
        %6427 = vmatprep.subr.bf16.mxu0 0
        %6428 = vmatpush1.bf16.msra.mxu0 %v6407
        %6429 = vmatprep.subr.bf16.mxu0 0
        %6430 = vmatpush1.bf16.msra.mxu0 %v6408
        %6431 = vmatprep.subr.bf16.mxu0 0
        %6432 = vmatpush1.bf16.msra.mxu0 %v6409
        %6433 = vmatprep.subr.bf16.mxu0 0
        %6434 = vmatpush1.bf16.msra.mxu0 %v6410
        %6435 = vmatprep.subr.bf16.mxu0 0
        %6436 = vmatpush1.bf16.msra.mxu0 0
        %6437 = vmatprep.subr.bf16.mxu0 0
        %6438 = vmatpush1.bf16.msra.mxu0 0
        %6439 = vmatprep.subr.bf16.mxu0 0
        %6440 = vmatpush1.bf16.msra.mxu0 0
        %6441 = vmatprep.subr.bf16.mxu0 0
        %6442 = vmatpush1.bf16.msra.mxu0 0
        %6443 = vmatprep.subr.bf16.mxu0 0
        %6444 = vmatpush1.bf16.msra.mxu0 0
        %6445 = vmatprep.subr.bf16.mxu0 0
        %6446 = vmatpush1.bf16.msra.mxu0 0
        %6447 = vmatprep.subr.bf16.mxu0 0
        %6448 = vmatpush1.bf16.msra.mxu0 0
        %6449 = vmatprep.subr.bf16.mxu0 0
        %6450 = vmatpush1.bf16.msra.mxu0 0
        %6451 = vmatprep.mubr.bf16.mxu0 0
        %6452 = vmatmul.mubr.bf16.gmra.mrb[0].mxu0 %v6353
        %v6453 = vpop.f32.mrb[0].mxu0
        %v6454 = vadd.f32 0.0, %v6453
        %v6455 = vpop.f32.mrb[0].mxu0
        %v6456 = vpop.f32.mrb[0].mxu0
        %v6457 = vpop.f32.mrb[0].mxu0
        %6458 = vdwg.mxu0
        %v6459 = vadd.f32 %v6307, %v6454
        %v6460 = vld [vmem:[%s6] sm:$0x1]
        %v6462 = vlaneseq
        %v6463 = vshrl.u32 %v6462, 7
        %v6464 = vsub.s32 0, %v6463
        %v6465 = vrot.slane %v6460, %v6464
        %v6467 = vadd.f32 %v6459, %v6465
        %6468 = vst [vmem:[%s629] sm:$0xff] %v6467
        %s6469 = sand.u32 %s203, 1
        %s6470 = scalar_lea.sflag [#allocation4], %s6469
        %s6471 = sand.u32 %s203, 1
        %s6472 = smul.addr %s6471, 8
        %s6473 = scalar_lea.vmem [#allocation3], %s6472
        // Predicated region
        $region94: #{forward.1} parent=88 // pred_check
          %p6474 = pneg %p213
        $region95: #{forward.1} parent=88 // pred_check_branch
          %6476 = sbr.rel (%p6474) target = $region97
        $region96: #{forward.1} parent=88 // pred_region
          %s6478 = ssub.s32 128, 128
          %6479 = vsyncadd %s6470, %s6478
          %s6480 = smul.addr %s22, 128
          %s6481 = scalar_lea.hbm %s8, %s6480
          %s6483 = sshll.u32 %s6473, 4
          %s6484 = int_to_ptr.vmem [resolvable:$true] %s6483
          %6486 = dma.vmem_to_hbm [thread:$0]  %s6484, 128, %s6481, %s6470
        $region97: #{forward.1} parent=88 // pred_fallthru
          _
      $region89: #{forward.1} parent=5 // pred_fallthru
        _
      %p6487 = scmp.le.s32.totalorder 2, %s17
      // Predicated region
      $region98: #{forward.1} parent=5 // pred_check
        %p6488 = pneg %p6487
      $region99: #{forward.1} parent=5 // pred_check_branch
        %6490 = sbr.rel (%p6488) target = $region101
      $region100: #{forward.1} parent=5 // pred_region
        %s6491 = ssub.s32 %s17, 2
        // Predicated region
        $region102: #{forward.1} parent=100 // pred_check
          %p6492 = pneg %p219
        $region103: #{forward.1} parent=100 // pred_check_branch
          %6494 = sbr.rel (%p6492) target = $region105
        $region104: #{forward.1} parent=100 // pred_region
          %s6495 = sand.u32 %s204, 1
          %s6496 = scalar_lea.sflag [#allocation4], %s6495
          %s6497 = sand.u32 %s204, 1
          %s6498 = smul.addr %s6497, 8
          %s6499 = scalar_lea.vmem [#allocation3], %s6498
          %6500 = dma.done %s6496, 128
        $region105: #{forward.1} parent=100 // pred_fallthru
          _
      $region101: #{forward.1} parent=5 // pred_fallthru
        _
    $region6: #{forward.1} parent=1 // loop_footer
      %s21 = sadd.s32 1, %s17
    $region7: #{forward.1} parent=1 // loop_footer_branch
      %16 = sbr.rel target = $region3
    $region8: #{forward.1} parent=1 // loop_exit
      _
    %6501 = vsyncpa [#allocation4], 1
    %s6502 = scalar_lea.sflag [#allocation4], 1
    %6503 = vsyncpa %s6502, 1

</llo_original>
